<compile_context>
chip_gen: v5e
topology: v5e:2x2
jax: 0.10.0
libtpu: 0.0.40
codegen_flags: <defaults>
</compile_context>

<pallas_src>
import math

import jax
import jax.numpy as jnp
from jax import lax
from jax.experimental import pallas as pl
from jax.experimental.pallas import tpu as pltpu

# ---- bounding constants (match the PyTorch module), plain Python scalars ----
MIN_TAU0, MAX_TAU0 = 26.0, 31.0
MIN_LOGKSV, MAX_LOGKSV = math.log(0.01), math.log(100.0)
MIN_F1, MAX_F1 = 0.0, 1.0

LAYER_DIMS = [2, 128, 64, 32, 16, 5]   # input_dim=2 -> ... -> 5 outputs
OUT_COLS = 8                           # small padded output width (not 128)
_SUBLANE = 8

_HIGHEST = jax.lax.Precision.HIGHEST


def _round_up(a, m):
    return ((a + m - 1) // m) * m


def _mlp_kernel(x_ref,
                w1_ref, b1_ref, w2_ref, b2_ref, w3_ref, b3_ref,
                w4_ref, b4_ref, w5_ref, b5_ref,
                lo_ref, scale_ref, raw_ref,
                out_ref):
    """Whole MLP + output bounding for one batch tile, entirely in VMEM."""
    x = x_ref[...]                     # (TB, 2) f32
    w1 = w1_ref[...]                   # (2, 128) f32

    # Layer 1: K=2 contraction -> two broadcast FMAs on the VPU (skip the MXU).
    h = x[:, 0:1] * w1[0:1, :] + x[:, 1:2] * w1[1:2, :]
    h = jnp.maximum(h + b1_ref[...], 0.0)                       # (TB, 128) f32

    def dot_f32acc(h, w_ref):
        w = w_ref[...]
        if w.dtype == jnp.bfloat16:
            # Single-pass bf16 MXU matmul with f32 accumulation (default path).
            return jnp.dot(h.astype(jnp.bfloat16), w,
                           preferred_element_type=jnp.float32)
        # f32 fallback path for tight numerics.
        return jnp.dot(h, w, preferred_element_type=jnp.float32,
                       precision=_HIGHEST)

    h = jnp.maximum(dot_f32acc(h, w2_ref) + b2_ref[...], 0.0)   # (TB, 64)
    h = jnp.maximum(dot_f32acc(h, w3_ref) + b3_ref[...], 0.0)   # (TB, 32)
    h = jnp.maximum(dot_f32acc(h, w4_ref) + b4_ref[...], 0.0)   # (TB, 16)

    out = dot_f32acc(h, w5_ref) + b5_ref[...]                   # (TB, 8) f32

    # Bounding: cols 0..3 -> lo + scale*sigmoid(out); col 4 raw; cols 5..7 pad.
    # lo / scale / raw are precomputed (1, 8) f32 vectors (no iota/compares).
    sig = jax.nn.sigmoid(out)                                   # 8 lanes only
    bounded = lo_ref[...] + scale_ref[...] * sig
    raw = raw_ref[...]
    out_ref[...] = out * raw + bounded * (1.0 - raw)


def multisite_quenching_mlp(x, params, *, batch_tile=2048,
                            dot_dtype=jnp.bfloat16):
    """x: (B, 2) float32; params: list of (W, b) with W (in,out), b (1,out).

    dot_dtype: dtype of the MXU matmul operands (bf16 default; f32 uses
    precision=HIGHEST). Accumulation and all elementwise math stay f32.
    """
    B, in_dim = x.shape
    assert in_dim == LAYER_DIMS[0]
    out_dim = LAYER_DIMS[-1]

    # --- tiling: large tiles amortize per-step overhead; keep >= 2 grid steps
    #     when the batch allows so both v7x TensorCores get work.
    n_steps = pl.cdiv(B, batch_tile)
    if n_steps == 1 and B > 2 * _SUBLANE:
        n_steps = 2
    tile = _round_up(pl.cdiv(B, n_steps), _SUBLANE)
    b_pad = tile * n_steps
    if b_pad != B:
        x = jnp.pad(x, ((0, b_pad - B), (0, 0)))
    x = x.astype(jnp.float32)          # inputs stay f32 (never quantized)

    # Pad the final layer only to OUT_COLS (=8) columns.
    (w1, b1), (w2, b2), (w3, b3), (w4, b4), (w5, b5) = params
    w5 = jnp.pad(w5, ((0, 0), (0, OUT_COLS - out_dim)))
    b5 = jnp.pad(b5, ((0, 0), (0, OUT_COLS - out_dim)))

    # Bounding vectors as (1, OUT_COLS) f32 inputs.
    lo_v = [MIN_TAU0, MIN_LOGKSV, MIN_LOGKSV, MIN_F1] + [0.0] * (OUT_COLS - 4)
    sc_v = [MAX_TAU0 - MIN_TAU0, MAX_LOGKSV - MIN_LOGKSV,
            MAX_LOGKSV - MIN_LOGKSV, MAX_F1 - MIN_F1] + [0.0] * (OUT_COLS - 4)
    raw_v = [0.0, 0.0, 0.0, 0.0] + [1.0] * (OUT_COLS - 4)
    lo = jnp.asarray([lo_v], jnp.float32)
    scale = jnp.asarray([sc_v], jnp.float32)
    raw = jnp.asarray([raw_v], jnp.float32)

    # Weight casting: only the MXU operands (w2..w5) take dot_dtype;
    # layer-1 weight and all biases stay f32.
    flat_inputs = [
        x,
        w1.astype(jnp.float32), b1.astype(jnp.float32),
        w2.astype(dot_dtype), b2.astype(jnp.float32),
        w3.astype(dot_dtype), b3.astype(jnp.float32),
        w4.astype(dot_dtype), b4.astype(jnp.float32),
        w5.astype(dot_dtype), b5.astype(jnp.float32),
        lo, scale, raw,
    ]

    # Weights/biases/constants: whole arrays resident in VMEM (no pipelining).
    vmem_spec = pl.BlockSpec(memory_space=pltpu.MemorySpace.VMEM)
    in_specs = [pl.BlockSpec((tile, in_dim), lambda i: (i, 0))]
    in_specs += [vmem_spec] * (len(flat_inputs) - 1)

    out = pl.pallas_call(
        _mlp_kernel,
        out_shape=jax.ShapeDtypeStruct((b_pad, OUT_COLS), jnp.float32),
        grid=(n_steps,),
        in_specs=in_specs,
        out_specs=pl.BlockSpec((tile, OUT_COLS), lambda i: (i, 0)),
        compiler_params=pltpu.CompilerParams(
            dimension_semantics=("parallel",)),
    )(*flat_inputs)

    return out[:B, :out_dim]


def init_params(key):
    """Deterministic PyTorch-style init: U(-1/sqrt(fan_in), 1/sqrt(fan_in))."""
    params = []
    for fan_in, fan_out in zip(LAYER_DIMS[:-1], LAYER_DIMS[1:]):
        key, kw, kb = jax.random.split(key, 3)
        bound = 1.0 / math.sqrt(fan_in)
        w = jax.random.uniform(kw, (fan_in, fan_out), jnp.float32, -bound, bound)
        b = jax.random.uniform(kb, (1, fan_out), jnp.float32, -bound, bound)
        params.append((w, b))
    return params


def reference_forward(x, params):
    """Plain-JAX reference mirroring the PyTorch forward (f32, HIGHEST)."""
    h = x
    n = len(params)
    for i, (w, b) in enumerate(params):
        h = jnp.dot(h, w, precision=_HIGHEST) + b
        if i < n - 1:
            h = jnp.maximum(h, 0.0)
    out = h
    sig = jax.nn.sigmoid(out)
    tau0 = MIN_TAU0 + (MAX_TAU0 - MIN_TAU0) * sig[:, 0]
    lks1 = MIN_LOGKSV + (MAX_LOGKSV - MIN_LOGKSV) * sig[:, 1]
    lks2 = MIN_LOGKSV + (MAX_LOGKSV - MIN_LOGKSV) * sig[:, 2]
    f1 = MIN_F1 + (MAX_F1 - MIN_F1) * sig[:, 3]
    return jnp.stack([tau0, lks1, lks2, f1, out[:, 4]], axis=1)


if __name__ == "__main__":
    key = jax.random.PRNGKey(0)
    key, kx = jax.random.split(key)

    # Small demo: B not a multiple of the tile -> exercises batch padding;
    # the wrapper splits into 2 grid steps so both v7x TensorCores get work.
    B = 600
    x = jax.random.normal(kx, (B, LAYER_DIMS[0]), jnp.float32)
    params = init_params(key)

    ref = reference_forward(x, params)

    # f32-operand MXU path: tight numerics check.
    out_f32 = jax.block_until_ready(
        multisite_quenching_mlp(x, params, dot_dtype=jnp.float32))
    assert out_f32.shape == (B, 5)
    assert jnp.allclose(out_f32, ref, atol=1e-3, rtol=1e-3), \
        "f32 path mismatch vs reference"

    # Default bf16-operand MXU path (perf path): f32 accumulation, loose check.
    out_bf16 = jax.block_until_ready(multisite_quenching_mlp(x, params))
    assert out_bf16.shape == (B, 5)
    assert jnp.allclose(out_bf16, ref, atol=1e-1, rtol=1e-2), \
        "bf16 path mismatch vs reference"

    print("KERNEL_OK")
</pallas_src>

<mosaic_0001>
module attributes {stable_mosaic.version = 11 : i64} {
  func.func @_mlp_kernel(%arg0: i32, %arg1: memref<304x2xf32, #tpu.memory_space<vmem>>, %arg2: memref<2x128xf32, #tpu.memory_space<vmem>>, %arg3: memref<1x128xf32, #tpu.memory_space<vmem>>, %arg4: memref<128x64xf32, #tpu.memory_space<vmem>>, %arg5: memref<1x64xf32, #tpu.memory_space<vmem>>, %arg6: memref<64x32xf32, #tpu.memory_space<vmem>>, %arg7: memref<1x32xf32, #tpu.memory_space<vmem>>, %arg8: memref<32x16xf32, #tpu.memory_space<vmem>>, %arg9: memref<1x16xf32, #tpu.memory_space<vmem>>, %arg10: memref<16x8xf32, #tpu.memory_space<vmem>>, %arg11: memref<1x8xf32, #tpu.memory_space<vmem>>, %arg12: memref<1x8xf32, #tpu.memory_space<vmem>>, %arg13: memref<1x8xf32, #tpu.memory_space<vmem>>, %arg14: memref<1x8xf32, #tpu.memory_space<vmem>>, %arg15: memref<304x8xf32, #tpu.memory_space<vmem>>) attributes {dimension_semantics = [#tpu.dimension_semantics<parallel>], iteration_bounds = array<i64: 2>, scalar_prefetch = 0 : i64, scratch_operands = 0 : i64, tpu.core_type = #tpu.core_type<tc>, window_params = [{transform_indices = @transform_0, window_bounds = array<i64: 304, 2>}, {pipeline_mode = #tpu.pipeline_mode<synchronous>, transform_indices = @transform_1, window_bounds = array<i64: 2, 128>}, {pipeline_mode = #tpu.pipeline_mode<synchronous>, transform_indices = @transform_2, window_bounds = array<i64: 1, 128>}, {pipeline_mode = #tpu.pipeline_mode<synchronous>, transform_indices = @transform_3, window_bounds = array<i64: 128, 64>}, {pipeline_mode = #tpu.pipeline_mode<synchronous>, transform_indices = @transform_4, window_bounds = array<i64: 1, 64>}, {pipeline_mode = #tpu.pipeline_mode<synchronous>, transform_indices = @transform_5, window_bounds = array<i64: 64, 32>}, {pipeline_mode = #tpu.pipeline_mode<synchronous>, transform_indices = @transform_6, window_bounds = array<i64: 1, 32>}, {pipeline_mode = #tpu.pipeline_mode<synchronous>, transform_indices = @transform_7, window_bounds = array<i64: 32, 16>}, {pipeline_mode = #tpu.pipeline_mode<synchronous>, transform_indices = @transform_8, window_bounds = array<i64: 1, 16>}, {pipeline_mode = #tpu.pipeline_mode<synchronous>, transform_indices = @transform_9, window_bounds = array<i64: 16, 8>}, {pipeline_mode = #tpu.pipeline_mode<synchronous>, transform_indices = @transform_10, window_bounds = array<i64: 1, 8>}, {pipeline_mode = #tpu.pipeline_mode<synchronous>, transform_indices = @transform_11, window_bounds = array<i64: 1, 8>}, {pipeline_mode = #tpu.pipeline_mode<synchronous>, transform_indices = @transform_12, window_bounds = array<i64: 1, 8>}, {pipeline_mode = #tpu.pipeline_mode<synchronous>, transform_indices = @transform_13, window_bounds = array<i64: 1, 8>}, {transform_indices = @transform_14, window_bounds = array<i64: 304, 8>}]} {
    %c0 = arith.constant 0 : index
    %c0_0 = arith.constant 0 : index
    %0 = vector.load %arg1[%c0, %c0_0] : memref<304x2xf32, #tpu.memory_space<vmem>>, vector<304x2xf32>
    %c0_1 = arith.constant 0 : index
    %c0_2 = arith.constant 0 : index
    %1 = vector.load %arg2[%c0_1, %c0_2] : memref<2x128xf32, #tpu.memory_space<vmem>>, vector<2x128xf32>
    %2 = vector.extract_strided_slice %0 {offsets = [0, 0], sizes = [304, 1], strides = [1, 1]} : vector<304x2xf32> to vector<304x1xf32>
    %3 = vector.extract_strided_slice %1 {offsets = [0, 0], sizes = [1, 128], strides = [1, 1]} : vector<2x128xf32> to vector<1x128xf32>
    %4 = vector.broadcast %2 : vector<304x1xf32> to vector<304x128xf32>
    %5 = vector.broadcast %3 : vector<1x128xf32> to vector<304x128xf32>
    %6 = arith.mulf %4, %5 : vector<304x128xf32>
    %7 = vector.extract_strided_slice %0 {offsets = [0, 1], sizes = [304, 1], strides = [1, 1]} : vector<304x2xf32> to vector<304x1xf32>
    %8 = vector.extract_strided_slice %1 {offsets = [1, 0], sizes = [1, 128], strides = [1, 1]} : vector<2x128xf32> to vector<1x128xf32>
    %9 = vector.broadcast %7 : vector<304x1xf32> to vector<304x128xf32>
    %10 = vector.broadcast %8 : vector<1x128xf32> to vector<304x128xf32>
    %11 = arith.mulf %9, %10 : vector<304x128xf32>
    %12 = arith.addf %6, %11 : vector<304x128xf32>
    %c0_3 = arith.constant 0 : index
    %c0_4 = arith.constant 0 : index
    %13 = vector.load %arg3[%c0_3, %c0_4] : memref<1x128xf32, #tpu.memory_space<vmem>>, vector<1x128xf32>
    %14 = vector.broadcast %13 : vector<1x128xf32> to vector<304x128xf32>
    %15 = arith.addf %12, %14 : vector<304x128xf32>
    %cst = arith.constant 0.000000e+00 : f32
    %16 = vector.broadcast %cst : f32 to vector<304x128xf32>
    %17 = arith.maximumf %15, %16 : vector<304x128xf32>
    %c0_5 = arith.constant 0 : index
    %c0_6 = arith.constant 0 : index
    %18 = vector.load %arg4[%c0_5, %c0_6] : memref<128x64xf32, #tpu.memory_space<vmem>>, vector<128x64xf32>
    %cst_7 = arith.constant dense<0.000000e+00> : vector<304x64xf32>
    %19 = tpu.matmul %17, %18, %cst_7 {dimension_numbers = #tpu.dot_dimension_numbers<[1], [0], [0], [1], [0, 0, 1, 1], [], []>, precision = #tpu.contract_precision<fp32>} : vector<304x128xf32>, vector<128x64xf32>, vector<304x64xf32> -> vector<304x64xf32>
    %c0_8 = arith.constant 0 : index
    %c0_9 = arith.constant 0 : index
    %20 = vector.load %arg5[%c0_8, %c0_9] : memref<1x64xf32, #tpu.memory_space<vmem>>, vector<1x64xf32>
    %21 = vector.broadcast %20 : vector<1x64xf32> to vector<304x64xf32>
    %22 = arith.addf %19, %21 : vector<304x64xf32>
    %cst_10 = arith.constant 0.000000e+00 : f32
    %23 = vector.broadcast %cst_10 : f32 to vector<304x64xf32>
    %24 = arith.maximumf %22, %23 : vector<304x64xf32>
    %c0_11 = arith.constant 0 : index
    %c0_12 = arith.constant 0 : index
    %25 = vector.load %arg6[%c0_11, %c0_12] : memref<64x32xf32, #tpu.memory_space<vmem>>, vector<64x32xf32>
    %cst_13 = arith.constant dense<0.000000e+00> : vector<304x32xf32>
    %26 = tpu.matmul %24, %25, %cst_13 {dimension_numbers = #tpu.dot_dimension_numbers<[1], [0], [0], [1], [0, 0, 1, 1], [], []>, precision = #tpu.contract_precision<fp32>} : vector<304x64xf32>, vector<64x32xf32>, vector<304x32xf32> -> vector<304x32xf32>
    %c0_14 = arith.constant 0 : index
    %c0_15 = arith.constant 0 : index
    %27 = vector.load %arg7[%c0_14, %c0_15] : memref<1x32xf32, #tpu.memory_space<vmem>>, vector<1x32xf32>
    %28 = vector.broadcast %27 : vector<1x32xf32> to vector<304x32xf32>
    %29 = arith.addf %26, %28 : vector<304x32xf32>
    %cst_16 = arith.constant 0.000000e+00 : f32
    %30 = vector.broadcast %cst_16 : f32 to vector<304x32xf32>
    %31 = arith.maximumf %29, %30 : vector<304x32xf32>
    %c0_17 = arith.constant 0 : index
    %c0_18 = arith.constant 0 : index
    %32 = vector.load %arg8[%c0_17, %c0_18] : memref<32x16xf32, #tpu.memory_space<vmem>>, vector<32x16xf32>
    %cst_19 = arith.constant dense<0.000000e+00> : vector<304x16xf32>
    %33 = tpu.matmul %31, %32, %cst_19 {dimension_numbers = #tpu.dot_dimension_numbers<[1], [0], [0], [1], [0, 0, 1, 1], [], []>, precision = #tpu.contract_precision<fp32>} : vector<304x32xf32>, vector<32x16xf32>, vector<304x16xf32> -> vector<304x16xf32>
    %c0_20 = arith.constant 0 : index
    %c0_21 = arith.constant 0 : index
    %34 = vector.load %arg9[%c0_20, %c0_21] : memref<1x16xf32, #tpu.memory_space<vmem>>, vector<1x16xf32>
    %35 = vector.broadcast %34 : vector<1x16xf32> to vector<304x16xf32>
    %36 = arith.addf %33, %35 : vector<304x16xf32>
    %cst_22 = arith.constant 0.000000e+00 : f32
    %37 = vector.broadcast %cst_22 : f32 to vector<304x16xf32>
    %38 = arith.maximumf %36, %37 : vector<304x16xf32>
    %c0_23 = arith.constant 0 : index
    %c0_24 = arith.constant 0 : index
    %39 = vector.load %arg10[%c0_23, %c0_24] : memref<16x8xf32, #tpu.memory_space<vmem>>, vector<16x8xf32>
    %cst_25 = arith.constant dense<0.000000e+00> : vector<304x8xf32>
    %40 = tpu.matmul %38, %39, %cst_25 {dimension_numbers = #tpu.dot_dimension_numbers<[1], [0], [0], [1], [0, 0, 1, 1], [], []>, precision = #tpu.contract_precision<fp32>} : vector<304x16xf32>, vector<16x8xf32>, vector<304x8xf32> -> vector<304x8xf32>
    %c0_26 = arith.constant 0 : index
    %c0_27 = arith.constant 0 : index
    %41 = vector.load %arg11[%c0_26, %c0_27] : memref<1x8xf32, #tpu.memory_space<vmem>>, vector<1x8xf32>
    %42 = vector.broadcast %41 : vector<1x8xf32> to vector<304x8xf32>
    %43 = arith.addf %40, %42 : vector<304x8xf32>
    %44 = arith.negf %43 : vector<304x8xf32>
    %45 = math.exp %44 : vector<304x8xf32>
    %cst_28 = arith.constant 1.000000e+00 : f32
    %46 = vector.broadcast %cst_28 : f32 to vector<304x8xf32>
    %47 = arith.addf %46, %45 : vector<304x8xf32>
    %48 = arith.divf %46, %47 : vector<304x8xf32>
    %c0_29 = arith.constant 0 : index
    %c0_30 = arith.constant 0 : index
    %49 = vector.load %arg12[%c0_29, %c0_30] : memref<1x8xf32, #tpu.memory_space<vmem>>, vector<1x8xf32>
    %c0_31 = arith.constant 0 : index
    %c0_32 = arith.constant 0 : index
    %50 = vector.load %arg13[%c0_31, %c0_32] : memref<1x8xf32, #tpu.memory_space<vmem>>, vector<1x8xf32>
    %51 = vector.broadcast %50 : vector<1x8xf32> to vector<304x8xf32>
    %52 = arith.mulf %51, %48 : vector<304x8xf32>
    %53 = vector.broadcast %49 : vector<1x8xf32> to vector<304x8xf32>
    %54 = arith.addf %53, %52 : vector<304x8xf32>
    %c0_33 = arith.constant 0 : index
    %c0_34 = arith.constant 0 : index
    %55 = vector.load %arg14[%c0_33, %c0_34] : memref<1x8xf32, #tpu.memory_space<vmem>>, vector<1x8xf32>
    %56 = vector.broadcast %55 : vector<1x8xf32> to vector<304x8xf32>
    %57 = arith.mulf %43, %56 : vector<304x8xf32>
    %cst_35 = arith.constant 1.000000e+00 : f32
    %58 = vector.broadcast %cst_35 : f32 to vector<1x8xf32>
    %59 = arith.subf %58, %55 : vector<1x8xf32>
    %60 = vector.broadcast %59 : vector<1x8xf32> to vector<304x8xf32>
    %61 = arith.mulf %54, %60 : vector<304x8xf32>
    %62 = arith.addf %57, %61 : vector<304x8xf32>
    %c0_36 = arith.constant 0 : index
    %c0_37 = arith.constant 0 : index
    %63 = vector.load %arg15[%c0_36, %c0_37] : memref<304x8xf32, #tpu.memory_space<vmem>>, vector<304x8xf32>
    tpu.vector_store %arg15[%c0_36, %c0_37], %62 {strides = array<i32>} : memref<304x8xf32, #tpu.memory_space<vmem>>, vector<304x8xf32>,
    return
  }
  func.func @transform_0(%arg0: i32) -> (i32, i32) {
    %c0_i32 = arith.constant 0 : i32
    %c0_i32_0 = arith.constant 0 : i32
    return %arg0, %c0_i32 : i32, i32
  }
  func.func @transform_1(%arg0: i32) -> (i32, i32) {
    %c0_i32 = arith.constant 0 : i32
    %c0_i32_0 = arith.constant 0 : i32
    %c0_i32_1 = arith.constant 0 : i32
    return %c0_i32, %c0_i32_0 : i32, i32
  }
  func.func @transform_2(%arg0: i32) -> (i32, i32) {
    %c0_i32 = arith.constant 0 : i32
    %c0_i32_0 = arith.constant 0 : i32
    %c0_i32_1 = arith.constant 0 : i32
    return %c0_i32, %c0_i32_0 : i32, i32
  }
  func.func @transform_3(%arg0: i32) -> (i32, i32) {
    %c0_i32 = arith.constant 0 : i32
    %c0_i32_0 = arith.constant 0 : i32
    %c0_i32_1 = arith.constant 0 : i32
    return %c0_i32, %c0_i32_0 : i32, i32
  }
  func.func @transform_4(%arg0: i32) -> (i32, i32) {
    %c0_i32 = arith.constant 0 : i32
    %c0_i32_0 = arith.constant 0 : i32
    %c0_i32_1 = arith.constant 0 : i32
    return %c0_i32, %c0_i32_0 : i32, i32
  }
  func.func @transform_5(%arg0: i32) -> (i32, i32) {
    %c0_i32 = arith.constant 0 : i32
    %c0_i32_0 = arith.constant 0 : i32
    %c0_i32_1 = arith.constant 0 : i32
    return %c0_i32, %c0_i32_0 : i32, i32
  }
  func.func @transform_6(%arg0: i32) -> (i32, i32) {
    %c0_i32 = arith.constant 0 : i32
    %c0_i32_0 = arith.constant 0 : i32
    %c0_i32_1 = arith.constant 0 : i32
    return %c0_i32, %c0_i32_0 : i32, i32
  }
  func.func @transform_7(%arg0: i32) -> (i32, i32) {
    %c0_i32 = arith.constant 0 : i32
    %c0_i32_0 = arith.constant 0 : i32
    %c0_i32_1 = arith.constant 0 : i32
    return %c0_i32, %c0_i32_0 : i32, i32
  }
  func.func @transform_8(%arg0: i32) -> (i32, i32) {
    %c0_i32 = arith.constant 0 : i32
    %c0_i32_0 = arith.constant 0 : i32
    %c0_i32_1 = arith.constant 0 : i32
    return %c0_i32, %c0_i32_0 : i32, i32
  }
  func.func @transform_9(%arg0: i32) -> (i32, i32) {
    %c0_i32 = arith.constant 0 : i32
    %c0_i32_0 = arith.constant 0 : i32
    %c0_i32_1 = arith.constant 0 : i32
    return %c0_i32, %c0_i32_0 : i32, i32
  }
  func.func @transform_10(%arg0: i32) -> (i32, i32) {
    %c0_i32 = arith.constant 0 : i32
    %c0_i32_0 = arith.constant 0 : i32
    %c0_i32_1 = arith.constant 0 : i32
    return %c0_i32, %c0_i32_0 : i32, i32
  }
  func.func @transform_11(%arg0: i32) -> (i32, i32) {
    %c0_i32 = arith.constant 0 : i32
    %c0_i32_0 = arith.constant 0 : i32
    %c0_i32_1 = arith.constant 0 : i32
    return %c0_i32, %c0_i32_0 : i32, i32
  }
  func.func @transform_12(%arg0: i32) -> (i32, i32) {
    %c0_i32 = arith.constant 0 : i32
    %c0_i32_0 = arith.constant 0 : i32
    %c0_i32_1 = arith.constant 0 : i32
    return %c0_i32, %c0_i32_0 : i32, i32
  }
  func.func @transform_13(%arg0: i32) -> (i32, i32) {
    %c0_i32 = arith.constant 0 : i32
    %c0_i32_0 = arith.constant 0 : i32
    %c0_i32_1 = arith.constant 0 : i32
    return %c0_i32, %c0_i32_0 : i32, i32
  }
  func.func @transform_14(%arg0: i32) -> (i32, i32) {
    %c0_i32 = arith.constant 0 : i32
    %c0_i32_0 = arith.constant 0 : i32
    return %arg0, %c0_i32 : i32, i32
  }
}

</mosaic_0001>

<llo_original>
// kernel: tpu_custom_call.1
$region0: #{tpu_custom_call.1}
  #allocation0 [shape = 'u32[]', space=smem, size = 0x4, offset = 0x4, fixed_abs, tag = 'smem constant byte address 0x4 - core index']
  #allocation1 [shape = 'u32[72,128]{1,0:T(1,128)}', space=vmem, size = 0x9000, scoped, tag = 'internal scratch']
  %s0 = inlined_call_operand.vmem [shape: f32[608,2], index: 0, kind: input, shape index: {}]
  %s1 = inlined_call_operand.vmem [shape: f32[2,128], index: 1, kind: input, shape index: {}]
  %s2 = inlined_call_operand.vmem [shape: f32[1,128], index: 2, kind: input, shape index: {}]
  %s3 = inlined_call_operand.vmem [shape: f32[128,64], index: 3, kind: input, shape index: {}]
  %s4 = inlined_call_operand.vmem [shape: f32[1,64], index: 4, kind: input, shape index: {}]
  %s5 = inlined_call_operand.vmem [shape: f32[64,32], index: 5, kind: input, shape index: {}]
  %s6 = inlined_call_operand.vmem [shape: f32[1,32], index: 6, kind: input, shape index: {}]
  %s7 = inlined_call_operand.vmem [shape: f32[32,16], index: 7, kind: input, shape index: {}]
  %s8 = inlined_call_operand.vmem [shape: f32[1,16], index: 8, kind: input, shape index: {}]
  %s9 = inlined_call_operand.vmem [shape: f32[16,8], index: 9, kind: input, shape index: {}]
  %s10 = inlined_call_operand.vmem [shape: f32[1,8], index: 10, kind: input, shape index: {}]
  %s11 = inlined_call_operand.vmem [shape: f32[1,8], index: 11, kind: input, shape index: {}]
  %s12 = inlined_call_operand.vmem [shape: f32[1,8], index: 12, kind: input, shape index: {}]
  %s13 = inlined_call_operand.vmem [shape: f32[1,8], index: 13, kind: input, shape index: {}]
  %s14 = inlined_call_operand.vmem [shape: f32[608,8], index: 14, kind: output, shape index: {}]
  %s15 = sld [smem:[#allocation0]]
  $region89: #{tpu_custom_call.1} parent=0
    _
  %s17 = ssub.s32 1, %s15
  %s18 = scalar_select 0, %s17, %s15
  loop: start=0, step=1, limit=4
  $region2: #{tpu_custom_call.1} parent=0 // loop_pre_header
    _
  $region3: #{tpu_custom_call.1} parent=0 // loop_header
    %s20 = sphi 0, %s24
    %p21 = scmp.ge.s32.totalorder %s20, 4
    %s30 = sphi 0, %s32
    %s33 = sphi 0, %s30
    %s34 = sphi 0, %s33
    %s50 = sphi 0, %s34
    %s54 = sphi 0, %s54
    %s56 = sphi 0, %s54
    %s57 = sphi 0, %s56
    %s71 = sphi 0, %s57
    %s75 = sphi 0, %s75
    %s77 = sphi 0, %s75
    %s78 = sphi 0, %s77
    %s92 = sphi 0, %s78
    %s96 = sphi 0, %s96
    %s98 = sphi 0, %s96
    %s99 = sphi 0, %s98
    %s113 = sphi 0, %s99
    %s117 = sphi 0, %s117
    %s119 = sphi 0, %s117
    %s120 = sphi 0, %s119
    %s134 = sphi 0, %s120
    %s138 = sphi 0, %s138
    %s140 = sphi 0, %s138
    %s141 = sphi 0, %s140
    %s155 = sphi 0, %s141
    %s159 = sphi 0, %s159
    %s161 = sphi 0, %s159
    %s162 = sphi 0, %s161
    %s176 = sphi 0, %s162
    %s180 = sphi 0, %s180
    %s182 = sphi 0, %s180
    %s183 = sphi 0, %s182
    %s197 = sphi 0, %s183
    %s201 = sphi 0, %s201
    %s203 = sphi 0, %s201
    %s204 = sphi 0, %s203
    %s218 = sphi 0, %s204
    %s222 = sphi 0, %s222
    %s224 = sphi 0, %s222
    %s225 = sphi 0, %s224
    %s239 = sphi 0, %s225
    %s243 = sphi 0, %s243
    %s245 = sphi 0, %s243
    %s246 = sphi 0, %s245
    %s260 = sphi 0, %s246
    %s264 = sphi 0, %s264
    %s266 = sphi 0, %s264
    %s267 = sphi 0, %s266
    %s281 = sphi 0, %s267
    %s285 = sphi 0, %s285
    %s287 = sphi 0, %s285
    %s288 = sphi 0, %s287
    %s302 = sphi 0, %s288
    %s306 = sphi 0, %s306
    %s308 = sphi 0, %s306
    %s309 = sphi 0, %s308
    %s323 = sphi 0, %s309
    %s329 = sphi 0, %s331
    %s332 = sphi 0, %s329
    %s333 = sphi 0, %s332
    %s349 = sphi 0, %s333
  $region4: #{tpu_custom_call.1} parent=0 // loop_header_branch
    %23 = sbr.rel (%p21) target = $region8
  $region5: #{tpu_custom_call.1} parent=0 // loop_body
    %s25 = ssub.s32 %s20, 1
    %s26 = ssub.s32 %s20, 2
    %s27 = sadd.s32 %s20, 1
    %s28 = ssub.s32 %s20, %s27
    %p29 = scmp.eq.s32.totalorder %s28, 0
    %s31 = sadd.s32 %s30, 1
    %s32 = scalar_select %p29, %s30, %s31
    %p35 = pneg %p29
    %p36 = scmp.eq.s32.totalorder %s20, 1
    %p37 = por %p35, %p36
    %p38 = scmp.ne.s32.totalorder %s30, %s33
    %p39 = scmp.eq.s32.totalorder %s20, 0
    %p40 = por %p38, %p39
    %p41 = scmp.ne.s32.totalorder %s30, %s33
    %p42 = scmp.eq.s32.totalorder %s25, 1
    %p43 = por %p41, %p42
    %p44 = scmp.ne.s32.totalorder %s33, %s34
    %p45 = scmp.eq.s32.totalorder %s25, 0
    %p46 = por %p44, %p45
    %p47 = scmp.ne.s32.totalorder %s33, %s34
    %p48 = scmp.eq.s32.totalorder %s26, 1
    %p49 = por %p47, %p48
    %p51 = scmp.ne.s32.totalorder %s34, %s50
    %p52 = scmp.eq.s32.totalorder %s26, 0
    %p53 = por %p51, %p52
    %s55 = sadd.s32 %s54, 1
    %p58 = scmp.eq.s32.totalorder %s20, 1
    %p59 = scmp.ne.s32.totalorder %s54, %s56
    %p60 = scmp.eq.s32.totalorder %s20, 0
    %p61 = por %p59, %p60
    %p62 = scmp.ne.s32.totalorder %s54, %s56
    %p63 = scmp.eq.s32.totalorder %s25, 1
    %p64 = por %p62, %p63
    %p65 = scmp.ne.s32.totalorder %s56, %s57
    %p66 = scmp.eq.s32.totalorder %s25, 0
    %p67 = por %p65, %p66
    %p68 = scmp.ne.s32.totalorder %s56, %s57
    %p69 = scmp.eq.s32.totalorder %s26, 1
    %p70 = por %p68, %p69
    %p72 = scmp.ne.s32.totalorder %s57, %s71
    %p73 = scmp.eq.s32.totalorder %s26, 0
    %p74 = por %p72, %p73
    %s76 = sadd.s32 %s75, 1
    %p79 = scmp.eq.s32.totalorder %s20, 1
    %p80 = scmp.ne.s32.totalorder %s75, %s77
    %p81 = scmp.eq.s32.totalorder %s20, 0
    %p82 = por %p80, %p81
    %p83 = scmp.ne.s32.totalorder %s75, %s77
    %p84 = scmp.eq.s32.totalorder %s25, 1
    %p85 = por %p83, %p84
    %p86 = scmp.ne.s32.totalorder %s77, %s78
    %p87 = scmp.eq.s32.totalorder %s25, 0
    %p88 = por %p86, %p87
    %p89 = scmp.ne.s32.totalorder %s77, %s78
    %p90 = scmp.eq.s32.totalorder %s26, 1
    %p91 = por %p89, %p90
    %p93 = scmp.ne.s32.totalorder %s78, %s92
    %p94 = scmp.eq.s32.totalorder %s26, 0
    %p95 = por %p93, %p94
    %s97 = sadd.s32 %s96, 1
    %p100 = scmp.eq.s32.totalorder %s20, 1
    %p101 = scmp.ne.s32.totalorder %s96, %s98
    %p102 = scmp.eq.s32.totalorder %s20, 0
    %p103 = por %p101, %p102
    %p104 = scmp.ne.s32.totalorder %s96, %s98
    %p105 = scmp.eq.s32.totalorder %s25, 1
    %p106 = por %p104, %p105
    %p107 = scmp.ne.s32.totalorder %s98, %s99
    %p108 = scmp.eq.s32.totalorder %s25, 0
    %p109 = por %p107, %p108
    %p110 = scmp.ne.s32.totalorder %s98, %s99
    %p111 = scmp.eq.s32.totalorder %s26, 1
    %p112 = por %p110, %p111
    %p114 = scmp.ne.s32.totalorder %s99, %s113
    %p115 = scmp.eq.s32.totalorder %s26, 0
    %p116 = por %p114, %p115
    %s118 = sadd.s32 %s117, 1
    %p121 = scmp.eq.s32.totalorder %s20, 1
    %p122 = scmp.ne.s32.totalorder %s117, %s119
    %p123 = scmp.eq.s32.totalorder %s20, 0
    %p124 = por %p122, %p123
    %p125 = scmp.ne.s32.totalorder %s117, %s119
    %p126 = scmp.eq.s32.totalorder %s25, 1
    %p127 = por %p125, %p126
    %p128 = scmp.ne.s32.totalorder %s119, %s120
    %p129 = scmp.eq.s32.totalorder %s25, 0
    %p130 = por %p128, %p129
    %p131 = scmp.ne.s32.totalorder %s119, %s120
    %p132 = scmp.eq.s32.totalorder %s26, 1
    %p133 = por %p131, %p132
    %p135 = scmp.ne.s32.totalorder %s120, %s134
    %p136 = scmp.eq.s32.totalorder %s26, 0
    %p137 = por %p135, %p136
    %s139 = sadd.s32 %s138, 1
    %p142 = scmp.eq.s32.totalorder %s20, 1
    %p143 = scmp.ne.s32.totalorder %s138, %s140
    %p144 = scmp.eq.s32.totalorder %s20, 0
    %p145 = por %p143, %p144
    %p146 = scmp.ne.s32.totalorder %s138, %s140
    %p147 = scmp.eq.s32.totalorder %s25, 1
    %p148 = por %p146, %p147
    %p149 = scmp.ne.s32.totalorder %s140, %s141
    %p150 = scmp.eq.s32.totalorder %s25, 0
    %p151 = por %p149, %p150
    %p152 = scmp.ne.s32.totalorder %s140, %s141
    %p153 = scmp.eq.s32.totalorder %s26, 1
    %p154 = por %p152, %p153
    %p156 = scmp.ne.s32.totalorder %s141, %s155
    %p157 = scmp.eq.s32.totalorder %s26, 0
    %p158 = por %p156, %p157
    %s160 = sadd.s32 %s159, 1
    %p163 = scmp.eq.s32.totalorder %s20, 1
    %p164 = scmp.ne.s32.totalorder %s159, %s161
    %p165 = scmp.eq.s32.totalorder %s20, 0
    %p166 = por %p164, %p165
    %p167 = scmp.ne.s32.totalorder %s159, %s161
    %p168 = scmp.eq.s32.totalorder %s25, 1
    %p169 = por %p167, %p168
    %p170 = scmp.ne.s32.totalorder %s161, %s162
    %p171 = scmp.eq.s32.totalorder %s25, 0
    %p172 = por %p170, %p171
    %p173 = scmp.ne.s32.totalorder %s161, %s162
    %p174 = scmp.eq.s32.totalorder %s26, 1
    %p175 = por %p173, %p174
    %p177 = scmp.ne.s32.totalorder %s162, %s176
    %p178 = scmp.eq.s32.totalorder %s26, 0
    %p179 = por %p177, %p178
    %s181 = sadd.s32 %s180, 1
    %p184 = scmp.eq.s32.totalorder %s20, 1
    %p185 = scmp.ne.s32.totalorder %s180, %s182
    %p186 = scmp.eq.s32.totalorder %s20, 0
    %p187 = por %p185, %p186
    %p188 = scmp.ne.s32.totalorder %s180, %s182
    %p189 = scmp.eq.s32.totalorder %s25, 1
    %p190 = por %p188, %p189
    %p191 = scmp.ne.s32.totalorder %s182, %s183
    %p192 = scmp.eq.s32.totalorder %s25, 0
    %p193 = por %p191, %p192
    %p194 = scmp.ne.s32.totalorder %s182, %s183
    %p195 = scmp.eq.s32.totalorder %s26, 1
    %p196 = por %p194, %p195
    %p198 = scmp.ne.s32.totalorder %s183, %s197
    %p199 = scmp.eq.s32.totalorder %s26, 0
    %p200 = por %p198, %p199
    %s202 = sadd.s32 %s201, 1
    %p205 = scmp.eq.s32.totalorder %s20, 1
    %p206 = scmp.ne.s32.totalorder %s201, %s203
    %p207 = scmp.eq.s32.totalorder %s20, 0
    %p208 = por %p206, %p207
    %p209 = scmp.ne.s32.totalorder %s201, %s203
    %p210 = scmp.eq.s32.totalorder %s25, 1
    %p211 = por %p209, %p210
    %p212 = scmp.ne.s32.totalorder %s203, %s204
    %p213 = scmp.eq.s32.totalorder %s25, 0
    %p214 = por %p212, %p213
    %p215 = scmp.ne.s32.totalorder %s203, %s204
    %p216 = scmp.eq.s32.totalorder %s26, 1
    %p217 = por %p215, %p216
    %p219 = scmp.ne.s32.totalorder %s204, %s218
    %p220 = scmp.eq.s32.totalorder %s26, 0
    %p221 = por %p219, %p220
    %s223 = sadd.s32 %s222, 1
    %p226 = scmp.eq.s32.totalorder %s20, 1
    %p227 = scmp.ne.s32.totalorder %s222, %s224
    %p228 = scmp.eq.s32.totalorder %s20, 0
    %p229 = por %p227, %p228
    %p230 = scmp.ne.s32.totalorder %s222, %s224
    %p231 = scmp.eq.s32.totalorder %s25, 1
    %p232 = por %p230, %p231
    %p233 = scmp.ne.s32.totalorder %s224, %s225
    %p234 = scmp.eq.s32.totalorder %s25, 0
    %p235 = por %p233, %p234
    %p236 = scmp.ne.s32.totalorder %s224, %s225
    %p237 = scmp.eq.s32.totalorder %s26, 1
    %p238 = por %p236, %p237
    %p240 = scmp.ne.s32.totalorder %s225, %s239
    %p241 = scmp.eq.s32.totalorder %s26, 0
    %p242 = por %p240, %p241
    %s244 = sadd.s32 %s243, 1
    %p247 = scmp.eq.s32.totalorder %s20, 1
    %p248 = scmp.ne.s32.totalorder %s243, %s245
    %p249 = scmp.eq.s32.totalorder %s20, 0
    %p250 = por %p248, %p249
    %p251 = scmp.ne.s32.totalorder %s243, %s245
    %p252 = scmp.eq.s32.totalorder %s25, 1
    %p253 = por %p251, %p252
    %p254 = scmp.ne.s32.totalorder %s245, %s246
    %p255 = scmp.eq.s32.totalorder %s25, 0
    %p256 = por %p254, %p255
    %p257 = scmp.ne.s32.totalorder %s245, %s246
    %p258 = scmp.eq.s32.totalorder %s26, 1
    %p259 = por %p257, %p258
    %p261 = scmp.ne.s32.totalorder %s246, %s260
    %p262 = scmp.eq.s32.totalorder %s26, 0
    %p263 = por %p261, %p262
    %s265 = sadd.s32 %s264, 1
    %p268 = scmp.eq.s32.totalorder %s20, 1
    %p269 = scmp.ne.s32.totalorder %s264, %s266
    %p270 = scmp.eq.s32.totalorder %s20, 0
    %p271 = por %p269, %p270
    %p272 = scmp.ne.s32.totalorder %s264, %s266
    %p273 = scmp.eq.s32.totalorder %s25, 1
    %p274 = por %p272, %p273
    %p275 = scmp.ne.s32.totalorder %s266, %s267
    %p276 = scmp.eq.s32.totalorder %s25, 0
    %p277 = por %p275, %p276
    %p278 = scmp.ne.s32.totalorder %s266, %s267
    %p279 = scmp.eq.s32.totalorder %s26, 1
    %p280 = por %p278, %p279
    %p282 = scmp.ne.s32.totalorder %s267, %s281
    %p283 = scmp.eq.s32.totalorder %s26, 0
    %p284 = por %p282, %p283
    %s286 = sadd.s32 %s285, 1
    %p289 = scmp.eq.s32.totalorder %s20, 1
    %p290 = scmp.ne.s32.totalorder %s285, %s287
    %p291 = scmp.eq.s32.totalorder %s20, 0
    %p292 = por %p290, %p291
    %p293 = scmp.ne.s32.totalorder %s285, %s287
    %p294 = scmp.eq.s32.totalorder %s25, 1
    %p295 = por %p293, %p294
    %p296 = scmp.ne.s32.totalorder %s287, %s288
    %p297 = scmp.eq.s32.totalorder %s25, 0
    %p298 = por %p296, %p297
    %p299 = scmp.ne.s32.totalorder %s287, %s288
    %p300 = scmp.eq.s32.totalorder %s26, 1
    %p301 = por %p299, %p300
    %p303 = scmp.ne.s32.totalorder %s288, %s302
    %p304 = scmp.eq.s32.totalorder %s26, 0
    %p305 = por %p303, %p304
    %s307 = sadd.s32 %s306, 1
    %p310 = scmp.eq.s32.totalorder %s20, 1
    %p311 = scmp.ne.s32.totalorder %s306, %s308
    %p312 = scmp.eq.s32.totalorder %s20, 0
    %p313 = por %p311, %p312
    %p314 = scmp.ne.s32.totalorder %s306, %s308
    %p315 = scmp.eq.s32.totalorder %s25, 1
    %p316 = por %p314, %p315
    %p317 = scmp.ne.s32.totalorder %s308, %s309
    %p318 = scmp.eq.s32.totalorder %s25, 0
    %p319 = por %p317, %p318
    %p320 = scmp.ne.s32.totalorder %s308, %s309
    %p321 = scmp.eq.s32.totalorder %s26, 1
    %p322 = por %p320, %p321
    %p324 = scmp.ne.s32.totalorder %s309, %s323
    %p325 = scmp.eq.s32.totalorder %s26, 0
    %p326 = por %p324, %p325
    %s327 = ssub.s32 %s20, %s27
    %p328 = scmp.eq.s32.totalorder %s327, 0
    %s330 = sadd.s32 %s329, 1
    %s331 = scalar_select %p328, %s329, %s330
    %p334 = pneg %p328
    %p335 = scmp.eq.s32.totalorder %s20, 1
    %p336 = por %p334, %p335
    %p337 = scmp.ne.s32.totalorder %s329, %s332
    %p338 = scmp.eq.s32.totalorder %s20, 0
    %p339 = por %p337, %p338
    %p340 = scmp.ne.s32.totalorder %s329, %s332
    %p341 = scmp.eq.s32.totalorder %s25, 1
    %p342 = por %p340, %p341
    %p343 = scmp.ne.s32.totalorder %s332, %s333
    %p344 = scmp.eq.s32.totalorder %s25, 0
    %p345 = por %p343, %p344
    %p346 = scmp.ne.s32.totalorder %s332, %s333
    %p347 = scmp.eq.s32.totalorder %s26, 1
    %p348 = por %p346, %p347
    %p350 = scmp.ne.s32.totalorder %s333, %s349
    %p351 = scmp.eq.s32.totalorder %s26, 0
    %p352 = por %p350, %p351
    %p353 = scmp.le.s32.totalorder 1, %s20
    %p354 = scmp.lt.s32.totalorder %s20, 3
    %p355 = pnand %p353, %p354
    %p356 = pneg %p355
    // Predicated region
    $region9: #{tpu_custom_call.1} parent=5 // pred_check
      _
    $region10: #{tpu_custom_call.1} parent=5 // pred_check_branch
      %358 = sbr.rel (%p355) target = $region12
    $region11: #{tpu_custom_call.1} parent=5 // pred_region
      %s359 = ssub.s32 %s20, 1
      // Predicated region
      $region13: #{tpu_custom_call.1} parent=11 // pred_check
        %p360 = pneg %p67
      $region14: #{tpu_custom_call.1} parent=11 // pred_check_branch
        %362 = sbr.rel (%p360) target = $region16
      $region15: #{tpu_custom_call.1} parent=11 // pred_region
        _
      $region16: #{tpu_custom_call.1} parent=11 // pred_fallthru
        _
      // Predicated region
      $region17: #{tpu_custom_call.1} parent=11 // pred_check
        %p363 = pneg %p88
      $region18: #{tpu_custom_call.1} parent=11 // pred_check_branch
        %365 = sbr.rel (%p363) target = $region20
      $region19: #{tpu_custom_call.1} parent=11 // pred_region
        _
      $region20: #{tpu_custom_call.1} parent=11 // pred_fallthru
        _
      // Predicated region
      $region21: #{tpu_custom_call.1} parent=11 // pred_check
        %p366 = pneg %p109
      $region22: #{tpu_custom_call.1} parent=11 // pred_check_branch
        %368 = sbr.rel (%p366) target = $region24
      $region23: #{tpu_custom_call.1} parent=11 // pred_region
        _
      $region24: #{tpu_custom_call.1} parent=11 // pred_fallthru
        _
      // Predicated region
      $region25: #{tpu_custom_call.1} parent=11 // pred_check
        %p369 = pneg %p130
      $region26: #{tpu_custom_call.1} parent=11 // pred_check_branch
        %371 = sbr.rel (%p369) target = $region28
      $region27: #{tpu_custom_call.1} parent=11 // pred_region
        _
      $region28: #{tpu_custom_call.1} parent=11 // pred_fallthru
        _
      // Predicated region
      $region29: #{tpu_custom_call.1} parent=11 // pred_check
        %p372 = pneg %p151
      $region30: #{tpu_custom_call.1} parent=11 // pred_check_branch
        %374 = sbr.rel (%p372) target = $region32
      $region31: #{tpu_custom_call.1} parent=11 // pred_region
        _
      $region32: #{tpu_custom_call.1} parent=11 // pred_fallthru
        _
      // Predicated region
      $region33: #{tpu_custom_call.1} parent=11 // pred_check
        %p375 = pneg %p172
      $region34: #{tpu_custom_call.1} parent=11 // pred_check_branch
        %377 = sbr.rel (%p375) target = $region36
      $region35: #{tpu_custom_call.1} parent=11 // pred_region
        _
      $region36: #{tpu_custom_call.1} parent=11 // pred_fallthru
        _
      // Predicated region
      $region37: #{tpu_custom_call.1} parent=11 // pred_check
        %p378 = pneg %p193
      $region38: #{tpu_custom_call.1} parent=11 // pred_check_branch
        %380 = sbr.rel (%p378) target = $region40
      $region39: #{tpu_custom_call.1} parent=11 // pred_region
        _
      $region40: #{tpu_custom_call.1} parent=11 // pred_fallthru
        _
      // Predicated region
      $region41: #{tpu_custom_call.1} parent=11 // pred_check
        %p381 = pneg %p214
      $region42: #{tpu_custom_call.1} parent=11 // pred_check_branch
        %383 = sbr.rel (%p381) target = $region44
      $region43: #{tpu_custom_call.1} parent=11 // pred_region
        _
      $region44: #{tpu_custom_call.1} parent=11 // pred_fallthru
        _
      // Predicated region
      $region45: #{tpu_custom_call.1} parent=11 // pred_check
        %p384 = pneg %p235
      $region46: #{tpu_custom_call.1} parent=11 // pred_check_branch
        %386 = sbr.rel (%p384) target = $region48
      $region47: #{tpu_custom_call.1} parent=11 // pred_region
        _
      $region48: #{tpu_custom_call.1} parent=11 // pred_fallthru
        _
      // Predicated region
      $region49: #{tpu_custom_call.1} parent=11 // pred_check
        %p387 = pneg %p256
      $region50: #{tpu_custom_call.1} parent=11 // pred_check_branch
        %389 = sbr.rel (%p387) target = $region52
      $region51: #{tpu_custom_call.1} parent=11 // pred_region
        _
      $region52: #{tpu_custom_call.1} parent=11 // pred_fallthru
        _
      // Predicated region
      $region53: #{tpu_custom_call.1} parent=11 // pred_check
        %p390 = pneg %p277
      $region54: #{tpu_custom_call.1} parent=11 // pred_check_branch
        %392 = sbr.rel (%p390) target = $region56
      $region55: #{tpu_custom_call.1} parent=11 // pred_region
        _
      $region56: #{tpu_custom_call.1} parent=11 // pred_fallthru
        _
      // Predicated region
      $region57: #{tpu_custom_call.1} parent=11 // pred_check
        %p393 = pneg %p298
      $region58: #{tpu_custom_call.1} parent=11 // pred_check_branch
        %395 = sbr.rel (%p393) target = $region60
      $region59: #{tpu_custom_call.1} parent=11 // pred_region
        _
      $region60: #{tpu_custom_call.1} parent=11 // pred_fallthru
        _
      // Predicated region
      $region61: #{tpu_custom_call.1} parent=11 // pred_check
        %p396 = pneg %p319
      $region62: #{tpu_custom_call.1} parent=11 // pred_check_branch
        %398 = sbr.rel (%p396) target = $region64
      $region63: #{tpu_custom_call.1} parent=11 // pred_region
        _
      $region64: #{tpu_custom_call.1} parent=11 // pred_fallthru
        _
    $region12: #{tpu_custom_call.1} parent=5 // pred_fallthru
      _
    %p399 = scmp.lt.s32.totalorder %s20, 2
    // Predicated region
    $region65: #{tpu_custom_call.1} parent=5 // pred_check
      %p400 = pneg %p399
    $region66: #{tpu_custom_call.1} parent=5 // pred_check_branch
      %402 = sbr.rel (%p400) target = $region68
    $region67: #{tpu_custom_call.1} parent=5 // pred_region
      // Predicated region
      $region69: #{tpu_custom_call.1} parent=67 // pred_check
        %p403 = pneg %p40
      $region70: #{tpu_custom_call.1} parent=67 // pred_check_branch
        %405 = sbr.rel (%p403) target = $region72
      $region71: #{tpu_custom_call.1} parent=67 // pred_region
        %s406 = smul.u32 38, %s20
        %p407 = scmp.lt.s32.totalorder %s406, 75
        %s408 = scalar_select %p407, %s406, 75
        %s409 = smul.addr %s408, 8
        %s410 = scalar_lea.vmem %s0, %s409
        %s411 = smul.u32 38, %s20
      $region72: #{tpu_custom_call.1} parent=67 // pred_fallthru
        _
    $region68: #{tpu_custom_call.1} parent=5 // pred_fallthru
      _
    %p412 = scmp.le.s32.totalorder 1, %s20
    %p413 = scmp.lt.s32.totalorder %s20, 3
    %p414 = pnand %p412, %p413
    %p415 = pneg %p414
    // Predicated region
    $region73: #{tpu_custom_call.1} parent=5 // pred_check
      _
    $region74: #{tpu_custom_call.1} parent=5 // pred_check_branch
      %417 = sbr.rel (%p414) target = $region76
    $region75: #{tpu_custom_call.1} parent=5 // pred_region
      %s418 = ssub.s32 %s20, 1
      %s419 = smul.u32 38, %s25
      %p420 = scmp.lt.s32.totalorder %s419, 75
      %s421 = scalar_select %p420, %s419, 75
      %s422 = smul.addr %s421, 8
      %s423 = scalar_lea.vmem %s0, %s422
      %p424 = pneg %p46
      %p425 = pneg %p43
      %p426 = pneg %p67
      %p427 = pneg %p64
      %p428 = pneg %p88
      %p429 = pneg %p85
      %p430 = pneg %p109
      %p431 = pneg %p106
      %p432 = pneg %p130
      %p433 = pneg %p127
      %p434 = pneg %p151
      %p435 = pneg %p148
      %p436 = pneg %p172
      %p437 = pneg %p169
      %p438 = pneg %p193
      %p439 = pneg %p190
      %p440 = pneg %p214
      %p441 = pneg %p211
      %p442 = pneg %p235
      %p443 = pneg %p232
      %p444 = pneg %p256
      %p445 = pneg %p253
      %p446 = pneg %p277
      %p447 = pneg %p274
      %p448 = pneg %p298
      %p449 = pneg %p295
      %p450 = pneg %p319
      %p451 = pneg %p316
      %p452 = pneg %p345
      %p453 = pneg %p342
      %s454 = smul.u32 38, %s25
      %p455 = scmp.lt.s32.totalorder %s454, 75
      %s456 = scalar_select %p455, %s454, 75
      %s457 = smul.addr %s456, 8
      %s458 = scalar_lea.vmem %s14, %s457
      %s459 = smul.u32 38, %s25
      %p460 = scmp.lt.s32.totalorder %s459, 75
      %s461 = scalar_select %p460, %s459, 75
      %s462 = smul.addr %s461, 8
      %s463 = scalar_lea.vmem %s0, %s462
      %s464 = smul.u32 38, %s25
      %s465 = smul.u32 38, %s25
      %p466 = scmp.lt.s32.totalorder %s465, 75
      %s467 = scalar_select %p466, %s465, 75
      %s468 = smul.addr %s467, 8
      %s469 = scalar_lea.vmem %s14, %s468
      %s470 = smul.u32 38, %s25
      %v471 = vld [vmem:[%s463] sm:$0xff]
      %v472 = vld [vmem:[%s463 + $0x8] sm:$0xff]
      %v473 = vld [vmem:[%s463 + $0x10] sm:$0xff]
      %v474 = vld [vmem:[%s463 + $0x18] sm:$0xff]
      %v475 = vld [vmem:[%s463 + $0x20] sm:$0xff]
      %v476 = vld [vmem:[%s463 + $0x28] sm:$0xff]
      %v477 = vld [vmem:[%s463 + $0x30] sm:$0xff]
      %v478 = vld [vmem:[%s463 + $0x38] sm:$0xff]
      %v479 = vld [vmem:[%s463 + $0x40] sm:$0xff]
      %v480 = vld [vmem:[%s463 + $0x48] sm:$0xff]
      %v481 = vld [vmem:[%s463 + $0x50] sm:$0xff]
      %v482 = vld [vmem:[%s463 + $0x58] sm:$0xff]
      %v483 = vld [vmem:[%s463 + $0x60] sm:$0xff]
      %v484 = vld [vmem:[%s463 + $0x68] sm:$0xff]
      %v485 = vld [vmem:[%s463 + $0x70] sm:$0xff]
      %v486 = vld [vmem:[%s463 + $0x78] sm:$0xff]
      %v487 = vld [vmem:[%s463 + $0x80] sm:$0xff]
      %v488 = vld [vmem:[%s463 + $0x88] sm:$0xff]
      %v489 = vld [vmem:[%s463 + $0x90] sm:$0xff]
      %v490 = vld [vmem:[%s463 + $0x98] sm:$0xff]
      %v491 = vld [vmem:[%s463 + $0xa0] sm:$0xff]
      %v492 = vld [vmem:[%s463 + $0xa8] sm:$0xff]
      %v493 = vld [vmem:[%s463 + $0xb0] sm:$0xff]
      %v494 = vld [vmem:[%s463 + $0xb8] sm:$0xff]
      %v495 = vld [vmem:[%s463 + $0xc0] sm:$0xff]
      %v496 = vld [vmem:[%s463 + $0xc8] sm:$0xff]
      %v497 = vld [vmem:[%s463 + $0xd0] sm:$0xff]
      %v498 = vld [vmem:[%s463 + $0xd8] sm:$0xff]
      %v499 = vld [vmem:[%s463 + $0xe0] sm:$0xff]
      %v500 = vld [vmem:[%s463 + $0xe8] sm:$0xff]
      %v501 = vld [vmem:[%s463 + $0xf0] sm:$0xff]
      %v502 = vld [vmem:[%s463 + $0xf8] sm:$0xff]
      %v503 = vld [vmem:[%s463 + $0x100] sm:$0xff]
      %v504 = vld [vmem:[%s463 + $0x108] sm:$0xff]
      %v505 = vld [vmem:[%s463 + $0x110] sm:$0xff]
      %v506 = vld [vmem:[%s463 + $0x118] sm:$0xff]
      %v507 = vld [vmem:[%s463 + $0x120] sm:$0xff]
      %v508 = vld [vmem:[%s463 + $0x128] sm:$0xff]
      %v509 = vld [vmem:[%s1] sm:$0x3]
      %511 = vset.pattern.permute.xlu0 0
      %512 = vperm.xlu0 %511, %v471
      %v513 = vpop.permute.xlu0 %512
      %516 = vset.pattern.permute.xlu0 0
      %517 = vperm.xlu0 %516, %v472
      %v518 = vpop.permute.xlu0 %517
      %521 = vset.pattern.permute.xlu0 0
      %522 = vperm.xlu0 %521, %v473
      %v523 = vpop.permute.xlu0 %522
      %526 = vset.pattern.permute.xlu0 0
      %527 = vperm.xlu0 %526, %v474
      %v528 = vpop.permute.xlu0 %527
      %531 = vset.pattern.permute.xlu0 0
      %532 = vperm.xlu0 %531, %v475
      %v533 = vpop.permute.xlu0 %532
      %536 = vset.pattern.permute.xlu0 0
      %537 = vperm.xlu0 %536, %v476
      %v538 = vpop.permute.xlu0 %537
      %541 = vset.pattern.permute.xlu0 0
      %542 = vperm.xlu0 %541, %v477
      %v543 = vpop.permute.xlu0 %542
      %546 = vset.pattern.permute.xlu0 0
      %547 = vperm.xlu0 %546, %v478
      %v548 = vpop.permute.xlu0 %547
      %551 = vset.pattern.permute.xlu0 0
      %552 = vperm.xlu0 %551, %v479
      %v553 = vpop.permute.xlu0 %552
      %556 = vset.pattern.permute.xlu0 0
      %557 = vperm.xlu0 %556, %v480
      %v558 = vpop.permute.xlu0 %557
      %561 = vset.pattern.permute.xlu0 0
      %562 = vperm.xlu0 %561, %v481
      %v563 = vpop.permute.xlu0 %562
      %566 = vset.pattern.permute.xlu0 0
      %567 = vperm.xlu0 %566, %v482
      %v568 = vpop.permute.xlu0 %567
      %571 = vset.pattern.permute.xlu0 0
      %572 = vperm.xlu0 %571, %v483
      %v573 = vpop.permute.xlu0 %572
      %576 = vset.pattern.permute.xlu0 0
      %577 = vperm.xlu0 %576, %v484
      %v578 = vpop.permute.xlu0 %577
      %581 = vset.pattern.permute.xlu0 0
      %582 = vperm.xlu0 %581, %v485
      %v583 = vpop.permute.xlu0 %582
      %586 = vset.pattern.permute.xlu0 0
      %587 = vperm.xlu0 %586, %v486
      %v588 = vpop.permute.xlu0 %587
      %591 = vset.pattern.permute.xlu0 0
      %592 = vperm.xlu0 %591, %v487
      %v593 = vpop.permute.xlu0 %592
      %596 = vset.pattern.permute.xlu0 0
      %597 = vperm.xlu0 %596, %v488
      %v598 = vpop.permute.xlu0 %597
      %601 = vset.pattern.permute.xlu0 0
      %602 = vperm.xlu0 %601, %v489
      %v603 = vpop.permute.xlu0 %602
      %606 = vset.pattern.permute.xlu0 0
      %607 = vperm.xlu0 %606, %v490
      %v608 = vpop.permute.xlu0 %607
      %611 = vset.pattern.permute.xlu0 0
      %612 = vperm.xlu0 %611, %v491
      %v613 = vpop.permute.xlu0 %612
      %616 = vset.pattern.permute.xlu0 0
      %617 = vperm.xlu0 %616, %v492
      %v618 = vpop.permute.xlu0 %617
      %621 = vset.pattern.permute.xlu0 0
      %622 = vperm.xlu0 %621, %v493
      %v623 = vpop.permute.xlu0 %622
      %626 = vset.pattern.permute.xlu0 0
      %627 = vperm.xlu0 %626, %v494
      %v628 = vpop.permute.xlu0 %627
      %631 = vset.pattern.permute.xlu0 0
      %632 = vperm.xlu0 %631, %v495
      %v633 = vpop.permute.xlu0 %632
      %636 = vset.pattern.permute.xlu0 0
      %637 = vperm.xlu0 %636, %v496
      %v638 = vpop.permute.xlu0 %637
      %641 = vset.pattern.permute.xlu0 0
      %642 = vperm.xlu0 %641, %v497
      %v643 = vpop.permute.xlu0 %642
      %646 = vset.pattern.permute.xlu0 0
      %647 = vperm.xlu0 %646, %v498
      %v648 = vpop.permute.xlu0 %647
      %651 = vset.pattern.permute.xlu0 0
      %652 = vperm.xlu0 %651, %v499
      %v653 = vpop.permute.xlu0 %652
      %656 = vset.pattern.permute.xlu0 0
      %657 = vperm.xlu0 %656, %v500
      %v658 = vpop.permute.xlu0 %657
      %661 = vset.pattern.permute.xlu0 0
      %662 = vperm.xlu0 %661, %v501
      %v663 = vpop.permute.xlu0 %662
      %666 = vset.pattern.permute.xlu0 0
      %667 = vperm.xlu0 %666, %v502
      %v668 = vpop.permute.xlu0 %667
      %671 = vset.pattern.permute.xlu0 0
      %672 = vperm.xlu0 %671, %v503
      %v673 = vpop.permute.xlu0 %672
      %676 = vset.pattern.permute.xlu0 0
      %677 = vperm.xlu0 %676, %v504
      %v678 = vpop.permute.xlu0 %677
      %681 = vset.pattern.permute.xlu0 0
      %682 = vperm.xlu0 %681, %v505
      %v683 = vpop.permute.xlu0 %682
      %686 = vset.pattern.permute.xlu0 0
      %687 = vperm.xlu0 %686, %v506
      %v688 = vpop.permute.xlu0 %687
      %691 = vset.pattern.permute.xlu0 0
      %692 = vperm.xlu0 %691, %v507
      %v693 = vpop.permute.xlu0 %692
      %696 = vset.pattern.permute.xlu0 0
      %697 = vperm.xlu0 %696, %v508
      %v698 = vpop.permute.xlu0 %697
      %v700 = vperm.slane %v509, 0
      %v701 = vmul.f32 %v513, %v700
      %v702 = vmul.f32 %v518, %v700
      %v703 = vmul.f32 %v523, %v700
      %v704 = vmul.f32 %v528, %v700
      %v705 = vmul.f32 %v533, %v700
      %v706 = vmul.f32 %v538, %v700
      %v707 = vmul.f32 %v543, %v700
      %v708 = vmul.f32 %v548, %v700
      %v709 = vmul.f32 %v553, %v700
      %v710 = vmul.f32 %v558, %v700
      %v711 = vmul.f32 %v563, %v700
      %v712 = vmul.f32 %v568, %v700
      %v713 = vmul.f32 %v573, %v700
      %v714 = vmul.f32 %v578, %v700
      %v715 = vmul.f32 %v583, %v700
      %v716 = vmul.f32 %v588, %v700
      %v717 = vmul.f32 %v593, %v700
      %v718 = vmul.f32 %v598, %v700
      %v719 = vmul.f32 %v603, %v700
      %v720 = vmul.f32 %v608, %v700
      %v721 = vmul.f32 %v613, %v700
      %v722 = vmul.f32 %v618, %v700
      %v723 = vmul.f32 %v623, %v700
      %v724 = vmul.f32 %v628, %v700
      %v725 = vmul.f32 %v633, %v700
      %v726 = vmul.f32 %v638, %v700
      %v727 = vmul.f32 %v643, %v700
      %v728 = vmul.f32 %v648, %v700
      %v729 = vmul.f32 %v653, %v700
      %v730 = vmul.f32 %v658, %v700
      %v731 = vmul.f32 %v663, %v700
      %v732 = vmul.f32 %v668, %v700
      %v733 = vmul.f32 %v673, %v700
      %v734 = vmul.f32 %v678, %v700
      %v735 = vmul.f32 %v683, %v700
      %v736 = vmul.f32 %v688, %v700
      %v737 = vmul.f32 %v693, %v700
      %v738 = vmul.f32 %v698, %v700
      %739 = vset.pattern.permute.xlu0 1
      %740 = vperm.xlu0 %739, %v471
      %v741 = vpop.permute.xlu0 %740
      %743 = vset.pattern.permute.xlu0 1
      %744 = vperm.xlu0 %743, %v472
      %v745 = vpop.permute.xlu0 %744
      %747 = vset.pattern.permute.xlu0 1
      %748 = vperm.xlu0 %747, %v473
      %v749 = vpop.permute.xlu0 %748
      %751 = vset.pattern.permute.xlu0 1
      %752 = vperm.xlu0 %751, %v474
      %v753 = vpop.permute.xlu0 %752
      %755 = vset.pattern.permute.xlu0 1
      %756 = vperm.xlu0 %755, %v475
      %v757 = vpop.permute.xlu0 %756
      %759 = vset.pattern.permute.xlu0 1
      %760 = vperm.xlu0 %759, %v476
      %v761 = vpop.permute.xlu0 %760
      %763 = vset.pattern.permute.xlu0 1
      %764 = vperm.xlu0 %763, %v477
      %v765 = vpop.permute.xlu0 %764
      %767 = vset.pattern.permute.xlu0 1
      %768 = vperm.xlu0 %767, %v478
      %v769 = vpop.permute.xlu0 %768
      %771 = vset.pattern.permute.xlu0 1
      %772 = vperm.xlu0 %771, %v479
      %v773 = vpop.permute.xlu0 %772
      %775 = vset.pattern.permute.xlu0 1
      %776 = vperm.xlu0 %775, %v480
      %v777 = vpop.permute.xlu0 %776
      %779 = vset.pattern.permute.xlu0 1
      %780 = vperm.xlu0 %779, %v481
      %v781 = vpop.permute.xlu0 %780
      %783 = vset.pattern.permute.xlu0 1
      %784 = vperm.xlu0 %783, %v482
      %v785 = vpop.permute.xlu0 %784
      %787 = vset.pattern.permute.xlu0 1
      %788 = vperm.xlu0 %787, %v483
      %v789 = vpop.permute.xlu0 %788
      %791 = vset.pattern.permute.xlu0 1
      %792 = vperm.xlu0 %791, %v484
      %v793 = vpop.permute.xlu0 %792
      %795 = vset.pattern.permute.xlu0 1
      %796 = vperm.xlu0 %795, %v485
      %v797 = vpop.permute.xlu0 %796
      %799 = vset.pattern.permute.xlu0 1
      %800 = vperm.xlu0 %799, %v486
      %v801 = vpop.permute.xlu0 %800
      %803 = vset.pattern.permute.xlu0 1
      %804 = vperm.xlu0 %803, %v487
      %v805 = vpop.permute.xlu0 %804
      %807 = vset.pattern.permute.xlu0 1
      %808 = vperm.xlu0 %807, %v488
      %v809 = vpop.permute.xlu0 %808
      %811 = vset.pattern.permute.xlu0 1
      %812 = vperm.xlu0 %811, %v489
      %v813 = vpop.permute.xlu0 %812
      %815 = vset.pattern.permute.xlu0 1
      %816 = vperm.xlu0 %815, %v490
      %v817 = vpop.permute.xlu0 %816
      %819 = vset.pattern.permute.xlu0 1
      %820 = vperm.xlu0 %819, %v491
      %v821 = vpop.permute.xlu0 %820
      %823 = vset.pattern.permute.xlu0 1
      %824 = vperm.xlu0 %823, %v492
      %v825 = vpop.permute.xlu0 %824
      %827 = vset.pattern.permute.xlu0 1
      %828 = vperm.xlu0 %827, %v493
      %v829 = vpop.permute.xlu0 %828
      %831 = vset.pattern.permute.xlu0 1
      %832 = vperm.xlu0 %831, %v494
      %v833 = vpop.permute.xlu0 %832
      %835 = vset.pattern.permute.xlu0 1
      %836 = vperm.xlu0 %835, %v495
      %v837 = vpop.permute.xlu0 %836
      %839 = vset.pattern.permute.xlu0 1
      %840 = vperm.xlu0 %839, %v496
      %v841 = vpop.permute.xlu0 %840
      %843 = vset.pattern.permute.xlu0 1
      %844 = vperm.xlu0 %843, %v497
      %v845 = vpop.permute.xlu0 %844
      %847 = vset.pattern.permute.xlu0 1
      %848 = vperm.xlu0 %847, %v498
      %v849 = vpop.permute.xlu0 %848
      %851 = vset.pattern.permute.xlu0 1
      %852 = vperm.xlu0 %851, %v499
      %v853 = vpop.permute.xlu0 %852
      %855 = vset.pattern.permute.xlu0 1
      %856 = vperm.xlu0 %855, %v500
      %v857 = vpop.permute.xlu0 %856
      %859 = vset.pattern.permute.xlu0 1
      %860 = vperm.xlu0 %859, %v501
      %v861 = vpop.permute.xlu0 %860
      %863 = vset.pattern.permute.xlu0 1
      %864 = vperm.xlu0 %863, %v502
      %v865 = vpop.permute.xlu0 %864
      %867 = vset.pattern.permute.xlu0 1
      %868 = vperm.xlu0 %867, %v503
      %v869 = vpop.permute.xlu0 %868
      %871 = vset.pattern.permute.xlu0 1
      %872 = vperm.xlu0 %871, %v504
      %v873 = vpop.permute.xlu0 %872
      %875 = vset.pattern.permute.xlu0 1
      %876 = vperm.xlu0 %875, %v505
      %v877 = vpop.permute.xlu0 %876
      %879 = vset.pattern.permute.xlu0 1
      %880 = vperm.xlu0 %879, %v506
      %v881 = vpop.permute.xlu0 %880
      %883 = vset.pattern.permute.xlu0 1
      %884 = vperm.xlu0 %883, %v507
      %v885 = vpop.permute.xlu0 %884
      %887 = vset.pattern.permute.xlu0 1
      %888 = vperm.xlu0 %887, %v508
      %v889 = vpop.permute.xlu0 %888
      %v891 = vperm.slane %v509, 1
      %v892 = vmul.f32 %v741, %v891
      %v893 = vmul.f32 %v745, %v891
      %v894 = vmul.f32 %v749, %v891
      %v895 = vmul.f32 %v753, %v891
      %v896 = vmul.f32 %v757, %v891
      %v897 = vmul.f32 %v761, %v891
      %v898 = vmul.f32 %v765, %v891
      %v899 = vmul.f32 %v769, %v891
      %v900 = vmul.f32 %v773, %v891
      %v901 = vmul.f32 %v777, %v891
      %v902 = vmul.f32 %v781, %v891
      %v903 = vmul.f32 %v785, %v891
      %v904 = vmul.f32 %v789, %v891
      %v905 = vmul.f32 %v793, %v891
      %v906 = vmul.f32 %v797, %v891
      %v907 = vmul.f32 %v801, %v891
      %v908 = vmul.f32 %v805, %v891
      %v909 = vmul.f32 %v809, %v891
      %v910 = vmul.f32 %v813, %v891
      %v911 = vmul.f32 %v817, %v891
      %v912 = vmul.f32 %v821, %v891
      %v913 = vmul.f32 %v825, %v891
      %v914 = vmul.f32 %v829, %v891
      %v915 = vmul.f32 %v833, %v891
      %v916 = vmul.f32 %v837, %v891
      %v917 = vmul.f32 %v841, %v891
      %v918 = vmul.f32 %v845, %v891
      %v919 = vmul.f32 %v849, %v891
      %v920 = vmul.f32 %v853, %v891
      %v921 = vmul.f32 %v857, %v891
      %v922 = vmul.f32 %v861, %v891
      %v923 = vmul.f32 %v865, %v891
      %v924 = vmul.f32 %v869, %v891
      %v925 = vmul.f32 %v873, %v891
      %v926 = vmul.f32 %v877, %v891
      %v927 = vmul.f32 %v881, %v891
      %v928 = vmul.f32 %v885, %v891
      %v929 = vmul.f32 %v889, %v891
      %v930 = vadd.f32 %v701, %v892
      %v931 = vadd.f32 %v702, %v893
      %v932 = vadd.f32 %v703, %v894
      %v933 = vadd.f32 %v704, %v895
      %v934 = vadd.f32 %v705, %v896
      %v935 = vadd.f32 %v706, %v897
      %v936 = vadd.f32 %v707, %v898
      %v937 = vadd.f32 %v708, %v899
      %v938 = vadd.f32 %v709, %v900
      %v939 = vadd.f32 %v710, %v901
      %v940 = vadd.f32 %v711, %v902
      %v941 = vadd.f32 %v712, %v903
      %v942 = vadd.f32 %v713, %v904
      %v943 = vadd.f32 %v714, %v905
      %v944 = vadd.f32 %v715, %v906
      %v945 = vadd.f32 %v716, %v907
      %v946 = vadd.f32 %v717, %v908
      %v947 = vadd.f32 %v718, %v909
      %v948 = vadd.f32 %v719, %v910
      %v949 = vadd.f32 %v720, %v911
      %v950 = vadd.f32 %v721, %v912
      %v951 = vadd.f32 %v722, %v913
      %v952 = vadd.f32 %v723, %v914
      %v953 = vadd.f32 %v724, %v915
      %v954 = vadd.f32 %v725, %v916
      %v955 = vadd.f32 %v726, %v917
      %v956 = vadd.f32 %v727, %v918
      %v957 = vadd.f32 %v728, %v919
      %v958 = vadd.f32 %v729, %v920
      %v959 = vadd.f32 %v730, %v921
      %v960 = vadd.f32 %v731, %v922
      %v961 = vadd.f32 %v732, %v923
      %v962 = vadd.f32 %v733, %v924
      %v963 = vadd.f32 %v734, %v925
      %v964 = vadd.f32 %v735, %v926
      %v965 = vadd.f32 %v736, %v927
      %v966 = vadd.f32 %v737, %v928
      %v967 = vadd.f32 %v738, %v929
      %v968 = vld [vmem:[%s2] sm:$0x1]
      %v970 = vperm.slane %v968, 0
      %v972 = vadd.f32 %v930, %v970
      %v973 = vadd.f32 %v931, %v970
      %v974 = vadd.f32 %v932, %v970
      %v975 = vadd.f32 %v933, %v970
      %v976 = vadd.f32 %v934, %v970
      %v977 = vadd.f32 %v935, %v970
      %v978 = vadd.f32 %v936, %v970
      %v979 = vadd.f32 %v937, %v970
      %v980 = vadd.f32 %v938, %v970
      %v981 = vadd.f32 %v939, %v970
      %v982 = vadd.f32 %v940, %v970
      %v983 = vadd.f32 %v941, %v970
      %v984 = vadd.f32 %v942, %v970
      %v985 = vadd.f32 %v943, %v970
      %v986 = vadd.f32 %v944, %v970
      %v987 = vadd.f32 %v945, %v970
      %v988 = vadd.f32 %v946, %v970
      %v989 = vadd.f32 %v947, %v970
      %v990 = vadd.f32 %v948, %v970
      %v991 = vadd.f32 %v949, %v970
      %v992 = vadd.f32 %v950, %v970
      %v993 = vadd.f32 %v951, %v970
      %v994 = vadd.f32 %v952, %v970
      %v995 = vadd.f32 %v953, %v970
      %v996 = vadd.f32 %v954, %v970
      %v997 = vadd.f32 %v955, %v970
      %v998 = vadd.f32 %v956, %v970
      %v999 = vadd.f32 %v957, %v970
      %v1000 = vadd.f32 %v958, %v970
      %v1001 = vadd.f32 %v959, %v970
      %v1002 = vadd.f32 %v960, %v970
      %v1003 = vadd.f32 %v961, %v970
      %v1004 = vadd.f32 %v962, %v970
      %v1005 = vadd.f32 %v963, %v970
      %v1006 = vadd.f32 %v964, %v970
      %v1007 = vadd.f32 %v965, %v970
      %v1008 = vadd.f32 %v966, %v970
      %v1009 = vadd.f32 %v967, %v970
      %v1010 = vmax.f32 %v972, 0.0
      %v1011 = vmax.f32 %v973, 0.0
      %v1012 = vmax.f32 %v974, 0.0
      %v1013 = vmax.f32 %v975, 0.0
      %v1014 = vmax.f32 %v976, 0.0
      %v1015 = vmax.f32 %v977, 0.0
      %v1016 = vmax.f32 %v978, 0.0
      %v1017 = vmax.f32 %v979, 0.0
      %v1018 = vmax.f32 %v980, 0.0
      %v1019 = vmax.f32 %v981, 0.0
      %v1020 = vmax.f32 %v982, 0.0
      %v1021 = vmax.f32 %v983, 0.0
      %v1022 = vmax.f32 %v984, 0.0
      %v1023 = vmax.f32 %v985, 0.0
      %v1024 = vmax.f32 %v986, 0.0
      %v1025 = vmax.f32 %v987, 0.0
      %v1026 = vmax.f32 %v988, 0.0
      %v1027 = vmax.f32 %v989, 0.0
      %v1028 = vmax.f32 %v990, 0.0
      %v1029 = vmax.f32 %v991, 0.0
      %v1030 = vmax.f32 %v992, 0.0
      %v1031 = vmax.f32 %v993, 0.0
      %v1032 = vmax.f32 %v994, 0.0
      %v1033 = vmax.f32 %v995, 0.0
      %v1034 = vmax.f32 %v996, 0.0
      %v1035 = vmax.f32 %v997, 0.0
      %v1036 = vmax.f32 %v998, 0.0
      %v1037 = vmax.f32 %v999, 0.0
      %v1038 = vmax.f32 %v1000, 0.0
      %v1039 = vmax.f32 %v1001, 0.0
      %v1040 = vmax.f32 %v1002, 0.0
      %v1041 = vmax.f32 %v1003, 0.0
      %v1042 = vmax.f32 %v1004, 0.0
      %v1043 = vmax.f32 %v1005, 0.0
      %v1044 = vmax.f32 %v1006, 0.0
      %v1045 = vmax.f32 %v1007, 0.0
      %v1046 = vmax.f32 %v1008, 0.0
      %v1047 = vmax.f32 %v1009, 0.0
      %v1048 = vld [vmem:[%s3] sm:$0xff]
      %v1049 = vld [vmem:[%s3 + $0x8] sm:$0xff]
      %v1050 = vld [vmem:[%s3 + $0x10] sm:$0xff]
      %v1051 = vld [vmem:[%s3 + $0x18] sm:$0xff]
      %v1052 = vld [vmem:[%s3 + $0x20] sm:$0xff]
      %v1053 = vld [vmem:[%s3 + $0x28] sm:$0xff]
      %v1054 = vld [vmem:[%s3 + $0x30] sm:$0xff]
      %v1055 = vld [vmem:[%s3 + $0x38] sm:$0xff]
      %v1056 = vld [vmem:[%s3 + $0x40] sm:$0xff]
      %v1057 = vld [vmem:[%s3 + $0x48] sm:$0xff]
      %v1058 = vld [vmem:[%s3 + $0x50] sm:$0xff]
      %v1059 = vld [vmem:[%s3 + $0x58] sm:$0xff]
      %v1060 = vld [vmem:[%s3 + $0x60] sm:$0xff]
      %v1061 = vld [vmem:[%s3 + $0x68] sm:$0xff]
      %v1062 = vld [vmem:[%s3 + $0x70] sm:$0xff]
      %v1063 = vld [vmem:[%s3 + $0x78] sm:$0xff]
      %v1064 = vld [vmem:[%s4] sm:$0x1]
      %v1066 = vperm.slane %v1064, 0
      %v1068 = vand.u32 %v1063, 4294901760
      %1069 = vmatpush.msra.mxu0 %v1068
      %v1070 = vand.u32 %v1062, 4294901760
      %1071 = vmatpush.msra.mxu0 %v1070
      %v1072 = vand.u32 %v1061, 4294901760
      %1073 = vmatpush.msra.mxu0 %v1072
      %v1074 = vand.u32 %v1060, 4294901760
      %1075 = vmatpush.msra.mxu0 %v1074
      %v1076 = vand.u32 %v1059, 4294901760
      %1077 = vmatpush.msra.mxu0 %v1076
      %v1078 = vand.u32 %v1058, 4294901760
      %1079 = vmatpush.msra.mxu0 %v1078
      %v1080 = vand.u32 %v1057, 4294901760
      %1081 = vmatpush.msra.mxu0 %v1080
      %v1082 = vand.u32 %v1056, 4294901760
      %1083 = vmatpush.msra.mxu0 %v1082
      %v1084 = vand.u32 %v1055, 4294901760
      %1085 = vmatpush.msra.mxu0 %v1084
      %v1086 = vand.u32 %v1054, 4294901760
      %1087 = vmatpush.msra.mxu0 %v1086
      %v1088 = vand.u32 %v1053, 4294901760
      %1089 = vmatpush.msra.mxu0 %v1088
      %v1090 = vand.u32 %v1052, 4294901760
      %1091 = vmatpush.msra.mxu0 %v1090
      %v1092 = vand.u32 %v1051, 4294901760
      %1093 = vmatpush.msra.mxu0 %v1092
      %v1094 = vand.u32 %v1050, 4294901760
      %1095 = vmatpush.msra.mxu0 %v1094
      %v1096 = vand.u32 %v1049, 4294901760
      %1097 = vmatpush.msra.mxu0 %v1096
      %v1098 = vand.u32 %v1048, 4294901760
      %1099 = vmatpush.msra.mxu0 %v1098
      %v1100 = vand.u32 %v1010, 4294901760
      %v1101 = vsub.f32 %v1010, %v1100
      %v1102 = vand.u32 %v1101, 4294901760
      %v1103 = vsub.f32 %v1101, %v1102
      %v1104 = vand.u32 %v1103, 4294901760
      %1105 = vmatmul.f32.gmra.mxu0 %v1104
      %v1106 = vpop.f32.mrf.mxu0
      %v1107 = vadd.f32 %v1066, %v1106
      %v1108 = vand.u32 %v1011, 4294901760
      %v1109 = vsub.f32 %v1011, %v1108
      %v1110 = vand.u32 %v1109, 4294901760
      %v1111 = vsub.f32 %v1109, %v1110
      %v1112 = vand.u32 %v1111, 4294901760
      %1113 = vmatmul.f32.gmra.mxu0 %v1112
      %v1114 = vpop.f32.mrf.mxu0
      %v1115 = vadd.f32 %v1066, %v1114
      %v1116 = vand.u32 %v1012, 4294901760
      %v1117 = vsub.f32 %v1012, %v1116
      %v1118 = vand.u32 %v1117, 4294901760
      %v1119 = vsub.f32 %v1117, %v1118
      %v1120 = vand.u32 %v1119, 4294901760
      %1121 = vmatmul.f32.gmra.mxu0 %v1120
      %v1122 = vpop.f32.mrf.mxu0
      %v1123 = vadd.f32 %v1066, %v1122
      %v1124 = vand.u32 %v1013, 4294901760
      %v1125 = vsub.f32 %v1013, %v1124
      %v1126 = vand.u32 %v1125, 4294901760
      %v1127 = vsub.f32 %v1125, %v1126
      %v1128 = vand.u32 %v1127, 4294901760
      %1129 = vmatmul.f32.gmra.mxu0 %v1128
      %v1130 = vpop.f32.mrf.mxu0
      %v1131 = vadd.f32 %v1066, %v1130
      %v1132 = vand.u32 %v1014, 4294901760
      %v1133 = vsub.f32 %v1014, %v1132
      %v1134 = vand.u32 %v1133, 4294901760
      %v1135 = vsub.f32 %v1133, %v1134
      %v1136 = vand.u32 %v1135, 4294901760
      %1137 = vmatmul.f32.gmra.mxu0 %v1136
      %v1138 = vpop.f32.mrf.mxu0
      %v1139 = vadd.f32 %v1066, %v1138
      %v1140 = vand.u32 %v1015, 4294901760
      %v1141 = vsub.f32 %v1015, %v1140
      %v1142 = vand.u32 %v1141, 4294901760
      %v1143 = vsub.f32 %v1141, %v1142
      %v1144 = vand.u32 %v1143, 4294901760
      %1145 = vmatmul.f32.gmra.mxu0 %v1144
      %v1146 = vpop.f32.mrf.mxu0
      %v1147 = vadd.f32 %v1066, %v1146
      %v1148 = vand.u32 %v1016, 4294901760
      %v1149 = vsub.f32 %v1016, %v1148
      %v1150 = vand.u32 %v1149, 4294901760
      %v1151 = vsub.f32 %v1149, %v1150
      %v1152 = vand.u32 %v1151, 4294901760
      %1153 = vmatmul.f32.gmra.mxu0 %v1152
      %v1154 = vpop.f32.mrf.mxu0
      %v1155 = vadd.f32 %v1066, %v1154
      %v1156 = vand.u32 %v1017, 4294901760
      %v1157 = vsub.f32 %v1017, %v1156
      %v1158 = vand.u32 %v1157, 4294901760
      %v1159 = vsub.f32 %v1157, %v1158
      %v1160 = vand.u32 %v1159, 4294901760
      %1161 = vmatmul.f32.gmra.mxu0 %v1160
      %v1162 = vpop.f32.mrf.mxu0
      %v1163 = vadd.f32 %v1066, %v1162
      %v1164 = vand.u32 %v1018, 4294901760
      %v1165 = vsub.f32 %v1018, %v1164
      %v1166 = vand.u32 %v1165, 4294901760
      %v1167 = vsub.f32 %v1165, %v1166
      %v1168 = vand.u32 %v1167, 4294901760
      %1169 = vmatmul.f32.gmra.mxu0 %v1168
      %v1170 = vpop.f32.mrf.mxu0
      %v1171 = vadd.f32 %v1066, %v1170
      %v1172 = vand.u32 %v1019, 4294901760
      %v1173 = vsub.f32 %v1019, %v1172
      %v1174 = vand.u32 %v1173, 4294901760
      %v1175 = vsub.f32 %v1173, %v1174
      %v1176 = vand.u32 %v1175, 4294901760
      %1177 = vmatmul.f32.gmra.mxu0 %v1176
      %v1178 = vpop.f32.mrf.mxu0
      %v1179 = vadd.f32 %v1066, %v1178
      %v1180 = vand.u32 %v1020, 4294901760
      %v1181 = vsub.f32 %v1020, %v1180
      %v1182 = vand.u32 %v1181, 4294901760
      %v1183 = vsub.f32 %v1181, %v1182
      %v1184 = vand.u32 %v1183, 4294901760
      %1185 = vmatmul.f32.gmra.mxu0 %v1184
      %v1186 = vpop.f32.mrf.mxu0
      %v1187 = vadd.f32 %v1066, %v1186
      %v1188 = vand.u32 %v1021, 4294901760
      %v1189 = vsub.f32 %v1021, %v1188
      %v1190 = vand.u32 %v1189, 4294901760
      %v1191 = vsub.f32 %v1189, %v1190
      %v1192 = vand.u32 %v1191, 4294901760
      %1193 = vmatmul.f32.gmra.mxu0 %v1192
      %v1194 = vpop.f32.mrf.mxu0
      %v1195 = vadd.f32 %v1066, %v1194
      %v1196 = vand.u32 %v1022, 4294901760
      %v1197 = vsub.f32 %v1022, %v1196
      %v1198 = vand.u32 %v1197, 4294901760
      %v1199 = vsub.f32 %v1197, %v1198
      %v1200 = vand.u32 %v1199, 4294901760
      %1201 = vmatmul.f32.gmra.mxu0 %v1200
      %v1202 = vpop.f32.mrf.mxu0
      %v1203 = vadd.f32 %v1066, %v1202
      %v1204 = vand.u32 %v1023, 4294901760
      %v1205 = vsub.f32 %v1023, %v1204
      %v1206 = vand.u32 %v1205, 4294901760
      %v1207 = vsub.f32 %v1205, %v1206
      %v1208 = vand.u32 %v1207, 4294901760
      %1209 = vmatmul.f32.gmra.mxu0 %v1208
      %v1210 = vpop.f32.mrf.mxu0
      %v1211 = vadd.f32 %v1066, %v1210
      %v1212 = vand.u32 %v1024, 4294901760
      %v1213 = vsub.f32 %v1024, %v1212
      %v1214 = vand.u32 %v1213, 4294901760
      %v1215 = vsub.f32 %v1213, %v1214
      %v1216 = vand.u32 %v1215, 4294901760
      %1217 = vmatmul.f32.gmra.mxu0 %v1216
      %v1218 = vpop.f32.mrf.mxu0
      %v1219 = vadd.f32 %v1066, %v1218
      %v1220 = vand.u32 %v1025, 4294901760
      %v1221 = vsub.f32 %v1025, %v1220
      %v1222 = vand.u32 %v1221, 4294901760
      %v1223 = vsub.f32 %v1221, %v1222
      %v1224 = vand.u32 %v1223, 4294901760
      %1225 = vmatmul.f32.gmra.mxu0 %v1224
      %v1226 = vpop.f32.mrf.mxu0
      %v1227 = vadd.f32 %v1066, %v1226
      %v1228 = vand.u32 %v1026, 4294901760
      %v1229 = vsub.f32 %v1026, %v1228
      %v1230 = vand.u32 %v1229, 4294901760
      %v1231 = vsub.f32 %v1229, %v1230
      %v1232 = vand.u32 %v1231, 4294901760
      %1233 = vmatmul.f32.gmra.mxu0 %v1232
      %v1234 = vpop.f32.mrf.mxu0
      %v1235 = vadd.f32 %v1066, %v1234
      %v1236 = vand.u32 %v1027, 4294901760
      %v1237 = vsub.f32 %v1027, %v1236
      %v1238 = vand.u32 %v1237, 4294901760
      %v1239 = vsub.f32 %v1237, %v1238
      %v1240 = vand.u32 %v1239, 4294901760
      %1241 = vmatmul.f32.gmra.mxu0 %v1240
      %v1242 = vpop.f32.mrf.mxu0
      %v1243 = vadd.f32 %v1066, %v1242
      %v1244 = vand.u32 %v1028, 4294901760
      %v1245 = vsub.f32 %v1028, %v1244
      %v1246 = vand.u32 %v1245, 4294901760
      %v1247 = vsub.f32 %v1245, %v1246
      %v1248 = vand.u32 %v1247, 4294901760
      %1249 = vmatmul.f32.gmra.mxu0 %v1248
      %v1250 = vpop.f32.mrf.mxu0
      %v1251 = vadd.f32 %v1066, %v1250
      %v1252 = vand.u32 %v1029, 4294901760
      %v1253 = vsub.f32 %v1029, %v1252
      %v1254 = vand.u32 %v1253, 4294901760
      %v1255 = vsub.f32 %v1253, %v1254
      %v1256 = vand.u32 %v1255, 4294901760
      %1257 = vmatmul.f32.gmra.mxu0 %v1256
      %v1258 = vpop.f32.mrf.mxu0
      %v1259 = vadd.f32 %v1066, %v1258
      %v1260 = vand.u32 %v1030, 4294901760
      %v1261 = vsub.f32 %v1030, %v1260
      %v1262 = vand.u32 %v1261, 4294901760
      %v1263 = vsub.f32 %v1261, %v1262
      %v1264 = vand.u32 %v1263, 4294901760
      %1265 = vmatmul.f32.gmra.mxu0 %v1264
      %v1266 = vpop.f32.mrf.mxu0
      %v1267 = vadd.f32 %v1066, %v1266
      %v1268 = vand.u32 %v1031, 4294901760
      %v1269 = vsub.f32 %v1031, %v1268
      %v1270 = vand.u32 %v1269, 4294901760
      %v1271 = vsub.f32 %v1269, %v1270
      %v1272 = vand.u32 %v1271, 4294901760
      %1273 = vmatmul.f32.gmra.mxu0 %v1272
      %v1274 = vpop.f32.mrf.mxu0
      %v1275 = vadd.f32 %v1066, %v1274
      %v1276 = vand.u32 %v1032, 4294901760
      %v1277 = vsub.f32 %v1032, %v1276
      %v1278 = vand.u32 %v1277, 4294901760
      %v1279 = vsub.f32 %v1277, %v1278
      %v1280 = vand.u32 %v1279, 4294901760
      %1281 = vmatmul.f32.gmra.mxu0 %v1280
      %v1282 = vpop.f32.mrf.mxu0
      %v1283 = vadd.f32 %v1066, %v1282
      %v1284 = vand.u32 %v1033, 4294901760
      %v1285 = vsub.f32 %v1033, %v1284
      %v1286 = vand.u32 %v1285, 4294901760
      %v1287 = vsub.f32 %v1285, %v1286
      %v1288 = vand.u32 %v1287, 4294901760
      %1289 = vmatmul.f32.gmra.mxu0 %v1288
      %v1290 = vpop.f32.mrf.mxu0
      %v1291 = vadd.f32 %v1066, %v1290
      %v1292 = vand.u32 %v1034, 4294901760
      %v1293 = vsub.f32 %v1034, %v1292
      %v1294 = vand.u32 %v1293, 4294901760
      %v1295 = vsub.f32 %v1293, %v1294
      %v1296 = vand.u32 %v1295, 4294901760
      %1297 = vmatmul.f32.gmra.mxu0 %v1296
      %v1298 = vpop.f32.mrf.mxu0
      %v1299 = vadd.f32 %v1066, %v1298
      %v1300 = vand.u32 %v1035, 4294901760
      %v1301 = vsub.f32 %v1035, %v1300
      %v1302 = vand.u32 %v1301, 4294901760
      %v1303 = vsub.f32 %v1301, %v1302
      %v1304 = vand.u32 %v1303, 4294901760
      %1305 = vmatmul.f32.gmra.mxu0 %v1304
      %v1306 = vpop.f32.mrf.mxu0
      %v1307 = vadd.f32 %v1066, %v1306
      %v1308 = vand.u32 %v1036, 4294901760
      %v1309 = vsub.f32 %v1036, %v1308
      %v1310 = vand.u32 %v1309, 4294901760
      %v1311 = vsub.f32 %v1309, %v1310
      %v1312 = vand.u32 %v1311, 4294901760
      %1313 = vmatmul.f32.gmra.mxu0 %v1312
      %v1314 = vpop.f32.mrf.mxu0
      %v1315 = vadd.f32 %v1066, %v1314
      %v1316 = vand.u32 %v1037, 4294901760
      %v1317 = vsub.f32 %v1037, %v1316
      %v1318 = vand.u32 %v1317, 4294901760
      %v1319 = vsub.f32 %v1317, %v1318
      %v1320 = vand.u32 %v1319, 4294901760
      %1321 = vmatmul.f32.gmra.mxu0 %v1320
      %v1322 = vpop.f32.mrf.mxu0
      %v1323 = vadd.f32 %v1066, %v1322
      %v1324 = vand.u32 %v1038, 4294901760
      %v1325 = vsub.f32 %v1038, %v1324
      %v1326 = vand.u32 %v1325, 4294901760
      %v1327 = vsub.f32 %v1325, %v1326
      %v1328 = vand.u32 %v1327, 4294901760
      %1329 = vmatmul.f32.gmra.mxu0 %v1328
      %v1330 = vpop.f32.mrf.mxu0
      %v1331 = vadd.f32 %v1066, %v1330
      %v1332 = vand.u32 %v1039, 4294901760
      %v1333 = vsub.f32 %v1039, %v1332
      %v1334 = vand.u32 %v1333, 4294901760
      %v1335 = vsub.f32 %v1333, %v1334
      %v1336 = vand.u32 %v1335, 4294901760
      %1337 = vmatmul.f32.gmra.mxu0 %v1336
      %v1338 = vpop.f32.mrf.mxu0
      %v1339 = vadd.f32 %v1066, %v1338
      %v1340 = vand.u32 %v1040, 4294901760
      %v1341 = vsub.f32 %v1040, %v1340
      %v1342 = vand.u32 %v1341, 4294901760
      %v1343 = vsub.f32 %v1341, %v1342
      %v1344 = vand.u32 %v1343, 4294901760
      %1345 = vmatmul.f32.gmra.mxu0 %v1344
      %v1346 = vpop.f32.mrf.mxu0
      %v1347 = vadd.f32 %v1066, %v1346
      %v1348 = vand.u32 %v1041, 4294901760
      %v1349 = vsub.f32 %v1041, %v1348
      %v1350 = vand.u32 %v1349, 4294901760
      %v1351 = vsub.f32 %v1349, %v1350
      %v1352 = vand.u32 %v1351, 4294901760
      %1353 = vmatmul.f32.gmra.mxu0 %v1352
      %v1354 = vpop.f32.mrf.mxu0
      %v1355 = vadd.f32 %v1066, %v1354
      %v1356 = vand.u32 %v1042, 4294901760
      %v1357 = vsub.f32 %v1042, %v1356
      %v1358 = vand.u32 %v1357, 4294901760
      %v1359 = vsub.f32 %v1357, %v1358
      %v1360 = vand.u32 %v1359, 4294901760
      %1361 = vmatmul.f32.gmra.mxu0 %v1360
      %v1362 = vpop.f32.mrf.mxu0
      %v1363 = vadd.f32 %v1066, %v1362
      %v1364 = vand.u32 %v1043, 4294901760
      %v1365 = vsub.f32 %v1043, %v1364
      %v1366 = vand.u32 %v1365, 4294901760
      %v1367 = vsub.f32 %v1365, %v1366
      %v1368 = vand.u32 %v1367, 4294901760
      %1369 = vmatmul.f32.gmra.mxu0 %v1368
      %v1370 = vpop.f32.mrf.mxu0
      %v1371 = vadd.f32 %v1066, %v1370
      %v1372 = vand.u32 %v1044, 4294901760
      %v1373 = vsub.f32 %v1044, %v1372
      %v1374 = vand.u32 %v1373, 4294901760
      %v1375 = vsub.f32 %v1373, %v1374
      %v1376 = vand.u32 %v1375, 4294901760
      %1377 = vmatmul.f32.gmra.mxu0 %v1376
      %v1378 = vpop.f32.mrf.mxu0
      %v1379 = vadd.f32 %v1066, %v1378
      %v1380 = vand.u32 %v1045, 4294901760
      %v1381 = vsub.f32 %v1045, %v1380
      %v1382 = vand.u32 %v1381, 4294901760
      %v1383 = vsub.f32 %v1381, %v1382
      %v1384 = vand.u32 %v1383, 4294901760
      %1385 = vmatmul.f32.gmra.mxu0 %v1384
      %v1386 = vpop.f32.mrf.mxu0
      %v1387 = vadd.f32 %v1066, %v1386
      %v1388 = vand.u32 %v1046, 4294901760
      %v1389 = vsub.f32 %v1046, %v1388
      %v1390 = vand.u32 %v1389, 4294901760
      %v1391 = vsub.f32 %v1389, %v1390
      %v1392 = vand.u32 %v1391, 4294901760
      %1393 = vmatmul.f32.gmra.mxu0 %v1392
      %v1394 = vpop.f32.mrf.mxu0
      %v1395 = vadd.f32 %v1066, %v1394
      %v1396 = vand.u32 %v1047, 4294901760
      %v1397 = vsub.f32 %v1047, %v1396
      %v1398 = vand.u32 %v1397, 4294901760
      %v1399 = vsub.f32 %v1397, %v1398
      %v1400 = vand.u32 %v1399, 4294901760
      %1401 = vmatmul.f32.gmra.mxu0 %v1400
      %v1402 = vpop.f32.mrf.mxu0
      %v1403 = vadd.f32 %v1066, %v1402
      %1404 = vdwg.mxu0
      %v1405 = vand.u32 %v1063, 4294901760
      %v1406 = vsub.f32 %v1063, %v1405
      %v1407 = vand.u32 %v1406, 4294901760
      %v1408 = vsub.f32 %v1406, %v1407
      %v1409 = vand.u32 %v1408, 4294901760
      %1410 = vmatpush.msra.mxu0 %v1409
      %v1411 = vand.u32 %v1062, 4294901760
      %v1412 = vsub.f32 %v1062, %v1411
      %v1413 = vand.u32 %v1412, 4294901760
      %v1414 = vsub.f32 %v1412, %v1413
      %v1415 = vand.u32 %v1414, 4294901760
      %1416 = vmatpush.msra.mxu0 %v1415
      %v1417 = vand.u32 %v1061, 4294901760
      %v1418 = vsub.f32 %v1061, %v1417
      %v1419 = vand.u32 %v1418, 4294901760
      %v1420 = vsub.f32 %v1418, %v1419
      %v1421 = vand.u32 %v1420, 4294901760
      %1422 = vmatpush.msra.mxu0 %v1421
      %v1423 = vand.u32 %v1060, 4294901760
      %v1424 = vsub.f32 %v1060, %v1423
      %v1425 = vand.u32 %v1424, 4294901760
      %v1426 = vsub.f32 %v1424, %v1425
      %v1427 = vand.u32 %v1426, 4294901760
      %1428 = vmatpush.msra.mxu0 %v1427
      %v1429 = vand.u32 %v1059, 4294901760
      %v1430 = vsub.f32 %v1059, %v1429
      %v1431 = vand.u32 %v1430, 4294901760
      %v1432 = vsub.f32 %v1430, %v1431
      %v1433 = vand.u32 %v1432, 4294901760
      %1434 = vmatpush.msra.mxu0 %v1433
      %v1435 = vand.u32 %v1058, 4294901760
      %v1436 = vsub.f32 %v1058, %v1435
      %v1437 = vand.u32 %v1436, 4294901760
      %v1438 = vsub.f32 %v1436, %v1437
      %v1439 = vand.u32 %v1438, 4294901760
      %1440 = vmatpush.msra.mxu0 %v1439
      %v1441 = vand.u32 %v1057, 4294901760
      %v1442 = vsub.f32 %v1057, %v1441
      %v1443 = vand.u32 %v1442, 4294901760
      %v1444 = vsub.f32 %v1442, %v1443
      %v1445 = vand.u32 %v1444, 4294901760
      %1446 = vmatpush.msra.mxu0 %v1445
      %v1447 = vand.u32 %v1056, 4294901760
      %v1448 = vsub.f32 %v1056, %v1447
      %v1449 = vand.u32 %v1448, 4294901760
      %v1450 = vsub.f32 %v1448, %v1449
      %v1451 = vand.u32 %v1450, 4294901760
      %1452 = vmatpush.msra.mxu0 %v1451
      %v1453 = vand.u32 %v1055, 4294901760
      %v1454 = vsub.f32 %v1055, %v1453
      %v1455 = vand.u32 %v1454, 4294901760
      %v1456 = vsub.f32 %v1454, %v1455
      %v1457 = vand.u32 %v1456, 4294901760
      %1458 = vmatpush.msra.mxu0 %v1457
      %v1459 = vand.u32 %v1054, 4294901760
      %v1460 = vsub.f32 %v1054, %v1459
      %v1461 = vand.u32 %v1460, 4294901760
      %v1462 = vsub.f32 %v1460, %v1461
      %v1463 = vand.u32 %v1462, 4294901760
      %1464 = vmatpush.msra.mxu0 %v1463
      %v1465 = vand.u32 %v1053, 4294901760
      %v1466 = vsub.f32 %v1053, %v1465
      %v1467 = vand.u32 %v1466, 4294901760
      %v1468 = vsub.f32 %v1466, %v1467
      %v1469 = vand.u32 %v1468, 4294901760
      %1470 = vmatpush.msra.mxu0 %v1469
      %v1471 = vand.u32 %v1052, 4294901760
      %v1472 = vsub.f32 %v1052, %v1471
      %v1473 = vand.u32 %v1472, 4294901760
      %v1474 = vsub.f32 %v1472, %v1473
      %v1475 = vand.u32 %v1474, 4294901760
      %1476 = vmatpush.msra.mxu0 %v1475
      %v1477 = vand.u32 %v1051, 4294901760
      %v1478 = vsub.f32 %v1051, %v1477
      %v1479 = vand.u32 %v1478, 4294901760
      %v1480 = vsub.f32 %v1478, %v1479
      %v1481 = vand.u32 %v1480, 4294901760
      %1482 = vmatpush.msra.mxu0 %v1481
      %v1483 = vand.u32 %v1050, 4294901760
      %v1484 = vsub.f32 %v1050, %v1483
      %v1485 = vand.u32 %v1484, 4294901760
      %v1486 = vsub.f32 %v1484, %v1485
      %v1487 = vand.u32 %v1486, 4294901760
      %1488 = vmatpush.msra.mxu0 %v1487
      %v1489 = vand.u32 %v1049, 4294901760
      %v1490 = vsub.f32 %v1049, %v1489
      %v1491 = vand.u32 %v1490, 4294901760
      %v1492 = vsub.f32 %v1490, %v1491
      %v1493 = vand.u32 %v1492, 4294901760
      %1494 = vmatpush.msra.mxu0 %v1493
      %v1495 = vand.u32 %v1048, 4294901760
      %v1496 = vsub.f32 %v1048, %v1495
      %v1497 = vand.u32 %v1496, 4294901760
      %v1498 = vsub.f32 %v1496, %v1497
      %v1499 = vand.u32 %v1498, 4294901760
      %1500 = vmatpush.msra.mxu0 %v1499
      %v1501 = vand.u32 %v1010, 4294901760
      %1502 = vmatmul.f32.gmra.mxu0 %v1501
      %v1503 = vpop.f32.mrf.mxu0
      %v1504 = vadd.f32 %v1107, %v1503
      %v1505 = vand.u32 %v1011, 4294901760
      %1506 = vmatmul.f32.gmra.mxu0 %v1505
      %v1507 = vpop.f32.mrf.mxu0
      %v1508 = vadd.f32 %v1115, %v1507
      %v1509 = vand.u32 %v1012, 4294901760
      %1510 = vmatmul.f32.gmra.mxu0 %v1509
      %v1511 = vpop.f32.mrf.mxu0
      %v1512 = vadd.f32 %v1123, %v1511
      %v1513 = vand.u32 %v1013, 4294901760
      %1514 = vmatmul.f32.gmra.mxu0 %v1513
      %v1515 = vpop.f32.mrf.mxu0
      %v1516 = vadd.f32 %v1131, %v1515
      %v1517 = vand.u32 %v1014, 4294901760
      %1518 = vmatmul.f32.gmra.mxu0 %v1517
      %v1519 = vpop.f32.mrf.mxu0
      %v1520 = vadd.f32 %v1139, %v1519
      %v1521 = vand.u32 %v1015, 4294901760
      %1522 = vmatmul.f32.gmra.mxu0 %v1521
      %v1523 = vpop.f32.mrf.mxu0
      %v1524 = vadd.f32 %v1147, %v1523
      %v1525 = vand.u32 %v1016, 4294901760
      %1526 = vmatmul.f32.gmra.mxu0 %v1525
      %v1527 = vpop.f32.mrf.mxu0
      %v1528 = vadd.f32 %v1155, %v1527
      %v1529 = vand.u32 %v1017, 4294901760
      %1530 = vmatmul.f32.gmra.mxu0 %v1529
      %v1531 = vpop.f32.mrf.mxu0
      %v1532 = vadd.f32 %v1163, %v1531
      %v1533 = vand.u32 %v1018, 4294901760
      %1534 = vmatmul.f32.gmra.mxu0 %v1533
      %v1535 = vpop.f32.mrf.mxu0
      %v1536 = vadd.f32 %v1171, %v1535
      %v1537 = vand.u32 %v1019, 4294901760
      %1538 = vmatmul.f32.gmra.mxu0 %v1537
      %v1539 = vpop.f32.mrf.mxu0
      %v1540 = vadd.f32 %v1179, %v1539
      %v1541 = vand.u32 %v1020, 4294901760
      %1542 = vmatmul.f32.gmra.mxu0 %v1541
      %v1543 = vpop.f32.mrf.mxu0
      %v1544 = vadd.f32 %v1187, %v1543
      %v1545 = vand.u32 %v1021, 4294901760
      %1546 = vmatmul.f32.gmra.mxu0 %v1545
      %v1547 = vpop.f32.mrf.mxu0
      %v1548 = vadd.f32 %v1195, %v1547
      %v1549 = vand.u32 %v1022, 4294901760
      %1550 = vmatmul.f32.gmra.mxu0 %v1549
      %v1551 = vpop.f32.mrf.mxu0
      %v1552 = vadd.f32 %v1203, %v1551
      %v1553 = vand.u32 %v1023, 4294901760
      %1554 = vmatmul.f32.gmra.mxu0 %v1553
      %v1555 = vpop.f32.mrf.mxu0
      %v1556 = vadd.f32 %v1211, %v1555
      %v1557 = vand.u32 %v1024, 4294901760
      %1558 = vmatmul.f32.gmra.mxu0 %v1557
      %v1559 = vpop.f32.mrf.mxu0
      %v1560 = vadd.f32 %v1219, %v1559
      %v1561 = vand.u32 %v1025, 4294901760
      %1562 = vmatmul.f32.gmra.mxu0 %v1561
      %v1563 = vpop.f32.mrf.mxu0
      %v1564 = vadd.f32 %v1227, %v1563
      %v1565 = vand.u32 %v1026, 4294901760
      %1566 = vmatmul.f32.gmra.mxu0 %v1565
      %v1567 = vpop.f32.mrf.mxu0
      %v1568 = vadd.f32 %v1235, %v1567
      %v1569 = vand.u32 %v1027, 4294901760
      %1570 = vmatmul.f32.gmra.mxu0 %v1569
      %v1571 = vpop.f32.mrf.mxu0
      %v1572 = vadd.f32 %v1243, %v1571
      %v1573 = vand.u32 %v1028, 4294901760
      %1574 = vmatmul.f32.gmra.mxu0 %v1573
      %v1575 = vpop.f32.mrf.mxu0
      %v1576 = vadd.f32 %v1251, %v1575
      %v1577 = vand.u32 %v1029, 4294901760
      %1578 = vmatmul.f32.gmra.mxu0 %v1577
      %v1579 = vpop.f32.mrf.mxu0
      %v1580 = vadd.f32 %v1259, %v1579
      %v1581 = vand.u32 %v1030, 4294901760
      %1582 = vmatmul.f32.gmra.mxu0 %v1581
      %v1583 = vpop.f32.mrf.mxu0
      %v1584 = vadd.f32 %v1267, %v1583
      %v1585 = vand.u32 %v1031, 4294901760
      %1586 = vmatmul.f32.gmra.mxu0 %v1585
      %v1587 = vpop.f32.mrf.mxu0
      %v1588 = vadd.f32 %v1275, %v1587
      %v1589 = vand.u32 %v1032, 4294901760
      %1590 = vmatmul.f32.gmra.mxu0 %v1589
      %v1591 = vpop.f32.mrf.mxu0
      %v1592 = vadd.f32 %v1283, %v1591
      %v1593 = vand.u32 %v1033, 4294901760
      %1594 = vmatmul.f32.gmra.mxu0 %v1593
      %v1595 = vpop.f32.mrf.mxu0
      %v1596 = vadd.f32 %v1291, %v1595
      %v1597 = vand.u32 %v1034, 4294901760
      %1598 = vmatmul.f32.gmra.mxu0 %v1597
      %v1599 = vpop.f32.mrf.mxu0
      %v1600 = vadd.f32 %v1299, %v1599
      %v1601 = vand.u32 %v1035, 4294901760
      %1602 = vmatmul.f32.gmra.mxu0 %v1601
      %v1603 = vpop.f32.mrf.mxu0
      %v1604 = vadd.f32 %v1307, %v1603
      %v1605 = vand.u32 %v1036, 4294901760
      %1606 = vmatmul.f32.gmra.mxu0 %v1605
      %v1607 = vpop.f32.mrf.mxu0
      %v1608 = vadd.f32 %v1315, %v1607
      %v1609 = vand.u32 %v1037, 4294901760
      %1610 = vmatmul.f32.gmra.mxu0 %v1609
      %v1611 = vpop.f32.mrf.mxu0
      %v1612 = vadd.f32 %v1323, %v1611
      %v1613 = vand.u32 %v1038, 4294901760
      %1614 = vmatmul.f32.gmra.mxu0 %v1613
      %v1615 = vpop.f32.mrf.mxu0
      %v1616 = vadd.f32 %v1331, %v1615
      %v1617 = vand.u32 %v1039, 4294901760
      %1618 = vmatmul.f32.gmra.mxu0 %v1617
      %v1619 = vpop.f32.mrf.mxu0
      %v1620 = vadd.f32 %v1339, %v1619
      %v1621 = vand.u32 %v1040, 4294901760
      %1622 = vmatmul.f32.gmra.mxu0 %v1621
      %v1623 = vpop.f32.mrf.mxu0
      %v1624 = vadd.f32 %v1347, %v1623
      %v1625 = vand.u32 %v1041, 4294901760
      %1626 = vmatmul.f32.gmra.mxu0 %v1625
      %v1627 = vpop.f32.mrf.mxu0
      %v1628 = vadd.f32 %v1355, %v1627
      %v1629 = vand.u32 %v1042, 4294901760
      %1630 = vmatmul.f32.gmra.mxu0 %v1629
      %v1631 = vpop.f32.mrf.mxu0
      %v1632 = vadd.f32 %v1363, %v1631
      %v1633 = vand.u32 %v1043, 4294901760
      %1634 = vmatmul.f32.gmra.mxu0 %v1633
      %v1635 = vpop.f32.mrf.mxu0
      %v1636 = vadd.f32 %v1371, %v1635
      %v1637 = vand.u32 %v1044, 4294901760
      %1638 = vmatmul.f32.gmra.mxu0 %v1637
      %v1639 = vpop.f32.mrf.mxu0
      %v1640 = vadd.f32 %v1379, %v1639
      %v1641 = vand.u32 %v1045, 4294901760
      %1642 = vmatmul.f32.gmra.mxu0 %v1641
      %v1643 = vpop.f32.mrf.mxu0
      %v1644 = vadd.f32 %v1387, %v1643
      %v1645 = vand.u32 %v1046, 4294901760
      %1646 = vmatmul.f32.gmra.mxu0 %v1645
      %v1647 = vpop.f32.mrf.mxu0
      %v1648 = vadd.f32 %v1395, %v1647
      %v1649 = vand.u32 %v1047, 4294901760
      %1650 = vmatmul.f32.gmra.mxu0 %v1649
      %v1651 = vpop.f32.mrf.mxu0
      %v1652 = vadd.f32 %v1403, %v1651
      %1653 = vdwg.mxu0
      %v1654 = vand.u32 %v1063, 4294901760
      %v1655 = vsub.f32 %v1063, %v1654
      %1656 = vmatpush.msra.mxu0 %v1655
      %v1657 = vand.u32 %v1062, 4294901760
      %v1658 = vsub.f32 %v1062, %v1657
      %1659 = vmatpush.msra.mxu0 %v1658
      %v1660 = vand.u32 %v1061, 4294901760
      %v1661 = vsub.f32 %v1061, %v1660
      %1662 = vmatpush.msra.mxu0 %v1661
      %v1663 = vand.u32 %v1060, 4294901760
      %v1664 = vsub.f32 %v1060, %v1663
      %1665 = vmatpush.msra.mxu0 %v1664
      %v1666 = vand.u32 %v1059, 4294901760
      %v1667 = vsub.f32 %v1059, %v1666
      %1668 = vmatpush.msra.mxu0 %v1667
      %v1669 = vand.u32 %v1058, 4294901760
      %v1670 = vsub.f32 %v1058, %v1669
      %1671 = vmatpush.msra.mxu0 %v1670
      %v1672 = vand.u32 %v1057, 4294901760
      %v1673 = vsub.f32 %v1057, %v1672
      %1674 = vmatpush.msra.mxu0 %v1673
      %v1675 = vand.u32 %v1056, 4294901760
      %v1676 = vsub.f32 %v1056, %v1675
      %1677 = vmatpush.msra.mxu0 %v1676
      %v1678 = vand.u32 %v1055, 4294901760
      %v1679 = vsub.f32 %v1055, %v1678
      %1680 = vmatpush.msra.mxu0 %v1679
      %v1681 = vand.u32 %v1054, 4294901760
      %v1682 = vsub.f32 %v1054, %v1681
      %1683 = vmatpush.msra.mxu0 %v1682
      %v1684 = vand.u32 %v1053, 4294901760
      %v1685 = vsub.f32 %v1053, %v1684
      %1686 = vmatpush.msra.mxu0 %v1685
      %v1687 = vand.u32 %v1052, 4294901760
      %v1688 = vsub.f32 %v1052, %v1687
      %1689 = vmatpush.msra.mxu0 %v1688
      %v1690 = vand.u32 %v1051, 4294901760
      %v1691 = vsub.f32 %v1051, %v1690
      %1692 = vmatpush.msra.mxu0 %v1691
      %v1693 = vand.u32 %v1050, 4294901760
      %v1694 = vsub.f32 %v1050, %v1693
      %1695 = vmatpush.msra.mxu0 %v1694
      %v1696 = vand.u32 %v1049, 4294901760
      %v1697 = vsub.f32 %v1049, %v1696
      %1698 = vmatpush.msra.mxu0 %v1697
      %v1699 = vand.u32 %v1048, 4294901760
      %v1700 = vsub.f32 %v1048, %v1699
      %1701 = vmatpush.msra.mxu0 %v1700
      %v1702 = vand.u32 %v1010, 4294901760
      %v1703 = vsub.f32 %v1010, %v1702
      %1704 = vmatmul.f32.gmra.mxu0 %v1703
      %v1705 = vpop.f32.mrf.mxu0
      %v1706 = vadd.f32 %v1504, %v1705
      %v1707 = vand.u32 %v1011, 4294901760
      %v1708 = vsub.f32 %v1011, %v1707
      %1709 = vmatmul.f32.gmra.mxu0 %v1708
      %v1710 = vpop.f32.mrf.mxu0
      %v1711 = vadd.f32 %v1508, %v1710
      %v1712 = vand.u32 %v1012, 4294901760
      %v1713 = vsub.f32 %v1012, %v1712
      %1714 = vmatmul.f32.gmra.mxu0 %v1713
      %v1715 = vpop.f32.mrf.mxu0
      %v1716 = vadd.f32 %v1512, %v1715
      %v1717 = vand.u32 %v1013, 4294901760
      %v1718 = vsub.f32 %v1013, %v1717
      %1719 = vmatmul.f32.gmra.mxu0 %v1718
      %v1720 = vpop.f32.mrf.mxu0
      %v1721 = vadd.f32 %v1516, %v1720
      %v1722 = vand.u32 %v1014, 4294901760
      %v1723 = vsub.f32 %v1014, %v1722
      %1724 = vmatmul.f32.gmra.mxu0 %v1723
      %v1725 = vpop.f32.mrf.mxu0
      %v1726 = vadd.f32 %v1520, %v1725
      %v1727 = vand.u32 %v1015, 4294901760
      %v1728 = vsub.f32 %v1015, %v1727
      %1729 = vmatmul.f32.gmra.mxu0 %v1728
      %v1730 = vpop.f32.mrf.mxu0
      %v1731 = vadd.f32 %v1524, %v1730
      %v1732 = vand.u32 %v1016, 4294901760
      %v1733 = vsub.f32 %v1016, %v1732
      %1734 = vmatmul.f32.gmra.mxu0 %v1733
      %v1735 = vpop.f32.mrf.mxu0
      %v1736 = vadd.f32 %v1528, %v1735
      %v1737 = vand.u32 %v1017, 4294901760
      %v1738 = vsub.f32 %v1017, %v1737
      %1739 = vmatmul.f32.gmra.mxu0 %v1738
      %v1740 = vpop.f32.mrf.mxu0
      %v1741 = vadd.f32 %v1532, %v1740
      %v1742 = vand.u32 %v1018, 4294901760
      %v1743 = vsub.f32 %v1018, %v1742
      %1744 = vmatmul.f32.gmra.mxu0 %v1743
      %v1745 = vpop.f32.mrf.mxu0
      %v1746 = vadd.f32 %v1536, %v1745
      %v1747 = vand.u32 %v1019, 4294901760
      %v1748 = vsub.f32 %v1019, %v1747
      %1749 = vmatmul.f32.gmra.mxu0 %v1748
      %v1750 = vpop.f32.mrf.mxu0
      %v1751 = vadd.f32 %v1540, %v1750
      %v1752 = vand.u32 %v1020, 4294901760
      %v1753 = vsub.f32 %v1020, %v1752
      %1754 = vmatmul.f32.gmra.mxu0 %v1753
      %v1755 = vpop.f32.mrf.mxu0
      %v1756 = vadd.f32 %v1544, %v1755
      %v1757 = vand.u32 %v1021, 4294901760
      %v1758 = vsub.f32 %v1021, %v1757
      %1759 = vmatmul.f32.gmra.mxu0 %v1758
      %v1760 = vpop.f32.mrf.mxu0
      %v1761 = vadd.f32 %v1548, %v1760
      %v1762 = vand.u32 %v1022, 4294901760
      %v1763 = vsub.f32 %v1022, %v1762
      %1764 = vmatmul.f32.gmra.mxu0 %v1763
      %v1765 = vpop.f32.mrf.mxu0
      %v1766 = vadd.f32 %v1552, %v1765
      %v1767 = vand.u32 %v1023, 4294901760
      %v1768 = vsub.f32 %v1023, %v1767
      %1769 = vmatmul.f32.gmra.mxu0 %v1768
      %v1770 = vpop.f32.mrf.mxu0
      %v1771 = vadd.f32 %v1556, %v1770
      %v1772 = vand.u32 %v1024, 4294901760
      %v1773 = vsub.f32 %v1024, %v1772
      %1774 = vmatmul.f32.gmra.mxu0 %v1773
      %v1775 = vpop.f32.mrf.mxu0
      %v1776 = vadd.f32 %v1560, %v1775
      %v1777 = vand.u32 %v1025, 4294901760
      %v1778 = vsub.f32 %v1025, %v1777
      %1779 = vmatmul.f32.gmra.mxu0 %v1778
      %v1780 = vpop.f32.mrf.mxu0
      %v1781 = vadd.f32 %v1564, %v1780
      %v1782 = vand.u32 %v1026, 4294901760
      %v1783 = vsub.f32 %v1026, %v1782
      %1784 = vmatmul.f32.gmra.mxu0 %v1783
      %v1785 = vpop.f32.mrf.mxu0
      %v1786 = vadd.f32 %v1568, %v1785
      %v1787 = vand.u32 %v1027, 4294901760
      %v1788 = vsub.f32 %v1027, %v1787
      %1789 = vmatmul.f32.gmra.mxu0 %v1788
      %v1790 = vpop.f32.mrf.mxu0
      %v1791 = vadd.f32 %v1572, %v1790
      %v1792 = vand.u32 %v1028, 4294901760
      %v1793 = vsub.f32 %v1028, %v1792
      %1794 = vmatmul.f32.gmra.mxu0 %v1793
      %v1795 = vpop.f32.mrf.mxu0
      %v1796 = vadd.f32 %v1576, %v1795
      %v1797 = vand.u32 %v1029, 4294901760
      %v1798 = vsub.f32 %v1029, %v1797
      %1799 = vmatmul.f32.gmra.mxu0 %v1798
      %v1800 = vpop.f32.mrf.mxu0
      %v1801 = vadd.f32 %v1580, %v1800
      %v1802 = vand.u32 %v1030, 4294901760
      %v1803 = vsub.f32 %v1030, %v1802
      %1804 = vmatmul.f32.gmra.mxu0 %v1803
      %v1805 = vpop.f32.mrf.mxu0
      %v1806 = vadd.f32 %v1584, %v1805
      %v1807 = vand.u32 %v1031, 4294901760
      %v1808 = vsub.f32 %v1031, %v1807
      %1809 = vmatmul.f32.gmra.mxu0 %v1808
      %v1810 = vpop.f32.mrf.mxu0
      %v1811 = vadd.f32 %v1588, %v1810
      %v1812 = vand.u32 %v1032, 4294901760
      %v1813 = vsub.f32 %v1032, %v1812
      %1814 = vmatmul.f32.gmra.mxu0 %v1813
      %v1815 = vpop.f32.mrf.mxu0
      %v1816 = vadd.f32 %v1592, %v1815
      %v1817 = vand.u32 %v1033, 4294901760
      %v1818 = vsub.f32 %v1033, %v1817
      %1819 = vmatmul.f32.gmra.mxu0 %v1818
      %v1820 = vpop.f32.mrf.mxu0
      %v1821 = vadd.f32 %v1596, %v1820
      %v1822 = vand.u32 %v1034, 4294901760
      %v1823 = vsub.f32 %v1034, %v1822
      %1824 = vmatmul.f32.gmra.mxu0 %v1823
      %v1825 = vpop.f32.mrf.mxu0
      %v1826 = vadd.f32 %v1600, %v1825
      %v1827 = vand.u32 %v1035, 4294901760
      %v1828 = vsub.f32 %v1035, %v1827
      %1829 = vmatmul.f32.gmra.mxu0 %v1828
      %v1830 = vpop.f32.mrf.mxu0
      %v1831 = vadd.f32 %v1604, %v1830
      %v1832 = vand.u32 %v1036, 4294901760
      %v1833 = vsub.f32 %v1036, %v1832
      %1834 = vmatmul.f32.gmra.mxu0 %v1833
      %v1835 = vpop.f32.mrf.mxu0
      %v1836 = vadd.f32 %v1608, %v1835
      %v1837 = vand.u32 %v1037, 4294901760
      %v1838 = vsub.f32 %v1037, %v1837
      %1839 = vmatmul.f32.gmra.mxu0 %v1838
      %v1840 = vpop.f32.mrf.mxu0
      %v1841 = vadd.f32 %v1612, %v1840
      %v1842 = vand.u32 %v1038, 4294901760
      %v1843 = vsub.f32 %v1038, %v1842
      %1844 = vmatmul.f32.gmra.mxu0 %v1843
      %v1845 = vpop.f32.mrf.mxu0
      %v1846 = vadd.f32 %v1616, %v1845
      %v1847 = vand.u32 %v1039, 4294901760
      %v1848 = vsub.f32 %v1039, %v1847
      %1849 = vmatmul.f32.gmra.mxu0 %v1848
      %v1850 = vpop.f32.mrf.mxu0
      %v1851 = vadd.f32 %v1620, %v1850
      %v1852 = vand.u32 %v1040, 4294901760
      %v1853 = vsub.f32 %v1040, %v1852
      %1854 = vmatmul.f32.gmra.mxu0 %v1853
      %v1855 = vpop.f32.mrf.mxu0
      %v1856 = vadd.f32 %v1624, %v1855
      %v1857 = vand.u32 %v1041, 4294901760
      %v1858 = vsub.f32 %v1041, %v1857
      %1859 = vmatmul.f32.gmra.mxu0 %v1858
      %v1860 = vpop.f32.mrf.mxu0
      %v1861 = vadd.f32 %v1628, %v1860
      %v1862 = vand.u32 %v1042, 4294901760
      %v1863 = vsub.f32 %v1042, %v1862
      %1864 = vmatmul.f32.gmra.mxu0 %v1863
      %v1865 = vpop.f32.mrf.mxu0
      %v1866 = vadd.f32 %v1632, %v1865
      %v1867 = vand.u32 %v1043, 4294901760
      %v1868 = vsub.f32 %v1043, %v1867
      %1869 = vmatmul.f32.gmra.mxu0 %v1868
      %v1870 = vpop.f32.mrf.mxu0
      %v1871 = vadd.f32 %v1636, %v1870
      %v1872 = vand.u32 %v1044, 4294901760
      %v1873 = vsub.f32 %v1044, %v1872
      %1874 = vmatmul.f32.gmra.mxu0 %v1873
      %v1875 = vpop.f32.mrf.mxu0
      %v1876 = vadd.f32 %v1640, %v1875
      %v1877 = vand.u32 %v1045, 4294901760
      %v1878 = vsub.f32 %v1045, %v1877
      %1879 = vmatmul.f32.gmra.mxu0 %v1878
      %v1880 = vpop.f32.mrf.mxu0
      %v1881 = vadd.f32 %v1644, %v1880
      %v1882 = vand.u32 %v1046, 4294901760
      %v1883 = vsub.f32 %v1046, %v1882
      %1884 = vmatmul.f32.gmra.mxu0 %v1883
      %v1885 = vpop.f32.mrf.mxu0
      %v1886 = vadd.f32 %v1648, %v1885
      %v1887 = vand.u32 %v1047, 4294901760
      %v1888 = vsub.f32 %v1047, %v1887
      %1889 = vmatmul.f32.gmra.mxu0 %v1888
      %v1890 = vpop.f32.mrf.mxu0
      %v1891 = vadd.f32 %v1652, %v1890
      %1892 = vdwg.mxu0
      %v1893 = vand.u32 %v1063, 4294901760
      %1894 = vmatpush.msra.mxu0 %v1893
      %v1895 = vand.u32 %v1062, 4294901760
      %1896 = vmatpush.msra.mxu0 %v1895
      %v1897 = vand.u32 %v1061, 4294901760
      %1898 = vmatpush.msra.mxu0 %v1897
      %v1899 = vand.u32 %v1060, 4294901760
      %1900 = vmatpush.msra.mxu0 %v1899
      %v1901 = vand.u32 %v1059, 4294901760
      %1902 = vmatpush.msra.mxu0 %v1901
      %v1903 = vand.u32 %v1058, 4294901760
      %1904 = vmatpush.msra.mxu0 %v1903
      %v1905 = vand.u32 %v1057, 4294901760
      %1906 = vmatpush.msra.mxu0 %v1905
      %v1907 = vand.u32 %v1056, 4294901760
      %1908 = vmatpush.msra.mxu0 %v1907
      %v1909 = vand.u32 %v1055, 4294901760
      %1910 = vmatpush.msra.mxu0 %v1909
      %v1911 = vand.u32 %v1054, 4294901760
      %1912 = vmatpush.msra.mxu0 %v1911
      %v1913 = vand.u32 %v1053, 4294901760
      %1914 = vmatpush.msra.mxu0 %v1913
      %v1915 = vand.u32 %v1052, 4294901760
      %1916 = vmatpush.msra.mxu0 %v1915
      %v1917 = vand.u32 %v1051, 4294901760
      %1918 = vmatpush.msra.mxu0 %v1917
      %v1919 = vand.u32 %v1050, 4294901760
      %1920 = vmatpush.msra.mxu0 %v1919
      %v1921 = vand.u32 %v1049, 4294901760
      %1922 = vmatpush.msra.mxu0 %v1921
      %v1923 = vand.u32 %v1048, 4294901760
      %1924 = vmatpush.msra.mxu0 %v1923
      %v1925 = vand.u32 %v1010, 4294901760
      %v1926 = vsub.f32 %v1010, %v1925
      %v1927 = vand.u32 %v1926, 4294901760
      %1928 = vmatmul.f32.gmra.mxu0 %v1927
      %v1929 = vpop.f32.mrf.mxu0
      %v1930 = vadd.f32 %v1706, %v1929
      %v1931 = vand.u32 %v1011, 4294901760
      %v1932 = vsub.f32 %v1011, %v1931
      %v1933 = vand.u32 %v1932, 4294901760
      %1934 = vmatmul.f32.gmra.mxu0 %v1933
      %v1935 = vpop.f32.mrf.mxu0
      %v1936 = vadd.f32 %v1711, %v1935
      %v1937 = vand.u32 %v1012, 4294901760
      %v1938 = vsub.f32 %v1012, %v1937
      %v1939 = vand.u32 %v1938, 4294901760
      %1940 = vmatmul.f32.gmra.mxu0 %v1939
      %v1941 = vpop.f32.mrf.mxu0
      %v1942 = vadd.f32 %v1716, %v1941
      %v1943 = vand.u32 %v1013, 4294901760
      %v1944 = vsub.f32 %v1013, %v1943
      %v1945 = vand.u32 %v1944, 4294901760
      %1946 = vmatmul.f32.gmra.mxu0 %v1945
      %v1947 = vpop.f32.mrf.mxu0
      %v1948 = vadd.f32 %v1721, %v1947
      %v1949 = vand.u32 %v1014, 4294901760
      %v1950 = vsub.f32 %v1014, %v1949
      %v1951 = vand.u32 %v1950, 4294901760
      %1952 = vmatmul.f32.gmra.mxu0 %v1951
      %v1953 = vpop.f32.mrf.mxu0
      %v1954 = vadd.f32 %v1726, %v1953
      %v1955 = vand.u32 %v1015, 4294901760
      %v1956 = vsub.f32 %v1015, %v1955
      %v1957 = vand.u32 %v1956, 4294901760
      %1958 = vmatmul.f32.gmra.mxu0 %v1957
      %v1959 = vpop.f32.mrf.mxu0
      %v1960 = vadd.f32 %v1731, %v1959
      %v1961 = vand.u32 %v1016, 4294901760
      %v1962 = vsub.f32 %v1016, %v1961
      %v1963 = vand.u32 %v1962, 4294901760
      %1964 = vmatmul.f32.gmra.mxu0 %v1963
      %v1965 = vpop.f32.mrf.mxu0
      %v1966 = vadd.f32 %v1736, %v1965
      %v1967 = vand.u32 %v1017, 4294901760
      %v1968 = vsub.f32 %v1017, %v1967
      %v1969 = vand.u32 %v1968, 4294901760
      %1970 = vmatmul.f32.gmra.mxu0 %v1969
      %v1971 = vpop.f32.mrf.mxu0
      %v1972 = vadd.f32 %v1741, %v1971
      %v1973 = vand.u32 %v1018, 4294901760
      %v1974 = vsub.f32 %v1018, %v1973
      %v1975 = vand.u32 %v1974, 4294901760
      %1976 = vmatmul.f32.gmra.mxu0 %v1975
      %v1977 = vpop.f32.mrf.mxu0
      %v1978 = vadd.f32 %v1746, %v1977
      %v1979 = vand.u32 %v1019, 4294901760
      %v1980 = vsub.f32 %v1019, %v1979
      %v1981 = vand.u32 %v1980, 4294901760
      %1982 = vmatmul.f32.gmra.mxu0 %v1981
      %v1983 = vpop.f32.mrf.mxu0
      %v1984 = vadd.f32 %v1751, %v1983
      %v1985 = vand.u32 %v1020, 4294901760
      %v1986 = vsub.f32 %v1020, %v1985
      %v1987 = vand.u32 %v1986, 4294901760
      %1988 = vmatmul.f32.gmra.mxu0 %v1987
      %v1989 = vpop.f32.mrf.mxu0
      %v1990 = vadd.f32 %v1756, %v1989
      %v1991 = vand.u32 %v1021, 4294901760
      %v1992 = vsub.f32 %v1021, %v1991
      %v1993 = vand.u32 %v1992, 4294901760
      %1994 = vmatmul.f32.gmra.mxu0 %v1993
      %v1995 = vpop.f32.mrf.mxu0
      %v1996 = vadd.f32 %v1761, %v1995
      %v1997 = vand.u32 %v1022, 4294901760
      %v1998 = vsub.f32 %v1022, %v1997
      %v1999 = vand.u32 %v1998, 4294901760
      %2000 = vmatmul.f32.gmra.mxu0 %v1999
      %v2001 = vpop.f32.mrf.mxu0
      %v2002 = vadd.f32 %v1766, %v2001
      %v2003 = vand.u32 %v1023, 4294901760
      %v2004 = vsub.f32 %v1023, %v2003
      %v2005 = vand.u32 %v2004, 4294901760
      %2006 = vmatmul.f32.gmra.mxu0 %v2005
      %v2007 = vpop.f32.mrf.mxu0
      %v2008 = vadd.f32 %v1771, %v2007
      %v2009 = vand.u32 %v1024, 4294901760
      %v2010 = vsub.f32 %v1024, %v2009
      %v2011 = vand.u32 %v2010, 4294901760
      %2012 = vmatmul.f32.gmra.mxu0 %v2011
      %v2013 = vpop.f32.mrf.mxu0
      %v2014 = vadd.f32 %v1776, %v2013
      %v2015 = vand.u32 %v1025, 4294901760
      %v2016 = vsub.f32 %v1025, %v2015
      %v2017 = vand.u32 %v2016, 4294901760
      %2018 = vmatmul.f32.gmra.mxu0 %v2017
      %v2019 = vpop.f32.mrf.mxu0
      %v2020 = vadd.f32 %v1781, %v2019
      %v2021 = vand.u32 %v1026, 4294901760
      %v2022 = vsub.f32 %v1026, %v2021
      %v2023 = vand.u32 %v2022, 4294901760
      %2024 = vmatmul.f32.gmra.mxu0 %v2023
      %v2025 = vpop.f32.mrf.mxu0
      %v2026 = vadd.f32 %v1786, %v2025
      %v2027 = vand.u32 %v1027, 4294901760
      %v2028 = vsub.f32 %v1027, %v2027
      %v2029 = vand.u32 %v2028, 4294901760
      %2030 = vmatmul.f32.gmra.mxu0 %v2029
      %v2031 = vpop.f32.mrf.mxu0
      %v2032 = vadd.f32 %v1791, %v2031
      %v2033 = vand.u32 %v1028, 4294901760
      %v2034 = vsub.f32 %v1028, %v2033
      %v2035 = vand.u32 %v2034, 4294901760
      %2036 = vmatmul.f32.gmra.mxu0 %v2035
      %v2037 = vpop.f32.mrf.mxu0
      %v2038 = vadd.f32 %v1796, %v2037
      %v2039 = vand.u32 %v1029, 4294901760
      %v2040 = vsub.f32 %v1029, %v2039
      %v2041 = vand.u32 %v2040, 4294901760
      %2042 = vmatmul.f32.gmra.mxu0 %v2041
      %v2043 = vpop.f32.mrf.mxu0
      %v2044 = vadd.f32 %v1801, %v2043
      %v2045 = vand.u32 %v1030, 4294901760
      %v2046 = vsub.f32 %v1030, %v2045
      %v2047 = vand.u32 %v2046, 4294901760
      %2048 = vmatmul.f32.gmra.mxu0 %v2047
      %v2049 = vpop.f32.mrf.mxu0
      %v2050 = vadd.f32 %v1806, %v2049
      %v2051 = vand.u32 %v1031, 4294901760
      %v2052 = vsub.f32 %v1031, %v2051
      %v2053 = vand.u32 %v2052, 4294901760
      %2054 = vmatmul.f32.gmra.mxu0 %v2053
      %v2055 = vpop.f32.mrf.mxu0
      %v2056 = vadd.f32 %v1811, %v2055
      %v2057 = vand.u32 %v1032, 4294901760
      %v2058 = vsub.f32 %v1032, %v2057
      %v2059 = vand.u32 %v2058, 4294901760
      %2060 = vmatmul.f32.gmra.mxu0 %v2059
      %v2061 = vpop.f32.mrf.mxu0
      %v2062 = vadd.f32 %v1816, %v2061
      %v2063 = vand.u32 %v1033, 4294901760
      %v2064 = vsub.f32 %v1033, %v2063
      %v2065 = vand.u32 %v2064, 4294901760
      %2066 = vmatmul.f32.gmra.mxu0 %v2065
      %v2067 = vpop.f32.mrf.mxu0
      %v2068 = vadd.f32 %v1821, %v2067
      %v2069 = vand.u32 %v1034, 4294901760
      %v2070 = vsub.f32 %v1034, %v2069
      %v2071 = vand.u32 %v2070, 4294901760
      %2072 = vmatmul.f32.gmra.mxu0 %v2071
      %v2073 = vpop.f32.mrf.mxu0
      %v2074 = vadd.f32 %v1826, %v2073
      %v2075 = vand.u32 %v1035, 4294901760
      %v2076 = vsub.f32 %v1035, %v2075
      %v2077 = vand.u32 %v2076, 4294901760
      %2078 = vmatmul.f32.gmra.mxu0 %v2077
      %v2079 = vpop.f32.mrf.mxu0
      %v2080 = vadd.f32 %v1831, %v2079
      %v2081 = vand.u32 %v1036, 4294901760
      %v2082 = vsub.f32 %v1036, %v2081
      %v2083 = vand.u32 %v2082, 4294901760
      %2084 = vmatmul.f32.gmra.mxu0 %v2083
      %v2085 = vpop.f32.mrf.mxu0
      %v2086 = vadd.f32 %v1836, %v2085
      %v2087 = vand.u32 %v1037, 4294901760
      %v2088 = vsub.f32 %v1037, %v2087
      %v2089 = vand.u32 %v2088, 4294901760
      %2090 = vmatmul.f32.gmra.mxu0 %v2089
      %v2091 = vpop.f32.mrf.mxu0
      %v2092 = vadd.f32 %v1841, %v2091
      %v2093 = vand.u32 %v1038, 4294901760
      %v2094 = vsub.f32 %v1038, %v2093
      %v2095 = vand.u32 %v2094, 4294901760
      %2096 = vmatmul.f32.gmra.mxu0 %v2095
      %v2097 = vpop.f32.mrf.mxu0
      %v2098 = vadd.f32 %v1846, %v2097
      %v2099 = vand.u32 %v1039, 4294901760
      %v2100 = vsub.f32 %v1039, %v2099
      %v2101 = vand.u32 %v2100, 4294901760
      %2102 = vmatmul.f32.gmra.mxu0 %v2101
      %v2103 = vpop.f32.mrf.mxu0
      %v2104 = vadd.f32 %v1851, %v2103
      %v2105 = vand.u32 %v1040, 4294901760
      %v2106 = vsub.f32 %v1040, %v2105
      %v2107 = vand.u32 %v2106, 4294901760
      %2108 = vmatmul.f32.gmra.mxu0 %v2107
      %v2109 = vpop.f32.mrf.mxu0
      %v2110 = vadd.f32 %v1856, %v2109
      %v2111 = vand.u32 %v1041, 4294901760
      %v2112 = vsub.f32 %v1041, %v2111
      %v2113 = vand.u32 %v2112, 4294901760
      %2114 = vmatmul.f32.gmra.mxu0 %v2113
      %v2115 = vpop.f32.mrf.mxu0
      %v2116 = vadd.f32 %v1861, %v2115
      %v2117 = vand.u32 %v1042, 4294901760
      %v2118 = vsub.f32 %v1042, %v2117
      %v2119 = vand.u32 %v2118, 4294901760
      %2120 = vmatmul.f32.gmra.mxu0 %v2119
      %v2121 = vpop.f32.mrf.mxu0
      %v2122 = vadd.f32 %v1866, %v2121
      %v2123 = vand.u32 %v1043, 4294901760
      %v2124 = vsub.f32 %v1043, %v2123
      %v2125 = vand.u32 %v2124, 4294901760
      %2126 = vmatmul.f32.gmra.mxu0 %v2125
      %v2127 = vpop.f32.mrf.mxu0
      %v2128 = vadd.f32 %v1871, %v2127
      %v2129 = vand.u32 %v1044, 4294901760
      %v2130 = vsub.f32 %v1044, %v2129
      %v2131 = vand.u32 %v2130, 4294901760
      %2132 = vmatmul.f32.gmra.mxu0 %v2131
      %v2133 = vpop.f32.mrf.mxu0
      %v2134 = vadd.f32 %v1876, %v2133
      %v2135 = vand.u32 %v1045, 4294901760
      %v2136 = vsub.f32 %v1045, %v2135
      %v2137 = vand.u32 %v2136, 4294901760
      %2138 = vmatmul.f32.gmra.mxu0 %v2137
      %v2139 = vpop.f32.mrf.mxu0
      %v2140 = vadd.f32 %v1881, %v2139
      %v2141 = vand.u32 %v1046, 4294901760
      %v2142 = vsub.f32 %v1046, %v2141
      %v2143 = vand.u32 %v2142, 4294901760
      %2144 = vmatmul.f32.gmra.mxu0 %v2143
      %v2145 = vpop.f32.mrf.mxu0
      %v2146 = vadd.f32 %v1886, %v2145
      %v2147 = vand.u32 %v1047, 4294901760
      %v2148 = vsub.f32 %v1047, %v2147
      %v2149 = vand.u32 %v2148, 4294901760
      %2150 = vmatmul.f32.gmra.mxu0 %v2149
      %v2151 = vpop.f32.mrf.mxu0
      %v2152 = vadd.f32 %v1891, %v2151
      %2153 = vdwg.mxu0
      %v2154 = vand.u32 %v1063, 4294901760
      %v2155 = vsub.f32 %v1063, %v2154
      %v2156 = vand.u32 %v2155, 4294901760
      %2157 = vmatpush.msra.mxu0 %v2156
      %v2158 = vand.u32 %v1062, 4294901760
      %v2159 = vsub.f32 %v1062, %v2158
      %v2160 = vand.u32 %v2159, 4294901760
      %2161 = vmatpush.msra.mxu0 %v2160
      %v2162 = vand.u32 %v1061, 4294901760
      %v2163 = vsub.f32 %v1061, %v2162
      %v2164 = vand.u32 %v2163, 4294901760
      %2165 = vmatpush.msra.mxu0 %v2164
      %v2166 = vand.u32 %v1060, 4294901760
      %v2167 = vsub.f32 %v1060, %v2166
      %v2168 = vand.u32 %v2167, 4294901760
      %2169 = vmatpush.msra.mxu0 %v2168
      %v2170 = vand.u32 %v1059, 4294901760
      %v2171 = vsub.f32 %v1059, %v2170
      %v2172 = vand.u32 %v2171, 4294901760
      %2173 = vmatpush.msra.mxu0 %v2172
      %v2174 = vand.u32 %v1058, 4294901760
      %v2175 = vsub.f32 %v1058, %v2174
      %v2176 = vand.u32 %v2175, 4294901760
      %2177 = vmatpush.msra.mxu0 %v2176
      %v2178 = vand.u32 %v1057, 4294901760
      %v2179 = vsub.f32 %v1057, %v2178
      %v2180 = vand.u32 %v2179, 4294901760
      %2181 = vmatpush.msra.mxu0 %v2180
      %v2182 = vand.u32 %v1056, 4294901760
      %v2183 = vsub.f32 %v1056, %v2182
      %v2184 = vand.u32 %v2183, 4294901760
      %2185 = vmatpush.msra.mxu0 %v2184
      %v2186 = vand.u32 %v1055, 4294901760
      %v2187 = vsub.f32 %v1055, %v2186
      %v2188 = vand.u32 %v2187, 4294901760
      %2189 = vmatpush.msra.mxu0 %v2188
      %v2190 = vand.u32 %v1054, 4294901760
      %v2191 = vsub.f32 %v1054, %v2190
      %v2192 = vand.u32 %v2191, 4294901760
      %2193 = vmatpush.msra.mxu0 %v2192
      %v2194 = vand.u32 %v1053, 4294901760
      %v2195 = vsub.f32 %v1053, %v2194
      %v2196 = vand.u32 %v2195, 4294901760
      %2197 = vmatpush.msra.mxu0 %v2196
      %v2198 = vand.u32 %v1052, 4294901760
      %v2199 = vsub.f32 %v1052, %v2198
      %v2200 = vand.u32 %v2199, 4294901760
      %2201 = vmatpush.msra.mxu0 %v2200
      %v2202 = vand.u32 %v1051, 4294901760
      %v2203 = vsub.f32 %v1051, %v2202
      %v2204 = vand.u32 %v2203, 4294901760
      %2205 = vmatpush.msra.mxu0 %v2204
      %v2206 = vand.u32 %v1050, 4294901760
      %v2207 = vsub.f32 %v1050, %v2206
      %v2208 = vand.u32 %v2207, 4294901760
      %2209 = vmatpush.msra.mxu0 %v2208
      %v2210 = vand.u32 %v1049, 4294901760
      %v2211 = vsub.f32 %v1049, %v2210
      %v2212 = vand.u32 %v2211, 4294901760
      %2213 = vmatpush.msra.mxu0 %v2212
      %v2214 = vand.u32 %v1048, 4294901760
      %v2215 = vsub.f32 %v1048, %v2214
      %v2216 = vand.u32 %v2215, 4294901760
      %2217 = vmatpush.msra.mxu0 %v2216
      %v2218 = vand.u32 %v1010, 4294901760
      %2219 = vmatmul.f32.gmra.mxu0 %v2218
      %v2220 = vpop.f32.mrf.mxu0
      %v2221 = vadd.f32 %v1930, %v2220
      %v2222 = vand.u32 %v1011, 4294901760
      %2223 = vmatmul.f32.gmra.mxu0 %v2222
      %v2224 = vpop.f32.mrf.mxu0
      %v2225 = vadd.f32 %v1936, %v2224
      %v2226 = vand.u32 %v1012, 4294901760
      %2227 = vmatmul.f32.gmra.mxu0 %v2226
      %v2228 = vpop.f32.mrf.mxu0
      %v2229 = vadd.f32 %v1942, %v2228
      %v2230 = vand.u32 %v1013, 4294901760
      %2231 = vmatmul.f32.gmra.mxu0 %v2230
      %v2232 = vpop.f32.mrf.mxu0
      %v2233 = vadd.f32 %v1948, %v2232
      %v2234 = vand.u32 %v1014, 4294901760
      %2235 = vmatmul.f32.gmra.mxu0 %v2234
      %v2236 = vpop.f32.mrf.mxu0
      %v2237 = vadd.f32 %v1954, %v2236
      %v2238 = vand.u32 %v1015, 4294901760
      %2239 = vmatmul.f32.gmra.mxu0 %v2238
      %v2240 = vpop.f32.mrf.mxu0
      %v2241 = vadd.f32 %v1960, %v2240
      %v2242 = vand.u32 %v1016, 4294901760
      %2243 = vmatmul.f32.gmra.mxu0 %v2242
      %v2244 = vpop.f32.mrf.mxu0
      %v2245 = vadd.f32 %v1966, %v2244
      %v2246 = vand.u32 %v1017, 4294901760
      %2247 = vmatmul.f32.gmra.mxu0 %v2246
      %v2248 = vpop.f32.mrf.mxu0
      %v2249 = vadd.f32 %v1972, %v2248
      %v2250 = vand.u32 %v1018, 4294901760
      %2251 = vmatmul.f32.gmra.mxu0 %v2250
      %v2252 = vpop.f32.mrf.mxu0
      %v2253 = vadd.f32 %v1978, %v2252
      %v2254 = vand.u32 %v1019, 4294901760
      %2255 = vmatmul.f32.gmra.mxu0 %v2254
      %v2256 = vpop.f32.mrf.mxu0
      %v2257 = vadd.f32 %v1984, %v2256
      %v2258 = vand.u32 %v1020, 4294901760
      %2259 = vmatmul.f32.gmra.mxu0 %v2258
      %v2260 = vpop.f32.mrf.mxu0
      %v2261 = vadd.f32 %v1990, %v2260
      %v2262 = vand.u32 %v1021, 4294901760
      %2263 = vmatmul.f32.gmra.mxu0 %v2262
      %v2264 = vpop.f32.mrf.mxu0
      %v2265 = vadd.f32 %v1996, %v2264
      %v2266 = vand.u32 %v1022, 4294901760
      %2267 = vmatmul.f32.gmra.mxu0 %v2266
      %v2268 = vpop.f32.mrf.mxu0
      %v2269 = vadd.f32 %v2002, %v2268
      %v2270 = vand.u32 %v1023, 4294901760
      %2271 = vmatmul.f32.gmra.mxu0 %v2270
      %v2272 = vpop.f32.mrf.mxu0
      %v2273 = vadd.f32 %v2008, %v2272
      %v2274 = vand.u32 %v1024, 4294901760
      %2275 = vmatmul.f32.gmra.mxu0 %v2274
      %v2276 = vpop.f32.mrf.mxu0
      %v2277 = vadd.f32 %v2014, %v2276
      %v2278 = vand.u32 %v1025, 4294901760
      %2279 = vmatmul.f32.gmra.mxu0 %v2278
      %v2280 = vpop.f32.mrf.mxu0
      %v2281 = vadd.f32 %v2020, %v2280
      %v2282 = vand.u32 %v1026, 4294901760
      %2283 = vmatmul.f32.gmra.mxu0 %v2282
      %v2284 = vpop.f32.mrf.mxu0
      %v2285 = vadd.f32 %v2026, %v2284
      %v2286 = vand.u32 %v1027, 4294901760
      %2287 = vmatmul.f32.gmra.mxu0 %v2286
      %v2288 = vpop.f32.mrf.mxu0
      %v2289 = vadd.f32 %v2032, %v2288
      %v2290 = vand.u32 %v1028, 4294901760
      %2291 = vmatmul.f32.gmra.mxu0 %v2290
      %v2292 = vpop.f32.mrf.mxu0
      %v2293 = vadd.f32 %v2038, %v2292
      %v2294 = vand.u32 %v1029, 4294901760
      %2295 = vmatmul.f32.gmra.mxu0 %v2294
      %v2296 = vpop.f32.mrf.mxu0
      %v2297 = vadd.f32 %v2044, %v2296
      %v2298 = vand.u32 %v1030, 4294901760
      %2299 = vmatmul.f32.gmra.mxu0 %v2298
      %v2300 = vpop.f32.mrf.mxu0
      %v2301 = vadd.f32 %v2050, %v2300
      %v2302 = vand.u32 %v1031, 4294901760
      %2303 = vmatmul.f32.gmra.mxu0 %v2302
      %v2304 = vpop.f32.mrf.mxu0
      %v2305 = vadd.f32 %v2056, %v2304
      %v2306 = vand.u32 %v1032, 4294901760
      %2307 = vmatmul.f32.gmra.mxu0 %v2306
      %v2308 = vpop.f32.mrf.mxu0
      %v2309 = vadd.f32 %v2062, %v2308
      %v2310 = vand.u32 %v1033, 4294901760
      %2311 = vmatmul.f32.gmra.mxu0 %v2310
      %v2312 = vpop.f32.mrf.mxu0
      %v2313 = vadd.f32 %v2068, %v2312
      %v2314 = vand.u32 %v1034, 4294901760
      %2315 = vmatmul.f32.gmra.mxu0 %v2314
      %v2316 = vpop.f32.mrf.mxu0
      %v2317 = vadd.f32 %v2074, %v2316
      %v2318 = vand.u32 %v1035, 4294901760
      %2319 = vmatmul.f32.gmra.mxu0 %v2318
      %v2320 = vpop.f32.mrf.mxu0
      %v2321 = vadd.f32 %v2080, %v2320
      %v2322 = vand.u32 %v1036, 4294901760
      %2323 = vmatmul.f32.gmra.mxu0 %v2322
      %v2324 = vpop.f32.mrf.mxu0
      %v2325 = vadd.f32 %v2086, %v2324
      %v2326 = vand.u32 %v1037, 4294901760
      %2327 = vmatmul.f32.gmra.mxu0 %v2326
      %v2328 = vpop.f32.mrf.mxu0
      %v2329 = vadd.f32 %v2092, %v2328
      %v2330 = vand.u32 %v1038, 4294901760
      %2331 = vmatmul.f32.gmra.mxu0 %v2330
      %v2332 = vpop.f32.mrf.mxu0
      %v2333 = vadd.f32 %v2098, %v2332
      %v2334 = vand.u32 %v1039, 4294901760
      %2335 = vmatmul.f32.gmra.mxu0 %v2334
      %v2336 = vpop.f32.mrf.mxu0
      %v2337 = vadd.f32 %v2104, %v2336
      %v2338 = vand.u32 %v1040, 4294901760
      %2339 = vmatmul.f32.gmra.mxu0 %v2338
      %v2340 = vpop.f32.mrf.mxu0
      %v2341 = vadd.f32 %v2110, %v2340
      %v2342 = vand.u32 %v1041, 4294901760
      %2343 = vmatmul.f32.gmra.mxu0 %v2342
      %v2344 = vpop.f32.mrf.mxu0
      %v2345 = vadd.f32 %v2116, %v2344
      %v2346 = vand.u32 %v1042, 4294901760
      %2347 = vmatmul.f32.gmra.mxu0 %v2346
      %v2348 = vpop.f32.mrf.mxu0
      %v2349 = vadd.f32 %v2122, %v2348
      %v2350 = vand.u32 %v1043, 4294901760
      %2351 = vmatmul.f32.gmra.mxu0 %v2350
      %v2352 = vpop.f32.mrf.mxu0
      %v2353 = vadd.f32 %v2128, %v2352
      %v2354 = vand.u32 %v1044, 4294901760
      %2355 = vmatmul.f32.gmra.mxu0 %v2354
      %v2356 = vpop.f32.mrf.mxu0
      %v2357 = vadd.f32 %v2134, %v2356
      %v2358 = vand.u32 %v1045, 4294901760
      %2359 = vmatmul.f32.gmra.mxu0 %v2358
      %v2360 = vpop.f32.mrf.mxu0
      %v2361 = vadd.f32 %v2140, %v2360
      %v2362 = vand.u32 %v1046, 4294901760
      %2363 = vmatmul.f32.gmra.mxu0 %v2362
      %v2364 = vpop.f32.mrf.mxu0
      %v2365 = vadd.f32 %v2146, %v2364
      %v2366 = vand.u32 %v1047, 4294901760
      %2367 = vmatmul.f32.gmra.mxu0 %v2366
      %v2368 = vpop.f32.mrf.mxu0
      %v2369 = vadd.f32 %v2152, %v2368
      %2370 = vdwg.mxu0
      %v2371 = vand.u32 %v1063, 4294901760
      %2372 = vmatpush.msra.mxu0 %v2371
      %v2373 = vand.u32 %v1062, 4294901760
      %2374 = vmatpush.msra.mxu0 %v2373
      %v2375 = vand.u32 %v1061, 4294901760
      %2376 = vmatpush.msra.mxu0 %v2375
      %v2377 = vand.u32 %v1060, 4294901760
      %2378 = vmatpush.msra.mxu0 %v2377
      %v2379 = vand.u32 %v1059, 4294901760
      %2380 = vmatpush.msra.mxu0 %v2379
      %v2381 = vand.u32 %v1058, 4294901760
      %2382 = vmatpush.msra.mxu0 %v2381
      %v2383 = vand.u32 %v1057, 4294901760
      %2384 = vmatpush.msra.mxu0 %v2383
      %v2385 = vand.u32 %v1056, 4294901760
      %2386 = vmatpush.msra.mxu0 %v2385
      %v2387 = vand.u32 %v1055, 4294901760
      %2388 = vmatpush.msra.mxu0 %v2387
      %v2389 = vand.u32 %v1054, 4294901760
      %2390 = vmatpush.msra.mxu0 %v2389
      %v2391 = vand.u32 %v1053, 4294901760
      %2392 = vmatpush.msra.mxu0 %v2391
      %v2393 = vand.u32 %v1052, 4294901760
      %2394 = vmatpush.msra.mxu0 %v2393
      %v2395 = vand.u32 %v1051, 4294901760
      %2396 = vmatpush.msra.mxu0 %v2395
      %v2397 = vand.u32 %v1050, 4294901760
      %2398 = vmatpush.msra.mxu0 %v2397
      %v2399 = vand.u32 %v1049, 4294901760
      %2400 = vmatpush.msra.mxu0 %v2399
      %v2401 = vand.u32 %v1048, 4294901760
      %2402 = vmatpush.msra.mxu0 %v2401
      %v2403 = vand.u32 %v1010, 4294901760
      %2404 = vmatmul.f32.gmra.mxu0 %v2403
      %v2405 = vpop.f32.mrf.mxu0
      %v2406 = vadd.f32 %v2221, %v2405
      %v2407 = vand.u32 %v1011, 4294901760
      %2408 = vmatmul.f32.gmra.mxu0 %v2407
      %v2409 = vpop.f32.mrf.mxu0
      %v2410 = vadd.f32 %v2225, %v2409
      %v2411 = vand.u32 %v1012, 4294901760
      %2412 = vmatmul.f32.gmra.mxu0 %v2411
      %v2413 = vpop.f32.mrf.mxu0
      %v2414 = vadd.f32 %v2229, %v2413
      %v2415 = vand.u32 %v1013, 4294901760
      %2416 = vmatmul.f32.gmra.mxu0 %v2415
      %v2417 = vpop.f32.mrf.mxu0
      %v2418 = vadd.f32 %v2233, %v2417
      %v2419 = vand.u32 %v1014, 4294901760
      %2420 = vmatmul.f32.gmra.mxu0 %v2419
      %v2421 = vpop.f32.mrf.mxu0
      %v2422 = vadd.f32 %v2237, %v2421
      %v2423 = vand.u32 %v1015, 4294901760
      %2424 = vmatmul.f32.gmra.mxu0 %v2423
      %v2425 = vpop.f32.mrf.mxu0
      %v2426 = vadd.f32 %v2241, %v2425
      %v2427 = vand.u32 %v1016, 4294901760
      %2428 = vmatmul.f32.gmra.mxu0 %v2427
      %v2429 = vpop.f32.mrf.mxu0
      %v2430 = vadd.f32 %v2245, %v2429
      %v2431 = vand.u32 %v1017, 4294901760
      %2432 = vmatmul.f32.gmra.mxu0 %v2431
      %v2433 = vpop.f32.mrf.mxu0
      %v2434 = vadd.f32 %v2249, %v2433
      %v2435 = vand.u32 %v1018, 4294901760
      %2436 = vmatmul.f32.gmra.mxu0 %v2435
      %v2437 = vpop.f32.mrf.mxu0
      %v2438 = vadd.f32 %v2253, %v2437
      %v2439 = vand.u32 %v1019, 4294901760
      %2440 = vmatmul.f32.gmra.mxu0 %v2439
      %v2441 = vpop.f32.mrf.mxu0
      %v2442 = vadd.f32 %v2257, %v2441
      %v2443 = vand.u32 %v1020, 4294901760
      %2444 = vmatmul.f32.gmra.mxu0 %v2443
      %v2445 = vpop.f32.mrf.mxu0
      %v2446 = vadd.f32 %v2261, %v2445
      %v2447 = vand.u32 %v1021, 4294901760
      %2448 = vmatmul.f32.gmra.mxu0 %v2447
      %v2449 = vpop.f32.mrf.mxu0
      %v2450 = vadd.f32 %v2265, %v2449
      %v2451 = vand.u32 %v1022, 4294901760
      %2452 = vmatmul.f32.gmra.mxu0 %v2451
      %v2453 = vpop.f32.mrf.mxu0
      %v2454 = vadd.f32 %v2269, %v2453
      %v2455 = vand.u32 %v1023, 4294901760
      %2456 = vmatmul.f32.gmra.mxu0 %v2455
      %v2457 = vpop.f32.mrf.mxu0
      %v2458 = vadd.f32 %v2273, %v2457
      %v2459 = vand.u32 %v1024, 4294901760
      %2460 = vmatmul.f32.gmra.mxu0 %v2459
      %v2461 = vpop.f32.mrf.mxu0
      %v2462 = vadd.f32 %v2277, %v2461
      %v2463 = vand.u32 %v1025, 4294901760
      %2464 = vmatmul.f32.gmra.mxu0 %v2463
      %v2465 = vpop.f32.mrf.mxu0
      %v2466 = vadd.f32 %v2281, %v2465
      %v2467 = vand.u32 %v1026, 4294901760
      %2468 = vmatmul.f32.gmra.mxu0 %v2467
      %v2469 = vpop.f32.mrf.mxu0
      %v2470 = vadd.f32 %v2285, %v2469
      %v2471 = vand.u32 %v1027, 4294901760
      %2472 = vmatmul.f32.gmra.mxu0 %v2471
      %v2473 = vpop.f32.mrf.mxu0
      %v2474 = vadd.f32 %v2289, %v2473
      %v2475 = vand.u32 %v1028, 4294901760
      %2476 = vmatmul.f32.gmra.mxu0 %v2475
      %v2477 = vpop.f32.mrf.mxu0
      %v2478 = vadd.f32 %v2293, %v2477
      %v2479 = vand.u32 %v1029, 4294901760
      %2480 = vmatmul.f32.gmra.mxu0 %v2479
      %v2481 = vpop.f32.mrf.mxu0
      %v2482 = vadd.f32 %v2297, %v2481
      %v2483 = vand.u32 %v1030, 4294901760
      %2484 = vmatmul.f32.gmra.mxu0 %v2483
      %v2485 = vpop.f32.mrf.mxu0
      %v2486 = vadd.f32 %v2301, %v2485
      %v2487 = vand.u32 %v1031, 4294901760
      %2488 = vmatmul.f32.gmra.mxu0 %v2487
      %v2489 = vpop.f32.mrf.mxu0
      %v2490 = vadd.f32 %v2305, %v2489
      %v2491 = vand.u32 %v1032, 4294901760
      %2492 = vmatmul.f32.gmra.mxu0 %v2491
      %v2493 = vpop.f32.mrf.mxu0
      %v2494 = vadd.f32 %v2309, %v2493
      %v2495 = vand.u32 %v1033, 4294901760
      %2496 = vmatmul.f32.gmra.mxu0 %v2495
      %v2497 = vpop.f32.mrf.mxu0
      %v2498 = vadd.f32 %v2313, %v2497
      %v2499 = vand.u32 %v1034, 4294901760
      %2500 = vmatmul.f32.gmra.mxu0 %v2499
      %v2501 = vpop.f32.mrf.mxu0
      %v2502 = vadd.f32 %v2317, %v2501
      %v2503 = vand.u32 %v1035, 4294901760
      %2504 = vmatmul.f32.gmra.mxu0 %v2503
      %v2505 = vpop.f32.mrf.mxu0
      %v2506 = vadd.f32 %v2321, %v2505
      %v2507 = vand.u32 %v1036, 4294901760
      %2508 = vmatmul.f32.gmra.mxu0 %v2507
      %v2509 = vpop.f32.mrf.mxu0
      %v2510 = vadd.f32 %v2325, %v2509
      %v2511 = vand.u32 %v1037, 4294901760
      %2512 = vmatmul.f32.gmra.mxu0 %v2511
      %v2513 = vpop.f32.mrf.mxu0
      %v2514 = vadd.f32 %v2329, %v2513
      %v2515 = vand.u32 %v1038, 4294901760
      %2516 = vmatmul.f32.gmra.mxu0 %v2515
      %v2517 = vpop.f32.mrf.mxu0
      %v2518 = vadd.f32 %v2333, %v2517
      %v2519 = vand.u32 %v1039, 4294901760
      %2520 = vmatmul.f32.gmra.mxu0 %v2519
      %v2521 = vpop.f32.mrf.mxu0
      %v2522 = vadd.f32 %v2337, %v2521
      %v2523 = vand.u32 %v1040, 4294901760
      %2524 = vmatmul.f32.gmra.mxu0 %v2523
      %v2525 = vpop.f32.mrf.mxu0
      %v2526 = vadd.f32 %v2341, %v2525
      %v2527 = vand.u32 %v1041, 4294901760
      %2528 = vmatmul.f32.gmra.mxu0 %v2527
      %v2529 = vpop.f32.mrf.mxu0
      %v2530 = vadd.f32 %v2345, %v2529
      %v2531 = vand.u32 %v1042, 4294901760
      %2532 = vmatmul.f32.gmra.mxu0 %v2531
      %v2533 = vpop.f32.mrf.mxu0
      %v2534 = vadd.f32 %v2349, %v2533
      %v2535 = vand.u32 %v1043, 4294901760
      %2536 = vmatmul.f32.gmra.mxu0 %v2535
      %v2537 = vpop.f32.mrf.mxu0
      %v2538 = vadd.f32 %v2353, %v2537
      %v2539 = vand.u32 %v1044, 4294901760
      %2540 = vmatmul.f32.gmra.mxu0 %v2539
      %v2541 = vpop.f32.mrf.mxu0
      %v2542 = vadd.f32 %v2357, %v2541
      %v2543 = vand.u32 %v1045, 4294901760
      %2544 = vmatmul.f32.gmra.mxu0 %v2543
      %v2545 = vpop.f32.mrf.mxu0
      %v2546 = vadd.f32 %v2361, %v2545
      %v2547 = vand.u32 %v1046, 4294901760
      %2548 = vmatmul.f32.gmra.mxu0 %v2547
      %v2549 = vpop.f32.mrf.mxu0
      %v2550 = vadd.f32 %v2365, %v2549
      %v2551 = vand.u32 %v1047, 4294901760
      %2552 = vmatmul.f32.gmra.mxu0 %v2551
      %v2553 = vpop.f32.mrf.mxu0
      %v2554 = vadd.f32 %v2369, %v2553
      %2555 = vdwg.mxu0
      %v2556 = vmax.f32 %v2406, 0.0
      %v2557 = vmax.f32 %v2410, 0.0
      %v2558 = vmax.f32 %v2414, 0.0
      %v2559 = vmax.f32 %v2418, 0.0
      %v2560 = vmax.f32 %v2422, 0.0
      %v2561 = vmax.f32 %v2426, 0.0
      %v2562 = vmax.f32 %v2430, 0.0
      %v2563 = vmax.f32 %v2434, 0.0
      %v2564 = vmax.f32 %v2438, 0.0
      %v2565 = vmax.f32 %v2442, 0.0
      %v2566 = vmax.f32 %v2446, 0.0
      %v2567 = vmax.f32 %v2450, 0.0
      %v2568 = vmax.f32 %v2454, 0.0
      %v2569 = vmax.f32 %v2458, 0.0
      %v2570 = vmax.f32 %v2462, 0.0
      %v2571 = vmax.f32 %v2466, 0.0
      %v2572 = vmax.f32 %v2470, 0.0
      %v2573 = vmax.f32 %v2474, 0.0
      %v2574 = vmax.f32 %v2478, 0.0
      %v2575 = vmax.f32 %v2482, 0.0
      %v2576 = vmax.f32 %v2486, 0.0
      %v2577 = vmax.f32 %v2490, 0.0
      %v2578 = vmax.f32 %v2494, 0.0
      %v2579 = vmax.f32 %v2498, 0.0
      %v2580 = vmax.f32 %v2502, 0.0
      %v2581 = vmax.f32 %v2506, 0.0
      %v2582 = vmax.f32 %v2510, 0.0
      %v2583 = vmax.f32 %v2514, 0.0
      %v2584 = vmax.f32 %v2518, 0.0
      %v2585 = vmax.f32 %v2522, 0.0
      %v2586 = vmax.f32 %v2526, 0.0
      %v2587 = vmax.f32 %v2530, 0.0
      %v2588 = vmax.f32 %v2534, 0.0
      %v2589 = vmax.f32 %v2538, 0.0
      %v2590 = vmax.f32 %v2542, 0.0
      %v2591 = vmax.f32 %v2546, 0.0
      %v2592 = vmax.f32 %v2550, 0.0
      %v2593 = vmax.f32 %v2554, 0.0
      %v2594 = vld [vmem:[%s5] sm:$0xff]
      %v2595 = vld [vmem:[%s5 + $0x8] sm:$0xff]
      %v2596 = vld [vmem:[%s5 + $0x10] sm:$0xff]
      %v2597 = vld [vmem:[%s5 + $0x18] sm:$0xff]
      %v2598 = vld [vmem:[%s5 + $0x20] sm:$0xff]
      %v2599 = vld [vmem:[%s5 + $0x28] sm:$0xff]
      %v2600 = vld [vmem:[%s5 + $0x30] sm:$0xff]
      %v2601 = vld [vmem:[%s5 + $0x38] sm:$0xff]
      %v2602 = vld [vmem:[%s6] sm:$0x1]
      %v2604 = vperm.slane %v2602, 0
      %vm2606 = vcmask 523264
      %v2608 = vsel %vm2606, %v2556, 0
      %v2611 = vsel %vm2606, %v2557, 0
      %v2614 = vsel %vm2606, %v2558, 0
      %v2617 = vsel %vm2606, %v2559, 0
      %v2620 = vsel %vm2606, %v2560, 0
      %v2623 = vsel %vm2606, %v2561, 0
      %v2626 = vsel %vm2606, %v2562, 0
      %v2629 = vsel %vm2606, %v2563, 0
      %v2632 = vsel %vm2606, %v2564, 0
      %v2635 = vsel %vm2606, %v2565, 0
      %v2638 = vsel %vm2606, %v2566, 0
      %v2641 = vsel %vm2606, %v2567, 0
      %v2644 = vsel %vm2606, %v2568, 0
      %v2647 = vsel %vm2606, %v2569, 0
      %v2650 = vsel %vm2606, %v2570, 0
      %v2653 = vsel %vm2606, %v2571, 0
      %v2656 = vsel %vm2606, %v2572, 0
      %v2659 = vsel %vm2606, %v2573, 0
      %v2662 = vsel %vm2606, %v2574, 0
      %v2665 = vsel %vm2606, %v2575, 0
      %v2668 = vsel %vm2606, %v2576, 0
      %v2671 = vsel %vm2606, %v2577, 0
      %v2674 = vsel %vm2606, %v2578, 0
      %v2677 = vsel %vm2606, %v2579, 0
      %v2680 = vsel %vm2606, %v2580, 0
      %v2683 = vsel %vm2606, %v2581, 0
      %v2686 = vsel %vm2606, %v2582, 0
      %v2689 = vsel %vm2606, %v2583, 0
      %v2692 = vsel %vm2606, %v2584, 0
      %v2695 = vsel %vm2606, %v2585, 0
      %v2698 = vsel %vm2606, %v2586, 0
      %v2701 = vsel %vm2606, %v2587, 0
      %v2704 = vsel %vm2606, %v2588, 0
      %v2707 = vsel %vm2606, %v2589, 0
      %v2710 = vsel %vm2606, %v2590, 0
      %v2713 = vsel %vm2606, %v2591, 0
      %v2716 = vsel %vm2606, %v2592, 0
      %v2719 = vsel %vm2606, %v2593, 0
      %2721 = vmatpush.msra.mxu0 0.0
      %2722 = vmatpush.msra.mxu0 0.0
      %2723 = vmatpush.msra.mxu0 0.0
      %2724 = vmatpush.msra.mxu0 0.0
      %2725 = vmatpush.msra.mxu0 0.0
      %2726 = vmatpush.msra.mxu0 0.0
      %2727 = vmatpush.msra.mxu0 0.0
      %2728 = vmatpush.msra.mxu0 0.0
      %v2729 = vand.u32 %v2601, 4294901760
      %2730 = vmatpush.msra.mxu0 %v2729
      %v2731 = vand.u32 %v2600, 4294901760
      %2732 = vmatpush.msra.mxu0 %v2731
      %v2733 = vand.u32 %v2599, 4294901760
      %2734 = vmatpush.msra.mxu0 %v2733
      %v2735 = vand.u32 %v2598, 4294901760
      %2736 = vmatpush.msra.mxu0 %v2735
      %v2737 = vand.u32 %v2597, 4294901760
      %2738 = vmatpush.msra.mxu0 %v2737
      %v2739 = vand.u32 %v2596, 4294901760
      %2740 = vmatpush.msra.mxu0 %v2739
      %v2741 = vand.u32 %v2595, 4294901760
      %2742 = vmatpush.msra.mxu0 %v2741
      %v2743 = vand.u32 %v2594, 4294901760
      %2744 = vmatpush.msra.mxu0 %v2743
      %v2745 = vand.u32 %v2608, 4294901760
      %v2746 = vsub.f32 %v2608, %v2745
      %v2747 = vand.u32 %v2746, 4294901760
      %v2748 = vsub.f32 %v2746, %v2747
      %v2749 = vand.u32 %v2748, 4294901760
      %2750 = vmatmul.f32.gmra.mxu0 %v2749
      %v2751 = vpop.f32.mrf.mxu0
      %v2752 = vadd.f32 %v2604, %v2751
      %v2753 = vand.u32 %v2611, 4294901760
      %v2754 = vsub.f32 %v2611, %v2753
      %v2755 = vand.u32 %v2754, 4294901760
      %v2756 = vsub.f32 %v2754, %v2755
      %v2757 = vand.u32 %v2756, 4294901760
      %2758 = vmatmul.f32.gmra.mxu0 %v2757
      %v2759 = vpop.f32.mrf.mxu0
      %v2760 = vadd.f32 %v2604, %v2759
      %v2761 = vand.u32 %v2614, 4294901760
      %v2762 = vsub.f32 %v2614, %v2761
      %v2763 = vand.u32 %v2762, 4294901760
      %v2764 = vsub.f32 %v2762, %v2763
      %v2765 = vand.u32 %v2764, 4294901760
      %2766 = vmatmul.f32.gmra.mxu0 %v2765
      %v2767 = vpop.f32.mrf.mxu0
      %v2768 = vadd.f32 %v2604, %v2767
      %v2769 = vand.u32 %v2617, 4294901760
      %v2770 = vsub.f32 %v2617, %v2769
      %v2771 = vand.u32 %v2770, 4294901760
      %v2772 = vsub.f32 %v2770, %v2771
      %v2773 = vand.u32 %v2772, 4294901760
      %2774 = vmatmul.f32.gmra.mxu0 %v2773
      %v2775 = vpop.f32.mrf.mxu0
      %v2776 = vadd.f32 %v2604, %v2775
      %v2777 = vand.u32 %v2620, 4294901760
      %v2778 = vsub.f32 %v2620, %v2777
      %v2779 = vand.u32 %v2778, 4294901760
      %v2780 = vsub.f32 %v2778, %v2779
      %v2781 = vand.u32 %v2780, 4294901760
      %2782 = vmatmul.f32.gmra.mxu0 %v2781
      %v2783 = vpop.f32.mrf.mxu0
      %v2784 = vadd.f32 %v2604, %v2783
      %v2785 = vand.u32 %v2623, 4294901760
      %v2786 = vsub.f32 %v2623, %v2785
      %v2787 = vand.u32 %v2786, 4294901760
      %v2788 = vsub.f32 %v2786, %v2787
      %v2789 = vand.u32 %v2788, 4294901760
      %2790 = vmatmul.f32.gmra.mxu0 %v2789
      %v2791 = vpop.f32.mrf.mxu0
      %v2792 = vadd.f32 %v2604, %v2791
      %v2793 = vand.u32 %v2626, 4294901760
      %v2794 = vsub.f32 %v2626, %v2793
      %v2795 = vand.u32 %v2794, 4294901760
      %v2796 = vsub.f32 %v2794, %v2795
      %v2797 = vand.u32 %v2796, 4294901760
      %2798 = vmatmul.f32.gmra.mxu0 %v2797
      %v2799 = vpop.f32.mrf.mxu0
      %v2800 = vadd.f32 %v2604, %v2799
      %v2801 = vand.u32 %v2629, 4294901760
      %v2802 = vsub.f32 %v2629, %v2801
      %v2803 = vand.u32 %v2802, 4294901760
      %v2804 = vsub.f32 %v2802, %v2803
      %v2805 = vand.u32 %v2804, 4294901760
      %2806 = vmatmul.f32.gmra.mxu0 %v2805
      %v2807 = vpop.f32.mrf.mxu0
      %v2808 = vadd.f32 %v2604, %v2807
      %v2809 = vand.u32 %v2632, 4294901760
      %v2810 = vsub.f32 %v2632, %v2809
      %v2811 = vand.u32 %v2810, 4294901760
      %v2812 = vsub.f32 %v2810, %v2811
      %v2813 = vand.u32 %v2812, 4294901760
      %2814 = vmatmul.f32.gmra.mxu0 %v2813
      %v2815 = vpop.f32.mrf.mxu0
      %v2816 = vadd.f32 %v2604, %v2815
      %v2817 = vand.u32 %v2635, 4294901760
      %v2818 = vsub.f32 %v2635, %v2817
      %v2819 = vand.u32 %v2818, 4294901760
      %v2820 = vsub.f32 %v2818, %v2819
      %v2821 = vand.u32 %v2820, 4294901760
      %2822 = vmatmul.f32.gmra.mxu0 %v2821
      %v2823 = vpop.f32.mrf.mxu0
      %v2824 = vadd.f32 %v2604, %v2823
      %v2825 = vand.u32 %v2638, 4294901760
      %v2826 = vsub.f32 %v2638, %v2825
      %v2827 = vand.u32 %v2826, 4294901760
      %v2828 = vsub.f32 %v2826, %v2827
      %v2829 = vand.u32 %v2828, 4294901760
      %2830 = vmatmul.f32.gmra.mxu0 %v2829
      %v2831 = vpop.f32.mrf.mxu0
      %v2832 = vadd.f32 %v2604, %v2831
      %v2833 = vand.u32 %v2641, 4294901760
      %v2834 = vsub.f32 %v2641, %v2833
      %v2835 = vand.u32 %v2834, 4294901760
      %v2836 = vsub.f32 %v2834, %v2835
      %v2837 = vand.u32 %v2836, 4294901760
      %2838 = vmatmul.f32.gmra.mxu0 %v2837
      %v2839 = vpop.f32.mrf.mxu0
      %v2840 = vadd.f32 %v2604, %v2839
      %v2841 = vand.u32 %v2644, 4294901760
      %v2842 = vsub.f32 %v2644, %v2841
      %v2843 = vand.u32 %v2842, 4294901760
      %v2844 = vsub.f32 %v2842, %v2843
      %v2845 = vand.u32 %v2844, 4294901760
      %2846 = vmatmul.f32.gmra.mxu0 %v2845
      %v2847 = vpop.f32.mrf.mxu0
      %v2848 = vadd.f32 %v2604, %v2847
      %v2849 = vand.u32 %v2647, 4294901760
      %v2850 = vsub.f32 %v2647, %v2849
      %v2851 = vand.u32 %v2850, 4294901760
      %v2852 = vsub.f32 %v2850, %v2851
      %v2853 = vand.u32 %v2852, 4294901760
      %2854 = vmatmul.f32.gmra.mxu0 %v2853
      %v2855 = vpop.f32.mrf.mxu0
      %v2856 = vadd.f32 %v2604, %v2855
      %v2857 = vand.u32 %v2650, 4294901760
      %v2858 = vsub.f32 %v2650, %v2857
      %v2859 = vand.u32 %v2858, 4294901760
      %v2860 = vsub.f32 %v2858, %v2859
      %v2861 = vand.u32 %v2860, 4294901760
      %2862 = vmatmul.f32.gmra.mxu0 %v2861
      %v2863 = vpop.f32.mrf.mxu0
      %v2864 = vadd.f32 %v2604, %v2863
      %v2865 = vand.u32 %v2653, 4294901760
      %v2866 = vsub.f32 %v2653, %v2865
      %v2867 = vand.u32 %v2866, 4294901760
      %v2868 = vsub.f32 %v2866, %v2867
      %v2869 = vand.u32 %v2868, 4294901760
      %2870 = vmatmul.f32.gmra.mxu0 %v2869
      %v2871 = vpop.f32.mrf.mxu0
      %v2872 = vadd.f32 %v2604, %v2871
      %v2873 = vand.u32 %v2656, 4294901760
      %v2874 = vsub.f32 %v2656, %v2873
      %v2875 = vand.u32 %v2874, 4294901760
      %v2876 = vsub.f32 %v2874, %v2875
      %v2877 = vand.u32 %v2876, 4294901760
      %2878 = vmatmul.f32.gmra.mxu0 %v2877
      %v2879 = vpop.f32.mrf.mxu0
      %v2880 = vadd.f32 %v2604, %v2879
      %v2881 = vand.u32 %v2659, 4294901760
      %v2882 = vsub.f32 %v2659, %v2881
      %v2883 = vand.u32 %v2882, 4294901760
      %v2884 = vsub.f32 %v2882, %v2883
      %v2885 = vand.u32 %v2884, 4294901760
      %2886 = vmatmul.f32.gmra.mxu0 %v2885
      %v2887 = vpop.f32.mrf.mxu0
      %v2888 = vadd.f32 %v2604, %v2887
      %v2889 = vand.u32 %v2662, 4294901760
      %v2890 = vsub.f32 %v2662, %v2889
      %v2891 = vand.u32 %v2890, 4294901760
      %v2892 = vsub.f32 %v2890, %v2891
      %v2893 = vand.u32 %v2892, 4294901760
      %2894 = vmatmul.f32.gmra.mxu0 %v2893
      %v2895 = vpop.f32.mrf.mxu0
      %v2896 = vadd.f32 %v2604, %v2895
      %v2897 = vand.u32 %v2665, 4294901760
      %v2898 = vsub.f32 %v2665, %v2897
      %v2899 = vand.u32 %v2898, 4294901760
      %v2900 = vsub.f32 %v2898, %v2899
      %v2901 = vand.u32 %v2900, 4294901760
      %2902 = vmatmul.f32.gmra.mxu0 %v2901
      %v2903 = vpop.f32.mrf.mxu0
      %v2904 = vadd.f32 %v2604, %v2903
      %v2905 = vand.u32 %v2668, 4294901760
      %v2906 = vsub.f32 %v2668, %v2905
      %v2907 = vand.u32 %v2906, 4294901760
      %v2908 = vsub.f32 %v2906, %v2907
      %v2909 = vand.u32 %v2908, 4294901760
      %2910 = vmatmul.f32.gmra.mxu0 %v2909
      %v2911 = vpop.f32.mrf.mxu0
      %v2912 = vadd.f32 %v2604, %v2911
      %v2913 = vand.u32 %v2671, 4294901760
      %v2914 = vsub.f32 %v2671, %v2913
      %v2915 = vand.u32 %v2914, 4294901760
      %v2916 = vsub.f32 %v2914, %v2915
      %v2917 = vand.u32 %v2916, 4294901760
      %2918 = vmatmul.f32.gmra.mxu0 %v2917
      %v2919 = vpop.f32.mrf.mxu0
      %v2920 = vadd.f32 %v2604, %v2919
      %v2921 = vand.u32 %v2674, 4294901760
      %v2922 = vsub.f32 %v2674, %v2921
      %v2923 = vand.u32 %v2922, 4294901760
      %v2924 = vsub.f32 %v2922, %v2923
      %v2925 = vand.u32 %v2924, 4294901760
      %2926 = vmatmul.f32.gmra.mxu0 %v2925
      %v2927 = vpop.f32.mrf.mxu0
      %v2928 = vadd.f32 %v2604, %v2927
      %v2929 = vand.u32 %v2677, 4294901760
      %v2930 = vsub.f32 %v2677, %v2929
      %v2931 = vand.u32 %v2930, 4294901760
      %v2932 = vsub.f32 %v2930, %v2931
      %v2933 = vand.u32 %v2932, 4294901760
      %2934 = vmatmul.f32.gmra.mxu0 %v2933
      %v2935 = vpop.f32.mrf.mxu0
      %v2936 = vadd.f32 %v2604, %v2935
      %v2937 = vand.u32 %v2680, 4294901760
      %v2938 = vsub.f32 %v2680, %v2937
      %v2939 = vand.u32 %v2938, 4294901760
      %v2940 = vsub.f32 %v2938, %v2939
      %v2941 = vand.u32 %v2940, 4294901760
      %2942 = vmatmul.f32.gmra.mxu0 %v2941
      %v2943 = vpop.f32.mrf.mxu0
      %v2944 = vadd.f32 %v2604, %v2943
      %v2945 = vand.u32 %v2683, 4294901760
      %v2946 = vsub.f32 %v2683, %v2945
      %v2947 = vand.u32 %v2946, 4294901760
      %v2948 = vsub.f32 %v2946, %v2947
      %v2949 = vand.u32 %v2948, 4294901760
      %2950 = vmatmul.f32.gmra.mxu0 %v2949
      %v2951 = vpop.f32.mrf.mxu0
      %v2952 = vadd.f32 %v2604, %v2951
      %v2953 = vand.u32 %v2686, 4294901760
      %v2954 = vsub.f32 %v2686, %v2953
      %v2955 = vand.u32 %v2954, 4294901760
      %v2956 = vsub.f32 %v2954, %v2955
      %v2957 = vand.u32 %v2956, 4294901760
      %2958 = vmatmul.f32.gmra.mxu0 %v2957
      %v2959 = vpop.f32.mrf.mxu0
      %v2960 = vadd.f32 %v2604, %v2959
      %v2961 = vand.u32 %v2689, 4294901760
      %v2962 = vsub.f32 %v2689, %v2961
      %v2963 = vand.u32 %v2962, 4294901760
      %v2964 = vsub.f32 %v2962, %v2963
      %v2965 = vand.u32 %v2964, 4294901760
      %2966 = vmatmul.f32.gmra.mxu0 %v2965
      %v2967 = vpop.f32.mrf.mxu0
      %v2968 = vadd.f32 %v2604, %v2967
      %v2969 = vand.u32 %v2692, 4294901760
      %v2970 = vsub.f32 %v2692, %v2969
      %v2971 = vand.u32 %v2970, 4294901760
      %v2972 = vsub.f32 %v2970, %v2971
      %v2973 = vand.u32 %v2972, 4294901760
      %2974 = vmatmul.f32.gmra.mxu0 %v2973
      %v2975 = vpop.f32.mrf.mxu0
      %v2976 = vadd.f32 %v2604, %v2975
      %v2977 = vand.u32 %v2695, 4294901760
      %v2978 = vsub.f32 %v2695, %v2977
      %v2979 = vand.u32 %v2978, 4294901760
      %v2980 = vsub.f32 %v2978, %v2979
      %v2981 = vand.u32 %v2980, 4294901760
      %2982 = vmatmul.f32.gmra.mxu0 %v2981
      %v2983 = vpop.f32.mrf.mxu0
      %v2984 = vadd.f32 %v2604, %v2983
      %v2985 = vand.u32 %v2698, 4294901760
      %v2986 = vsub.f32 %v2698, %v2985
      %v2987 = vand.u32 %v2986, 4294901760
      %v2988 = vsub.f32 %v2986, %v2987
      %v2989 = vand.u32 %v2988, 4294901760
      %2990 = vmatmul.f32.gmra.mxu0 %v2989
      %v2991 = vpop.f32.mrf.mxu0
      %v2992 = vadd.f32 %v2604, %v2991
      %v2993 = vand.u32 %v2701, 4294901760
      %v2994 = vsub.f32 %v2701, %v2993
      %v2995 = vand.u32 %v2994, 4294901760
      %v2996 = vsub.f32 %v2994, %v2995
      %v2997 = vand.u32 %v2996, 4294901760
      %2998 = vmatmul.f32.gmra.mxu0 %v2997
      %v2999 = vpop.f32.mrf.mxu0
      %v3000 = vadd.f32 %v2604, %v2999
      %v3001 = vand.u32 %v2704, 4294901760
      %v3002 = vsub.f32 %v2704, %v3001
      %v3003 = vand.u32 %v3002, 4294901760
      %v3004 = vsub.f32 %v3002, %v3003
      %v3005 = vand.u32 %v3004, 4294901760
      %3006 = vmatmul.f32.gmra.mxu0 %v3005
      %v3007 = vpop.f32.mrf.mxu0
      %v3008 = vadd.f32 %v2604, %v3007
      %v3009 = vand.u32 %v2707, 4294901760
      %v3010 = vsub.f32 %v2707, %v3009
      %v3011 = vand.u32 %v3010, 4294901760
      %v3012 = vsub.f32 %v3010, %v3011
      %v3013 = vand.u32 %v3012, 4294901760
      %3014 = vmatmul.f32.gmra.mxu0 %v3013
      %v3015 = vpop.f32.mrf.mxu0
      %v3016 = vadd.f32 %v2604, %v3015
      %v3017 = vand.u32 %v2710, 4294901760
      %v3018 = vsub.f32 %v2710, %v3017
      %v3019 = vand.u32 %v3018, 4294901760
      %v3020 = vsub.f32 %v3018, %v3019
      %v3021 = vand.u32 %v3020, 4294901760
      %3022 = vmatmul.f32.gmra.mxu0 %v3021
      %v3023 = vpop.f32.mrf.mxu0
      %v3024 = vadd.f32 %v2604, %v3023
      %v3025 = vand.u32 %v2713, 4294901760
      %v3026 = vsub.f32 %v2713, %v3025
      %v3027 = vand.u32 %v3026, 4294901760
      %v3028 = vsub.f32 %v3026, %v3027
      %v3029 = vand.u32 %v3028, 4294901760
      %3030 = vmatmul.f32.gmra.mxu0 %v3029
      %v3031 = vpop.f32.mrf.mxu0
      %v3032 = vadd.f32 %v2604, %v3031
      %v3033 = vand.u32 %v2716, 4294901760
      %v3034 = vsub.f32 %v2716, %v3033
      %v3035 = vand.u32 %v3034, 4294901760
      %v3036 = vsub.f32 %v3034, %v3035
      %v3037 = vand.u32 %v3036, 4294901760
      %3038 = vmatmul.f32.gmra.mxu0 %v3037
      %v3039 = vpop.f32.mrf.mxu0
      %v3040 = vadd.f32 %v2604, %v3039
      %v3041 = vand.u32 %v2719, 4294901760
      %v3042 = vsub.f32 %v2719, %v3041
      %v3043 = vand.u32 %v3042, 4294901760
      %v3044 = vsub.f32 %v3042, %v3043
      %v3045 = vand.u32 %v3044, 4294901760
      %3046 = vmatmul.f32.gmra.mxu0 %v3045
      %v3047 = vpop.f32.mrf.mxu0
      %v3048 = vadd.f32 %v2604, %v3047
      %3049 = vdwg.mxu0
      %3050 = vmatpush.msra.mxu0 0.0
      %3051 = vmatpush.msra.mxu0 0.0
      %3052 = vmatpush.msra.mxu0 0.0
      %3053 = vmatpush.msra.mxu0 0.0
      %3054 = vmatpush.msra.mxu0 0.0
      %3055 = vmatpush.msra.mxu0 0.0
      %3056 = vmatpush.msra.mxu0 0.0
      %3057 = vmatpush.msra.mxu0 0.0
      %v3058 = vand.u32 %v2601, 4294901760
      %v3059 = vsub.f32 %v2601, %v3058
      %v3060 = vand.u32 %v3059, 4294901760
      %v3061 = vsub.f32 %v3059, %v3060
      %v3062 = vand.u32 %v3061, 4294901760
      %3063 = vmatpush.msra.mxu0 %v3062
      %v3064 = vand.u32 %v2600, 4294901760
      %v3065 = vsub.f32 %v2600, %v3064
      %v3066 = vand.u32 %v3065, 4294901760
      %v3067 = vsub.f32 %v3065, %v3066
      %v3068 = vand.u32 %v3067, 4294901760
      %3069 = vmatpush.msra.mxu0 %v3068
      %v3070 = vand.u32 %v2599, 4294901760
      %v3071 = vsub.f32 %v2599, %v3070
      %v3072 = vand.u32 %v3071, 4294901760
      %v3073 = vsub.f32 %v3071, %v3072
      %v3074 = vand.u32 %v3073, 4294901760
      %3075 = vmatpush.msra.mxu0 %v3074
      %v3076 = vand.u32 %v2598, 4294901760
      %v3077 = vsub.f32 %v2598, %v3076
      %v3078 = vand.u32 %v3077, 4294901760
      %v3079 = vsub.f32 %v3077, %v3078
      %v3080 = vand.u32 %v3079, 4294901760
      %3081 = vmatpush.msra.mxu0 %v3080
      %v3082 = vand.u32 %v2597, 4294901760
      %v3083 = vsub.f32 %v2597, %v3082
      %v3084 = vand.u32 %v3083, 4294901760
      %v3085 = vsub.f32 %v3083, %v3084
      %v3086 = vand.u32 %v3085, 4294901760
      %3087 = vmatpush.msra.mxu0 %v3086
      %v3088 = vand.u32 %v2596, 4294901760
      %v3089 = vsub.f32 %v2596, %v3088
      %v3090 = vand.u32 %v3089, 4294901760
      %v3091 = vsub.f32 %v3089, %v3090
      %v3092 = vand.u32 %v3091, 4294901760
      %3093 = vmatpush.msra.mxu0 %v3092
      %v3094 = vand.u32 %v2595, 4294901760
      %v3095 = vsub.f32 %v2595, %v3094
      %v3096 = vand.u32 %v3095, 4294901760
      %v3097 = vsub.f32 %v3095, %v3096
      %v3098 = vand.u32 %v3097, 4294901760
      %3099 = vmatpush.msra.mxu0 %v3098
      %v3100 = vand.u32 %v2594, 4294901760
      %v3101 = vsub.f32 %v2594, %v3100
      %v3102 = vand.u32 %v3101, 4294901760
      %v3103 = vsub.f32 %v3101, %v3102
      %v3104 = vand.u32 %v3103, 4294901760
      %3105 = vmatpush.msra.mxu0 %v3104
      %v3106 = vand.u32 %v2608, 4294901760
      %3107 = vmatmul.f32.gmra.mxu0 %v3106
      %v3108 = vpop.f32.mrf.mxu0
      %v3109 = vadd.f32 %v2752, %v3108
      %v3110 = vand.u32 %v2611, 4294901760
      %3111 = vmatmul.f32.gmra.mxu0 %v3110
      %v3112 = vpop.f32.mrf.mxu0
      %v3113 = vadd.f32 %v2760, %v3112
      %v3114 = vand.u32 %v2614, 4294901760
      %3115 = vmatmul.f32.gmra.mxu0 %v3114
      %v3116 = vpop.f32.mrf.mxu0
      %v3117 = vadd.f32 %v2768, %v3116
      %v3118 = vand.u32 %v2617, 4294901760
      %3119 = vmatmul.f32.gmra.mxu0 %v3118
      %v3120 = vpop.f32.mrf.mxu0
      %v3121 = vadd.f32 %v2776, %v3120
      %v3122 = vand.u32 %v2620, 4294901760
      %3123 = vmatmul.f32.gmra.mxu0 %v3122
      %v3124 = vpop.f32.mrf.mxu0
      %v3125 = vadd.f32 %v2784, %v3124
      %v3126 = vand.u32 %v2623, 4294901760
      %3127 = vmatmul.f32.gmra.mxu0 %v3126
      %v3128 = vpop.f32.mrf.mxu0
      %v3129 = vadd.f32 %v2792, %v3128
      %v3130 = vand.u32 %v2626, 4294901760
      %3131 = vmatmul.f32.gmra.mxu0 %v3130
      %v3132 = vpop.f32.mrf.mxu0
      %v3133 = vadd.f32 %v2800, %v3132
      %v3134 = vand.u32 %v2629, 4294901760
      %3135 = vmatmul.f32.gmra.mxu0 %v3134
      %v3136 = vpop.f32.mrf.mxu0
      %v3137 = vadd.f32 %v2808, %v3136
      %v3138 = vand.u32 %v2632, 4294901760
      %3139 = vmatmul.f32.gmra.mxu0 %v3138
      %v3140 = vpop.f32.mrf.mxu0
      %v3141 = vadd.f32 %v2816, %v3140
      %v3142 = vand.u32 %v2635, 4294901760
      %3143 = vmatmul.f32.gmra.mxu0 %v3142
      %v3144 = vpop.f32.mrf.mxu0
      %v3145 = vadd.f32 %v2824, %v3144
      %v3146 = vand.u32 %v2638, 4294901760
      %3147 = vmatmul.f32.gmra.mxu0 %v3146
      %v3148 = vpop.f32.mrf.mxu0
      %v3149 = vadd.f32 %v2832, %v3148
      %v3150 = vand.u32 %v2641, 4294901760
      %3151 = vmatmul.f32.gmra.mxu0 %v3150
      %v3152 = vpop.f32.mrf.mxu0
      %v3153 = vadd.f32 %v2840, %v3152
      %v3154 = vand.u32 %v2644, 4294901760
      %3155 = vmatmul.f32.gmra.mxu0 %v3154
      %v3156 = vpop.f32.mrf.mxu0
      %v3157 = vadd.f32 %v2848, %v3156
      %v3158 = vand.u32 %v2647, 4294901760
      %3159 = vmatmul.f32.gmra.mxu0 %v3158
      %v3160 = vpop.f32.mrf.mxu0
      %v3161 = vadd.f32 %v2856, %v3160
      %v3162 = vand.u32 %v2650, 4294901760
      %3163 = vmatmul.f32.gmra.mxu0 %v3162
      %v3164 = vpop.f32.mrf.mxu0
      %v3165 = vadd.f32 %v2864, %v3164
      %v3166 = vand.u32 %v2653, 4294901760
      %3167 = vmatmul.f32.gmra.mxu0 %v3166
      %v3168 = vpop.f32.mrf.mxu0
      %v3169 = vadd.f32 %v2872, %v3168
      %v3170 = vand.u32 %v2656, 4294901760
      %3171 = vmatmul.f32.gmra.mxu0 %v3170
      %v3172 = vpop.f32.mrf.mxu0
      %v3173 = vadd.f32 %v2880, %v3172
      %v3174 = vand.u32 %v2659, 4294901760
      %3175 = vmatmul.f32.gmra.mxu0 %v3174
      %v3176 = vpop.f32.mrf.mxu0
      %v3177 = vadd.f32 %v2888, %v3176
      %v3178 = vand.u32 %v2662, 4294901760
      %3179 = vmatmul.f32.gmra.mxu0 %v3178
      %v3180 = vpop.f32.mrf.mxu0
      %v3181 = vadd.f32 %v2896, %v3180
      %v3182 = vand.u32 %v2665, 4294901760
      %3183 = vmatmul.f32.gmra.mxu0 %v3182
      %v3184 = vpop.f32.mrf.mxu0
      %v3185 = vadd.f32 %v2904, %v3184
      %v3186 = vand.u32 %v2668, 4294901760
      %3187 = vmatmul.f32.gmra.mxu0 %v3186
      %v3188 = vpop.f32.mrf.mxu0
      %v3189 = vadd.f32 %v2912, %v3188
      %v3190 = vand.u32 %v2671, 4294901760
      %3191 = vmatmul.f32.gmra.mxu0 %v3190
      %v3192 = vpop.f32.mrf.mxu0
      %v3193 = vadd.f32 %v2920, %v3192
      %v3194 = vand.u32 %v2674, 4294901760
      %3195 = vmatmul.f32.gmra.mxu0 %v3194
      %v3196 = vpop.f32.mrf.mxu0
      %v3197 = vadd.f32 %v2928, %v3196
      %v3198 = vand.u32 %v2677, 4294901760
      %3199 = vmatmul.f32.gmra.mxu0 %v3198
      %v3200 = vpop.f32.mrf.mxu0
      %v3201 = vadd.f32 %v2936, %v3200
      %v3202 = vand.u32 %v2680, 4294901760
      %3203 = vmatmul.f32.gmra.mxu0 %v3202
      %v3204 = vpop.f32.mrf.mxu0
      %v3205 = vadd.f32 %v2944, %v3204
      %v3206 = vand.u32 %v2683, 4294901760
      %3207 = vmatmul.f32.gmra.mxu0 %v3206
      %v3208 = vpop.f32.mrf.mxu0
      %v3209 = vadd.f32 %v2952, %v3208
      %v3210 = vand.u32 %v2686, 4294901760
      %3211 = vmatmul.f32.gmra.mxu0 %v3210
      %v3212 = vpop.f32.mrf.mxu0
      %v3213 = vadd.f32 %v2960, %v3212
      %v3214 = vand.u32 %v2689, 4294901760
      %3215 = vmatmul.f32.gmra.mxu0 %v3214
      %v3216 = vpop.f32.mrf.mxu0
      %v3217 = vadd.f32 %v2968, %v3216
      %v3218 = vand.u32 %v2692, 4294901760
      %3219 = vmatmul.f32.gmra.mxu0 %v3218
      %v3220 = vpop.f32.mrf.mxu0
      %v3221 = vadd.f32 %v2976, %v3220
      %v3222 = vand.u32 %v2695, 4294901760
      %3223 = vmatmul.f32.gmra.mxu0 %v3222
      %v3224 = vpop.f32.mrf.mxu0
      %v3225 = vadd.f32 %v2984, %v3224
      %v3226 = vand.u32 %v2698, 4294901760
      %3227 = vmatmul.f32.gmra.mxu0 %v3226
      %v3228 = vpop.f32.mrf.mxu0
      %v3229 = vadd.f32 %v2992, %v3228
      %v3230 = vand.u32 %v2701, 4294901760
      %3231 = vmatmul.f32.gmra.mxu0 %v3230
      %v3232 = vpop.f32.mrf.mxu0
      %v3233 = vadd.f32 %v3000, %v3232
      %v3234 = vand.u32 %v2704, 4294901760
      %3235 = vmatmul.f32.gmra.mxu0 %v3234
      %v3236 = vpop.f32.mrf.mxu0
      %v3237 = vadd.f32 %v3008, %v3236
      %v3238 = vand.u32 %v2707, 4294901760
      %3239 = vmatmul.f32.gmra.mxu0 %v3238
      %v3240 = vpop.f32.mrf.mxu0
      %v3241 = vadd.f32 %v3016, %v3240
      %v3242 = vand.u32 %v2710, 4294901760
      %3243 = vmatmul.f32.gmra.mxu0 %v3242
      %v3244 = vpop.f32.mrf.mxu0
      %v3245 = vadd.f32 %v3024, %v3244
      %v3246 = vand.u32 %v2713, 4294901760
      %3247 = vmatmul.f32.gmra.mxu0 %v3246
      %v3248 = vpop.f32.mrf.mxu0
      %v3249 = vadd.f32 %v3032, %v3248
      %v3250 = vand.u32 %v2716, 4294901760
      %3251 = vmatmul.f32.gmra.mxu0 %v3250
      %v3252 = vpop.f32.mrf.mxu0
      %v3253 = vadd.f32 %v3040, %v3252
      %v3254 = vand.u32 %v2719, 4294901760
      %3255 = vmatmul.f32.gmra.mxu0 %v3254
      %v3256 = vpop.f32.mrf.mxu0
      %v3257 = vadd.f32 %v3048, %v3256
      %3258 = vdwg.mxu0
      %3259 = vmatpush.msra.mxu0 0.0
      %3260 = vmatpush.msra.mxu0 0.0
      %3261 = vmatpush.msra.mxu0 0.0
      %3262 = vmatpush.msra.mxu0 0.0
      %3263 = vmatpush.msra.mxu0 0.0
      %3264 = vmatpush.msra.mxu0 0.0
      %3265 = vmatpush.msra.mxu0 0.0
      %3266 = vmatpush.msra.mxu0 0.0
      %v3267 = vand.u32 %v2601, 4294901760
      %v3268 = vsub.f32 %v2601, %v3267
      %3269 = vmatpush.msra.mxu0 %v3268
      %v3270 = vand.u32 %v2600, 4294901760
      %v3271 = vsub.f32 %v2600, %v3270
      %3272 = vmatpush.msra.mxu0 %v3271
      %v3273 = vand.u32 %v2599, 4294901760
      %v3274 = vsub.f32 %v2599, %v3273
      %3275 = vmatpush.msra.mxu0 %v3274
      %v3276 = vand.u32 %v2598, 4294901760
      %v3277 = vsub.f32 %v2598, %v3276
      %3278 = vmatpush.msra.mxu0 %v3277
      %v3279 = vand.u32 %v2597, 4294901760
      %v3280 = vsub.f32 %v2597, %v3279
      %3281 = vmatpush.msra.mxu0 %v3280
      %v3282 = vand.u32 %v2596, 4294901760
      %v3283 = vsub.f32 %v2596, %v3282
      %3284 = vmatpush.msra.mxu0 %v3283
      %v3285 = vand.u32 %v2595, 4294901760
      %v3286 = vsub.f32 %v2595, %v3285
      %3287 = vmatpush.msra.mxu0 %v3286
      %v3288 = vand.u32 %v2594, 4294901760
      %v3289 = vsub.f32 %v2594, %v3288
      %3290 = vmatpush.msra.mxu0 %v3289
      %v3291 = vand.u32 %v2608, 4294901760
      %v3292 = vsub.f32 %v2608, %v3291
      %3293 = vmatmul.f32.gmra.mxu0 %v3292
      %v3294 = vpop.f32.mrf.mxu0
      %v3295 = vadd.f32 %v3109, %v3294
      %v3296 = vand.u32 %v2611, 4294901760
      %v3297 = vsub.f32 %v2611, %v3296
      %3298 = vmatmul.f32.gmra.mxu0 %v3297
      %v3299 = vpop.f32.mrf.mxu0
      %v3300 = vadd.f32 %v3113, %v3299
      %v3301 = vand.u32 %v2614, 4294901760
      %v3302 = vsub.f32 %v2614, %v3301
      %3303 = vmatmul.f32.gmra.mxu0 %v3302
      %v3304 = vpop.f32.mrf.mxu0
      %v3305 = vadd.f32 %v3117, %v3304
      %v3306 = vand.u32 %v2617, 4294901760
      %v3307 = vsub.f32 %v2617, %v3306
      %3308 = vmatmul.f32.gmra.mxu0 %v3307
      %v3309 = vpop.f32.mrf.mxu0
      %v3310 = vadd.f32 %v3121, %v3309
      %v3311 = vand.u32 %v2620, 4294901760
      %v3312 = vsub.f32 %v2620, %v3311
      %3313 = vmatmul.f32.gmra.mxu0 %v3312
      %v3314 = vpop.f32.mrf.mxu0
      %v3315 = vadd.f32 %v3125, %v3314
      %v3316 = vand.u32 %v2623, 4294901760
      %v3317 = vsub.f32 %v2623, %v3316
      %3318 = vmatmul.f32.gmra.mxu0 %v3317
      %v3319 = vpop.f32.mrf.mxu0
      %v3320 = vadd.f32 %v3129, %v3319
      %v3321 = vand.u32 %v2626, 4294901760
      %v3322 = vsub.f32 %v2626, %v3321
      %3323 = vmatmul.f32.gmra.mxu0 %v3322
      %v3324 = vpop.f32.mrf.mxu0
      %v3325 = vadd.f32 %v3133, %v3324
      %v3326 = vand.u32 %v2629, 4294901760
      %v3327 = vsub.f32 %v2629, %v3326
      %3328 = vmatmul.f32.gmra.mxu0 %v3327
      %v3329 = vpop.f32.mrf.mxu0
      %v3330 = vadd.f32 %v3137, %v3329
      %v3331 = vand.u32 %v2632, 4294901760
      %v3332 = vsub.f32 %v2632, %v3331
      %3333 = vmatmul.f32.gmra.mxu0 %v3332
      %v3334 = vpop.f32.mrf.mxu0
      %v3335 = vadd.f32 %v3141, %v3334
      %v3336 = vand.u32 %v2635, 4294901760
      %v3337 = vsub.f32 %v2635, %v3336
      %3338 = vmatmul.f32.gmra.mxu0 %v3337
      %v3339 = vpop.f32.mrf.mxu0
      %v3340 = vadd.f32 %v3145, %v3339
      %v3341 = vand.u32 %v2638, 4294901760
      %v3342 = vsub.f32 %v2638, %v3341
      %3343 = vmatmul.f32.gmra.mxu0 %v3342
      %v3344 = vpop.f32.mrf.mxu0
      %v3345 = vadd.f32 %v3149, %v3344
      %v3346 = vand.u32 %v2641, 4294901760
      %v3347 = vsub.f32 %v2641, %v3346
      %3348 = vmatmul.f32.gmra.mxu0 %v3347
      %v3349 = vpop.f32.mrf.mxu0
      %v3350 = vadd.f32 %v3153, %v3349
      %v3351 = vand.u32 %v2644, 4294901760
      %v3352 = vsub.f32 %v2644, %v3351
      %3353 = vmatmul.f32.gmra.mxu0 %v3352
      %v3354 = vpop.f32.mrf.mxu0
      %v3355 = vadd.f32 %v3157, %v3354
      %v3356 = vand.u32 %v2647, 4294901760
      %v3357 = vsub.f32 %v2647, %v3356
      %3358 = vmatmul.f32.gmra.mxu0 %v3357
      %v3359 = vpop.f32.mrf.mxu0
      %v3360 = vadd.f32 %v3161, %v3359
      %v3361 = vand.u32 %v2650, 4294901760
      %v3362 = vsub.f32 %v2650, %v3361
      %3363 = vmatmul.f32.gmra.mxu0 %v3362
      %v3364 = vpop.f32.mrf.mxu0
      %v3365 = vadd.f32 %v3165, %v3364
      %v3366 = vand.u32 %v2653, 4294901760
      %v3367 = vsub.f32 %v2653, %v3366
      %3368 = vmatmul.f32.gmra.mxu0 %v3367
      %v3369 = vpop.f32.mrf.mxu0
      %v3370 = vadd.f32 %v3169, %v3369
      %v3371 = vand.u32 %v2656, 4294901760
      %v3372 = vsub.f32 %v2656, %v3371
      %3373 = vmatmul.f32.gmra.mxu0 %v3372
      %v3374 = vpop.f32.mrf.mxu0
      %v3375 = vadd.f32 %v3173, %v3374
      %v3376 = vand.u32 %v2659, 4294901760
      %v3377 = vsub.f32 %v2659, %v3376
      %3378 = vmatmul.f32.gmra.mxu0 %v3377
      %v3379 = vpop.f32.mrf.mxu0
      %v3380 = vadd.f32 %v3177, %v3379
      %v3381 = vand.u32 %v2662, 4294901760
      %v3382 = vsub.f32 %v2662, %v3381
      %3383 = vmatmul.f32.gmra.mxu0 %v3382
      %v3384 = vpop.f32.mrf.mxu0
      %v3385 = vadd.f32 %v3181, %v3384
      %v3386 = vand.u32 %v2665, 4294901760
      %v3387 = vsub.f32 %v2665, %v3386
      %3388 = vmatmul.f32.gmra.mxu0 %v3387
      %v3389 = vpop.f32.mrf.mxu0
      %v3390 = vadd.f32 %v3185, %v3389
      %v3391 = vand.u32 %v2668, 4294901760
      %v3392 = vsub.f32 %v2668, %v3391
      %3393 = vmatmul.f32.gmra.mxu0 %v3392
      %v3394 = vpop.f32.mrf.mxu0
      %v3395 = vadd.f32 %v3189, %v3394
      %v3396 = vand.u32 %v2671, 4294901760
      %v3397 = vsub.f32 %v2671, %v3396
      %3398 = vmatmul.f32.gmra.mxu0 %v3397
      %v3399 = vpop.f32.mrf.mxu0
      %v3400 = vadd.f32 %v3193, %v3399
      %v3401 = vand.u32 %v2674, 4294901760
      %v3402 = vsub.f32 %v2674, %v3401
      %3403 = vmatmul.f32.gmra.mxu0 %v3402
      %v3404 = vpop.f32.mrf.mxu0
      %v3405 = vadd.f32 %v3197, %v3404
      %v3406 = vand.u32 %v2677, 4294901760
      %v3407 = vsub.f32 %v2677, %v3406
      %3408 = vmatmul.f32.gmra.mxu0 %v3407
      %v3409 = vpop.f32.mrf.mxu0
      %v3410 = vadd.f32 %v3201, %v3409
      %v3411 = vand.u32 %v2680, 4294901760
      %v3412 = vsub.f32 %v2680, %v3411
      %3413 = vmatmul.f32.gmra.mxu0 %v3412
      %v3414 = vpop.f32.mrf.mxu0
      %v3415 = vadd.f32 %v3205, %v3414
      %v3416 = vand.u32 %v2683, 4294901760
      %v3417 = vsub.f32 %v2683, %v3416
      %3418 = vmatmul.f32.gmra.mxu0 %v3417
      %v3419 = vpop.f32.mrf.mxu0
      %v3420 = vadd.f32 %v3209, %v3419
      %v3421 = vand.u32 %v2686, 4294901760
      %v3422 = vsub.f32 %v2686, %v3421
      %3423 = vmatmul.f32.gmra.mxu0 %v3422
      %v3424 = vpop.f32.mrf.mxu0
      %v3425 = vadd.f32 %v3213, %v3424
      %v3426 = vand.u32 %v2689, 4294901760
      %v3427 = vsub.f32 %v2689, %v3426
      %3428 = vmatmul.f32.gmra.mxu0 %v3427
      %v3429 = vpop.f32.mrf.mxu0
      %v3430 = vadd.f32 %v3217, %v3429
      %v3431 = vand.u32 %v2692, 4294901760
      %v3432 = vsub.f32 %v2692, %v3431
      %3433 = vmatmul.f32.gmra.mxu0 %v3432
      %v3434 = vpop.f32.mrf.mxu0
      %v3435 = vadd.f32 %v3221, %v3434
      %v3436 = vand.u32 %v2695, 4294901760
      %v3437 = vsub.f32 %v2695, %v3436
      %3438 = vmatmul.f32.gmra.mxu0 %v3437
      %v3439 = vpop.f32.mrf.mxu0
      %v3440 = vadd.f32 %v3225, %v3439
      %v3441 = vand.u32 %v2698, 4294901760
      %v3442 = vsub.f32 %v2698, %v3441
      %3443 = vmatmul.f32.gmra.mxu0 %v3442
      %v3444 = vpop.f32.mrf.mxu0
      %v3445 = vadd.f32 %v3229, %v3444
      %v3446 = vand.u32 %v2701, 4294901760
      %v3447 = vsub.f32 %v2701, %v3446
      %3448 = vmatmul.f32.gmra.mxu0 %v3447
      %v3449 = vpop.f32.mrf.mxu0
      %v3450 = vadd.f32 %v3233, %v3449
      %v3451 = vand.u32 %v2704, 4294901760
      %v3452 = vsub.f32 %v2704, %v3451
      %3453 = vmatmul.f32.gmra.mxu0 %v3452
      %v3454 = vpop.f32.mrf.mxu0
      %v3455 = vadd.f32 %v3237, %v3454
      %v3456 = vand.u32 %v2707, 4294901760
      %v3457 = vsub.f32 %v2707, %v3456
      %3458 = vmatmul.f32.gmra.mxu0 %v3457
      %v3459 = vpop.f32.mrf.mxu0
      %v3460 = vadd.f32 %v3241, %v3459
      %v3461 = vand.u32 %v2710, 4294901760
      %v3462 = vsub.f32 %v2710, %v3461
      %3463 = vmatmul.f32.gmra.mxu0 %v3462
      %v3464 = vpop.f32.mrf.mxu0
      %v3465 = vadd.f32 %v3245, %v3464
      %v3466 = vand.u32 %v2713, 4294901760
      %v3467 = vsub.f32 %v2713, %v3466
      %3468 = vmatmul.f32.gmra.mxu0 %v3467
      %v3469 = vpop.f32.mrf.mxu0
      %v3470 = vadd.f32 %v3249, %v3469
      %v3471 = vand.u32 %v2716, 4294901760
      %v3472 = vsub.f32 %v2716, %v3471
      %3473 = vmatmul.f32.gmra.mxu0 %v3472
      %v3474 = vpop.f32.mrf.mxu0
      %v3475 = vadd.f32 %v3253, %v3474
      %v3476 = vand.u32 %v2719, 4294901760
      %v3477 = vsub.f32 %v2719, %v3476
      %3478 = vmatmul.f32.gmra.mxu0 %v3477
      %v3479 = vpop.f32.mrf.mxu0
      %v3480 = vadd.f32 %v3257, %v3479
      %3481 = vdwg.mxu0
      %3482 = vmatpush.msra.mxu0 0.0
      %3483 = vmatpush.msra.mxu0 0.0
      %3484 = vmatpush.msra.mxu0 0.0
      %3485 = vmatpush.msra.mxu0 0.0
      %3486 = vmatpush.msra.mxu0 0.0
      %3487 = vmatpush.msra.mxu0 0.0
      %3488 = vmatpush.msra.mxu0 0.0
      %3489 = vmatpush.msra.mxu0 0.0
      %v3490 = vand.u32 %v2601, 4294901760
      %3491 = vmatpush.msra.mxu0 %v3490
      %v3492 = vand.u32 %v2600, 4294901760
      %3493 = vmatpush.msra.mxu0 %v3492
      %v3494 = vand.u32 %v2599, 4294901760
      %3495 = vmatpush.msra.mxu0 %v3494
      %v3496 = vand.u32 %v2598, 4294901760
      %3497 = vmatpush.msra.mxu0 %v3496
      %v3498 = vand.u32 %v2597, 4294901760
      %3499 = vmatpush.msra.mxu0 %v3498
      %v3500 = vand.u32 %v2596, 4294901760
      %3501 = vmatpush.msra.mxu0 %v3500
      %v3502 = vand.u32 %v2595, 4294901760
      %3503 = vmatpush.msra.mxu0 %v3502
      %v3504 = vand.u32 %v2594, 4294901760
      %3505 = vmatpush.msra.mxu0 %v3504
      %v3506 = vand.u32 %v2608, 4294901760
      %v3507 = vsub.f32 %v2608, %v3506
      %v3508 = vand.u32 %v3507, 4294901760
      %3509 = vmatmul.f32.gmra.mxu0 %v3508
      %v3510 = vpop.f32.mrf.mxu0
      %v3511 = vadd.f32 %v3295, %v3510
      %v3512 = vand.u32 %v2611, 4294901760
      %v3513 = vsub.f32 %v2611, %v3512
      %v3514 = vand.u32 %v3513, 4294901760
      %3515 = vmatmul.f32.gmra.mxu0 %v3514
      %v3516 = vpop.f32.mrf.mxu0
      %v3517 = vadd.f32 %v3300, %v3516
      %v3518 = vand.u32 %v2614, 4294901760
      %v3519 = vsub.f32 %v2614, %v3518
      %v3520 = vand.u32 %v3519, 4294901760
      %3521 = vmatmul.f32.gmra.mxu0 %v3520
      %v3522 = vpop.f32.mrf.mxu0
      %v3523 = vadd.f32 %v3305, %v3522
      %v3524 = vand.u32 %v2617, 4294901760
      %v3525 = vsub.f32 %v2617, %v3524
      %v3526 = vand.u32 %v3525, 4294901760
      %3527 = vmatmul.f32.gmra.mxu0 %v3526
      %v3528 = vpop.f32.mrf.mxu0
      %v3529 = vadd.f32 %v3310, %v3528
      %v3530 = vand.u32 %v2620, 4294901760
      %v3531 = vsub.f32 %v2620, %v3530
      %v3532 = vand.u32 %v3531, 4294901760
      %3533 = vmatmul.f32.gmra.mxu0 %v3532
      %v3534 = vpop.f32.mrf.mxu0
      %v3535 = vadd.f32 %v3315, %v3534
      %v3536 = vand.u32 %v2623, 4294901760
      %v3537 = vsub.f32 %v2623, %v3536
      %v3538 = vand.u32 %v3537, 4294901760
      %3539 = vmatmul.f32.gmra.mxu0 %v3538
      %v3540 = vpop.f32.mrf.mxu0
      %v3541 = vadd.f32 %v3320, %v3540
      %v3542 = vand.u32 %v2626, 4294901760
      %v3543 = vsub.f32 %v2626, %v3542
      %v3544 = vand.u32 %v3543, 4294901760
      %3545 = vmatmul.f32.gmra.mxu0 %v3544
      %v3546 = vpop.f32.mrf.mxu0
      %v3547 = vadd.f32 %v3325, %v3546
      %v3548 = vand.u32 %v2629, 4294901760
      %v3549 = vsub.f32 %v2629, %v3548
      %v3550 = vand.u32 %v3549, 4294901760
      %3551 = vmatmul.f32.gmra.mxu0 %v3550
      %v3552 = vpop.f32.mrf.mxu0
      %v3553 = vadd.f32 %v3330, %v3552
      %v3554 = vand.u32 %v2632, 4294901760
      %v3555 = vsub.f32 %v2632, %v3554
      %v3556 = vand.u32 %v3555, 4294901760
      %3557 = vmatmul.f32.gmra.mxu0 %v3556
      %v3558 = vpop.f32.mrf.mxu0
      %v3559 = vadd.f32 %v3335, %v3558
      %v3560 = vand.u32 %v2635, 4294901760
      %v3561 = vsub.f32 %v2635, %v3560
      %v3562 = vand.u32 %v3561, 4294901760
      %3563 = vmatmul.f32.gmra.mxu0 %v3562
      %v3564 = vpop.f32.mrf.mxu0
      %v3565 = vadd.f32 %v3340, %v3564
      %v3566 = vand.u32 %v2638, 4294901760
      %v3567 = vsub.f32 %v2638, %v3566
      %v3568 = vand.u32 %v3567, 4294901760
      %3569 = vmatmul.f32.gmra.mxu0 %v3568
      %v3570 = vpop.f32.mrf.mxu0
      %v3571 = vadd.f32 %v3345, %v3570
      %v3572 = vand.u32 %v2641, 4294901760
      %v3573 = vsub.f32 %v2641, %v3572
      %v3574 = vand.u32 %v3573, 4294901760
      %3575 = vmatmul.f32.gmra.mxu0 %v3574
      %v3576 = vpop.f32.mrf.mxu0
      %v3577 = vadd.f32 %v3350, %v3576
      %v3578 = vand.u32 %v2644, 4294901760
      %v3579 = vsub.f32 %v2644, %v3578
      %v3580 = vand.u32 %v3579, 4294901760
      %3581 = vmatmul.f32.gmra.mxu0 %v3580
      %v3582 = vpop.f32.mrf.mxu0
      %v3583 = vadd.f32 %v3355, %v3582
      %v3584 = vand.u32 %v2647, 4294901760
      %v3585 = vsub.f32 %v2647, %v3584
      %v3586 = vand.u32 %v3585, 4294901760
      %3587 = vmatmul.f32.gmra.mxu0 %v3586
      %v3588 = vpop.f32.mrf.mxu0
      %v3589 = vadd.f32 %v3360, %v3588
      %v3590 = vand.u32 %v2650, 4294901760
      %v3591 = vsub.f32 %v2650, %v3590
      %v3592 = vand.u32 %v3591, 4294901760
      %3593 = vmatmul.f32.gmra.mxu0 %v3592
      %v3594 = vpop.f32.mrf.mxu0
      %v3595 = vadd.f32 %v3365, %v3594
      %v3596 = vand.u32 %v2653, 4294901760
      %v3597 = vsub.f32 %v2653, %v3596
      %v3598 = vand.u32 %v3597, 4294901760
      %3599 = vmatmul.f32.gmra.mxu0 %v3598
      %v3600 = vpop.f32.mrf.mxu0
      %v3601 = vadd.f32 %v3370, %v3600
      %v3602 = vand.u32 %v2656, 4294901760
      %v3603 = vsub.f32 %v2656, %v3602
      %v3604 = vand.u32 %v3603, 4294901760
      %3605 = vmatmul.f32.gmra.mxu0 %v3604
      %v3606 = vpop.f32.mrf.mxu0
      %v3607 = vadd.f32 %v3375, %v3606
      %v3608 = vand.u32 %v2659, 4294901760
      %v3609 = vsub.f32 %v2659, %v3608
      %v3610 = vand.u32 %v3609, 4294901760
      %3611 = vmatmul.f32.gmra.mxu0 %v3610
      %v3612 = vpop.f32.mrf.mxu0
      %v3613 = vadd.f32 %v3380, %v3612
      %v3614 = vand.u32 %v2662, 4294901760
      %v3615 = vsub.f32 %v2662, %v3614
      %v3616 = vand.u32 %v3615, 4294901760
      %3617 = vmatmul.f32.gmra.mxu0 %v3616
      %v3618 = vpop.f32.mrf.mxu0
      %v3619 = vadd.f32 %v3385, %v3618
      %v3620 = vand.u32 %v2665, 4294901760
      %v3621 = vsub.f32 %v2665, %v3620
      %v3622 = vand.u32 %v3621, 4294901760
      %3623 = vmatmul.f32.gmra.mxu0 %v3622
      %v3624 = vpop.f32.mrf.mxu0
      %v3625 = vadd.f32 %v3390, %v3624
      %v3626 = vand.u32 %v2668, 4294901760
      %v3627 = vsub.f32 %v2668, %v3626
      %v3628 = vand.u32 %v3627, 4294901760
      %3629 = vmatmul.f32.gmra.mxu0 %v3628
      %v3630 = vpop.f32.mrf.mxu0
      %v3631 = vadd.f32 %v3395, %v3630
      %v3632 = vand.u32 %v2671, 4294901760
      %v3633 = vsub.f32 %v2671, %v3632
      %v3634 = vand.u32 %v3633, 4294901760
      %3635 = vmatmul.f32.gmra.mxu0 %v3634
      %v3636 = vpop.f32.mrf.mxu0
      %v3637 = vadd.f32 %v3400, %v3636
      %v3638 = vand.u32 %v2674, 4294901760
      %v3639 = vsub.f32 %v2674, %v3638
      %v3640 = vand.u32 %v3639, 4294901760
      %3641 = vmatmul.f32.gmra.mxu0 %v3640
      %v3642 = vpop.f32.mrf.mxu0
      %v3643 = vadd.f32 %v3405, %v3642
      %v3644 = vand.u32 %v2677, 4294901760
      %v3645 = vsub.f32 %v2677, %v3644
      %v3646 = vand.u32 %v3645, 4294901760
      %3647 = vmatmul.f32.gmra.mxu0 %v3646
      %v3648 = vpop.f32.mrf.mxu0
      %v3649 = vadd.f32 %v3410, %v3648
      %v3650 = vand.u32 %v2680, 4294901760
      %v3651 = vsub.f32 %v2680, %v3650
      %v3652 = vand.u32 %v3651, 4294901760
      %3653 = vmatmul.f32.gmra.mxu0 %v3652
      %v3654 = vpop.f32.mrf.mxu0
      %v3655 = vadd.f32 %v3415, %v3654
      %v3656 = vand.u32 %v2683, 4294901760
      %v3657 = vsub.f32 %v2683, %v3656
      %v3658 = vand.u32 %v3657, 4294901760
      %3659 = vmatmul.f32.gmra.mxu0 %v3658
      %v3660 = vpop.f32.mrf.mxu0
      %v3661 = vadd.f32 %v3420, %v3660
      %v3662 = vand.u32 %v2686, 4294901760
      %v3663 = vsub.f32 %v2686, %v3662
      %v3664 = vand.u32 %v3663, 4294901760
      %3665 = vmatmul.f32.gmra.mxu0 %v3664
      %v3666 = vpop.f32.mrf.mxu0
      %v3667 = vadd.f32 %v3425, %v3666
      %v3668 = vand.u32 %v2689, 4294901760
      %v3669 = vsub.f32 %v2689, %v3668
      %v3670 = vand.u32 %v3669, 4294901760
      %3671 = vmatmul.f32.gmra.mxu0 %v3670
      %v3672 = vpop.f32.mrf.mxu0
      %v3673 = vadd.f32 %v3430, %v3672
      %v3674 = vand.u32 %v2692, 4294901760
      %v3675 = vsub.f32 %v2692, %v3674
      %v3676 = vand.u32 %v3675, 4294901760
      %3677 = vmatmul.f32.gmra.mxu0 %v3676
      %v3678 = vpop.f32.mrf.mxu0
      %v3679 = vadd.f32 %v3435, %v3678
      %v3680 = vand.u32 %v2695, 4294901760
      %v3681 = vsub.f32 %v2695, %v3680
      %v3682 = vand.u32 %v3681, 4294901760
      %3683 = vmatmul.f32.gmra.mxu0 %v3682
      %v3684 = vpop.f32.mrf.mxu0
      %v3685 = vadd.f32 %v3440, %v3684
      %v3686 = vand.u32 %v2698, 4294901760
      %v3687 = vsub.f32 %v2698, %v3686
      %v3688 = vand.u32 %v3687, 4294901760
      %3689 = vmatmul.f32.gmra.mxu0 %v3688
      %v3690 = vpop.f32.mrf.mxu0
      %v3691 = vadd.f32 %v3445, %v3690
      %v3692 = vand.u32 %v2701, 4294901760
      %v3693 = vsub.f32 %v2701, %v3692
      %v3694 = vand.u32 %v3693, 4294901760
      %3695 = vmatmul.f32.gmra.mxu0 %v3694
      %v3696 = vpop.f32.mrf.mxu0
      %v3697 = vadd.f32 %v3450, %v3696
      %v3698 = vand.u32 %v2704, 4294901760
      %v3699 = vsub.f32 %v2704, %v3698
      %v3700 = vand.u32 %v3699, 4294901760
      %3701 = vmatmul.f32.gmra.mxu0 %v3700
      %v3702 = vpop.f32.mrf.mxu0
      %v3703 = vadd.f32 %v3455, %v3702
      %v3704 = vand.u32 %v2707, 4294901760
      %v3705 = vsub.f32 %v2707, %v3704
      %v3706 = vand.u32 %v3705, 4294901760
      %3707 = vmatmul.f32.gmra.mxu0 %v3706
      %v3708 = vpop.f32.mrf.mxu0
      %v3709 = vadd.f32 %v3460, %v3708
      %v3710 = vand.u32 %v2710, 4294901760
      %v3711 = vsub.f32 %v2710, %v3710
      %v3712 = vand.u32 %v3711, 4294901760
      %3713 = vmatmul.f32.gmra.mxu0 %v3712
      %v3714 = vpop.f32.mrf.mxu0
      %v3715 = vadd.f32 %v3465, %v3714
      %v3716 = vand.u32 %v2713, 4294901760
      %v3717 = vsub.f32 %v2713, %v3716
      %v3718 = vand.u32 %v3717, 4294901760
      %3719 = vmatmul.f32.gmra.mxu0 %v3718
      %v3720 = vpop.f32.mrf.mxu0
      %v3721 = vadd.f32 %v3470, %v3720
      %v3722 = vand.u32 %v2716, 4294901760
      %v3723 = vsub.f32 %v2716, %v3722
      %v3724 = vand.u32 %v3723, 4294901760
      %3725 = vmatmul.f32.gmra.mxu0 %v3724
      %v3726 = vpop.f32.mrf.mxu0
      %v3727 = vadd.f32 %v3475, %v3726
      %v3728 = vand.u32 %v2719, 4294901760
      %v3729 = vsub.f32 %v2719, %v3728
      %v3730 = vand.u32 %v3729, 4294901760
      %3731 = vmatmul.f32.gmra.mxu0 %v3730
      %v3732 = vpop.f32.mrf.mxu0
      %v3733 = vadd.f32 %v3480, %v3732
      %3734 = vdwg.mxu0
      %3735 = vmatpush.msra.mxu0 0.0
      %3736 = vmatpush.msra.mxu0 0.0
      %3737 = vmatpush.msra.mxu0 0.0
      %3738 = vmatpush.msra.mxu0 0.0
      %3739 = vmatpush.msra.mxu0 0.0
      %3740 = vmatpush.msra.mxu0 0.0
      %3741 = vmatpush.msra.mxu0 0.0
      %3742 = vmatpush.msra.mxu0 0.0
      %v3743 = vand.u32 %v2601, 4294901760
      %v3744 = vsub.f32 %v2601, %v3743
      %v3745 = vand.u32 %v3744, 4294901760
      %3746 = vmatpush.msra.mxu0 %v3745
      %v3747 = vand.u32 %v2600, 4294901760
      %v3748 = vsub.f32 %v2600, %v3747
      %v3749 = vand.u32 %v3748, 4294901760
      %3750 = vmatpush.msra.mxu0 %v3749
      %v3751 = vand.u32 %v2599, 4294901760
      %v3752 = vsub.f32 %v2599, %v3751
      %v3753 = vand.u32 %v3752, 4294901760
      %3754 = vmatpush.msra.mxu0 %v3753
      %v3755 = vand.u32 %v2598, 4294901760
      %v3756 = vsub.f32 %v2598, %v3755
      %v3757 = vand.u32 %v3756, 4294901760
      %3758 = vmatpush.msra.mxu0 %v3757
      %v3759 = vand.u32 %v2597, 4294901760
      %v3760 = vsub.f32 %v2597, %v3759
      %v3761 = vand.u32 %v3760, 4294901760
      %3762 = vmatpush.msra.mxu0 %v3761
      %v3763 = vand.u32 %v2596, 4294901760
      %v3764 = vsub.f32 %v2596, %v3763
      %v3765 = vand.u32 %v3764, 4294901760
      %3766 = vmatpush.msra.mxu0 %v3765
      %v3767 = vand.u32 %v2595, 4294901760
      %v3768 = vsub.f32 %v2595, %v3767
      %v3769 = vand.u32 %v3768, 4294901760
      %3770 = vmatpush.msra.mxu0 %v3769
      %v3771 = vand.u32 %v2594, 4294901760
      %v3772 = vsub.f32 %v2594, %v3771
      %v3773 = vand.u32 %v3772, 4294901760
      %3774 = vmatpush.msra.mxu0 %v3773
      %v3775 = vand.u32 %v2608, 4294901760
      %3776 = vmatmul.f32.gmra.mxu0 %v3775
      %v3777 = vpop.f32.mrf.mxu0
      %v3778 = vadd.f32 %v3511, %v3777
      %v3779 = vand.u32 %v2611, 4294901760
      %3780 = vmatmul.f32.gmra.mxu0 %v3779
      %v3781 = vpop.f32.mrf.mxu0
      %v3782 = vadd.f32 %v3517, %v3781
      %v3783 = vand.u32 %v2614, 4294901760
      %3784 = vmatmul.f32.gmra.mxu0 %v3783
      %v3785 = vpop.f32.mrf.mxu0
      %v3786 = vadd.f32 %v3523, %v3785
      %v3787 = vand.u32 %v2617, 4294901760
      %3788 = vmatmul.f32.gmra.mxu0 %v3787
      %v3789 = vpop.f32.mrf.mxu0
      %v3790 = vadd.f32 %v3529, %v3789
      %v3791 = vand.u32 %v2620, 4294901760
      %3792 = vmatmul.f32.gmra.mxu0 %v3791
      %v3793 = vpop.f32.mrf.mxu0
      %v3794 = vadd.f32 %v3535, %v3793
      %v3795 = vand.u32 %v2623, 4294901760
      %3796 = vmatmul.f32.gmra.mxu0 %v3795
      %v3797 = vpop.f32.mrf.mxu0
      %v3798 = vadd.f32 %v3541, %v3797
      %v3799 = vand.u32 %v2626, 4294901760
      %3800 = vmatmul.f32.gmra.mxu0 %v3799
      %v3801 = vpop.f32.mrf.mxu0
      %v3802 = vadd.f32 %v3547, %v3801
      %v3803 = vand.u32 %v2629, 4294901760
      %3804 = vmatmul.f32.gmra.mxu0 %v3803
      %v3805 = vpop.f32.mrf.mxu0
      %v3806 = vadd.f32 %v3553, %v3805
      %v3807 = vand.u32 %v2632, 4294901760
      %3808 = vmatmul.f32.gmra.mxu0 %v3807
      %v3809 = vpop.f32.mrf.mxu0
      %v3810 = vadd.f32 %v3559, %v3809
      %v3811 = vand.u32 %v2635, 4294901760
      %3812 = vmatmul.f32.gmra.mxu0 %v3811
      %v3813 = vpop.f32.mrf.mxu0
      %v3814 = vadd.f32 %v3565, %v3813
      %v3815 = vand.u32 %v2638, 4294901760
      %3816 = vmatmul.f32.gmra.mxu0 %v3815
      %v3817 = vpop.f32.mrf.mxu0
      %v3818 = vadd.f32 %v3571, %v3817
      %v3819 = vand.u32 %v2641, 4294901760
      %3820 = vmatmul.f32.gmra.mxu0 %v3819
      %v3821 = vpop.f32.mrf.mxu0
      %v3822 = vadd.f32 %v3577, %v3821
      %v3823 = vand.u32 %v2644, 4294901760
      %3824 = vmatmul.f32.gmra.mxu0 %v3823
      %v3825 = vpop.f32.mrf.mxu0
      %v3826 = vadd.f32 %v3583, %v3825
      %v3827 = vand.u32 %v2647, 4294901760
      %3828 = vmatmul.f32.gmra.mxu0 %v3827
      %v3829 = vpop.f32.mrf.mxu0
      %v3830 = vadd.f32 %v3589, %v3829
      %v3831 = vand.u32 %v2650, 4294901760
      %3832 = vmatmul.f32.gmra.mxu0 %v3831
      %v3833 = vpop.f32.mrf.mxu0
      %v3834 = vadd.f32 %v3595, %v3833
      %v3835 = vand.u32 %v2653, 4294901760
      %3836 = vmatmul.f32.gmra.mxu0 %v3835
      %v3837 = vpop.f32.mrf.mxu0
      %v3838 = vadd.f32 %v3601, %v3837
      %v3839 = vand.u32 %v2656, 4294901760
      %3840 = vmatmul.f32.gmra.mxu0 %v3839
      %v3841 = vpop.f32.mrf.mxu0
      %v3842 = vadd.f32 %v3607, %v3841
      %v3843 = vand.u32 %v2659, 4294901760
      %3844 = vmatmul.f32.gmra.mxu0 %v3843
      %v3845 = vpop.f32.mrf.mxu0
      %v3846 = vadd.f32 %v3613, %v3845
      %v3847 = vand.u32 %v2662, 4294901760
      %3848 = vmatmul.f32.gmra.mxu0 %v3847
      %v3849 = vpop.f32.mrf.mxu0
      %v3850 = vadd.f32 %v3619, %v3849
      %v3851 = vand.u32 %v2665, 4294901760
      %3852 = vmatmul.f32.gmra.mxu0 %v3851
      %v3853 = vpop.f32.mrf.mxu0
      %v3854 = vadd.f32 %v3625, %v3853
      %v3855 = vand.u32 %v2668, 4294901760
      %3856 = vmatmul.f32.gmra.mxu0 %v3855
      %v3857 = vpop.f32.mrf.mxu0
      %v3858 = vadd.f32 %v3631, %v3857
      %v3859 = vand.u32 %v2671, 4294901760
      %3860 = vmatmul.f32.gmra.mxu0 %v3859
      %v3861 = vpop.f32.mrf.mxu0
      %v3862 = vadd.f32 %v3637, %v3861
      %v3863 = vand.u32 %v2674, 4294901760
      %3864 = vmatmul.f32.gmra.mxu0 %v3863
      %v3865 = vpop.f32.mrf.mxu0
      %v3866 = vadd.f32 %v3643, %v3865
      %v3867 = vand.u32 %v2677, 4294901760
      %3868 = vmatmul.f32.gmra.mxu0 %v3867
      %v3869 = vpop.f32.mrf.mxu0
      %v3870 = vadd.f32 %v3649, %v3869
      %v3871 = vand.u32 %v2680, 4294901760
      %3872 = vmatmul.f32.gmra.mxu0 %v3871
      %v3873 = vpop.f32.mrf.mxu0
      %v3874 = vadd.f32 %v3655, %v3873
      %v3875 = vand.u32 %v2683, 4294901760
      %3876 = vmatmul.f32.gmra.mxu0 %v3875
      %v3877 = vpop.f32.mrf.mxu0
      %v3878 = vadd.f32 %v3661, %v3877
      %v3879 = vand.u32 %v2686, 4294901760
      %3880 = vmatmul.f32.gmra.mxu0 %v3879
      %v3881 = vpop.f32.mrf.mxu0
      %v3882 = vadd.f32 %v3667, %v3881
      %v3883 = vand.u32 %v2689, 4294901760
      %3884 = vmatmul.f32.gmra.mxu0 %v3883
      %v3885 = vpop.f32.mrf.mxu0
      %v3886 = vadd.f32 %v3673, %v3885
      %v3887 = vand.u32 %v2692, 4294901760
      %3888 = vmatmul.f32.gmra.mxu0 %v3887
      %v3889 = vpop.f32.mrf.mxu0
      %v3890 = vadd.f32 %v3679, %v3889
      %v3891 = vand.u32 %v2695, 4294901760
      %3892 = vmatmul.f32.gmra.mxu0 %v3891
      %v3893 = vpop.f32.mrf.mxu0
      %v3894 = vadd.f32 %v3685, %v3893
      %v3895 = vand.u32 %v2698, 4294901760
      %3896 = vmatmul.f32.gmra.mxu0 %v3895
      %v3897 = vpop.f32.mrf.mxu0
      %v3898 = vadd.f32 %v3691, %v3897
      %v3899 = vand.u32 %v2701, 4294901760
      %3900 = vmatmul.f32.gmra.mxu0 %v3899
      %v3901 = vpop.f32.mrf.mxu0
      %v3902 = vadd.f32 %v3697, %v3901
      %v3903 = vand.u32 %v2704, 4294901760
      %3904 = vmatmul.f32.gmra.mxu0 %v3903
      %v3905 = vpop.f32.mrf.mxu0
      %v3906 = vadd.f32 %v3703, %v3905
      %v3907 = vand.u32 %v2707, 4294901760
      %3908 = vmatmul.f32.gmra.mxu0 %v3907
      %v3909 = vpop.f32.mrf.mxu0
      %v3910 = vadd.f32 %v3709, %v3909
      %v3911 = vand.u32 %v2710, 4294901760
      %3912 = vmatmul.f32.gmra.mxu0 %v3911
      %v3913 = vpop.f32.mrf.mxu0
      %v3914 = vadd.f32 %v3715, %v3913
      %v3915 = vand.u32 %v2713, 4294901760
      %3916 = vmatmul.f32.gmra.mxu0 %v3915
      %v3917 = vpop.f32.mrf.mxu0
      %v3918 = vadd.f32 %v3721, %v3917
      %v3919 = vand.u32 %v2716, 4294901760
      %3920 = vmatmul.f32.gmra.mxu0 %v3919
      %v3921 = vpop.f32.mrf.mxu0
      %v3922 = vadd.f32 %v3727, %v3921
      %v3923 = vand.u32 %v2719, 4294901760
      %3924 = vmatmul.f32.gmra.mxu0 %v3923
      %v3925 = vpop.f32.mrf.mxu0
      %v3926 = vadd.f32 %v3733, %v3925
      %3927 = vdwg.mxu0
      %3928 = vmatpush.msra.mxu0 0.0
      %3929 = vmatpush.msra.mxu0 0.0
      %3930 = vmatpush.msra.mxu0 0.0
      %3931 = vmatpush.msra.mxu0 0.0
      %3932 = vmatpush.msra.mxu0 0.0
      %3933 = vmatpush.msra.mxu0 0.0
      %3934 = vmatpush.msra.mxu0 0.0
      %3935 = vmatpush.msra.mxu0 0.0
      %v3936 = vand.u32 %v2601, 4294901760
      %3937 = vmatpush.msra.mxu0 %v3936
      %v3938 = vand.u32 %v2600, 4294901760
      %3939 = vmatpush.msra.mxu0 %v3938
      %v3940 = vand.u32 %v2599, 4294901760
      %3941 = vmatpush.msra.mxu0 %v3940
      %v3942 = vand.u32 %v2598, 4294901760
      %3943 = vmatpush.msra.mxu0 %v3942
      %v3944 = vand.u32 %v2597, 4294901760
      %3945 = vmatpush.msra.mxu0 %v3944
      %v3946 = vand.u32 %v2596, 4294901760
      %3947 = vmatpush.msra.mxu0 %v3946
      %v3948 = vand.u32 %v2595, 4294901760
      %3949 = vmatpush.msra.mxu0 %v3948
      %v3950 = vand.u32 %v2594, 4294901760
      %3951 = vmatpush.msra.mxu0 %v3950
      %v3952 = vand.u32 %v2608, 4294901760
      %3953 = vmatmul.f32.gmra.mxu0 %v3952
      %v3954 = vpop.f32.mrf.mxu0
      %v3955 = vadd.f32 %v3778, %v3954
      %v3956 = vand.u32 %v2611, 4294901760
      %3957 = vmatmul.f32.gmra.mxu0 %v3956
      %v3958 = vpop.f32.mrf.mxu0
      %v3959 = vadd.f32 %v3782, %v3958
      %v3960 = vand.u32 %v2614, 4294901760
      %3961 = vmatmul.f32.gmra.mxu0 %v3960
      %v3962 = vpop.f32.mrf.mxu0
      %v3963 = vadd.f32 %v3786, %v3962
      %v3964 = vand.u32 %v2617, 4294901760
      %3965 = vmatmul.f32.gmra.mxu0 %v3964
      %v3966 = vpop.f32.mrf.mxu0
      %v3967 = vadd.f32 %v3790, %v3966
      %v3968 = vand.u32 %v2620, 4294901760
      %3969 = vmatmul.f32.gmra.mxu0 %v3968
      %v3970 = vpop.f32.mrf.mxu0
      %v3971 = vadd.f32 %v3794, %v3970
      %v3972 = vand.u32 %v2623, 4294901760
      %3973 = vmatmul.f32.gmra.mxu0 %v3972
      %v3974 = vpop.f32.mrf.mxu0
      %v3975 = vadd.f32 %v3798, %v3974
      %v3976 = vand.u32 %v2626, 4294901760
      %3977 = vmatmul.f32.gmra.mxu0 %v3976
      %v3978 = vpop.f32.mrf.mxu0
      %v3979 = vadd.f32 %v3802, %v3978
      %v3980 = vand.u32 %v2629, 4294901760
      %3981 = vmatmul.f32.gmra.mxu0 %v3980
      %v3982 = vpop.f32.mrf.mxu0
      %v3983 = vadd.f32 %v3806, %v3982
      %v3984 = vand.u32 %v2632, 4294901760
      %3985 = vmatmul.f32.gmra.mxu0 %v3984
      %v3986 = vpop.f32.mrf.mxu0
      %v3987 = vadd.f32 %v3810, %v3986
      %v3988 = vand.u32 %v2635, 4294901760
      %3989 = vmatmul.f32.gmra.mxu0 %v3988
      %v3990 = vpop.f32.mrf.mxu0
      %v3991 = vadd.f32 %v3814, %v3990
      %v3992 = vand.u32 %v2638, 4294901760
      %3993 = vmatmul.f32.gmra.mxu0 %v3992
      %v3994 = vpop.f32.mrf.mxu0
      %v3995 = vadd.f32 %v3818, %v3994
      %v3996 = vand.u32 %v2641, 4294901760
      %3997 = vmatmul.f32.gmra.mxu0 %v3996
      %v3998 = vpop.f32.mrf.mxu0
      %v3999 = vadd.f32 %v3822, %v3998
      %v4000 = vand.u32 %v2644, 4294901760
      %4001 = vmatmul.f32.gmra.mxu0 %v4000
      %v4002 = vpop.f32.mrf.mxu0
      %v4003 = vadd.f32 %v3826, %v4002
      %v4004 = vand.u32 %v2647, 4294901760
      %4005 = vmatmul.f32.gmra.mxu0 %v4004
      %v4006 = vpop.f32.mrf.mxu0
      %v4007 = vadd.f32 %v3830, %v4006
      %v4008 = vand.u32 %v2650, 4294901760
      %4009 = vmatmul.f32.gmra.mxu0 %v4008
      %v4010 = vpop.f32.mrf.mxu0
      %v4011 = vadd.f32 %v3834, %v4010
      %v4012 = vand.u32 %v2653, 4294901760
      %4013 = vmatmul.f32.gmra.mxu0 %v4012
      %v4014 = vpop.f32.mrf.mxu0
      %v4015 = vadd.f32 %v3838, %v4014
      %v4016 = vand.u32 %v2656, 4294901760
      %4017 = vmatmul.f32.gmra.mxu0 %v4016
      %v4018 = vpop.f32.mrf.mxu0
      %v4019 = vadd.f32 %v3842, %v4018
      %v4020 = vand.u32 %v2659, 4294901760
      %4021 = vmatmul.f32.gmra.mxu0 %v4020
      %v4022 = vpop.f32.mrf.mxu0
      %v4023 = vadd.f32 %v3846, %v4022
      %v4024 = vand.u32 %v2662, 4294901760
      %4025 = vmatmul.f32.gmra.mxu0 %v4024
      %v4026 = vpop.f32.mrf.mxu0
      %v4027 = vadd.f32 %v3850, %v4026
      %v4028 = vand.u32 %v2665, 4294901760
      %4029 = vmatmul.f32.gmra.mxu0 %v4028
      %v4030 = vpop.f32.mrf.mxu0
      %v4031 = vadd.f32 %v3854, %v4030
      %v4032 = vand.u32 %v2668, 4294901760
      %4033 = vmatmul.f32.gmra.mxu0 %v4032
      %v4034 = vpop.f32.mrf.mxu0
      %v4035 = vadd.f32 %v3858, %v4034
      %v4036 = vand.u32 %v2671, 4294901760
      %4037 = vmatmul.f32.gmra.mxu0 %v4036
      %v4038 = vpop.f32.mrf.mxu0
      %v4039 = vadd.f32 %v3862, %v4038
      %v4040 = vand.u32 %v2674, 4294901760
      %4041 = vmatmul.f32.gmra.mxu0 %v4040
      %v4042 = vpop.f32.mrf.mxu0
      %v4043 = vadd.f32 %v3866, %v4042
      %v4044 = vand.u32 %v2677, 4294901760
      %4045 = vmatmul.f32.gmra.mxu0 %v4044
      %v4046 = vpop.f32.mrf.mxu0
      %v4047 = vadd.f32 %v3870, %v4046
      %v4048 = vand.u32 %v2680, 4294901760
      %4049 = vmatmul.f32.gmra.mxu0 %v4048
      %v4050 = vpop.f32.mrf.mxu0
      %v4051 = vadd.f32 %v3874, %v4050
      %v4052 = vand.u32 %v2683, 4294901760
      %4053 = vmatmul.f32.gmra.mxu0 %v4052
      %v4054 = vpop.f32.mrf.mxu0
      %v4055 = vadd.f32 %v3878, %v4054
      %v4056 = vand.u32 %v2686, 4294901760
      %4057 = vmatmul.f32.gmra.mxu0 %v4056
      %v4058 = vpop.f32.mrf.mxu0
      %v4059 = vadd.f32 %v3882, %v4058
      %v4060 = vand.u32 %v2689, 4294901760
      %4061 = vmatmul.f32.gmra.mxu0 %v4060
      %v4062 = vpop.f32.mrf.mxu0
      %v4063 = vadd.f32 %v3886, %v4062
      %v4064 = vand.u32 %v2692, 4294901760
      %4065 = vmatmul.f32.gmra.mxu0 %v4064
      %v4066 = vpop.f32.mrf.mxu0
      %v4067 = vadd.f32 %v3890, %v4066
      %v4068 = vand.u32 %v2695, 4294901760
      %4069 = vmatmul.f32.gmra.mxu0 %v4068
      %v4070 = vpop.f32.mrf.mxu0
      %v4071 = vadd.f32 %v3894, %v4070
      %v4072 = vand.u32 %v2698, 4294901760
      %4073 = vmatmul.f32.gmra.mxu0 %v4072
      %v4074 = vpop.f32.mrf.mxu0
      %v4075 = vadd.f32 %v3898, %v4074
      %v4076 = vand.u32 %v2701, 4294901760
      %4077 = vmatmul.f32.gmra.mxu0 %v4076
      %v4078 = vpop.f32.mrf.mxu0
      %v4079 = vadd.f32 %v3902, %v4078
      %v4080 = vand.u32 %v2704, 4294901760
      %4081 = vmatmul.f32.gmra.mxu0 %v4080
      %v4082 = vpop.f32.mrf.mxu0
      %v4083 = vadd.f32 %v3906, %v4082
      %v4084 = vand.u32 %v2707, 4294901760
      %4085 = vmatmul.f32.gmra.mxu0 %v4084
      %v4086 = vpop.f32.mrf.mxu0
      %v4087 = vadd.f32 %v3910, %v4086
      %v4088 = vand.u32 %v2710, 4294901760
      %4089 = vmatmul.f32.gmra.mxu0 %v4088
      %v4090 = vpop.f32.mrf.mxu0
      %v4091 = vadd.f32 %v3914, %v4090
      %v4092 = vand.u32 %v2713, 4294901760
      %4093 = vmatmul.f32.gmra.mxu0 %v4092
      %v4094 = vpop.f32.mrf.mxu0
      %v4095 = vadd.f32 %v3918, %v4094
      %v4096 = vand.u32 %v2716, 4294901760
      %4097 = vmatmul.f32.gmra.mxu0 %v4096
      %v4098 = vpop.f32.mrf.mxu0
      %v4099 = vadd.f32 %v3922, %v4098
      %v4100 = vand.u32 %v2719, 4294901760
      %4101 = vmatmul.f32.gmra.mxu0 %v4100
      %v4102 = vpop.f32.mrf.mxu0
      %v4103 = vadd.f32 %v3926, %v4102
      %4104 = vdwg.mxu0
      %v4105 = vmax.f32 %v3955, 0.0
      %v4106 = vmax.f32 %v3959, 0.0
      %v4107 = vmax.f32 %v3963, 0.0
      %v4108 = vmax.f32 %v3967, 0.0
      %v4109 = vmax.f32 %v3971, 0.0
      %v4110 = vmax.f32 %v3975, 0.0
      %v4111 = vmax.f32 %v3979, 0.0
      %v4112 = vmax.f32 %v3983, 0.0
      %v4113 = vmax.f32 %v3987, 0.0
      %v4114 = vmax.f32 %v3991, 0.0
      %v4115 = vmax.f32 %v3995, 0.0
      %v4116 = vmax.f32 %v3999, 0.0
      %v4117 = vmax.f32 %v4003, 0.0
      %v4118 = vmax.f32 %v4007, 0.0
      %v4119 = vmax.f32 %v4011, 0.0
      %v4120 = vmax.f32 %v4015, 0.0
      %v4121 = vmax.f32 %v4019, 0.0
      %v4122 = vmax.f32 %v4023, 0.0
      %v4123 = vmax.f32 %v4027, 0.0
      %v4124 = vmax.f32 %v4031, 0.0
      %v4125 = vmax.f32 %v4035, 0.0
      %v4126 = vmax.f32 %v4039, 0.0
      %v4127 = vmax.f32 %v4043, 0.0
      %v4128 = vmax.f32 %v4047, 0.0
      %v4129 = vmax.f32 %v4051, 0.0
      %v4130 = vmax.f32 %v4055, 0.0
      %v4131 = vmax.f32 %v4059, 0.0
      %v4132 = vmax.f32 %v4063, 0.0
      %v4133 = vmax.f32 %v4067, 0.0
      %v4134 = vmax.f32 %v4071, 0.0
      %v4135 = vmax.f32 %v4075, 0.0
      %v4136 = vmax.f32 %v4079, 0.0
      %v4137 = vmax.f32 %v4083, 0.0
      %v4138 = vmax.f32 %v4087, 0.0
      %v4139 = vmax.f32 %v4091, 0.0
      %v4140 = vmax.f32 %v4095, 0.0
      %v4141 = vmax.f32 %v4099, 0.0
      %v4142 = vmax.f32 %v4103, 0.0
      %v4143 = vld [vmem:[%s7] sm:$0xff]
      %v4144 = vld [vmem:[%s7 + $0x8] sm:$0xff]
      %v4145 = vld [vmem:[%s7 + $0x10] sm:$0xff]
      %v4146 = vld [vmem:[%s7 + $0x18] sm:$0xff]
      %v4147 = vld [vmem:[%s8] sm:$0x1]
      %v4149 = vperm.slane %v4147, 0
      %vm4151 = vcmask 261120
      %v4153 = vsel %vm4151, %v4105, 0
      %v4156 = vsel %vm4151, %v4106, 0
      %v4159 = vsel %vm4151, %v4107, 0
      %v4162 = vsel %vm4151, %v4108, 0
      %v4165 = vsel %vm4151, %v4109, 0
      %v4168 = vsel %vm4151, %v4110, 0
      %v4171 = vsel %vm4151, %v4111, 0
      %v4174 = vsel %vm4151, %v4112, 0
      %v4177 = vsel %vm4151, %v4113, 0
      %v4180 = vsel %vm4151, %v4114, 0
      %v4183 = vsel %vm4151, %v4115, 0
      %v4186 = vsel %vm4151, %v4116, 0
      %v4189 = vsel %vm4151, %v4117, 0
      %v4192 = vsel %vm4151, %v4118, 0
      %v4195 = vsel %vm4151, %v4119, 0
      %v4198 = vsel %vm4151, %v4120, 0
      %v4201 = vsel %vm4151, %v4121, 0
      %v4204 = vsel %vm4151, %v4122, 0
      %v4207 = vsel %vm4151, %v4123, 0
      %v4210 = vsel %vm4151, %v4124, 0
      %v4213 = vsel %vm4151, %v4125, 0
      %v4216 = vsel %vm4151, %v4126, 0
      %v4219 = vsel %vm4151, %v4127, 0
      %v4222 = vsel %vm4151, %v4128, 0
      %v4225 = vsel %vm4151, %v4129, 0
      %v4228 = vsel %vm4151, %v4130, 0
      %v4231 = vsel %vm4151, %v4131, 0
      %v4234 = vsel %vm4151, %v4132, 0
      %v4237 = vsel %vm4151, %v4133, 0
      %v4240 = vsel %vm4151, %v4134, 0
      %v4243 = vsel %vm4151, %v4135, 0
      %v4246 = vsel %vm4151, %v4136, 0
      %v4249 = vsel %vm4151, %v4137, 0
      %v4252 = vsel %vm4151, %v4138, 0
      %v4255 = vsel %vm4151, %v4139, 0
      %v4258 = vsel %vm4151, %v4140, 0
      %v4261 = vsel %vm4151, %v4141, 0
      %v4264 = vsel %vm4151, %v4142, 0
      %4266 = vmatpush.msra.mxu0 0.0
      %4267 = vmatpush.msra.mxu0 0.0
      %4268 = vmatpush.msra.mxu0 0.0
      %4269 = vmatpush.msra.mxu0 0.0
      %4270 = vmatpush.msra.mxu0 0.0
      %4271 = vmatpush.msra.mxu0 0.0
      %4272 = vmatpush.msra.mxu0 0.0
      %4273 = vmatpush.msra.mxu0 0.0
      %4274 = vmatpush.msra.mxu0 0.0
      %4275 = vmatpush.msra.mxu0 0.0
      %4276 = vmatpush.msra.mxu0 0.0
      %4277 = vmatpush.msra.mxu0 0.0
      %v4278 = vand.u32 %v4146, 4294901760
      %4279 = vmatpush.msra.mxu0 %v4278
      %v4280 = vand.u32 %v4145, 4294901760
      %4281 = vmatpush.msra.mxu0 %v4280
      %v4282 = vand.u32 %v4144, 4294901760
      %4283 = vmatpush.msra.mxu0 %v4282
      %v4284 = vand.u32 %v4143, 4294901760
      %4285 = vmatpush.msra.mxu0 %v4284
      %v4286 = vand.u32 %v4153, 4294901760
      %v4287 = vsub.f32 %v4153, %v4286
      %v4288 = vand.u32 %v4287, 4294901760
      %v4289 = vsub.f32 %v4287, %v4288
      %v4290 = vand.u32 %v4289, 4294901760
      %4291 = vmatmul.f32.gmra.mxu0 %v4290
      %v4292 = vpop.f32.mrf.mxu0
      %v4293 = vadd.f32 %v4149, %v4292
      %v4294 = vand.u32 %v4156, 4294901760
      %v4295 = vsub.f32 %v4156, %v4294
      %v4296 = vand.u32 %v4295, 4294901760
      %v4297 = vsub.f32 %v4295, %v4296
      %v4298 = vand.u32 %v4297, 4294901760
      %4299 = vmatmul.f32.gmra.mxu0 %v4298
      %v4300 = vpop.f32.mrf.mxu0
      %v4301 = vadd.f32 %v4149, %v4300
      %v4302 = vand.u32 %v4159, 4294901760
      %v4303 = vsub.f32 %v4159, %v4302
      %v4304 = vand.u32 %v4303, 4294901760
      %v4305 = vsub.f32 %v4303, %v4304
      %v4306 = vand.u32 %v4305, 4294901760
      %4307 = vmatmul.f32.gmra.mxu0 %v4306
      %v4308 = vpop.f32.mrf.mxu0
      %v4309 = vadd.f32 %v4149, %v4308
      %v4310 = vand.u32 %v4162, 4294901760
      %v4311 = vsub.f32 %v4162, %v4310
      %v4312 = vand.u32 %v4311, 4294901760
      %v4313 = vsub.f32 %v4311, %v4312
      %v4314 = vand.u32 %v4313, 4294901760
      %4315 = vmatmul.f32.gmra.mxu0 %v4314
      %v4316 = vpop.f32.mrf.mxu0
      %v4317 = vadd.f32 %v4149, %v4316
      %v4318 = vand.u32 %v4165, 4294901760
      %v4319 = vsub.f32 %v4165, %v4318
      %v4320 = vand.u32 %v4319, 4294901760
      %v4321 = vsub.f32 %v4319, %v4320
      %v4322 = vand.u32 %v4321, 4294901760
      %4323 = vmatmul.f32.gmra.mxu0 %v4322
      %v4324 = vpop.f32.mrf.mxu0
      %v4325 = vadd.f32 %v4149, %v4324
      %v4326 = vand.u32 %v4168, 4294901760
      %v4327 = vsub.f32 %v4168, %v4326
      %v4328 = vand.u32 %v4327, 4294901760
      %v4329 = vsub.f32 %v4327, %v4328
      %v4330 = vand.u32 %v4329, 4294901760
      %4331 = vmatmul.f32.gmra.mxu0 %v4330
      %v4332 = vpop.f32.mrf.mxu0
      %v4333 = vadd.f32 %v4149, %v4332
      %v4334 = vand.u32 %v4171, 4294901760
      %v4335 = vsub.f32 %v4171, %v4334
      %v4336 = vand.u32 %v4335, 4294901760
      %v4337 = vsub.f32 %v4335, %v4336
      %v4338 = vand.u32 %v4337, 4294901760
      %4339 = vmatmul.f32.gmra.mxu0 %v4338
      %v4340 = vpop.f32.mrf.mxu0
      %v4341 = vadd.f32 %v4149, %v4340
      %v4342 = vand.u32 %v4174, 4294901760
      %v4343 = vsub.f32 %v4174, %v4342
      %v4344 = vand.u32 %v4343, 4294901760
      %v4345 = vsub.f32 %v4343, %v4344
      %v4346 = vand.u32 %v4345, 4294901760
      %4347 = vmatmul.f32.gmra.mxu0 %v4346
      %v4348 = vpop.f32.mrf.mxu0
      %v4349 = vadd.f32 %v4149, %v4348
      %v4350 = vand.u32 %v4177, 4294901760
      %v4351 = vsub.f32 %v4177, %v4350
      %v4352 = vand.u32 %v4351, 4294901760
      %v4353 = vsub.f32 %v4351, %v4352
      %v4354 = vand.u32 %v4353, 4294901760
      %4355 = vmatmul.f32.gmra.mxu0 %v4354
      %v4356 = vpop.f32.mrf.mxu0
      %v4357 = vadd.f32 %v4149, %v4356
      %v4358 = vand.u32 %v4180, 4294901760
      %v4359 = vsub.f32 %v4180, %v4358
      %v4360 = vand.u32 %v4359, 4294901760
      %v4361 = vsub.f32 %v4359, %v4360
      %v4362 = vand.u32 %v4361, 4294901760
      %4363 = vmatmul.f32.gmra.mxu0 %v4362
      %v4364 = vpop.f32.mrf.mxu0
      %v4365 = vadd.f32 %v4149, %v4364
      %v4366 = vand.u32 %v4183, 4294901760
      %v4367 = vsub.f32 %v4183, %v4366
      %v4368 = vand.u32 %v4367, 4294901760
      %v4369 = vsub.f32 %v4367, %v4368
      %v4370 = vand.u32 %v4369, 4294901760
      %4371 = vmatmul.f32.gmra.mxu0 %v4370
      %v4372 = vpop.f32.mrf.mxu0
      %v4373 = vadd.f32 %v4149, %v4372
      %v4374 = vand.u32 %v4186, 4294901760
      %v4375 = vsub.f32 %v4186, %v4374
      %v4376 = vand.u32 %v4375, 4294901760
      %v4377 = vsub.f32 %v4375, %v4376
      %v4378 = vand.u32 %v4377, 4294901760
      %4379 = vmatmul.f32.gmra.mxu0 %v4378
      %v4380 = vpop.f32.mrf.mxu0
      %v4381 = vadd.f32 %v4149, %v4380
      %v4382 = vand.u32 %v4189, 4294901760
      %v4383 = vsub.f32 %v4189, %v4382
      %v4384 = vand.u32 %v4383, 4294901760
      %v4385 = vsub.f32 %v4383, %v4384
      %v4386 = vand.u32 %v4385, 4294901760
      %4387 = vmatmul.f32.gmra.mxu0 %v4386
      %v4388 = vpop.f32.mrf.mxu0
      %v4389 = vadd.f32 %v4149, %v4388
      %v4390 = vand.u32 %v4192, 4294901760
      %v4391 = vsub.f32 %v4192, %v4390
      %v4392 = vand.u32 %v4391, 4294901760
      %v4393 = vsub.f32 %v4391, %v4392
      %v4394 = vand.u32 %v4393, 4294901760
      %4395 = vmatmul.f32.gmra.mxu0 %v4394
      %v4396 = vpop.f32.mrf.mxu0
      %v4397 = vadd.f32 %v4149, %v4396
      %v4398 = vand.u32 %v4195, 4294901760
      %v4399 = vsub.f32 %v4195, %v4398
      %v4400 = vand.u32 %v4399, 4294901760
      %v4401 = vsub.f32 %v4399, %v4400
      %v4402 = vand.u32 %v4401, 4294901760
      %4403 = vmatmul.f32.gmra.mxu0 %v4402
      %v4404 = vpop.f32.mrf.mxu0
      %v4405 = vadd.f32 %v4149, %v4404
      %v4406 = vand.u32 %v4198, 4294901760
      %v4407 = vsub.f32 %v4198, %v4406
      %v4408 = vand.u32 %v4407, 4294901760
      %v4409 = vsub.f32 %v4407, %v4408
      %v4410 = vand.u32 %v4409, 4294901760
      %4411 = vmatmul.f32.gmra.mxu0 %v4410
      %v4412 = vpop.f32.mrf.mxu0
      %v4413 = vadd.f32 %v4149, %v4412
      %v4414 = vand.u32 %v4201, 4294901760
      %v4415 = vsub.f32 %v4201, %v4414
      %v4416 = vand.u32 %v4415, 4294901760
      %v4417 = vsub.f32 %v4415, %v4416
      %v4418 = vand.u32 %v4417, 4294901760
      %4419 = vmatmul.f32.gmra.mxu0 %v4418
      %v4420 = vpop.f32.mrf.mxu0
      %v4421 = vadd.f32 %v4149, %v4420
      %v4422 = vand.u32 %v4204, 4294901760
      %v4423 = vsub.f32 %v4204, %v4422
      %v4424 = vand.u32 %v4423, 4294901760
      %v4425 = vsub.f32 %v4423, %v4424
      %v4426 = vand.u32 %v4425, 4294901760
      %4427 = vmatmul.f32.gmra.mxu0 %v4426
      %v4428 = vpop.f32.mrf.mxu0
      %v4429 = vadd.f32 %v4149, %v4428
      %v4430 = vand.u32 %v4207, 4294901760
      %v4431 = vsub.f32 %v4207, %v4430
      %v4432 = vand.u32 %v4431, 4294901760
      %v4433 = vsub.f32 %v4431, %v4432
      %v4434 = vand.u32 %v4433, 4294901760
      %4435 = vmatmul.f32.gmra.mxu0 %v4434
      %v4436 = vpop.f32.mrf.mxu0
      %v4437 = vadd.f32 %v4149, %v4436
      %v4438 = vand.u32 %v4210, 4294901760
      %v4439 = vsub.f32 %v4210, %v4438
      %v4440 = vand.u32 %v4439, 4294901760
      %v4441 = vsub.f32 %v4439, %v4440
      %v4442 = vand.u32 %v4441, 4294901760
      %4443 = vmatmul.f32.gmra.mxu0 %v4442
      %v4444 = vpop.f32.mrf.mxu0
      %v4445 = vadd.f32 %v4149, %v4444
      %v4446 = vand.u32 %v4213, 4294901760
      %v4447 = vsub.f32 %v4213, %v4446
      %v4448 = vand.u32 %v4447, 4294901760
      %v4449 = vsub.f32 %v4447, %v4448
      %v4450 = vand.u32 %v4449, 4294901760
      %4451 = vmatmul.f32.gmra.mxu0 %v4450
      %v4452 = vpop.f32.mrf.mxu0
      %v4453 = vadd.f32 %v4149, %v4452
      %v4454 = vand.u32 %v4216, 4294901760
      %v4455 = vsub.f32 %v4216, %v4454
      %v4456 = vand.u32 %v4455, 4294901760
      %v4457 = vsub.f32 %v4455, %v4456
      %v4458 = vand.u32 %v4457, 4294901760
      %4459 = vmatmul.f32.gmra.mxu0 %v4458
      %v4460 = vpop.f32.mrf.mxu0
      %v4461 = vadd.f32 %v4149, %v4460
      %v4462 = vand.u32 %v4219, 4294901760
      %v4463 = vsub.f32 %v4219, %v4462
      %v4464 = vand.u32 %v4463, 4294901760
      %v4465 = vsub.f32 %v4463, %v4464
      %v4466 = vand.u32 %v4465, 4294901760
      %4467 = vmatmul.f32.gmra.mxu0 %v4466
      %v4468 = vpop.f32.mrf.mxu0
      %v4469 = vadd.f32 %v4149, %v4468
      %v4470 = vand.u32 %v4222, 4294901760
      %v4471 = vsub.f32 %v4222, %v4470
      %v4472 = vand.u32 %v4471, 4294901760
      %v4473 = vsub.f32 %v4471, %v4472
      %v4474 = vand.u32 %v4473, 4294901760
      %4475 = vmatmul.f32.gmra.mxu0 %v4474
      %v4476 = vpop.f32.mrf.mxu0
      %v4477 = vadd.f32 %v4149, %v4476
      %v4478 = vand.u32 %v4225, 4294901760
      %v4479 = vsub.f32 %v4225, %v4478
      %v4480 = vand.u32 %v4479, 4294901760
      %v4481 = vsub.f32 %v4479, %v4480
      %v4482 = vand.u32 %v4481, 4294901760
      %4483 = vmatmul.f32.gmra.mxu0 %v4482
      %v4484 = vpop.f32.mrf.mxu0
      %v4485 = vadd.f32 %v4149, %v4484
      %v4486 = vand.u32 %v4228, 4294901760
      %v4487 = vsub.f32 %v4228, %v4486
      %v4488 = vand.u32 %v4487, 4294901760
      %v4489 = vsub.f32 %v4487, %v4488
      %v4490 = vand.u32 %v4489, 4294901760
      %4491 = vmatmul.f32.gmra.mxu0 %v4490
      %v4492 = vpop.f32.mrf.mxu0
      %v4493 = vadd.f32 %v4149, %v4492
      %v4494 = vand.u32 %v4231, 4294901760
      %v4495 = vsub.f32 %v4231, %v4494
      %v4496 = vand.u32 %v4495, 4294901760
      %v4497 = vsub.f32 %v4495, %v4496
      %v4498 = vand.u32 %v4497, 4294901760
      %4499 = vmatmul.f32.gmra.mxu0 %v4498
      %v4500 = vpop.f32.mrf.mxu0
      %v4501 = vadd.f32 %v4149, %v4500
      %v4502 = vand.u32 %v4234, 4294901760
      %v4503 = vsub.f32 %v4234, %v4502
      %v4504 = vand.u32 %v4503, 4294901760
      %v4505 = vsub.f32 %v4503, %v4504
      %v4506 = vand.u32 %v4505, 4294901760
      %4507 = vmatmul.f32.gmra.mxu0 %v4506
      %v4508 = vpop.f32.mrf.mxu0
      %v4509 = vadd.f32 %v4149, %v4508
      %v4510 = vand.u32 %v4237, 4294901760
      %v4511 = vsub.f32 %v4237, %v4510
      %v4512 = vand.u32 %v4511, 4294901760
      %v4513 = vsub.f32 %v4511, %v4512
      %v4514 = vand.u32 %v4513, 4294901760
      %4515 = vmatmul.f32.gmra.mxu0 %v4514
      %v4516 = vpop.f32.mrf.mxu0
      %v4517 = vadd.f32 %v4149, %v4516
      %v4518 = vand.u32 %v4240, 4294901760
      %v4519 = vsub.f32 %v4240, %v4518
      %v4520 = vand.u32 %v4519, 4294901760
      %v4521 = vsub.f32 %v4519, %v4520
      %v4522 = vand.u32 %v4521, 4294901760
      %4523 = vmatmul.f32.gmra.mxu0 %v4522
      %v4524 = vpop.f32.mrf.mxu0
      %v4525 = vadd.f32 %v4149, %v4524
      %v4526 = vand.u32 %v4243, 4294901760
      %v4527 = vsub.f32 %v4243, %v4526
      %v4528 = vand.u32 %v4527, 4294901760
      %v4529 = vsub.f32 %v4527, %v4528
      %v4530 = vand.u32 %v4529, 4294901760
      %4531 = vmatmul.f32.gmra.mxu0 %v4530
      %v4532 = vpop.f32.mrf.mxu0
      %v4533 = vadd.f32 %v4149, %v4532
      %v4534 = vand.u32 %v4246, 4294901760
      %v4535 = vsub.f32 %v4246, %v4534
      %v4536 = vand.u32 %v4535, 4294901760
      %v4537 = vsub.f32 %v4535, %v4536
      %v4538 = vand.u32 %v4537, 4294901760
      %4539 = vmatmul.f32.gmra.mxu0 %v4538
      %v4540 = vpop.f32.mrf.mxu0
      %v4541 = vadd.f32 %v4149, %v4540
      %v4542 = vand.u32 %v4249, 4294901760
      %v4543 = vsub.f32 %v4249, %v4542
      %v4544 = vand.u32 %v4543, 4294901760
      %v4545 = vsub.f32 %v4543, %v4544
      %v4546 = vand.u32 %v4545, 4294901760
      %4547 = vmatmul.f32.gmra.mxu0 %v4546
      %v4548 = vpop.f32.mrf.mxu0
      %v4549 = vadd.f32 %v4149, %v4548
      %v4550 = vand.u32 %v4252, 4294901760
      %v4551 = vsub.f32 %v4252, %v4550
      %v4552 = vand.u32 %v4551, 4294901760
      %v4553 = vsub.f32 %v4551, %v4552
      %v4554 = vand.u32 %v4553, 4294901760
      %4555 = vmatmul.f32.gmra.mxu0 %v4554
      %v4556 = vpop.f32.mrf.mxu0
      %v4557 = vadd.f32 %v4149, %v4556
      %v4558 = vand.u32 %v4255, 4294901760
      %v4559 = vsub.f32 %v4255, %v4558
      %v4560 = vand.u32 %v4559, 4294901760
      %v4561 = vsub.f32 %v4559, %v4560
      %v4562 = vand.u32 %v4561, 4294901760
      %4563 = vmatmul.f32.gmra.mxu0 %v4562
      %v4564 = vpop.f32.mrf.mxu0
      %v4565 = vadd.f32 %v4149, %v4564
      %v4566 = vand.u32 %v4258, 4294901760
      %v4567 = vsub.f32 %v4258, %v4566
      %v4568 = vand.u32 %v4567, 4294901760
      %v4569 = vsub.f32 %v4567, %v4568
      %v4570 = vand.u32 %v4569, 4294901760
      %4571 = vmatmul.f32.gmra.mxu0 %v4570
      %v4572 = vpop.f32.mrf.mxu0
      %v4573 = vadd.f32 %v4149, %v4572
      %v4574 = vand.u32 %v4261, 4294901760
      %v4575 = vsub.f32 %v4261, %v4574
      %v4576 = vand.u32 %v4575, 4294901760
      %v4577 = vsub.f32 %v4575, %v4576
      %v4578 = vand.u32 %v4577, 4294901760
      %4579 = vmatmul.f32.gmra.mxu0 %v4578
      %v4580 = vpop.f32.mrf.mxu0
      %v4581 = vadd.f32 %v4149, %v4580
      %v4582 = vand.u32 %v4264, 4294901760
      %v4583 = vsub.f32 %v4264, %v4582
      %v4584 = vand.u32 %v4583, 4294901760
      %v4585 = vsub.f32 %v4583, %v4584
      %v4586 = vand.u32 %v4585, 4294901760
      %4587 = vmatmul.f32.gmra.mxu0 %v4586
      %v4588 = vpop.f32.mrf.mxu0
      %v4589 = vadd.f32 %v4149, %v4588
      %4590 = vdwg.mxu0
      %4591 = vmatpush.msra.mxu0 0.0
      %4592 = vmatpush.msra.mxu0 0.0
      %4593 = vmatpush.msra.mxu0 0.0
      %4594 = vmatpush.msra.mxu0 0.0
      %4595 = vmatpush.msra.mxu0 0.0
      %4596 = vmatpush.msra.mxu0 0.0
      %4597 = vmatpush.msra.mxu0 0.0
      %4598 = vmatpush.msra.mxu0 0.0
      %4599 = vmatpush.msra.mxu0 0.0
      %4600 = vmatpush.msra.mxu0 0.0
      %4601 = vmatpush.msra.mxu0 0.0
      %4602 = vmatpush.msra.mxu0 0.0
      %v4603 = vand.u32 %v4146, 4294901760
      %v4604 = vsub.f32 %v4146, %v4603
      %v4605 = vand.u32 %v4604, 4294901760
      %v4606 = vsub.f32 %v4604, %v4605
      %v4607 = vand.u32 %v4606, 4294901760
      %4608 = vmatpush.msra.mxu0 %v4607
      %v4609 = vand.u32 %v4145, 4294901760
      %v4610 = vsub.f32 %v4145, %v4609
      %v4611 = vand.u32 %v4610, 4294901760
      %v4612 = vsub.f32 %v4610, %v4611
      %v4613 = vand.u32 %v4612, 4294901760
      %4614 = vmatpush.msra.mxu0 %v4613
      %v4615 = vand.u32 %v4144, 4294901760
      %v4616 = vsub.f32 %v4144, %v4615
      %v4617 = vand.u32 %v4616, 4294901760
      %v4618 = vsub.f32 %v4616, %v4617
      %v4619 = vand.u32 %v4618, 4294901760
      %4620 = vmatpush.msra.mxu0 %v4619
      %v4621 = vand.u32 %v4143, 4294901760
      %v4622 = vsub.f32 %v4143, %v4621
      %v4623 = vand.u32 %v4622, 4294901760
      %v4624 = vsub.f32 %v4622, %v4623
      %v4625 = vand.u32 %v4624, 4294901760
      %4626 = vmatpush.msra.mxu0 %v4625
      %v4627 = vand.u32 %v4153, 4294901760
      %4628 = vmatmul.f32.gmra.mxu0 %v4627
      %v4629 = vpop.f32.mrf.mxu0
      %v4630 = vadd.f32 %v4293, %v4629
      %v4631 = vand.u32 %v4156, 4294901760
      %4632 = vmatmul.f32.gmra.mxu0 %v4631
      %v4633 = vpop.f32.mrf.mxu0
      %v4634 = vadd.f32 %v4301, %v4633
      %v4635 = vand.u32 %v4159, 4294901760
      %4636 = vmatmul.f32.gmra.mxu0 %v4635
      %v4637 = vpop.f32.mrf.mxu0
      %v4638 = vadd.f32 %v4309, %v4637
      %v4639 = vand.u32 %v4162, 4294901760
      %4640 = vmatmul.f32.gmra.mxu0 %v4639
      %v4641 = vpop.f32.mrf.mxu0
      %v4642 = vadd.f32 %v4317, %v4641
      %v4643 = vand.u32 %v4165, 4294901760
      %4644 = vmatmul.f32.gmra.mxu0 %v4643
      %v4645 = vpop.f32.mrf.mxu0
      %v4646 = vadd.f32 %v4325, %v4645
      %v4647 = vand.u32 %v4168, 4294901760
      %4648 = vmatmul.f32.gmra.mxu0 %v4647
      %v4649 = vpop.f32.mrf.mxu0
      %v4650 = vadd.f32 %v4333, %v4649
      %v4651 = vand.u32 %v4171, 4294901760
      %4652 = vmatmul.f32.gmra.mxu0 %v4651
      %v4653 = vpop.f32.mrf.mxu0
      %v4654 = vadd.f32 %v4341, %v4653
      %v4655 = vand.u32 %v4174, 4294901760
      %4656 = vmatmul.f32.gmra.mxu0 %v4655
      %v4657 = vpop.f32.mrf.mxu0
      %v4658 = vadd.f32 %v4349, %v4657
      %v4659 = vand.u32 %v4177, 4294901760
      %4660 = vmatmul.f32.gmra.mxu0 %v4659
      %v4661 = vpop.f32.mrf.mxu0
      %v4662 = vadd.f32 %v4357, %v4661
      %v4663 = vand.u32 %v4180, 4294901760
      %4664 = vmatmul.f32.gmra.mxu0 %v4663
      %v4665 = vpop.f32.mrf.mxu0
      %v4666 = vadd.f32 %v4365, %v4665
      %v4667 = vand.u32 %v4183, 4294901760
      %4668 = vmatmul.f32.gmra.mxu0 %v4667
      %v4669 = vpop.f32.mrf.mxu0
      %v4670 = vadd.f32 %v4373, %v4669
      %v4671 = vand.u32 %v4186, 4294901760
      %4672 = vmatmul.f32.gmra.mxu0 %v4671
      %v4673 = vpop.f32.mrf.mxu0
      %v4674 = vadd.f32 %v4381, %v4673
      %v4675 = vand.u32 %v4189, 4294901760
      %4676 = vmatmul.f32.gmra.mxu0 %v4675
      %v4677 = vpop.f32.mrf.mxu0
      %v4678 = vadd.f32 %v4389, %v4677
      %v4679 = vand.u32 %v4192, 4294901760
      %4680 = vmatmul.f32.gmra.mxu0 %v4679
      %v4681 = vpop.f32.mrf.mxu0
      %v4682 = vadd.f32 %v4397, %v4681
      %v4683 = vand.u32 %v4195, 4294901760
      %4684 = vmatmul.f32.gmra.mxu0 %v4683
      %v4685 = vpop.f32.mrf.mxu0
      %v4686 = vadd.f32 %v4405, %v4685
      %v4687 = vand.u32 %v4198, 4294901760
      %4688 = vmatmul.f32.gmra.mxu0 %v4687
      %v4689 = vpop.f32.mrf.mxu0
      %v4690 = vadd.f32 %v4413, %v4689
      %v4691 = vand.u32 %v4201, 4294901760
      %4692 = vmatmul.f32.gmra.mxu0 %v4691
      %v4693 = vpop.f32.mrf.mxu0
      %v4694 = vadd.f32 %v4421, %v4693
      %v4695 = vand.u32 %v4204, 4294901760
      %4696 = vmatmul.f32.gmra.mxu0 %v4695
      %v4697 = vpop.f32.mrf.mxu0
      %v4698 = vadd.f32 %v4429, %v4697
      %v4699 = vand.u32 %v4207, 4294901760
      %4700 = vmatmul.f32.gmra.mxu0 %v4699
      %v4701 = vpop.f32.mrf.mxu0
      %v4702 = vadd.f32 %v4437, %v4701
      %v4703 = vand.u32 %v4210, 4294901760
      %4704 = vmatmul.f32.gmra.mxu0 %v4703
      %v4705 = vpop.f32.mrf.mxu0
      %v4706 = vadd.f32 %v4445, %v4705
      %v4707 = vand.u32 %v4213, 4294901760
      %4708 = vmatmul.f32.gmra.mxu0 %v4707
      %v4709 = vpop.f32.mrf.mxu0
      %v4710 = vadd.f32 %v4453, %v4709
      %v4711 = vand.u32 %v4216, 4294901760
      %4712 = vmatmul.f32.gmra.mxu0 %v4711
      %v4713 = vpop.f32.mrf.mxu0
      %v4714 = vadd.f32 %v4461, %v4713
      %v4715 = vand.u32 %v4219, 4294901760
      %4716 = vmatmul.f32.gmra.mxu0 %v4715
      %v4717 = vpop.f32.mrf.mxu0
      %v4718 = vadd.f32 %v4469, %v4717
      %v4719 = vand.u32 %v4222, 4294901760
      %4720 = vmatmul.f32.gmra.mxu0 %v4719
      %v4721 = vpop.f32.mrf.mxu0
      %v4722 = vadd.f32 %v4477, %v4721
      %v4723 = vand.u32 %v4225, 4294901760
      %4724 = vmatmul.f32.gmra.mxu0 %v4723
      %v4725 = vpop.f32.mrf.mxu0
      %v4726 = vadd.f32 %v4485, %v4725
      %v4727 = vand.u32 %v4228, 4294901760
      %4728 = vmatmul.f32.gmra.mxu0 %v4727
      %v4729 = vpop.f32.mrf.mxu0
      %v4730 = vadd.f32 %v4493, %v4729
      %v4731 = vand.u32 %v4231, 4294901760
      %4732 = vmatmul.f32.gmra.mxu0 %v4731
      %v4733 = vpop.f32.mrf.mxu0
      %v4734 = vadd.f32 %v4501, %v4733
      %v4735 = vand.u32 %v4234, 4294901760
      %4736 = vmatmul.f32.gmra.mxu0 %v4735
      %v4737 = vpop.f32.mrf.mxu0
      %v4738 = vadd.f32 %v4509, %v4737
      %v4739 = vand.u32 %v4237, 4294901760
      %4740 = vmatmul.f32.gmra.mxu0 %v4739
      %v4741 = vpop.f32.mrf.mxu0
      %v4742 = vadd.f32 %v4517, %v4741
      %v4743 = vand.u32 %v4240, 4294901760
      %4744 = vmatmul.f32.gmra.mxu0 %v4743
      %v4745 = vpop.f32.mrf.mxu0
      %v4746 = vadd.f32 %v4525, %v4745
      %v4747 = vand.u32 %v4243, 4294901760
      %4748 = vmatmul.f32.gmra.mxu0 %v4747
      %v4749 = vpop.f32.mrf.mxu0
      %v4750 = vadd.f32 %v4533, %v4749
      %v4751 = vand.u32 %v4246, 4294901760
      %4752 = vmatmul.f32.gmra.mxu0 %v4751
      %v4753 = vpop.f32.mrf.mxu0
      %v4754 = vadd.f32 %v4541, %v4753
      %v4755 = vand.u32 %v4249, 4294901760
      %4756 = vmatmul.f32.gmra.mxu0 %v4755
      %v4757 = vpop.f32.mrf.mxu0
      %v4758 = vadd.f32 %v4549, %v4757
      %v4759 = vand.u32 %v4252, 4294901760
      %4760 = vmatmul.f32.gmra.mxu0 %v4759
      %v4761 = vpop.f32.mrf.mxu0
      %v4762 = vadd.f32 %v4557, %v4761
      %v4763 = vand.u32 %v4255, 4294901760
      %4764 = vmatmul.f32.gmra.mxu0 %v4763
      %v4765 = vpop.f32.mrf.mxu0
      %v4766 = vadd.f32 %v4565, %v4765
      %v4767 = vand.u32 %v4258, 4294901760
      %4768 = vmatmul.f32.gmra.mxu0 %v4767
      %v4769 = vpop.f32.mrf.mxu0
      %v4770 = vadd.f32 %v4573, %v4769
      %v4771 = vand.u32 %v4261, 4294901760
      %4772 = vmatmul.f32.gmra.mxu0 %v4771
      %v4773 = vpop.f32.mrf.mxu0
      %v4774 = vadd.f32 %v4581, %v4773
      %v4775 = vand.u32 %v4264, 4294901760
      %4776 = vmatmul.f32.gmra.mxu0 %v4775
      %v4777 = vpop.f32.mrf.mxu0
      %v4778 = vadd.f32 %v4589, %v4777
      %4779 = vdwg.mxu0
      %4780 = vmatpush.msra.mxu0 0.0
      %4781 = vmatpush.msra.mxu0 0.0
      %4782 = vmatpush.msra.mxu0 0.0
      %4783 = vmatpush.msra.mxu0 0.0
      %4784 = vmatpush.msra.mxu0 0.0
      %4785 = vmatpush.msra.mxu0 0.0
      %4786 = vmatpush.msra.mxu0 0.0
      %4787 = vmatpush.msra.mxu0 0.0
      %4788 = vmatpush.msra.mxu0 0.0
      %4789 = vmatpush.msra.mxu0 0.0
      %4790 = vmatpush.msra.mxu0 0.0
      %4791 = vmatpush.msra.mxu0 0.0
      %v4792 = vand.u32 %v4146, 4294901760
      %v4793 = vsub.f32 %v4146, %v4792
      %4794 = vmatpush.msra.mxu0 %v4793
      %v4795 = vand.u32 %v4145, 4294901760
      %v4796 = vsub.f32 %v4145, %v4795
      %4797 = vmatpush.msra.mxu0 %v4796
      %v4798 = vand.u32 %v4144, 4294901760
      %v4799 = vsub.f32 %v4144, %v4798
      %4800 = vmatpush.msra.mxu0 %v4799
      %v4801 = vand.u32 %v4143, 4294901760
      %v4802 = vsub.f32 %v4143, %v4801
      %4803 = vmatpush.msra.mxu0 %v4802
      %v4804 = vand.u32 %v4153, 4294901760
      %v4805 = vsub.f32 %v4153, %v4804
      %4806 = vmatmul.f32.gmra.mxu0 %v4805
      %v4807 = vpop.f32.mrf.mxu0
      %v4808 = vadd.f32 %v4630, %v4807
      %v4809 = vand.u32 %v4156, 4294901760
      %v4810 = vsub.f32 %v4156, %v4809
      %4811 = vmatmul.f32.gmra.mxu0 %v4810
      %v4812 = vpop.f32.mrf.mxu0
      %v4813 = vadd.f32 %v4634, %v4812
      %v4814 = vand.u32 %v4159, 4294901760
      %v4815 = vsub.f32 %v4159, %v4814
      %4816 = vmatmul.f32.gmra.mxu0 %v4815
      %v4817 = vpop.f32.mrf.mxu0
      %v4818 = vadd.f32 %v4638, %v4817
      %v4819 = vand.u32 %v4162, 4294901760
      %v4820 = vsub.f32 %v4162, %v4819
      %4821 = vmatmul.f32.gmra.mxu0 %v4820
      %v4822 = vpop.f32.mrf.mxu0
      %v4823 = vadd.f32 %v4642, %v4822
      %v4824 = vand.u32 %v4165, 4294901760
      %v4825 = vsub.f32 %v4165, %v4824
      %4826 = vmatmul.f32.gmra.mxu0 %v4825
      %v4827 = vpop.f32.mrf.mxu0
      %v4828 = vadd.f32 %v4646, %v4827
      %v4829 = vand.u32 %v4168, 4294901760
      %v4830 = vsub.f32 %v4168, %v4829
      %4831 = vmatmul.f32.gmra.mxu0 %v4830
      %v4832 = vpop.f32.mrf.mxu0
      %v4833 = vadd.f32 %v4650, %v4832
      %v4834 = vand.u32 %v4171, 4294901760
      %v4835 = vsub.f32 %v4171, %v4834
      %4836 = vmatmul.f32.gmra.mxu0 %v4835
      %v4837 = vpop.f32.mrf.mxu0
      %v4838 = vadd.f32 %v4654, %v4837
      %v4839 = vand.u32 %v4174, 4294901760
      %v4840 = vsub.f32 %v4174, %v4839
      %4841 = vmatmul.f32.gmra.mxu0 %v4840
      %v4842 = vpop.f32.mrf.mxu0
      %v4843 = vadd.f32 %v4658, %v4842
      %v4844 = vand.u32 %v4177, 4294901760
      %v4845 = vsub.f32 %v4177, %v4844
      %4846 = vmatmul.f32.gmra.mxu0 %v4845
      %v4847 = vpop.f32.mrf.mxu0
      %v4848 = vadd.f32 %v4662, %v4847
      %v4849 = vand.u32 %v4180, 4294901760
      %v4850 = vsub.f32 %v4180, %v4849
      %4851 = vmatmul.f32.gmra.mxu0 %v4850
      %v4852 = vpop.f32.mrf.mxu0
      %v4853 = vadd.f32 %v4666, %v4852
      %v4854 = vand.u32 %v4183, 4294901760
      %v4855 = vsub.f32 %v4183, %v4854
      %4856 = vmatmul.f32.gmra.mxu0 %v4855
      %v4857 = vpop.f32.mrf.mxu0
      %v4858 = vadd.f32 %v4670, %v4857
      %v4859 = vand.u32 %v4186, 4294901760
      %v4860 = vsub.f32 %v4186, %v4859
      %4861 = vmatmul.f32.gmra.mxu0 %v4860
      %v4862 = vpop.f32.mrf.mxu0
      %v4863 = vadd.f32 %v4674, %v4862
      %v4864 = vand.u32 %v4189, 4294901760
      %v4865 = vsub.f32 %v4189, %v4864
      %4866 = vmatmul.f32.gmra.mxu0 %v4865
      %v4867 = vpop.f32.mrf.mxu0
      %v4868 = vadd.f32 %v4678, %v4867
      %v4869 = vand.u32 %v4192, 4294901760
      %v4870 = vsub.f32 %v4192, %v4869
      %4871 = vmatmul.f32.gmra.mxu0 %v4870
      %v4872 = vpop.f32.mrf.mxu0
      %v4873 = vadd.f32 %v4682, %v4872
      %v4874 = vand.u32 %v4195, 4294901760
      %v4875 = vsub.f32 %v4195, %v4874
      %4876 = vmatmul.f32.gmra.mxu0 %v4875
      %v4877 = vpop.f32.mrf.mxu0
      %v4878 = vadd.f32 %v4686, %v4877
      %v4879 = vand.u32 %v4198, 4294901760
      %v4880 = vsub.f32 %v4198, %v4879
      %4881 = vmatmul.f32.gmra.mxu0 %v4880
      %v4882 = vpop.f32.mrf.mxu0
      %v4883 = vadd.f32 %v4690, %v4882
      %v4884 = vand.u32 %v4201, 4294901760
      %v4885 = vsub.f32 %v4201, %v4884
      %4886 = vmatmul.f32.gmra.mxu0 %v4885
      %v4887 = vpop.f32.mrf.mxu0
      %v4888 = vadd.f32 %v4694, %v4887
      %v4889 = vand.u32 %v4204, 4294901760
      %v4890 = vsub.f32 %v4204, %v4889
      %4891 = vmatmul.f32.gmra.mxu0 %v4890
      %v4892 = vpop.f32.mrf.mxu0
      %v4893 = vadd.f32 %v4698, %v4892
      %v4894 = vand.u32 %v4207, 4294901760
      %v4895 = vsub.f32 %v4207, %v4894
      %4896 = vmatmul.f32.gmra.mxu0 %v4895
      %v4897 = vpop.f32.mrf.mxu0
      %v4898 = vadd.f32 %v4702, %v4897
      %v4899 = vand.u32 %v4210, 4294901760
      %v4900 = vsub.f32 %v4210, %v4899
      %4901 = vmatmul.f32.gmra.mxu0 %v4900
      %v4902 = vpop.f32.mrf.mxu0
      %v4903 = vadd.f32 %v4706, %v4902
      %v4904 = vand.u32 %v4213, 4294901760
      %v4905 = vsub.f32 %v4213, %v4904
      %4906 = vmatmul.f32.gmra.mxu0 %v4905
      %v4907 = vpop.f32.mrf.mxu0
      %v4908 = vadd.f32 %v4710, %v4907
      %v4909 = vand.u32 %v4216, 4294901760
      %v4910 = vsub.f32 %v4216, %v4909
      %4911 = vmatmul.f32.gmra.mxu0 %v4910
      %v4912 = vpop.f32.mrf.mxu0
      %v4913 = vadd.f32 %v4714, %v4912
      %v4914 = vand.u32 %v4219, 4294901760
      %v4915 = vsub.f32 %v4219, %v4914
      %4916 = vmatmul.f32.gmra.mxu0 %v4915
      %v4917 = vpop.f32.mrf.mxu0
      %v4918 = vadd.f32 %v4718, %v4917
      %v4919 = vand.u32 %v4222, 4294901760
      %v4920 = vsub.f32 %v4222, %v4919
      %4921 = vmatmul.f32.gmra.mxu0 %v4920
      %v4922 = vpop.f32.mrf.mxu0
      %v4923 = vadd.f32 %v4722, %v4922
      %v4924 = vand.u32 %v4225, 4294901760
      %v4925 = vsub.f32 %v4225, %v4924
      %4926 = vmatmul.f32.gmra.mxu0 %v4925
      %v4927 = vpop.f32.mrf.mxu0
      %v4928 = vadd.f32 %v4726, %v4927
      %v4929 = vand.u32 %v4228, 4294901760
      %v4930 = vsub.f32 %v4228, %v4929
      %4931 = vmatmul.f32.gmra.mxu0 %v4930
      %v4932 = vpop.f32.mrf.mxu0
      %v4933 = vadd.f32 %v4730, %v4932
      %v4934 = vand.u32 %v4231, 4294901760
      %v4935 = vsub.f32 %v4231, %v4934
      %4936 = vmatmul.f32.gmra.mxu0 %v4935
      %v4937 = vpop.f32.mrf.mxu0
      %v4938 = vadd.f32 %v4734, %v4937
      %v4939 = vand.u32 %v4234, 4294901760
      %v4940 = vsub.f32 %v4234, %v4939
      %4941 = vmatmul.f32.gmra.mxu0 %v4940
      %v4942 = vpop.f32.mrf.mxu0
      %v4943 = vadd.f32 %v4738, %v4942
      %v4944 = vand.u32 %v4237, 4294901760
      %v4945 = vsub.f32 %v4237, %v4944
      %4946 = vmatmul.f32.gmra.mxu0 %v4945
      %v4947 = vpop.f32.mrf.mxu0
      %v4948 = vadd.f32 %v4742, %v4947
      %v4949 = vand.u32 %v4240, 4294901760
      %v4950 = vsub.f32 %v4240, %v4949
      %4951 = vmatmul.f32.gmra.mxu0 %v4950
      %v4952 = vpop.f32.mrf.mxu0
      %v4953 = vadd.f32 %v4746, %v4952
      %v4954 = vand.u32 %v4243, 4294901760
      %v4955 = vsub.f32 %v4243, %v4954
      %4956 = vmatmul.f32.gmra.mxu0 %v4955
      %v4957 = vpop.f32.mrf.mxu0
      %v4958 = vadd.f32 %v4750, %v4957
      %v4959 = vand.u32 %v4246, 4294901760
      %v4960 = vsub.f32 %v4246, %v4959
      %4961 = vmatmul.f32.gmra.mxu0 %v4960
      %v4962 = vpop.f32.mrf.mxu0
      %v4963 = vadd.f32 %v4754, %v4962
      %v4964 = vand.u32 %v4249, 4294901760
      %v4965 = vsub.f32 %v4249, %v4964
      %4966 = vmatmul.f32.gmra.mxu0 %v4965
      %v4967 = vpop.f32.mrf.mxu0
      %v4968 = vadd.f32 %v4758, %v4967
      %v4969 = vand.u32 %v4252, 4294901760
      %v4970 = vsub.f32 %v4252, %v4969
      %4971 = vmatmul.f32.gmra.mxu0 %v4970
      %v4972 = vpop.f32.mrf.mxu0
      %v4973 = vadd.f32 %v4762, %v4972
      %v4974 = vand.u32 %v4255, 4294901760
      %v4975 = vsub.f32 %v4255, %v4974
      %4976 = vmatmul.f32.gmra.mxu0 %v4975
      %v4977 = vpop.f32.mrf.mxu0
      %v4978 = vadd.f32 %v4766, %v4977
      %v4979 = vand.u32 %v4258, 4294901760
      %v4980 = vsub.f32 %v4258, %v4979
      %4981 = vmatmul.f32.gmra.mxu0 %v4980
      %v4982 = vpop.f32.mrf.mxu0
      %v4983 = vadd.f32 %v4770, %v4982
      %v4984 = vand.u32 %v4261, 4294901760
      %v4985 = vsub.f32 %v4261, %v4984
      %4986 = vmatmul.f32.gmra.mxu0 %v4985
      %v4987 = vpop.f32.mrf.mxu0
      %v4988 = vadd.f32 %v4774, %v4987
      %v4989 = vand.u32 %v4264, 4294901760
      %v4990 = vsub.f32 %v4264, %v4989
      %4991 = vmatmul.f32.gmra.mxu0 %v4990
      %v4992 = vpop.f32.mrf.mxu0
      %v4993 = vadd.f32 %v4778, %v4992
      %4994 = vdwg.mxu0
      %4995 = vmatpush.msra.mxu0 0.0
      %4996 = vmatpush.msra.mxu0 0.0
      %4997 = vmatpush.msra.mxu0 0.0
      %4998 = vmatpush.msra.mxu0 0.0
      %4999 = vmatpush.msra.mxu0 0.0
      %5000 = vmatpush.msra.mxu0 0.0
      %5001 = vmatpush.msra.mxu0 0.0
      %5002 = vmatpush.msra.mxu0 0.0
      %5003 = vmatpush.msra.mxu0 0.0
      %5004 = vmatpush.msra.mxu0 0.0
      %5005 = vmatpush.msra.mxu0 0.0
      %5006 = vmatpush.msra.mxu0 0.0
      %v5007 = vand.u32 %v4146, 4294901760
      %5008 = vmatpush.msra.mxu0 %v5007
      %v5009 = vand.u32 %v4145, 4294901760
      %5010 = vmatpush.msra.mxu0 %v5009
      %v5011 = vand.u32 %v4144, 4294901760
      %5012 = vmatpush.msra.mxu0 %v5011
      %v5013 = vand.u32 %v4143, 4294901760
      %5014 = vmatpush.msra.mxu0 %v5013
      %v5015 = vand.u32 %v4153, 4294901760
      %v5016 = vsub.f32 %v4153, %v5015
      %v5017 = vand.u32 %v5016, 4294901760
      %5018 = vmatmul.f32.gmra.mxu0 %v5017
      %v5019 = vpop.f32.mrf.mxu0
      %v5020 = vadd.f32 %v4808, %v5019
      %v5021 = vand.u32 %v4156, 4294901760
      %v5022 = vsub.f32 %v4156, %v5021
      %v5023 = vand.u32 %v5022, 4294901760
      %5024 = vmatmul.f32.gmra.mxu0 %v5023
      %v5025 = vpop.f32.mrf.mxu0
      %v5026 = vadd.f32 %v4813, %v5025
      %v5027 = vand.u32 %v4159, 4294901760
      %v5028 = vsub.f32 %v4159, %v5027
      %v5029 = vand.u32 %v5028, 4294901760
      %5030 = vmatmul.f32.gmra.mxu0 %v5029
      %v5031 = vpop.f32.mrf.mxu0
      %v5032 = vadd.f32 %v4818, %v5031
      %v5033 = vand.u32 %v4162, 4294901760
      %v5034 = vsub.f32 %v4162, %v5033
      %v5035 = vand.u32 %v5034, 4294901760
      %5036 = vmatmul.f32.gmra.mxu0 %v5035
      %v5037 = vpop.f32.mrf.mxu0
      %v5038 = vadd.f32 %v4823, %v5037
      %v5039 = vand.u32 %v4165, 4294901760
      %v5040 = vsub.f32 %v4165, %v5039
      %v5041 = vand.u32 %v5040, 4294901760
      %5042 = vmatmul.f32.gmra.mxu0 %v5041
      %v5043 = vpop.f32.mrf.mxu0
      %v5044 = vadd.f32 %v4828, %v5043
      %v5045 = vand.u32 %v4168, 4294901760
      %v5046 = vsub.f32 %v4168, %v5045
      %v5047 = vand.u32 %v5046, 4294901760
      %5048 = vmatmul.f32.gmra.mxu0 %v5047
      %v5049 = vpop.f32.mrf.mxu0
      %v5050 = vadd.f32 %v4833, %v5049
      %v5051 = vand.u32 %v4171, 4294901760
      %v5052 = vsub.f32 %v4171, %v5051
      %v5053 = vand.u32 %v5052, 4294901760
      %5054 = vmatmul.f32.gmra.mxu0 %v5053
      %v5055 = vpop.f32.mrf.mxu0
      %v5056 = vadd.f32 %v4838, %v5055
      %v5057 = vand.u32 %v4174, 4294901760
      %v5058 = vsub.f32 %v4174, %v5057
      %v5059 = vand.u32 %v5058, 4294901760
      %5060 = vmatmul.f32.gmra.mxu0 %v5059
      %v5061 = vpop.f32.mrf.mxu0
      %v5062 = vadd.f32 %v4843, %v5061
      %v5063 = vand.u32 %v4177, 4294901760
      %v5064 = vsub.f32 %v4177, %v5063
      %v5065 = vand.u32 %v5064, 4294901760
      %5066 = vmatmul.f32.gmra.mxu0 %v5065
      %v5067 = vpop.f32.mrf.mxu0
      %v5068 = vadd.f32 %v4848, %v5067
      %v5069 = vand.u32 %v4180, 4294901760
      %v5070 = vsub.f32 %v4180, %v5069
      %v5071 = vand.u32 %v5070, 4294901760
      %5072 = vmatmul.f32.gmra.mxu0 %v5071
      %v5073 = vpop.f32.mrf.mxu0
      %v5074 = vadd.f32 %v4853, %v5073
      %v5075 = vand.u32 %v4183, 4294901760
      %v5076 = vsub.f32 %v4183, %v5075
      %v5077 = vand.u32 %v5076, 4294901760
      %5078 = vmatmul.f32.gmra.mxu0 %v5077
      %v5079 = vpop.f32.mrf.mxu0
      %v5080 = vadd.f32 %v4858, %v5079
      %v5081 = vand.u32 %v4186, 4294901760
      %v5082 = vsub.f32 %v4186, %v5081
      %v5083 = vand.u32 %v5082, 4294901760
      %5084 = vmatmul.f32.gmra.mxu0 %v5083
      %v5085 = vpop.f32.mrf.mxu0
      %v5086 = vadd.f32 %v4863, %v5085
      %v5087 = vand.u32 %v4189, 4294901760
      %v5088 = vsub.f32 %v4189, %v5087
      %v5089 = vand.u32 %v5088, 4294901760
      %5090 = vmatmul.f32.gmra.mxu0 %v5089
      %v5091 = vpop.f32.mrf.mxu0
      %v5092 = vadd.f32 %v4868, %v5091
      %v5093 = vand.u32 %v4192, 4294901760
      %v5094 = vsub.f32 %v4192, %v5093
      %v5095 = vand.u32 %v5094, 4294901760
      %5096 = vmatmul.f32.gmra.mxu0 %v5095
      %v5097 = vpop.f32.mrf.mxu0
      %v5098 = vadd.f32 %v4873, %v5097
      %v5099 = vand.u32 %v4195, 4294901760
      %v5100 = vsub.f32 %v4195, %v5099
      %v5101 = vand.u32 %v5100, 4294901760
      %5102 = vmatmul.f32.gmra.mxu0 %v5101
      %v5103 = vpop.f32.mrf.mxu0
      %v5104 = vadd.f32 %v4878, %v5103
      %v5105 = vand.u32 %v4198, 4294901760
      %v5106 = vsub.f32 %v4198, %v5105
      %v5107 = vand.u32 %v5106, 4294901760
      %5108 = vmatmul.f32.gmra.mxu0 %v5107
      %v5109 = vpop.f32.mrf.mxu0
      %v5110 = vadd.f32 %v4883, %v5109
      %v5111 = vand.u32 %v4201, 4294901760
      %v5112 = vsub.f32 %v4201, %v5111
      %v5113 = vand.u32 %v5112, 4294901760
      %5114 = vmatmul.f32.gmra.mxu0 %v5113
      %v5115 = vpop.f32.mrf.mxu0
      %v5116 = vadd.f32 %v4888, %v5115
      %v5117 = vand.u32 %v4204, 4294901760
      %v5118 = vsub.f32 %v4204, %v5117
      %v5119 = vand.u32 %v5118, 4294901760
      %5120 = vmatmul.f32.gmra.mxu0 %v5119
      %v5121 = vpop.f32.mrf.mxu0
      %v5122 = vadd.f32 %v4893, %v5121
      %v5123 = vand.u32 %v4207, 4294901760
      %v5124 = vsub.f32 %v4207, %v5123
      %v5125 = vand.u32 %v5124, 4294901760
      %5126 = vmatmul.f32.gmra.mxu0 %v5125
      %v5127 = vpop.f32.mrf.mxu0
      %v5128 = vadd.f32 %v4898, %v5127
      %v5129 = vand.u32 %v4210, 4294901760
      %v5130 = vsub.f32 %v4210, %v5129
      %v5131 = vand.u32 %v5130, 4294901760
      %5132 = vmatmul.f32.gmra.mxu0 %v5131
      %v5133 = vpop.f32.mrf.mxu0
      %v5134 = vadd.f32 %v4903, %v5133
      %v5135 = vand.u32 %v4213, 4294901760
      %v5136 = vsub.f32 %v4213, %v5135
      %v5137 = vand.u32 %v5136, 4294901760
      %5138 = vmatmul.f32.gmra.mxu0 %v5137
      %v5139 = vpop.f32.mrf.mxu0
      %v5140 = vadd.f32 %v4908, %v5139
      %v5141 = vand.u32 %v4216, 4294901760
      %v5142 = vsub.f32 %v4216, %v5141
      %v5143 = vand.u32 %v5142, 4294901760
      %5144 = vmatmul.f32.gmra.mxu0 %v5143
      %v5145 = vpop.f32.mrf.mxu0
      %v5146 = vadd.f32 %v4913, %v5145
      %v5147 = vand.u32 %v4219, 4294901760
      %v5148 = vsub.f32 %v4219, %v5147
      %v5149 = vand.u32 %v5148, 4294901760
      %5150 = vmatmul.f32.gmra.mxu0 %v5149
      %v5151 = vpop.f32.mrf.mxu0
      %v5152 = vadd.f32 %v4918, %v5151
      %v5153 = vand.u32 %v4222, 4294901760
      %v5154 = vsub.f32 %v4222, %v5153
      %v5155 = vand.u32 %v5154, 4294901760
      %5156 = vmatmul.f32.gmra.mxu0 %v5155
      %v5157 = vpop.f32.mrf.mxu0
      %v5158 = vadd.f32 %v4923, %v5157
      %v5159 = vand.u32 %v4225, 4294901760
      %v5160 = vsub.f32 %v4225, %v5159
      %v5161 = vand.u32 %v5160, 4294901760
      %5162 = vmatmul.f32.gmra.mxu0 %v5161
      %v5163 = vpop.f32.mrf.mxu0
      %v5164 = vadd.f32 %v4928, %v5163
      %v5165 = vand.u32 %v4228, 4294901760
      %v5166 = vsub.f32 %v4228, %v5165
      %v5167 = vand.u32 %v5166, 4294901760
      %5168 = vmatmul.f32.gmra.mxu0 %v5167
      %v5169 = vpop.f32.mrf.mxu0
      %v5170 = vadd.f32 %v4933, %v5169
      %v5171 = vand.u32 %v4231, 4294901760
      %v5172 = vsub.f32 %v4231, %v5171
      %v5173 = vand.u32 %v5172, 4294901760
      %5174 = vmatmul.f32.gmra.mxu0 %v5173
      %v5175 = vpop.f32.mrf.mxu0
      %v5176 = vadd.f32 %v4938, %v5175
      %v5177 = vand.u32 %v4234, 4294901760
      %v5178 = vsub.f32 %v4234, %v5177
      %v5179 = vand.u32 %v5178, 4294901760
      %5180 = vmatmul.f32.gmra.mxu0 %v5179
      %v5181 = vpop.f32.mrf.mxu0
      %v5182 = vadd.f32 %v4943, %v5181
      %v5183 = vand.u32 %v4237, 4294901760
      %v5184 = vsub.f32 %v4237, %v5183
      %v5185 = vand.u32 %v5184, 4294901760
      %5186 = vmatmul.f32.gmra.mxu0 %v5185
      %v5187 = vpop.f32.mrf.mxu0
      %v5188 = vadd.f32 %v4948, %v5187
      %v5189 = vand.u32 %v4240, 4294901760
      %v5190 = vsub.f32 %v4240, %v5189
      %v5191 = vand.u32 %v5190, 4294901760
      %5192 = vmatmul.f32.gmra.mxu0 %v5191
      %v5193 = vpop.f32.mrf.mxu0
      %v5194 = vadd.f32 %v4953, %v5193
      %v5195 = vand.u32 %v4243, 4294901760
      %v5196 = vsub.f32 %v4243, %v5195
      %v5197 = vand.u32 %v5196, 4294901760
      %5198 = vmatmul.f32.gmra.mxu0 %v5197
      %v5199 = vpop.f32.mrf.mxu0
      %v5200 = vadd.f32 %v4958, %v5199
      %v5201 = vand.u32 %v4246, 4294901760
      %v5202 = vsub.f32 %v4246, %v5201
      %v5203 = vand.u32 %v5202, 4294901760
      %5204 = vmatmul.f32.gmra.mxu0 %v5203
      %v5205 = vpop.f32.mrf.mxu0
      %v5206 = vadd.f32 %v4963, %v5205
      %v5207 = vand.u32 %v4249, 4294901760
      %v5208 = vsub.f32 %v4249, %v5207
      %v5209 = vand.u32 %v5208, 4294901760
      %5210 = vmatmul.f32.gmra.mxu0 %v5209
      %v5211 = vpop.f32.mrf.mxu0
      %v5212 = vadd.f32 %v4968, %v5211
      %v5213 = vand.u32 %v4252, 4294901760
      %v5214 = vsub.f32 %v4252, %v5213
      %v5215 = vand.u32 %v5214, 4294901760
      %5216 = vmatmul.f32.gmra.mxu0 %v5215
      %v5217 = vpop.f32.mrf.mxu0
      %v5218 = vadd.f32 %v4973, %v5217
      %v5219 = vand.u32 %v4255, 4294901760
      %v5220 = vsub.f32 %v4255, %v5219
      %v5221 = vand.u32 %v5220, 4294901760
      %5222 = vmatmul.f32.gmra.mxu0 %v5221
      %v5223 = vpop.f32.mrf.mxu0
      %v5224 = vadd.f32 %v4978, %v5223
      %v5225 = vand.u32 %v4258, 4294901760
      %v5226 = vsub.f32 %v4258, %v5225
      %v5227 = vand.u32 %v5226, 4294901760
      %5228 = vmatmul.f32.gmra.mxu0 %v5227
      %v5229 = vpop.f32.mrf.mxu0
      %v5230 = vadd.f32 %v4983, %v5229
      %v5231 = vand.u32 %v4261, 4294901760
      %v5232 = vsub.f32 %v4261, %v5231
      %v5233 = vand.u32 %v5232, 4294901760
      %5234 = vmatmul.f32.gmra.mxu0 %v5233
      %v5235 = vpop.f32.mrf.mxu0
      %v5236 = vadd.f32 %v4988, %v5235
      %v5237 = vand.u32 %v4264, 4294901760
      %v5238 = vsub.f32 %v4264, %v5237
      %v5239 = vand.u32 %v5238, 4294901760
      %5240 = vmatmul.f32.gmra.mxu0 %v5239
      %v5241 = vpop.f32.mrf.mxu0
      %v5242 = vadd.f32 %v4993, %v5241
      %5243 = vdwg.mxu0
      %5244 = vmatpush.msra.mxu0 0.0
      %5245 = vmatpush.msra.mxu0 0.0
      %5246 = vmatpush.msra.mxu0 0.0
      %5247 = vmatpush.msra.mxu0 0.0
      %5248 = vmatpush.msra.mxu0 0.0
      %5249 = vmatpush.msra.mxu0 0.0
      %5250 = vmatpush.msra.mxu0 0.0
      %5251 = vmatpush.msra.mxu0 0.0
      %5252 = vmatpush.msra.mxu0 0.0
      %5253 = vmatpush.msra.mxu0 0.0
      %5254 = vmatpush.msra.mxu0 0.0
      %5255 = vmatpush.msra.mxu0 0.0
      %v5256 = vand.u32 %v4146, 4294901760
      %v5257 = vsub.f32 %v4146, %v5256
      %v5258 = vand.u32 %v5257, 4294901760
      %5259 = vmatpush.msra.mxu0 %v5258
      %v5260 = vand.u32 %v4145, 4294901760
      %v5261 = vsub.f32 %v4145, %v5260
      %v5262 = vand.u32 %v5261, 4294901760
      %5263 = vmatpush.msra.mxu0 %v5262
      %v5264 = vand.u32 %v4144, 4294901760
      %v5265 = vsub.f32 %v4144, %v5264
      %v5266 = vand.u32 %v5265, 4294901760
      %5267 = vmatpush.msra.mxu0 %v5266
      %v5268 = vand.u32 %v4143, 4294901760
      %v5269 = vsub.f32 %v4143, %v5268
      %v5270 = vand.u32 %v5269, 4294901760
      %5271 = vmatpush.msra.mxu0 %v5270
      %v5272 = vand.u32 %v4153, 4294901760
      %5273 = vmatmul.f32.gmra.mxu0 %v5272
      %v5274 = vpop.f32.mrf.mxu0
      %v5275 = vadd.f32 %v5020, %v5274
      %v5276 = vand.u32 %v4156, 4294901760
      %5277 = vmatmul.f32.gmra.mxu0 %v5276
      %v5278 = vpop.f32.mrf.mxu0
      %v5279 = vadd.f32 %v5026, %v5278
      %v5280 = vand.u32 %v4159, 4294901760
      %5281 = vmatmul.f32.gmra.mxu0 %v5280
      %v5282 = vpop.f32.mrf.mxu0
      %v5283 = vadd.f32 %v5032, %v5282
      %v5284 = vand.u32 %v4162, 4294901760
      %5285 = vmatmul.f32.gmra.mxu0 %v5284
      %v5286 = vpop.f32.mrf.mxu0
      %v5287 = vadd.f32 %v5038, %v5286
      %v5288 = vand.u32 %v4165, 4294901760
      %5289 = vmatmul.f32.gmra.mxu0 %v5288
      %v5290 = vpop.f32.mrf.mxu0
      %v5291 = vadd.f32 %v5044, %v5290
      %v5292 = vand.u32 %v4168, 4294901760
      %5293 = vmatmul.f32.gmra.mxu0 %v5292
      %v5294 = vpop.f32.mrf.mxu0
      %v5295 = vadd.f32 %v5050, %v5294
      %v5296 = vand.u32 %v4171, 4294901760
      %5297 = vmatmul.f32.gmra.mxu0 %v5296
      %v5298 = vpop.f32.mrf.mxu0
      %v5299 = vadd.f32 %v5056, %v5298
      %v5300 = vand.u32 %v4174, 4294901760
      %5301 = vmatmul.f32.gmra.mxu0 %v5300
      %v5302 = vpop.f32.mrf.mxu0
      %v5303 = vadd.f32 %v5062, %v5302
      %v5304 = vand.u32 %v4177, 4294901760
      %5305 = vmatmul.f32.gmra.mxu0 %v5304
      %v5306 = vpop.f32.mrf.mxu0
      %v5307 = vadd.f32 %v5068, %v5306
      %v5308 = vand.u32 %v4180, 4294901760
      %5309 = vmatmul.f32.gmra.mxu0 %v5308
      %v5310 = vpop.f32.mrf.mxu0
      %v5311 = vadd.f32 %v5074, %v5310
      %v5312 = vand.u32 %v4183, 4294901760
      %5313 = vmatmul.f32.gmra.mxu0 %v5312
      %v5314 = vpop.f32.mrf.mxu0
      %v5315 = vadd.f32 %v5080, %v5314
      %v5316 = vand.u32 %v4186, 4294901760
      %5317 = vmatmul.f32.gmra.mxu0 %v5316
      %v5318 = vpop.f32.mrf.mxu0
      %v5319 = vadd.f32 %v5086, %v5318
      %v5320 = vand.u32 %v4189, 4294901760
      %5321 = vmatmul.f32.gmra.mxu0 %v5320
      %v5322 = vpop.f32.mrf.mxu0
      %v5323 = vadd.f32 %v5092, %v5322
      %v5324 = vand.u32 %v4192, 4294901760
      %5325 = vmatmul.f32.gmra.mxu0 %v5324
      %v5326 = vpop.f32.mrf.mxu0
      %v5327 = vadd.f32 %v5098, %v5326
      %v5328 = vand.u32 %v4195, 4294901760
      %5329 = vmatmul.f32.gmra.mxu0 %v5328
      %v5330 = vpop.f32.mrf.mxu0
      %v5331 = vadd.f32 %v5104, %v5330
      %v5332 = vand.u32 %v4198, 4294901760
      %5333 = vmatmul.f32.gmra.mxu0 %v5332
      %v5334 = vpop.f32.mrf.mxu0
      %v5335 = vadd.f32 %v5110, %v5334
      %v5336 = vand.u32 %v4201, 4294901760
      %5337 = vmatmul.f32.gmra.mxu0 %v5336
      %v5338 = vpop.f32.mrf.mxu0
      %v5339 = vadd.f32 %v5116, %v5338
      %v5340 = vand.u32 %v4204, 4294901760
      %5341 = vmatmul.f32.gmra.mxu0 %v5340
      %v5342 = vpop.f32.mrf.mxu0
      %v5343 = vadd.f32 %v5122, %v5342
      %v5344 = vand.u32 %v4207, 4294901760
      %5345 = vmatmul.f32.gmra.mxu0 %v5344
      %v5346 = vpop.f32.mrf.mxu0
      %v5347 = vadd.f32 %v5128, %v5346
      %v5348 = vand.u32 %v4210, 4294901760
      %5349 = vmatmul.f32.gmra.mxu0 %v5348
      %v5350 = vpop.f32.mrf.mxu0
      %v5351 = vadd.f32 %v5134, %v5350
      %v5352 = vand.u32 %v4213, 4294901760
      %5353 = vmatmul.f32.gmra.mxu0 %v5352
      %v5354 = vpop.f32.mrf.mxu0
      %v5355 = vadd.f32 %v5140, %v5354
      %v5356 = vand.u32 %v4216, 4294901760
      %5357 = vmatmul.f32.gmra.mxu0 %v5356
      %v5358 = vpop.f32.mrf.mxu0
      %v5359 = vadd.f32 %v5146, %v5358
      %v5360 = vand.u32 %v4219, 4294901760
      %5361 = vmatmul.f32.gmra.mxu0 %v5360
      %v5362 = vpop.f32.mrf.mxu0
      %v5363 = vadd.f32 %v5152, %v5362
      %v5364 = vand.u32 %v4222, 4294901760
      %5365 = vmatmul.f32.gmra.mxu0 %v5364
      %v5366 = vpop.f32.mrf.mxu0
      %v5367 = vadd.f32 %v5158, %v5366
      %v5368 = vand.u32 %v4225, 4294901760
      %5369 = vmatmul.f32.gmra.mxu0 %v5368
      %v5370 = vpop.f32.mrf.mxu0
      %v5371 = vadd.f32 %v5164, %v5370
      %v5372 = vand.u32 %v4228, 4294901760
      %5373 = vmatmul.f32.gmra.mxu0 %v5372
      %v5374 = vpop.f32.mrf.mxu0
      %v5375 = vadd.f32 %v5170, %v5374
      %v5376 = vand.u32 %v4231, 4294901760
      %5377 = vmatmul.f32.gmra.mxu0 %v5376
      %v5378 = vpop.f32.mrf.mxu0
      %v5379 = vadd.f32 %v5176, %v5378
      %v5380 = vand.u32 %v4234, 4294901760
      %5381 = vmatmul.f32.gmra.mxu0 %v5380
      %v5382 = vpop.f32.mrf.mxu0
      %v5383 = vadd.f32 %v5182, %v5382
      %v5384 = vand.u32 %v4237, 4294901760
      %5385 = vmatmul.f32.gmra.mxu0 %v5384
      %v5386 = vpop.f32.mrf.mxu0
      %v5387 = vadd.f32 %v5188, %v5386
      %v5388 = vand.u32 %v4240, 4294901760
      %5389 = vmatmul.f32.gmra.mxu0 %v5388
      %v5390 = vpop.f32.mrf.mxu0
      %v5391 = vadd.f32 %v5194, %v5390
      %v5392 = vand.u32 %v4243, 4294901760
      %5393 = vmatmul.f32.gmra.mxu0 %v5392
      %v5394 = vpop.f32.mrf.mxu0
      %v5395 = vadd.f32 %v5200, %v5394
      %v5396 = vand.u32 %v4246, 4294901760
      %5397 = vmatmul.f32.gmra.mxu0 %v5396
      %v5398 = vpop.f32.mrf.mxu0
      %v5399 = vadd.f32 %v5206, %v5398
      %v5400 = vand.u32 %v4249, 4294901760
      %5401 = vmatmul.f32.gmra.mxu0 %v5400
      %v5402 = vpop.f32.mrf.mxu0
      %v5403 = vadd.f32 %v5212, %v5402
      %v5404 = vand.u32 %v4252, 4294901760
      %5405 = vmatmul.f32.gmra.mxu0 %v5404
      %v5406 = vpop.f32.mrf.mxu0
      %v5407 = vadd.f32 %v5218, %v5406
      %v5408 = vand.u32 %v4255, 4294901760
      %5409 = vmatmul.f32.gmra.mxu0 %v5408
      %v5410 = vpop.f32.mrf.mxu0
      %v5411 = vadd.f32 %v5224, %v5410
      %v5412 = vand.u32 %v4258, 4294901760
      %5413 = vmatmul.f32.gmra.mxu0 %v5412
      %v5414 = vpop.f32.mrf.mxu0
      %v5415 = vadd.f32 %v5230, %v5414
      %v5416 = vand.u32 %v4261, 4294901760
      %5417 = vmatmul.f32.gmra.mxu0 %v5416
      %v5418 = vpop.f32.mrf.mxu0
      %v5419 = vadd.f32 %v5236, %v5418
      %v5420 = vand.u32 %v4264, 4294901760
      %5421 = vmatmul.f32.gmra.mxu0 %v5420
      %v5422 = vpop.f32.mrf.mxu0
      %v5423 = vadd.f32 %v5242, %v5422
      %5424 = vdwg.mxu0
      %5425 = vmatpush.msra.mxu0 0.0
      %5426 = vmatpush.msra.mxu0 0.0
      %5427 = vmatpush.msra.mxu0 0.0
      %5428 = vmatpush.msra.mxu0 0.0
      %5429 = vmatpush.msra.mxu0 0.0
      %5430 = vmatpush.msra.mxu0 0.0
      %5431 = vmatpush.msra.mxu0 0.0
      %5432 = vmatpush.msra.mxu0 0.0
      %5433 = vmatpush.msra.mxu0 0.0
      %5434 = vmatpush.msra.mxu0 0.0
      %5435 = vmatpush.msra.mxu0 0.0
      %5436 = vmatpush.msra.mxu0 0.0
      %v5437 = vand.u32 %v4146, 4294901760
      %5438 = vmatpush.msra.mxu0 %v5437
      %v5439 = vand.u32 %v4145, 4294901760
      %5440 = vmatpush.msra.mxu0 %v5439
      %v5441 = vand.u32 %v4144, 4294901760
      %5442 = vmatpush.msra.mxu0 %v5441
      %v5443 = vand.u32 %v4143, 4294901760
      %5444 = vmatpush.msra.mxu0 %v5443
      %v5445 = vand.u32 %v4153, 4294901760
      %5446 = vmatmul.f32.gmra.mxu0 %v5445
      %v5447 = vpop.f32.mrf.mxu0
      %v5448 = vadd.f32 %v5275, %v5447
      %v5449 = vand.u32 %v4156, 4294901760
      %5450 = vmatmul.f32.gmra.mxu0 %v5449
      %v5451 = vpop.f32.mrf.mxu0
      %v5452 = vadd.f32 %v5279, %v5451
      %v5453 = vand.u32 %v4159, 4294901760
      %5454 = vmatmul.f32.gmra.mxu0 %v5453
      %v5455 = vpop.f32.mrf.mxu0
      %v5456 = vadd.f32 %v5283, %v5455
      %v5457 = vand.u32 %v4162, 4294901760
      %5458 = vmatmul.f32.gmra.mxu0 %v5457
      %v5459 = vpop.f32.mrf.mxu0
      %v5460 = vadd.f32 %v5287, %v5459
      %v5461 = vand.u32 %v4165, 4294901760
      %5462 = vmatmul.f32.gmra.mxu0 %v5461
      %v5463 = vpop.f32.mrf.mxu0
      %v5464 = vadd.f32 %v5291, %v5463
      %v5465 = vand.u32 %v4168, 4294901760
      %5466 = vmatmul.f32.gmra.mxu0 %v5465
      %v5467 = vpop.f32.mrf.mxu0
      %v5468 = vadd.f32 %v5295, %v5467
      %v5469 = vand.u32 %v4171, 4294901760
      %5470 = vmatmul.f32.gmra.mxu0 %v5469
      %v5471 = vpop.f32.mrf.mxu0
      %v5472 = vadd.f32 %v5299, %v5471
      %v5473 = vand.u32 %v4174, 4294901760
      %5474 = vmatmul.f32.gmra.mxu0 %v5473
      %v5475 = vpop.f32.mrf.mxu0
      %v5476 = vadd.f32 %v5303, %v5475
      %v5477 = vand.u32 %v4177, 4294901760
      %5478 = vmatmul.f32.gmra.mxu0 %v5477
      %v5479 = vpop.f32.mrf.mxu0
      %v5480 = vadd.f32 %v5307, %v5479
      %v5481 = vand.u32 %v4180, 4294901760
      %5482 = vmatmul.f32.gmra.mxu0 %v5481
      %v5483 = vpop.f32.mrf.mxu0
      %v5484 = vadd.f32 %v5311, %v5483
      %v5485 = vand.u32 %v4183, 4294901760
      %5486 = vmatmul.f32.gmra.mxu0 %v5485
      %v5487 = vpop.f32.mrf.mxu0
      %v5488 = vadd.f32 %v5315, %v5487
      %v5489 = vand.u32 %v4186, 4294901760
      %5490 = vmatmul.f32.gmra.mxu0 %v5489
      %v5491 = vpop.f32.mrf.mxu0
      %v5492 = vadd.f32 %v5319, %v5491
      %v5493 = vand.u32 %v4189, 4294901760
      %5494 = vmatmul.f32.gmra.mxu0 %v5493
      %v5495 = vpop.f32.mrf.mxu0
      %v5496 = vadd.f32 %v5323, %v5495
      %v5497 = vand.u32 %v4192, 4294901760
      %5498 = vmatmul.f32.gmra.mxu0 %v5497
      %v5499 = vpop.f32.mrf.mxu0
      %v5500 = vadd.f32 %v5327, %v5499
      %v5501 = vand.u32 %v4195, 4294901760
      %5502 = vmatmul.f32.gmra.mxu0 %v5501
      %v5503 = vpop.f32.mrf.mxu0
      %v5504 = vadd.f32 %v5331, %v5503
      %v5505 = vand.u32 %v4198, 4294901760
      %5506 = vmatmul.f32.gmra.mxu0 %v5505
      %v5507 = vpop.f32.mrf.mxu0
      %v5508 = vadd.f32 %v5335, %v5507
      %v5509 = vand.u32 %v4201, 4294901760
      %5510 = vmatmul.f32.gmra.mxu0 %v5509
      %v5511 = vpop.f32.mrf.mxu0
      %v5512 = vadd.f32 %v5339, %v5511
      %v5513 = vand.u32 %v4204, 4294901760
      %5514 = vmatmul.f32.gmra.mxu0 %v5513
      %v5515 = vpop.f32.mrf.mxu0
      %v5516 = vadd.f32 %v5343, %v5515
      %v5517 = vand.u32 %v4207, 4294901760
      %5518 = vmatmul.f32.gmra.mxu0 %v5517
      %v5519 = vpop.f32.mrf.mxu0
      %v5520 = vadd.f32 %v5347, %v5519
      %v5521 = vand.u32 %v4210, 4294901760
      %5522 = vmatmul.f32.gmra.mxu0 %v5521
      %v5523 = vpop.f32.mrf.mxu0
      %v5524 = vadd.f32 %v5351, %v5523
      %v5525 = vand.u32 %v4213, 4294901760
      %5526 = vmatmul.f32.gmra.mxu0 %v5525
      %v5527 = vpop.f32.mrf.mxu0
      %v5528 = vadd.f32 %v5355, %v5527
      %v5529 = vand.u32 %v4216, 4294901760
      %5530 = vmatmul.f32.gmra.mxu0 %v5529
      %v5531 = vpop.f32.mrf.mxu0
      %v5532 = vadd.f32 %v5359, %v5531
      %v5533 = vand.u32 %v4219, 4294901760
      %5534 = vmatmul.f32.gmra.mxu0 %v5533
      %v5535 = vpop.f32.mrf.mxu0
      %v5536 = vadd.f32 %v5363, %v5535
      %v5537 = vand.u32 %v4222, 4294901760
      %5538 = vmatmul.f32.gmra.mxu0 %v5537
      %v5539 = vpop.f32.mrf.mxu0
      %v5540 = vadd.f32 %v5367, %v5539
      %v5541 = vand.u32 %v4225, 4294901760
      %5542 = vmatmul.f32.gmra.mxu0 %v5541
      %v5543 = vpop.f32.mrf.mxu0
      %v5544 = vadd.f32 %v5371, %v5543
      %v5545 = vand.u32 %v4228, 4294901760
      %5546 = vmatmul.f32.gmra.mxu0 %v5545
      %v5547 = vpop.f32.mrf.mxu0
      %v5548 = vadd.f32 %v5375, %v5547
      %v5549 = vand.u32 %v4231, 4294901760
      %5550 = vmatmul.f32.gmra.mxu0 %v5549
      %v5551 = vpop.f32.mrf.mxu0
      %v5552 = vadd.f32 %v5379, %v5551
      %v5553 = vand.u32 %v4234, 4294901760
      %5554 = vmatmul.f32.gmra.mxu0 %v5553
      %v5555 = vpop.f32.mrf.mxu0
      %v5556 = vadd.f32 %v5383, %v5555
      %v5557 = vand.u32 %v4237, 4294901760
      %5558 = vmatmul.f32.gmra.mxu0 %v5557
      %v5559 = vpop.f32.mrf.mxu0
      %v5560 = vadd.f32 %v5387, %v5559
      %v5561 = vand.u32 %v4240, 4294901760
      %5562 = vmatmul.f32.gmra.mxu0 %v5561
      %v5563 = vpop.f32.mrf.mxu0
      %v5564 = vadd.f32 %v5391, %v5563
      %v5565 = vand.u32 %v4243, 4294901760
      %5566 = vmatmul.f32.gmra.mxu0 %v5565
      %v5567 = vpop.f32.mrf.mxu0
      %v5568 = vadd.f32 %v5395, %v5567
      %v5569 = vand.u32 %v4246, 4294901760
      %5570 = vmatmul.f32.gmra.mxu0 %v5569
      %v5571 = vpop.f32.mrf.mxu0
      %v5572 = vadd.f32 %v5399, %v5571
      %v5573 = vand.u32 %v4249, 4294901760
      %5574 = vmatmul.f32.gmra.mxu0 %v5573
      %v5575 = vpop.f32.mrf.mxu0
      %v5576 = vadd.f32 %v5403, %v5575
      %v5577 = vand.u32 %v4252, 4294901760
      %5578 = vmatmul.f32.gmra.mxu0 %v5577
      %v5579 = vpop.f32.mrf.mxu0
      %v5580 = vadd.f32 %v5407, %v5579
      %v5581 = vand.u32 %v4255, 4294901760
      %5582 = vmatmul.f32.gmra.mxu0 %v5581
      %v5583 = vpop.f32.mrf.mxu0
      %v5584 = vadd.f32 %v5411, %v5583
      %v5585 = vand.u32 %v4258, 4294901760
      %5586 = vmatmul.f32.gmra.mxu0 %v5585
      %v5587 = vpop.f32.mrf.mxu0
      %v5588 = vadd.f32 %v5415, %v5587
      %v5589 = vand.u32 %v4261, 4294901760
      %5590 = vmatmul.f32.gmra.mxu0 %v5589
      %v5591 = vpop.f32.mrf.mxu0
      %v5592 = vadd.f32 %v5419, %v5591
      %v5593 = vand.u32 %v4264, 4294901760
      %5594 = vmatmul.f32.gmra.mxu0 %v5593
      %v5595 = vpop.f32.mrf.mxu0
      %v5596 = vadd.f32 %v5423, %v5595
      %5597 = vdwg.mxu0
      %v5598 = vmax.f32 %v5448, 0.0
      %v5599 = vmax.f32 %v5452, 0.0
      %v5600 = vmax.f32 %v5456, 0.0
      %v5601 = vmax.f32 %v5460, 0.0
      %v5602 = vmax.f32 %v5464, 0.0
      %v5603 = vmax.f32 %v5468, 0.0
      %v5604 = vmax.f32 %v5472, 0.0
      %v5605 = vmax.f32 %v5476, 0.0
      %v5606 = vmax.f32 %v5480, 0.0
      %v5607 = vmax.f32 %v5484, 0.0
      %v5608 = vmax.f32 %v5488, 0.0
      %v5609 = vmax.f32 %v5492, 0.0
      %v5610 = vmax.f32 %v5496, 0.0
      %v5611 = vmax.f32 %v5500, 0.0
      %v5612 = vmax.f32 %v5504, 0.0
      %v5613 = vmax.f32 %v5508, 0.0
      %v5614 = vmax.f32 %v5512, 0.0
      %v5615 = vmax.f32 %v5516, 0.0
      %v5616 = vmax.f32 %v5520, 0.0
      %v5617 = vmax.f32 %v5524, 0.0
      %v5618 = vmax.f32 %v5528, 0.0
      %v5619 = vmax.f32 %v5532, 0.0
      %v5620 = vmax.f32 %v5536, 0.0
      %v5621 = vmax.f32 %v5540, 0.0
      %v5622 = vmax.f32 %v5544, 0.0
      %v5623 = vmax.f32 %v5548, 0.0
      %v5624 = vmax.f32 %v5552, 0.0
      %v5625 = vmax.f32 %v5556, 0.0
      %v5626 = vmax.f32 %v5560, 0.0
      %v5627 = vmax.f32 %v5564, 0.0
      %v5628 = vmax.f32 %v5568, 0.0
      %v5629 = vmax.f32 %v5572, 0.0
      %v5630 = vmax.f32 %v5576, 0.0
      %v5631 = vmax.f32 %v5580, 0.0
      %v5632 = vmax.f32 %v5584, 0.0
      %v5633 = vmax.f32 %v5588, 0.0
      %v5634 = vmax.f32 %v5592, 0.0
      %v5635 = vmax.f32 %v5596, 0.0
      %v5636 = vld [vmem:[%s9] sm:$0xff]
      %v5637 = vld [vmem:[%s9 + $0x8] sm:$0xff]
      %v5638 = vld [vmem:[%s10] sm:$0x1]
      %v5640 = vperm.slane %v5638, 0
      %vm5642 = vcmask 130048
      %v5644 = vsel %vm5642, %v5598, 0
      %v5647 = vsel %vm5642, %v5599, 0
      %v5650 = vsel %vm5642, %v5600, 0
      %v5653 = vsel %vm5642, %v5601, 0
      %v5656 = vsel %vm5642, %v5602, 0
      %v5659 = vsel %vm5642, %v5603, 0
      %v5662 = vsel %vm5642, %v5604, 0
      %v5665 = vsel %vm5642, %v5605, 0
      %v5668 = vsel %vm5642, %v5606, 0
      %v5671 = vsel %vm5642, %v5607, 0
      %v5674 = vsel %vm5642, %v5608, 0
      %v5677 = vsel %vm5642, %v5609, 0
      %v5680 = vsel %vm5642, %v5610, 0
      %v5683 = vsel %vm5642, %v5611, 0
      %v5686 = vsel %vm5642, %v5612, 0
      %v5689 = vsel %vm5642, %v5613, 0
      %v5692 = vsel %vm5642, %v5614, 0
      %v5695 = vsel %vm5642, %v5615, 0
      %v5698 = vsel %vm5642, %v5616, 0
      %v5701 = vsel %vm5642, %v5617, 0
      %v5704 = vsel %vm5642, %v5618, 0
      %v5707 = vsel %vm5642, %v5619, 0
      %v5710 = vsel %vm5642, %v5620, 0
      %v5713 = vsel %vm5642, %v5621, 0
      %v5716 = vsel %vm5642, %v5622, 0
      %v5719 = vsel %vm5642, %v5623, 0
      %v5722 = vsel %vm5642, %v5624, 0
      %v5725 = vsel %vm5642, %v5625, 0
      %v5728 = vsel %vm5642, %v5626, 0
      %v5731 = vsel %vm5642, %v5627, 0
      %v5734 = vsel %vm5642, %v5628, 0
      %v5737 = vsel %vm5642, %v5629, 0
      %v5740 = vsel %vm5642, %v5630, 0
      %v5743 = vsel %vm5642, %v5631, 0
      %v5746 = vsel %vm5642, %v5632, 0
      %v5749 = vsel %vm5642, %v5633, 0
      %v5752 = vsel %vm5642, %v5634, 0
      %v5755 = vsel %vm5642, %v5635, 0
      %5757 = vmatpush.msra.mxu0 0.0
      %5758 = vmatpush.msra.mxu0 0.0
      %5759 = vmatpush.msra.mxu0 0.0
      %5760 = vmatpush.msra.mxu0 0.0
      %5761 = vmatpush.msra.mxu0 0.0
      %5762 = vmatpush.msra.mxu0 0.0
      %5763 = vmatpush.msra.mxu0 0.0
      %5764 = vmatpush.msra.mxu0 0.0
      %5765 = vmatpush.msra.mxu0 0.0
      %5766 = vmatpush.msra.mxu0 0.0
      %5767 = vmatpush.msra.mxu0 0.0
      %5768 = vmatpush.msra.mxu0 0.0
      %5769 = vmatpush.msra.mxu0 0.0
      %5770 = vmatpush.msra.mxu0 0.0
      %v5771 = vand.u32 %v5637, 4294901760
      %5772 = vmatpush.msra.mxu0 %v5771
      %v5773 = vand.u32 %v5636, 4294901760
      %5774 = vmatpush.msra.mxu0 %v5773
      %v5775 = vand.u32 %v5644, 4294901760
      %v5776 = vsub.f32 %v5644, %v5775
      %v5777 = vand.u32 %v5776, 4294901760
      %v5778 = vsub.f32 %v5776, %v5777
      %v5779 = vand.u32 %v5778, 4294901760
      %5780 = vmatmul.f32.gmra.mxu0 %v5779
      %v5781 = vpop.f32.mrf.mxu0
      %v5782 = vadd.f32 %v5640, %v5781
      %v5783 = vand.u32 %v5647, 4294901760
      %v5784 = vsub.f32 %v5647, %v5783
      %v5785 = vand.u32 %v5784, 4294901760
      %v5786 = vsub.f32 %v5784, %v5785
      %v5787 = vand.u32 %v5786, 4294901760
      %5788 = vmatmul.f32.gmra.mxu0 %v5787
      %v5789 = vpop.f32.mrf.mxu0
      %v5790 = vadd.f32 %v5640, %v5789
      %v5791 = vand.u32 %v5650, 4294901760
      %v5792 = vsub.f32 %v5650, %v5791
      %v5793 = vand.u32 %v5792, 4294901760
      %v5794 = vsub.f32 %v5792, %v5793
      %v5795 = vand.u32 %v5794, 4294901760
      %5796 = vmatmul.f32.gmra.mxu0 %v5795
      %v5797 = vpop.f32.mrf.mxu0
      %v5798 = vadd.f32 %v5640, %v5797
      %v5799 = vand.u32 %v5653, 4294901760
      %v5800 = vsub.f32 %v5653, %v5799
      %v5801 = vand.u32 %v5800, 4294901760
      %v5802 = vsub.f32 %v5800, %v5801
      %v5803 = vand.u32 %v5802, 4294901760
      %5804 = vmatmul.f32.gmra.mxu0 %v5803
      %v5805 = vpop.f32.mrf.mxu0
      %v5806 = vadd.f32 %v5640, %v5805
      %v5807 = vand.u32 %v5656, 4294901760
      %v5808 = vsub.f32 %v5656, %v5807
      %v5809 = vand.u32 %v5808, 4294901760
      %v5810 = vsub.f32 %v5808, %v5809
      %v5811 = vand.u32 %v5810, 4294901760
      %5812 = vmatmul.f32.gmra.mxu0 %v5811
      %v5813 = vpop.f32.mrf.mxu0
      %v5814 = vadd.f32 %v5640, %v5813
      %v5815 = vand.u32 %v5659, 4294901760
      %v5816 = vsub.f32 %v5659, %v5815
      %v5817 = vand.u32 %v5816, 4294901760
      %v5818 = vsub.f32 %v5816, %v5817
      %v5819 = vand.u32 %v5818, 4294901760
      %5820 = vmatmul.f32.gmra.mxu0 %v5819
      %v5821 = vpop.f32.mrf.mxu0
      %v5822 = vadd.f32 %v5640, %v5821
      %v5823 = vand.u32 %v5662, 4294901760
      %v5824 = vsub.f32 %v5662, %v5823
      %v5825 = vand.u32 %v5824, 4294901760
      %v5826 = vsub.f32 %v5824, %v5825
      %v5827 = vand.u32 %v5826, 4294901760
      %5828 = vmatmul.f32.gmra.mxu0 %v5827
      %v5829 = vpop.f32.mrf.mxu0
      %v5830 = vadd.f32 %v5640, %v5829
      %v5831 = vand.u32 %v5665, 4294901760
      %v5832 = vsub.f32 %v5665, %v5831
      %v5833 = vand.u32 %v5832, 4294901760
      %v5834 = vsub.f32 %v5832, %v5833
      %v5835 = vand.u32 %v5834, 4294901760
      %5836 = vmatmul.f32.gmra.mxu0 %v5835
      %v5837 = vpop.f32.mrf.mxu0
      %v5838 = vadd.f32 %v5640, %v5837
      %v5839 = vand.u32 %v5668, 4294901760
      %v5840 = vsub.f32 %v5668, %v5839
      %v5841 = vand.u32 %v5840, 4294901760
      %v5842 = vsub.f32 %v5840, %v5841
      %v5843 = vand.u32 %v5842, 4294901760
      %5844 = vmatmul.f32.gmra.mxu0 %v5843
      %v5845 = vpop.f32.mrf.mxu0
      %v5846 = vadd.f32 %v5640, %v5845
      %v5847 = vand.u32 %v5671, 4294901760
      %v5848 = vsub.f32 %v5671, %v5847
      %v5849 = vand.u32 %v5848, 4294901760
      %v5850 = vsub.f32 %v5848, %v5849
      %v5851 = vand.u32 %v5850, 4294901760
      %5852 = vmatmul.f32.gmra.mxu0 %v5851
      %v5853 = vpop.f32.mrf.mxu0
      %v5854 = vadd.f32 %v5640, %v5853
      %v5855 = vand.u32 %v5674, 4294901760
      %v5856 = vsub.f32 %v5674, %v5855
      %v5857 = vand.u32 %v5856, 4294901760
      %v5858 = vsub.f32 %v5856, %v5857
      %v5859 = vand.u32 %v5858, 4294901760
      %5860 = vmatmul.f32.gmra.mxu0 %v5859
      %v5861 = vpop.f32.mrf.mxu0
      %v5862 = vadd.f32 %v5640, %v5861
      %v5863 = vand.u32 %v5677, 4294901760
      %v5864 = vsub.f32 %v5677, %v5863
      %v5865 = vand.u32 %v5864, 4294901760
      %v5866 = vsub.f32 %v5864, %v5865
      %v5867 = vand.u32 %v5866, 4294901760
      %5868 = vmatmul.f32.gmra.mxu0 %v5867
      %v5869 = vpop.f32.mrf.mxu0
      %v5870 = vadd.f32 %v5640, %v5869
      %v5871 = vand.u32 %v5680, 4294901760
      %v5872 = vsub.f32 %v5680, %v5871
      %v5873 = vand.u32 %v5872, 4294901760
      %v5874 = vsub.f32 %v5872, %v5873
      %v5875 = vand.u32 %v5874, 4294901760
      %5876 = vmatmul.f32.gmra.mxu0 %v5875
      %v5877 = vpop.f32.mrf.mxu0
      %v5878 = vadd.f32 %v5640, %v5877
      %v5879 = vand.u32 %v5683, 4294901760
      %v5880 = vsub.f32 %v5683, %v5879
      %v5881 = vand.u32 %v5880, 4294901760
      %v5882 = vsub.f32 %v5880, %v5881
      %v5883 = vand.u32 %v5882, 4294901760
      %5884 = vmatmul.f32.gmra.mxu0 %v5883
      %v5885 = vpop.f32.mrf.mxu0
      %v5886 = vadd.f32 %v5640, %v5885
      %v5887 = vand.u32 %v5686, 4294901760
      %v5888 = vsub.f32 %v5686, %v5887
      %v5889 = vand.u32 %v5888, 4294901760
      %v5890 = vsub.f32 %v5888, %v5889
      %v5891 = vand.u32 %v5890, 4294901760
      %5892 = vmatmul.f32.gmra.mxu0 %v5891
      %v5893 = vpop.f32.mrf.mxu0
      %v5894 = vadd.f32 %v5640, %v5893
      %v5895 = vand.u32 %v5689, 4294901760
      %v5896 = vsub.f32 %v5689, %v5895
      %v5897 = vand.u32 %v5896, 4294901760
      %v5898 = vsub.f32 %v5896, %v5897
      %v5899 = vand.u32 %v5898, 4294901760
      %5900 = vmatmul.f32.gmra.mxu0 %v5899
      %v5901 = vpop.f32.mrf.mxu0
      %v5902 = vadd.f32 %v5640, %v5901
      %v5903 = vand.u32 %v5692, 4294901760
      %v5904 = vsub.f32 %v5692, %v5903
      %v5905 = vand.u32 %v5904, 4294901760
      %v5906 = vsub.f32 %v5904, %v5905
      %v5907 = vand.u32 %v5906, 4294901760
      %5908 = vmatmul.f32.gmra.mxu0 %v5907
      %v5909 = vpop.f32.mrf.mxu0
      %v5910 = vadd.f32 %v5640, %v5909
      %v5911 = vand.u32 %v5695, 4294901760
      %v5912 = vsub.f32 %v5695, %v5911
      %v5913 = vand.u32 %v5912, 4294901760
      %v5914 = vsub.f32 %v5912, %v5913
      %v5915 = vand.u32 %v5914, 4294901760
      %5916 = vmatmul.f32.gmra.mxu0 %v5915
      %v5917 = vpop.f32.mrf.mxu0
      %v5918 = vadd.f32 %v5640, %v5917
      %v5919 = vand.u32 %v5698, 4294901760
      %v5920 = vsub.f32 %v5698, %v5919
      %v5921 = vand.u32 %v5920, 4294901760
      %v5922 = vsub.f32 %v5920, %v5921
      %v5923 = vand.u32 %v5922, 4294901760
      %5924 = vmatmul.f32.gmra.mxu0 %v5923
      %v5925 = vpop.f32.mrf.mxu0
      %v5926 = vadd.f32 %v5640, %v5925
      %v5927 = vand.u32 %v5701, 4294901760
      %v5928 = vsub.f32 %v5701, %v5927
      %v5929 = vand.u32 %v5928, 4294901760
      %v5930 = vsub.f32 %v5928, %v5929
      %v5931 = vand.u32 %v5930, 4294901760
      %5932 = vmatmul.f32.gmra.mxu0 %v5931
      %v5933 = vpop.f32.mrf.mxu0
      %v5934 = vadd.f32 %v5640, %v5933
      %v5935 = vand.u32 %v5704, 4294901760
      %v5936 = vsub.f32 %v5704, %v5935
      %v5937 = vand.u32 %v5936, 4294901760
      %v5938 = vsub.f32 %v5936, %v5937
      %v5939 = vand.u32 %v5938, 4294901760
      %5940 = vmatmul.f32.gmra.mxu0 %v5939
      %v5941 = vpop.f32.mrf.mxu0
      %v5942 = vadd.f32 %v5640, %v5941
      %v5943 = vand.u32 %v5707, 4294901760
      %v5944 = vsub.f32 %v5707, %v5943
      %v5945 = vand.u32 %v5944, 4294901760
      %v5946 = vsub.f32 %v5944, %v5945
      %v5947 = vand.u32 %v5946, 4294901760
      %5948 = vmatmul.f32.gmra.mxu0 %v5947
      %v5949 = vpop.f32.mrf.mxu0
      %v5950 = vadd.f32 %v5640, %v5949
      %v5951 = vand.u32 %v5710, 4294901760
      %v5952 = vsub.f32 %v5710, %v5951
      %v5953 = vand.u32 %v5952, 4294901760
      %v5954 = vsub.f32 %v5952, %v5953
      %v5955 = vand.u32 %v5954, 4294901760
      %5956 = vmatmul.f32.gmra.mxu0 %v5955
      %v5957 = vpop.f32.mrf.mxu0
      %v5958 = vadd.f32 %v5640, %v5957
      %v5959 = vand.u32 %v5713, 4294901760
      %v5960 = vsub.f32 %v5713, %v5959
      %v5961 = vand.u32 %v5960, 4294901760
      %v5962 = vsub.f32 %v5960, %v5961
      %v5963 = vand.u32 %v5962, 4294901760
      %5964 = vmatmul.f32.gmra.mxu0 %v5963
      %v5965 = vpop.f32.mrf.mxu0
      %v5966 = vadd.f32 %v5640, %v5965
      %v5967 = vand.u32 %v5716, 4294901760
      %v5968 = vsub.f32 %v5716, %v5967
      %v5969 = vand.u32 %v5968, 4294901760
      %v5970 = vsub.f32 %v5968, %v5969
      %v5971 = vand.u32 %v5970, 4294901760
      %5972 = vmatmul.f32.gmra.mxu0 %v5971
      %v5973 = vpop.f32.mrf.mxu0
      %v5974 = vadd.f32 %v5640, %v5973
      %v5975 = vand.u32 %v5719, 4294901760
      %v5976 = vsub.f32 %v5719, %v5975
      %v5977 = vand.u32 %v5976, 4294901760
      %v5978 = vsub.f32 %v5976, %v5977
      %v5979 = vand.u32 %v5978, 4294901760
      %5980 = vmatmul.f32.gmra.mxu0 %v5979
      %v5981 = vpop.f32.mrf.mxu0
      %v5982 = vadd.f32 %v5640, %v5981
      %v5983 = vand.u32 %v5722, 4294901760
      %v5984 = vsub.f32 %v5722, %v5983
      %v5985 = vand.u32 %v5984, 4294901760
      %v5986 = vsub.f32 %v5984, %v5985
      %v5987 = vand.u32 %v5986, 4294901760
      %5988 = vmatmul.f32.gmra.mxu0 %v5987
      %v5989 = vpop.f32.mrf.mxu0
      %v5990 = vadd.f32 %v5640, %v5989
      %v5991 = vand.u32 %v5725, 4294901760
      %v5992 = vsub.f32 %v5725, %v5991
      %v5993 = vand.u32 %v5992, 4294901760
      %v5994 = vsub.f32 %v5992, %v5993
      %v5995 = vand.u32 %v5994, 4294901760
      %5996 = vmatmul.f32.gmra.mxu0 %v5995
      %v5997 = vpop.f32.mrf.mxu0
      %v5998 = vadd.f32 %v5640, %v5997
      %v5999 = vand.u32 %v5728, 4294901760
      %v6000 = vsub.f32 %v5728, %v5999
      %v6001 = vand.u32 %v6000, 4294901760
      %v6002 = vsub.f32 %v6000, %v6001
      %v6003 = vand.u32 %v6002, 4294901760
      %6004 = vmatmul.f32.gmra.mxu0 %v6003
      %v6005 = vpop.f32.mrf.mxu0
      %v6006 = vadd.f32 %v5640, %v6005
      %v6007 = vand.u32 %v5731, 4294901760
      %v6008 = vsub.f32 %v5731, %v6007
      %v6009 = vand.u32 %v6008, 4294901760
      %v6010 = vsub.f32 %v6008, %v6009
      %v6011 = vand.u32 %v6010, 4294901760
      %6012 = vmatmul.f32.gmra.mxu0 %v6011
      %v6013 = vpop.f32.mrf.mxu0
      %v6014 = vadd.f32 %v5640, %v6013
      %v6015 = vand.u32 %v5734, 4294901760
      %v6016 = vsub.f32 %v5734, %v6015
      %v6017 = vand.u32 %v6016, 4294901760
      %v6018 = vsub.f32 %v6016, %v6017
      %v6019 = vand.u32 %v6018, 4294901760
      %6020 = vmatmul.f32.gmra.mxu0 %v6019
      %v6021 = vpop.f32.mrf.mxu0
      %v6022 = vadd.f32 %v5640, %v6021
      %v6023 = vand.u32 %v5737, 4294901760
      %v6024 = vsub.f32 %v5737, %v6023
      %v6025 = vand.u32 %v6024, 4294901760
      %v6026 = vsub.f32 %v6024, %v6025
      %v6027 = vand.u32 %v6026, 4294901760
      %6028 = vmatmul.f32.gmra.mxu0 %v6027
      %v6029 = vpop.f32.mrf.mxu0
      %v6030 = vadd.f32 %v5640, %v6029
      %v6031 = vand.u32 %v5740, 4294901760
      %v6032 = vsub.f32 %v5740, %v6031
      %v6033 = vand.u32 %v6032, 4294901760
      %v6034 = vsub.f32 %v6032, %v6033
      %v6035 = vand.u32 %v6034, 4294901760
      %6036 = vmatmul.f32.gmra.mxu0 %v6035
      %v6037 = vpop.f32.mrf.mxu0
      %v6038 = vadd.f32 %v5640, %v6037
      %v6039 = vand.u32 %v5743, 4294901760
      %v6040 = vsub.f32 %v5743, %v6039
      %v6041 = vand.u32 %v6040, 4294901760
      %v6042 = vsub.f32 %v6040, %v6041
      %v6043 = vand.u32 %v6042, 4294901760
      %6044 = vmatmul.f32.gmra.mxu0 %v6043
      %v6045 = vpop.f32.mrf.mxu0
      %v6046 = vadd.f32 %v5640, %v6045
      %v6047 = vand.u32 %v5746, 4294901760
      %v6048 = vsub.f32 %v5746, %v6047
      %v6049 = vand.u32 %v6048, 4294901760
      %v6050 = vsub.f32 %v6048, %v6049
      %v6051 = vand.u32 %v6050, 4294901760
      %6052 = vmatmul.f32.gmra.mxu0 %v6051
      %v6053 = vpop.f32.mrf.mxu0
      %v6054 = vadd.f32 %v5640, %v6053
      %v6055 = vand.u32 %v5749, 4294901760
      %v6056 = vsub.f32 %v5749, %v6055
      %v6057 = vand.u32 %v6056, 4294901760
      %v6058 = vsub.f32 %v6056, %v6057
      %v6059 = vand.u32 %v6058, 4294901760
      %6060 = vmatmul.f32.gmra.mxu0 %v6059
      %v6061 = vpop.f32.mrf.mxu0
      %v6062 = vadd.f32 %v5640, %v6061
      %v6063 = vand.u32 %v5752, 4294901760
      %v6064 = vsub.f32 %v5752, %v6063
      %v6065 = vand.u32 %v6064, 4294901760
      %v6066 = vsub.f32 %v6064, %v6065
      %v6067 = vand.u32 %v6066, 4294901760
      %6068 = vmatmul.f32.gmra.mxu0 %v6067
      %v6069 = vpop.f32.mrf.mxu0
      %v6070 = vadd.f32 %v5640, %v6069
      %v6071 = vand.u32 %v5755, 4294901760
      %v6072 = vsub.f32 %v5755, %v6071
      %v6073 = vand.u32 %v6072, 4294901760
      %v6074 = vsub.f32 %v6072, %v6073
      %v6075 = vand.u32 %v6074, 4294901760
      %6076 = vmatmul.f32.gmra.mxu0 %v6075
      %v6077 = vpop.f32.mrf.mxu0
      %v6078 = vadd.f32 %v5640, %v6077
      %6079 = vdwg.mxu0
      %6080 = vmatpush.msra.mxu0 0.0
      %6081 = vmatpush.msra.mxu0 0.0
      %6082 = vmatpush.msra.mxu0 0.0
      %6083 = vmatpush.msra.mxu0 0.0
      %6084 = vmatpush.msra.mxu0 0.0
      %6085 = vmatpush.msra.mxu0 0.0
      %6086 = vmatpush.msra.mxu0 0.0
      %6087 = vmatpush.msra.mxu0 0.0
      %6088 = vmatpush.msra.mxu0 0.0
      %6089 = vmatpush.msra.mxu0 0.0
      %6090 = vmatpush.msra.mxu0 0.0
      %6091 = vmatpush.msra.mxu0 0.0
      %6092 = vmatpush.msra.mxu0 0.0
      %6093 = vmatpush.msra.mxu0 0.0
      %v6094 = vand.u32 %v5637, 4294901760
      %v6095 = vsub.f32 %v5637, %v6094
      %v6096 = vand.u32 %v6095, 4294901760
      %v6097 = vsub.f32 %v6095, %v6096
      %v6098 = vand.u32 %v6097, 4294901760
      %6099 = vmatpush.msra.mxu0 %v6098
      %v6100 = vand.u32 %v5636, 4294901760
      %v6101 = vsub.f32 %v5636, %v6100
      %v6102 = vand.u32 %v6101, 4294901760
      %v6103 = vsub.f32 %v6101, %v6102
      %v6104 = vand.u32 %v6103, 4294901760
      %6105 = vmatpush.msra.mxu0 %v6104
      %v6106 = vand.u32 %v5644, 4294901760
      %6107 = vmatmul.f32.gmra.mxu0 %v6106
      %v6108 = vpop.f32.mrf.mxu0
      %v6109 = vadd.f32 %v5782, %v6108
      %v6110 = vand.u32 %v5647, 4294901760
      %6111 = vmatmul.f32.gmra.mxu0 %v6110
      %v6112 = vpop.f32.mrf.mxu0
      %v6113 = vadd.f32 %v5790, %v6112
      %v6114 = vand.u32 %v5650, 4294901760
      %6115 = vmatmul.f32.gmra.mxu0 %v6114
      %v6116 = vpop.f32.mrf.mxu0
      %v6117 = vadd.f32 %v5798, %v6116
      %v6118 = vand.u32 %v5653, 4294901760
      %6119 = vmatmul.f32.gmra.mxu0 %v6118
      %v6120 = vpop.f32.mrf.mxu0
      %v6121 = vadd.f32 %v5806, %v6120
      %v6122 = vand.u32 %v5656, 4294901760
      %6123 = vmatmul.f32.gmra.mxu0 %v6122
      %v6124 = vpop.f32.mrf.mxu0
      %v6125 = vadd.f32 %v5814, %v6124
      %v6126 = vand.u32 %v5659, 4294901760
      %6127 = vmatmul.f32.gmra.mxu0 %v6126
      %v6128 = vpop.f32.mrf.mxu0
      %v6129 = vadd.f32 %v5822, %v6128
      %v6130 = vand.u32 %v5662, 4294901760
      %6131 = vmatmul.f32.gmra.mxu0 %v6130
      %v6132 = vpop.f32.mrf.mxu0
      %v6133 = vadd.f32 %v5830, %v6132
      %v6134 = vand.u32 %v5665, 4294901760
      %6135 = vmatmul.f32.gmra.mxu0 %v6134
      %v6136 = vpop.f32.mrf.mxu0
      %v6137 = vadd.f32 %v5838, %v6136
      %v6138 = vand.u32 %v5668, 4294901760
      %6139 = vmatmul.f32.gmra.mxu0 %v6138
      %v6140 = vpop.f32.mrf.mxu0
      %v6141 = vadd.f32 %v5846, %v6140
      %v6142 = vand.u32 %v5671, 4294901760
      %6143 = vmatmul.f32.gmra.mxu0 %v6142
      %v6144 = vpop.f32.mrf.mxu0
      %v6145 = vadd.f32 %v5854, %v6144
      %v6146 = vand.u32 %v5674, 4294901760
      %6147 = vmatmul.f32.gmra.mxu0 %v6146
      %v6148 = vpop.f32.mrf.mxu0
      %v6149 = vadd.f32 %v5862, %v6148
      %v6150 = vand.u32 %v5677, 4294901760
      %6151 = vmatmul.f32.gmra.mxu0 %v6150
      %v6152 = vpop.f32.mrf.mxu0
      %v6153 = vadd.f32 %v5870, %v6152
      %v6154 = vand.u32 %v5680, 4294901760
      %6155 = vmatmul.f32.gmra.mxu0 %v6154
      %v6156 = vpop.f32.mrf.mxu0
      %v6157 = vadd.f32 %v5878, %v6156
      %v6158 = vand.u32 %v5683, 4294901760
      %6159 = vmatmul.f32.gmra.mxu0 %v6158
      %v6160 = vpop.f32.mrf.mxu0
      %v6161 = vadd.f32 %v5886, %v6160
      %v6162 = vand.u32 %v5686, 4294901760
      %6163 = vmatmul.f32.gmra.mxu0 %v6162
      %v6164 = vpop.f32.mrf.mxu0
      %v6165 = vadd.f32 %v5894, %v6164
      %v6166 = vand.u32 %v5689, 4294901760
      %6167 = vmatmul.f32.gmra.mxu0 %v6166
      %v6168 = vpop.f32.mrf.mxu0
      %v6169 = vadd.f32 %v5902, %v6168
      %v6170 = vand.u32 %v5692, 4294901760
      %6171 = vmatmul.f32.gmra.mxu0 %v6170
      %v6172 = vpop.f32.mrf.mxu0
      %v6173 = vadd.f32 %v5910, %v6172
      %v6174 = vand.u32 %v5695, 4294901760
      %6175 = vmatmul.f32.gmra.mxu0 %v6174
      %v6176 = vpop.f32.mrf.mxu0
      %v6177 = vadd.f32 %v5918, %v6176
      %v6178 = vand.u32 %v5698, 4294901760
      %6179 = vmatmul.f32.gmra.mxu0 %v6178
      %v6180 = vpop.f32.mrf.mxu0
      %v6181 = vadd.f32 %v5926, %v6180
      %v6182 = vand.u32 %v5701, 4294901760
      %6183 = vmatmul.f32.gmra.mxu0 %v6182
      %v6184 = vpop.f32.mrf.mxu0
      %v6185 = vadd.f32 %v5934, %v6184
      %v6186 = vand.u32 %v5704, 4294901760
      %6187 = vmatmul.f32.gmra.mxu0 %v6186
      %v6188 = vpop.f32.mrf.mxu0
      %v6189 = vadd.f32 %v5942, %v6188
      %v6190 = vand.u32 %v5707, 4294901760
      %6191 = vmatmul.f32.gmra.mxu0 %v6190
      %v6192 = vpop.f32.mrf.mxu0
      %v6193 = vadd.f32 %v5950, %v6192
      %v6194 = vand.u32 %v5710, 4294901760
      %6195 = vmatmul.f32.gmra.mxu0 %v6194
      %v6196 = vpop.f32.mrf.mxu0
      %v6197 = vadd.f32 %v5958, %v6196
      %v6198 = vand.u32 %v5713, 4294901760
      %6199 = vmatmul.f32.gmra.mxu0 %v6198
      %v6200 = vpop.f32.mrf.mxu0
      %v6201 = vadd.f32 %v5966, %v6200
      %v6202 = vand.u32 %v5716, 4294901760
      %6203 = vmatmul.f32.gmra.mxu0 %v6202
      %v6204 = vpop.f32.mrf.mxu0
      %v6205 = vadd.f32 %v5974, %v6204
      %v6206 = vand.u32 %v5719, 4294901760
      %6207 = vmatmul.f32.gmra.mxu0 %v6206
      %v6208 = vpop.f32.mrf.mxu0
      %v6209 = vadd.f32 %v5982, %v6208
      %v6210 = vand.u32 %v5722, 4294901760
      %6211 = vmatmul.f32.gmra.mxu0 %v6210
      %v6212 = vpop.f32.mrf.mxu0
      %v6213 = vadd.f32 %v5990, %v6212
      %v6214 = vand.u32 %v5725, 4294901760
      %6215 = vmatmul.f32.gmra.mxu0 %v6214
      %v6216 = vpop.f32.mrf.mxu0
      %v6217 = vadd.f32 %v5998, %v6216
      %v6218 = vand.u32 %v5728, 4294901760
      %6219 = vmatmul.f32.gmra.mxu0 %v6218
      %v6220 = vpop.f32.mrf.mxu0
      %v6221 = vadd.f32 %v6006, %v6220
      %v6222 = vand.u32 %v5731, 4294901760
      %6223 = vmatmul.f32.gmra.mxu0 %v6222
      %v6224 = vpop.f32.mrf.mxu0
      %v6225 = vadd.f32 %v6014, %v6224
      %v6226 = vand.u32 %v5734, 4294901760
      %6227 = vmatmul.f32.gmra.mxu0 %v6226
      %v6228 = vpop.f32.mrf.mxu0
      %v6229 = vadd.f32 %v6022, %v6228
      %v6230 = vand.u32 %v5737, 4294901760
      %6231 = vmatmul.f32.gmra.mxu0 %v6230
      %v6232 = vpop.f32.mrf.mxu0
      %v6233 = vadd.f32 %v6030, %v6232
      %v6234 = vand.u32 %v5740, 4294901760
      %6235 = vmatmul.f32.gmra.mxu0 %v6234
      %v6236 = vpop.f32.mrf.mxu0
      %v6237 = vadd.f32 %v6038, %v6236
      %v6238 = vand.u32 %v5743, 4294901760
      %6239 = vmatmul.f32.gmra.mxu0 %v6238
      %v6240 = vpop.f32.mrf.mxu0
      %v6241 = vadd.f32 %v6046, %v6240
      %v6242 = vand.u32 %v5746, 4294901760
      %6243 = vmatmul.f32.gmra.mxu0 %v6242
      %v6244 = vpop.f32.mrf.mxu0
      %v6245 = vadd.f32 %v6054, %v6244
      %v6246 = vand.u32 %v5749, 4294901760
      %6247 = vmatmul.f32.gmra.mxu0 %v6246
      %v6248 = vpop.f32.mrf.mxu0
      %v6249 = vadd.f32 %v6062, %v6248
      %v6250 = vand.u32 %v5752, 4294901760
      %6251 = vmatmul.f32.gmra.mxu0 %v6250
      %v6252 = vpop.f32.mrf.mxu0
      %v6253 = vadd.f32 %v6070, %v6252
      %v6254 = vand.u32 %v5755, 4294901760
      %6255 = vmatmul.f32.gmra.mxu0 %v6254
      %v6256 = vpop.f32.mrf.mxu0
      %v6257 = vadd.f32 %v6078, %v6256
      %6258 = vdwg.mxu0
      %6259 = vmatpush.msra.mxu0 0.0
      %6260 = vmatpush.msra.mxu0 0.0
      %6261 = vmatpush.msra.mxu0 0.0
      %6262 = vmatpush.msra.mxu0 0.0
      %6263 = vmatpush.msra.mxu0 0.0
      %6264 = vmatpush.msra.mxu0 0.0
      %6265 = vmatpush.msra.mxu0 0.0
      %6266 = vmatpush.msra.mxu0 0.0
      %6267 = vmatpush.msra.mxu0 0.0
      %6268 = vmatpush.msra.mxu0 0.0
      %6269 = vmatpush.msra.mxu0 0.0
      %6270 = vmatpush.msra.mxu0 0.0
      %6271 = vmatpush.msra.mxu0 0.0
      %6272 = vmatpush.msra.mxu0 0.0
      %v6273 = vand.u32 %v5637, 4294901760
      %v6274 = vsub.f32 %v5637, %v6273
      %6275 = vmatpush.msra.mxu0 %v6274
      %v6276 = vand.u32 %v5636, 4294901760
      %v6277 = vsub.f32 %v5636, %v6276
      %6278 = vmatpush.msra.mxu0 %v6277
      %v6279 = vand.u32 %v5644, 4294901760
      %v6280 = vsub.f32 %v5644, %v6279
      %6281 = vmatmul.f32.gmra.mxu0 %v6280
      %v6282 = vpop.f32.mrf.mxu0
      %v6283 = vadd.f32 %v6109, %v6282
      %v6284 = vand.u32 %v5647, 4294901760
      %v6285 = vsub.f32 %v5647, %v6284
      %6286 = vmatmul.f32.gmra.mxu0 %v6285
      %v6287 = vpop.f32.mrf.mxu0
      %v6288 = vadd.f32 %v6113, %v6287
      %v6289 = vand.u32 %v5650, 4294901760
      %v6290 = vsub.f32 %v5650, %v6289
      %6291 = vmatmul.f32.gmra.mxu0 %v6290
      %v6292 = vpop.f32.mrf.mxu0
      %v6293 = vadd.f32 %v6117, %v6292
      %v6294 = vand.u32 %v5653, 4294901760
      %v6295 = vsub.f32 %v5653, %v6294
      %6296 = vmatmul.f32.gmra.mxu0 %v6295
      %v6297 = vpop.f32.mrf.mxu0
      %v6298 = vadd.f32 %v6121, %v6297
      %v6299 = vand.u32 %v5656, 4294901760
      %v6300 = vsub.f32 %v5656, %v6299
      %6301 = vmatmul.f32.gmra.mxu0 %v6300
      %v6302 = vpop.f32.mrf.mxu0
      %v6303 = vadd.f32 %v6125, %v6302
      %v6304 = vand.u32 %v5659, 4294901760
      %v6305 = vsub.f32 %v5659, %v6304
      %6306 = vmatmul.f32.gmra.mxu0 %v6305
      %v6307 = vpop.f32.mrf.mxu0
      %v6308 = vadd.f32 %v6129, %v6307
      %v6309 = vand.u32 %v5662, 4294901760
      %v6310 = vsub.f32 %v5662, %v6309
      %6311 = vmatmul.f32.gmra.mxu0 %v6310
      %v6312 = vpop.f32.mrf.mxu0
      %v6313 = vadd.f32 %v6133, %v6312
      %v6314 = vand.u32 %v5665, 4294901760
      %v6315 = vsub.f32 %v5665, %v6314
      %6316 = vmatmul.f32.gmra.mxu0 %v6315
      %v6317 = vpop.f32.mrf.mxu0
      %v6318 = vadd.f32 %v6137, %v6317
      %v6319 = vand.u32 %v5668, 4294901760
      %v6320 = vsub.f32 %v5668, %v6319
      %6321 = vmatmul.f32.gmra.mxu0 %v6320
      %v6322 = vpop.f32.mrf.mxu0
      %v6323 = vadd.f32 %v6141, %v6322
      %v6324 = vand.u32 %v5671, 4294901760
      %v6325 = vsub.f32 %v5671, %v6324
      %6326 = vmatmul.f32.gmra.mxu0 %v6325
      %v6327 = vpop.f32.mrf.mxu0
      %v6328 = vadd.f32 %v6145, %v6327
      %v6329 = vand.u32 %v5674, 4294901760
      %v6330 = vsub.f32 %v5674, %v6329
      %6331 = vmatmul.f32.gmra.mxu0 %v6330
      %v6332 = vpop.f32.mrf.mxu0
      %v6333 = vadd.f32 %v6149, %v6332
      %v6334 = vand.u32 %v5677, 4294901760
      %v6335 = vsub.f32 %v5677, %v6334
      %6336 = vmatmul.f32.gmra.mxu0 %v6335
      %v6337 = vpop.f32.mrf.mxu0
      %v6338 = vadd.f32 %v6153, %v6337
      %v6339 = vand.u32 %v5680, 4294901760
      %v6340 = vsub.f32 %v5680, %v6339
      %6341 = vmatmul.f32.gmra.mxu0 %v6340
      %v6342 = vpop.f32.mrf.mxu0
      %v6343 = vadd.f32 %v6157, %v6342
      %v6344 = vand.u32 %v5683, 4294901760
      %v6345 = vsub.f32 %v5683, %v6344
      %6346 = vmatmul.f32.gmra.mxu0 %v6345
      %v6347 = vpop.f32.mrf.mxu0
      %v6348 = vadd.f32 %v6161, %v6347
      %v6349 = vand.u32 %v5686, 4294901760
      %v6350 = vsub.f32 %v5686, %v6349
      %6351 = vmatmul.f32.gmra.mxu0 %v6350
      %v6352 = vpop.f32.mrf.mxu0
      %v6353 = vadd.f32 %v6165, %v6352
      %v6354 = vand.u32 %v5689, 4294901760
      %v6355 = vsub.f32 %v5689, %v6354
      %6356 = vmatmul.f32.gmra.mxu0 %v6355
      %v6357 = vpop.f32.mrf.mxu0
      %v6358 = vadd.f32 %v6169, %v6357
      %v6359 = vand.u32 %v5692, 4294901760
      %v6360 = vsub.f32 %v5692, %v6359
      %6361 = vmatmul.f32.gmra.mxu0 %v6360
      %v6362 = vpop.f32.mrf.mxu0
      %v6363 = vadd.f32 %v6173, %v6362
      %v6364 = vand.u32 %v5695, 4294901760
      %v6365 = vsub.f32 %v5695, %v6364
      %6366 = vmatmul.f32.gmra.mxu0 %v6365
      %v6367 = vpop.f32.mrf.mxu0
      %v6368 = vadd.f32 %v6177, %v6367
      %v6369 = vand.u32 %v5698, 4294901760
      %v6370 = vsub.f32 %v5698, %v6369
      %6371 = vmatmul.f32.gmra.mxu0 %v6370
      %v6372 = vpop.f32.mrf.mxu0
      %v6373 = vadd.f32 %v6181, %v6372
      %v6374 = vand.u32 %v5701, 4294901760
      %v6375 = vsub.f32 %v5701, %v6374
      %6376 = vmatmul.f32.gmra.mxu0 %v6375
      %v6377 = vpop.f32.mrf.mxu0
      %v6378 = vadd.f32 %v6185, %v6377
      %v6379 = vand.u32 %v5704, 4294901760
      %v6380 = vsub.f32 %v5704, %v6379
      %6381 = vmatmul.f32.gmra.mxu0 %v6380
      %v6382 = vpop.f32.mrf.mxu0
      %v6383 = vadd.f32 %v6189, %v6382
      %v6384 = vand.u32 %v5707, 4294901760
      %v6385 = vsub.f32 %v5707, %v6384
      %6386 = vmatmul.f32.gmra.mxu0 %v6385
      %v6387 = vpop.f32.mrf.mxu0
      %v6388 = vadd.f32 %v6193, %v6387
      %v6389 = vand.u32 %v5710, 4294901760
      %v6390 = vsub.f32 %v5710, %v6389
      %6391 = vmatmul.f32.gmra.mxu0 %v6390
      %v6392 = vpop.f32.mrf.mxu0
      %v6393 = vadd.f32 %v6197, %v6392
      %v6394 = vand.u32 %v5713, 4294901760
      %v6395 = vsub.f32 %v5713, %v6394
      %6396 = vmatmul.f32.gmra.mxu0 %v6395
      %v6397 = vpop.f32.mrf.mxu0
      %v6398 = vadd.f32 %v6201, %v6397
      %v6399 = vand.u32 %v5716, 4294901760
      %v6400 = vsub.f32 %v5716, %v6399
      %6401 = vmatmul.f32.gmra.mxu0 %v6400
      %v6402 = vpop.f32.mrf.mxu0
      %v6403 = vadd.f32 %v6205, %v6402
      %v6404 = vand.u32 %v5719, 4294901760
      %v6405 = vsub.f32 %v5719, %v6404
      %6406 = vmatmul.f32.gmra.mxu0 %v6405
      %v6407 = vpop.f32.mrf.mxu0
      %v6408 = vadd.f32 %v6209, %v6407
      %v6409 = vand.u32 %v5722, 4294901760
      %v6410 = vsub.f32 %v5722, %v6409
      %6411 = vmatmul.f32.gmra.mxu0 %v6410
      %v6412 = vpop.f32.mrf.mxu0
      %v6413 = vadd.f32 %v6213, %v6412
      %v6414 = vand.u32 %v5725, 4294901760
      %v6415 = vsub.f32 %v5725, %v6414
      %6416 = vmatmul.f32.gmra.mxu0 %v6415
      %v6417 = vpop.f32.mrf.mxu0
      %v6418 = vadd.f32 %v6217, %v6417
      %v6419 = vand.u32 %v5728, 4294901760
      %v6420 = vsub.f32 %v5728, %v6419
      %6421 = vmatmul.f32.gmra.mxu0 %v6420
      %v6422 = vpop.f32.mrf.mxu0
      %v6423 = vadd.f32 %v6221, %v6422
      %v6424 = vand.u32 %v5731, 4294901760
      %v6425 = vsub.f32 %v5731, %v6424
      %6426 = vmatmul.f32.gmra.mxu0 %v6425
      %v6427 = vpop.f32.mrf.mxu0
      %v6428 = vadd.f32 %v6225, %v6427
      %v6429 = vand.u32 %v5734, 4294901760
      %v6430 = vsub.f32 %v5734, %v6429
      %6431 = vmatmul.f32.gmra.mxu0 %v6430
      %v6432 = vpop.f32.mrf.mxu0
      %v6433 = vadd.f32 %v6229, %v6432
      %v6434 = vand.u32 %v5737, 4294901760
      %v6435 = vsub.f32 %v5737, %v6434
      %6436 = vmatmul.f32.gmra.mxu0 %v6435
      %v6437 = vpop.f32.mrf.mxu0
      %v6438 = vadd.f32 %v6233, %v6437
      %v6439 = vand.u32 %v5740, 4294901760
      %v6440 = vsub.f32 %v5740, %v6439
      %6441 = vmatmul.f32.gmra.mxu0 %v6440
      %v6442 = vpop.f32.mrf.mxu0
      %v6443 = vadd.f32 %v6237, %v6442
      %v6444 = vand.u32 %v5743, 4294901760
      %v6445 = vsub.f32 %v5743, %v6444
      %6446 = vmatmul.f32.gmra.mxu0 %v6445
      %v6447 = vpop.f32.mrf.mxu0
      %v6448 = vadd.f32 %v6241, %v6447
      %v6449 = vand.u32 %v5746, 4294901760
      %v6450 = vsub.f32 %v5746, %v6449
      %6451 = vmatmul.f32.gmra.mxu0 %v6450
      %v6452 = vpop.f32.mrf.mxu0
      %v6453 = vadd.f32 %v6245, %v6452
      %v6454 = vand.u32 %v5749, 4294901760
      %v6455 = vsub.f32 %v5749, %v6454
      %6456 = vmatmul.f32.gmra.mxu0 %v6455
      %v6457 = vpop.f32.mrf.mxu0
      %v6458 = vadd.f32 %v6249, %v6457
      %v6459 = vand.u32 %v5752, 4294901760
      %v6460 = vsub.f32 %v5752, %v6459
      %6461 = vmatmul.f32.gmra.mxu0 %v6460
      %v6462 = vpop.f32.mrf.mxu0
      %v6463 = vadd.f32 %v6253, %v6462
      %v6464 = vand.u32 %v5755, 4294901760
      %v6465 = vsub.f32 %v5755, %v6464
      %6466 = vmatmul.f32.gmra.mxu0 %v6465
      %v6467 = vpop.f32.mrf.mxu0
      %v6468 = vadd.f32 %v6257, %v6467
      %6469 = vdwg.mxu0
      %6470 = vmatpush.msra.mxu0 0.0
      %6471 = vmatpush.msra.mxu0 0.0
      %6472 = vmatpush.msra.mxu0 0.0
      %6473 = vmatpush.msra.mxu0 0.0
      %6474 = vmatpush.msra.mxu0 0.0
      %6475 = vmatpush.msra.mxu0 0.0
      %6476 = vmatpush.msra.mxu0 0.0
      %6477 = vmatpush.msra.mxu0 0.0
      %6478 = vmatpush.msra.mxu0 0.0
      %6479 = vmatpush.msra.mxu0 0.0
      %6480 = vmatpush.msra.mxu0 0.0
      %6481 = vmatpush.msra.mxu0 0.0
      %6482 = vmatpush.msra.mxu0 0.0
      %6483 = vmatpush.msra.mxu0 0.0
      %v6484 = vand.u32 %v5637, 4294901760
      %6485 = vmatpush.msra.mxu0 %v6484
      %v6486 = vand.u32 %v5636, 4294901760
      %6487 = vmatpush.msra.mxu0 %v6486
      %v6488 = vand.u32 %v5644, 4294901760
      %v6489 = vsub.f32 %v5644, %v6488
      %v6490 = vand.u32 %v6489, 4294901760
      %6491 = vmatmul.f32.gmra.mxu0 %v6490
      %v6492 = vpop.f32.mrf.mxu0
      %v6493 = vadd.f32 %v6283, %v6492
      %v6494 = vand.u32 %v5647, 4294901760
      %v6495 = vsub.f32 %v5647, %v6494
      %v6496 = vand.u32 %v6495, 4294901760
      %6497 = vmatmul.f32.gmra.mxu0 %v6496
      %v6498 = vpop.f32.mrf.mxu0
      %v6499 = vadd.f32 %v6288, %v6498
      %v6500 = vand.u32 %v5650, 4294901760
      %v6501 = vsub.f32 %v5650, %v6500
      %v6502 = vand.u32 %v6501, 4294901760
      %6503 = vmatmul.f32.gmra.mxu0 %v6502
      %v6504 = vpop.f32.mrf.mxu0
      %v6505 = vadd.f32 %v6293, %v6504
      %v6506 = vand.u32 %v5653, 4294901760
      %v6507 = vsub.f32 %v5653, %v6506
      %v6508 = vand.u32 %v6507, 4294901760
      %6509 = vmatmul.f32.gmra.mxu0 %v6508
      %v6510 = vpop.f32.mrf.mxu0
      %v6511 = vadd.f32 %v6298, %v6510
      %v6512 = vand.u32 %v5656, 4294901760
      %v6513 = vsub.f32 %v5656, %v6512
      %v6514 = vand.u32 %v6513, 4294901760
      %6515 = vmatmul.f32.gmra.mxu0 %v6514
      %v6516 = vpop.f32.mrf.mxu0
      %v6517 = vadd.f32 %v6303, %v6516
      %v6518 = vand.u32 %v5659, 4294901760
      %v6519 = vsub.f32 %v5659, %v6518
      %v6520 = vand.u32 %v6519, 4294901760
      %6521 = vmatmul.f32.gmra.mxu0 %v6520
      %v6522 = vpop.f32.mrf.mxu0
      %v6523 = vadd.f32 %v6308, %v6522
      %v6524 = vand.u32 %v5662, 4294901760
      %v6525 = vsub.f32 %v5662, %v6524
      %v6526 = vand.u32 %v6525, 4294901760
      %6527 = vmatmul.f32.gmra.mxu0 %v6526
      %v6528 = vpop.f32.mrf.mxu0
      %v6529 = vadd.f32 %v6313, %v6528
      %v6530 = vand.u32 %v5665, 4294901760
      %v6531 = vsub.f32 %v5665, %v6530
      %v6532 = vand.u32 %v6531, 4294901760
      %6533 = vmatmul.f32.gmra.mxu0 %v6532
      %v6534 = vpop.f32.mrf.mxu0
      %v6535 = vadd.f32 %v6318, %v6534
      %v6536 = vand.u32 %v5668, 4294901760
      %v6537 = vsub.f32 %v5668, %v6536
      %v6538 = vand.u32 %v6537, 4294901760
      %6539 = vmatmul.f32.gmra.mxu0 %v6538
      %v6540 = vpop.f32.mrf.mxu0
      %v6541 = vadd.f32 %v6323, %v6540
      %v6542 = vand.u32 %v5671, 4294901760
      %v6543 = vsub.f32 %v5671, %v6542
      %v6544 = vand.u32 %v6543, 4294901760
      %6545 = vmatmul.f32.gmra.mxu0 %v6544
      %v6546 = vpop.f32.mrf.mxu0
      %v6547 = vadd.f32 %v6328, %v6546
      %v6548 = vand.u32 %v5674, 4294901760
      %v6549 = vsub.f32 %v5674, %v6548
      %v6550 = vand.u32 %v6549, 4294901760
      %6551 = vmatmul.f32.gmra.mxu0 %v6550
      %v6552 = vpop.f32.mrf.mxu0
      %v6553 = vadd.f32 %v6333, %v6552
      %v6554 = vand.u32 %v5677, 4294901760
      %v6555 = vsub.f32 %v5677, %v6554
      %v6556 = vand.u32 %v6555, 4294901760
      %6557 = vmatmul.f32.gmra.mxu0 %v6556
      %v6558 = vpop.f32.mrf.mxu0
      %v6559 = vadd.f32 %v6338, %v6558
      %v6560 = vand.u32 %v5680, 4294901760
      %v6561 = vsub.f32 %v5680, %v6560
      %v6562 = vand.u32 %v6561, 4294901760
      %6563 = vmatmul.f32.gmra.mxu0 %v6562
      %v6564 = vpop.f32.mrf.mxu0
      %v6565 = vadd.f32 %v6343, %v6564
      %v6566 = vand.u32 %v5683, 4294901760
      %v6567 = vsub.f32 %v5683, %v6566
      %v6568 = vand.u32 %v6567, 4294901760
      %6569 = vmatmul.f32.gmra.mxu0 %v6568
      %v6570 = vpop.f32.mrf.mxu0
      %v6571 = vadd.f32 %v6348, %v6570
      %v6572 = vand.u32 %v5686, 4294901760
      %v6573 = vsub.f32 %v5686, %v6572
      %v6574 = vand.u32 %v6573, 4294901760
      %6575 = vmatmul.f32.gmra.mxu0 %v6574
      %v6576 = vpop.f32.mrf.mxu0
      %v6577 = vadd.f32 %v6353, %v6576
      %v6578 = vand.u32 %v5689, 4294901760
      %v6579 = vsub.f32 %v5689, %v6578
      %v6580 = vand.u32 %v6579, 4294901760
      %6581 = vmatmul.f32.gmra.mxu0 %v6580
      %v6582 = vpop.f32.mrf.mxu0
      %v6583 = vadd.f32 %v6358, %v6582
      %v6584 = vand.u32 %v5692, 4294901760
      %v6585 = vsub.f32 %v5692, %v6584
      %v6586 = vand.u32 %v6585, 4294901760
      %6587 = vmatmul.f32.gmra.mxu0 %v6586
      %v6588 = vpop.f32.mrf.mxu0
      %v6589 = vadd.f32 %v6363, %v6588
      %v6590 = vand.u32 %v5695, 4294901760
      %v6591 = vsub.f32 %v5695, %v6590
      %v6592 = vand.u32 %v6591, 4294901760
      %6593 = vmatmul.f32.gmra.mxu0 %v6592
      %v6594 = vpop.f32.mrf.mxu0
      %v6595 = vadd.f32 %v6368, %v6594
      %v6596 = vand.u32 %v5698, 4294901760
      %v6597 = vsub.f32 %v5698, %v6596
      %v6598 = vand.u32 %v6597, 4294901760
      %6599 = vmatmul.f32.gmra.mxu0 %v6598
      %v6600 = vpop.f32.mrf.mxu0
      %v6601 = vadd.f32 %v6373, %v6600
      %v6602 = vand.u32 %v5701, 4294901760
      %v6603 = vsub.f32 %v5701, %v6602
      %v6604 = vand.u32 %v6603, 4294901760
      %6605 = vmatmul.f32.gmra.mxu0 %v6604
      %v6606 = vpop.f32.mrf.mxu0
      %v6607 = vadd.f32 %v6378, %v6606
      %v6608 = vand.u32 %v5704, 4294901760
      %v6609 = vsub.f32 %v5704, %v6608
      %v6610 = vand.u32 %v6609, 4294901760
      %6611 = vmatmul.f32.gmra.mxu0 %v6610
      %v6612 = vpop.f32.mrf.mxu0
      %v6613 = vadd.f32 %v6383, %v6612
      %v6614 = vand.u32 %v5707, 4294901760
      %v6615 = vsub.f32 %v5707, %v6614
      %v6616 = vand.u32 %v6615, 4294901760
      %6617 = vmatmul.f32.gmra.mxu0 %v6616
      %v6618 = vpop.f32.mrf.mxu0
      %v6619 = vadd.f32 %v6388, %v6618
      %v6620 = vand.u32 %v5710, 4294901760
      %v6621 = vsub.f32 %v5710, %v6620
      %v6622 = vand.u32 %v6621, 4294901760
      %6623 = vmatmul.f32.gmra.mxu0 %v6622
      %v6624 = vpop.f32.mrf.mxu0
      %v6625 = vadd.f32 %v6393, %v6624
      %v6626 = vand.u32 %v5713, 4294901760
      %v6627 = vsub.f32 %v5713, %v6626
      %v6628 = vand.u32 %v6627, 4294901760
      %6629 = vmatmul.f32.gmra.mxu0 %v6628
      %v6630 = vpop.f32.mrf.mxu0
      %v6631 = vadd.f32 %v6398, %v6630
      %v6632 = vand.u32 %v5716, 4294901760
      %v6633 = vsub.f32 %v5716, %v6632
      %v6634 = vand.u32 %v6633, 4294901760
      %6635 = vmatmul.f32.gmra.mxu0 %v6634
      %v6636 = vpop.f32.mrf.mxu0
      %v6637 = vadd.f32 %v6403, %v6636
      %v6638 = vand.u32 %v5719, 4294901760
      %v6639 = vsub.f32 %v5719, %v6638
      %v6640 = vand.u32 %v6639, 4294901760
      %6641 = vmatmul.f32.gmra.mxu0 %v6640
      %v6642 = vpop.f32.mrf.mxu0
      %v6643 = vadd.f32 %v6408, %v6642
      %v6644 = vand.u32 %v5722, 4294901760
      %v6645 = vsub.f32 %v5722, %v6644
      %v6646 = vand.u32 %v6645, 4294901760
      %6647 = vmatmul.f32.gmra.mxu0 %v6646
      %v6648 = vpop.f32.mrf.mxu0
      %v6649 = vadd.f32 %v6413, %v6648
      %v6650 = vand.u32 %v5725, 4294901760
      %v6651 = vsub.f32 %v5725, %v6650
      %v6652 = vand.u32 %v6651, 4294901760
      %6653 = vmatmul.f32.gmra.mxu0 %v6652
      %v6654 = vpop.f32.mrf.mxu0
      %v6655 = vadd.f32 %v6418, %v6654
      %v6656 = vand.u32 %v5728, 4294901760
      %v6657 = vsub.f32 %v5728, %v6656
      %v6658 = vand.u32 %v6657, 4294901760
      %6659 = vmatmul.f32.gmra.mxu0 %v6658
      %v6660 = vpop.f32.mrf.mxu0
      %v6661 = vadd.f32 %v6423, %v6660
      %v6662 = vand.u32 %v5731, 4294901760
      %v6663 = vsub.f32 %v5731, %v6662
      %v6664 = vand.u32 %v6663, 4294901760
      %6665 = vmatmul.f32.gmra.mxu0 %v6664
      %v6666 = vpop.f32.mrf.mxu0
      %v6667 = vadd.f32 %v6428, %v6666
      %v6668 = vand.u32 %v5734, 4294901760
      %v6669 = vsub.f32 %v5734, %v6668
      %v6670 = vand.u32 %v6669, 4294901760
      %6671 = vmatmul.f32.gmra.mxu0 %v6670
      %v6672 = vpop.f32.mrf.mxu0
      %v6673 = vadd.f32 %v6433, %v6672
      %v6674 = vand.u32 %v5737, 4294901760
      %v6675 = vsub.f32 %v5737, %v6674
      %v6676 = vand.u32 %v6675, 4294901760
      %6677 = vmatmul.f32.gmra.mxu0 %v6676
      %v6678 = vpop.f32.mrf.mxu0
      %v6679 = vadd.f32 %v6438, %v6678
      %v6680 = vand.u32 %v5740, 4294901760
      %v6681 = vsub.f32 %v5740, %v6680
      %v6682 = vand.u32 %v6681, 4294901760
      %6683 = vmatmul.f32.gmra.mxu0 %v6682
      %v6684 = vpop.f32.mrf.mxu0
      %v6685 = vadd.f32 %v6443, %v6684
      %v6686 = vand.u32 %v5743, 4294901760
      %v6687 = vsub.f32 %v5743, %v6686
      %v6688 = vand.u32 %v6687, 4294901760
      %6689 = vmatmul.f32.gmra.mxu0 %v6688
      %v6690 = vpop.f32.mrf.mxu0
      %v6691 = vadd.f32 %v6448, %v6690
      %v6692 = vand.u32 %v5746, 4294901760
      %v6693 = vsub.f32 %v5746, %v6692
      %v6694 = vand.u32 %v6693, 4294901760
      %6695 = vmatmul.f32.gmra.mxu0 %v6694
      %v6696 = vpop.f32.mrf.mxu0
      %v6697 = vadd.f32 %v6453, %v6696
      %v6698 = vand.u32 %v5749, 4294901760
      %v6699 = vsub.f32 %v5749, %v6698
      %v6700 = vand.u32 %v6699, 4294901760
      %6701 = vmatmul.f32.gmra.mxu0 %v6700
      %v6702 = vpop.f32.mrf.mxu0
      %v6703 = vadd.f32 %v6458, %v6702
      %v6704 = vand.u32 %v5752, 4294901760
      %v6705 = vsub.f32 %v5752, %v6704
      %v6706 = vand.u32 %v6705, 4294901760
      %6707 = vmatmul.f32.gmra.mxu0 %v6706
      %v6708 = vpop.f32.mrf.mxu0
      %v6709 = vadd.f32 %v6463, %v6708
      %v6710 = vand.u32 %v5755, 4294901760
      %v6711 = vsub.f32 %v5755, %v6710
      %v6712 = vand.u32 %v6711, 4294901760
      %6713 = vmatmul.f32.gmra.mxu0 %v6712
      %v6714 = vpop.f32.mrf.mxu0
      %v6715 = vadd.f32 %v6468, %v6714
      %6716 = vdwg.mxu0
      %6717 = vmatpush.msra.mxu0 0.0
      %6718 = vmatpush.msra.mxu0 0.0
      %6719 = vmatpush.msra.mxu0 0.0
      %6720 = vmatpush.msra.mxu0 0.0
      %6721 = vmatpush.msra.mxu0 0.0
      %6722 = vmatpush.msra.mxu0 0.0
      %6723 = vmatpush.msra.mxu0 0.0
      %6724 = vmatpush.msra.mxu0 0.0
      %6725 = vmatpush.msra.mxu0 0.0
      %6726 = vmatpush.msra.mxu0 0.0
      %6727 = vmatpush.msra.mxu0 0.0
      %6728 = vmatpush.msra.mxu0 0.0
      %6729 = vmatpush.msra.mxu0 0.0
      %6730 = vmatpush.msra.mxu0 0.0
      %v6731 = vand.u32 %v5637, 4294901760
      %v6732 = vsub.f32 %v5637, %v6731
      %v6733 = vand.u32 %v6732, 4294901760
      %6734 = vmatpush.msra.mxu0 %v6733
      %v6735 = vand.u32 %v5636, 4294901760
      %v6736 = vsub.f32 %v5636, %v6735
      %v6737 = vand.u32 %v6736, 4294901760
      %6738 = vmatpush.msra.mxu0 %v6737
      %v6739 = vand.u32 %v5644, 4294901760
      %6740 = vmatmul.f32.gmra.mxu0 %v6739
      %v6741 = vpop.f32.mrf.mxu0
      %v6742 = vadd.f32 %v6493, %v6741
      %v6743 = vand.u32 %v5647, 4294901760
      %6744 = vmatmul.f32.gmra.mxu0 %v6743
      %v6745 = vpop.f32.mrf.mxu0
      %v6746 = vadd.f32 %v6499, %v6745
      %v6747 = vand.u32 %v5650, 4294901760
      %6748 = vmatmul.f32.gmra.mxu0 %v6747
      %v6749 = vpop.f32.mrf.mxu0
      %v6750 = vadd.f32 %v6505, %v6749
      %v6751 = vand.u32 %v5653, 4294901760
      %6752 = vmatmul.f32.gmra.mxu0 %v6751
      %v6753 = vpop.f32.mrf.mxu0
      %v6754 = vadd.f32 %v6511, %v6753
      %v6755 = vand.u32 %v5656, 4294901760
      %6756 = vmatmul.f32.gmra.mxu0 %v6755
      %v6757 = vpop.f32.mrf.mxu0
      %v6758 = vadd.f32 %v6517, %v6757
      %v6759 = vand.u32 %v5659, 4294901760
      %6760 = vmatmul.f32.gmra.mxu0 %v6759
      %v6761 = vpop.f32.mrf.mxu0
      %v6762 = vadd.f32 %v6523, %v6761
      %v6763 = vand.u32 %v5662, 4294901760
      %6764 = vmatmul.f32.gmra.mxu0 %v6763
      %v6765 = vpop.f32.mrf.mxu0
      %v6766 = vadd.f32 %v6529, %v6765
      %v6767 = vand.u32 %v5665, 4294901760
      %6768 = vmatmul.f32.gmra.mxu0 %v6767
      %v6769 = vpop.f32.mrf.mxu0
      %v6770 = vadd.f32 %v6535, %v6769
      %v6771 = vand.u32 %v5668, 4294901760
      %6772 = vmatmul.f32.gmra.mxu0 %v6771
      %v6773 = vpop.f32.mrf.mxu0
      %v6774 = vadd.f32 %v6541, %v6773
      %v6775 = vand.u32 %v5671, 4294901760
      %6776 = vmatmul.f32.gmra.mxu0 %v6775
      %v6777 = vpop.f32.mrf.mxu0
      %v6778 = vadd.f32 %v6547, %v6777
      %v6779 = vand.u32 %v5674, 4294901760
      %6780 = vmatmul.f32.gmra.mxu0 %v6779
      %v6781 = vpop.f32.mrf.mxu0
      %v6782 = vadd.f32 %v6553, %v6781
      %v6783 = vand.u32 %v5677, 4294901760
      %6784 = vmatmul.f32.gmra.mxu0 %v6783
      %v6785 = vpop.f32.mrf.mxu0
      %v6786 = vadd.f32 %v6559, %v6785
      %v6787 = vand.u32 %v5680, 4294901760
      %6788 = vmatmul.f32.gmra.mxu0 %v6787
      %v6789 = vpop.f32.mrf.mxu0
      %v6790 = vadd.f32 %v6565, %v6789
      %v6791 = vand.u32 %v5683, 4294901760
      %6792 = vmatmul.f32.gmra.mxu0 %v6791
      %v6793 = vpop.f32.mrf.mxu0
      %v6794 = vadd.f32 %v6571, %v6793
      %v6795 = vand.u32 %v5686, 4294901760
      %6796 = vmatmul.f32.gmra.mxu0 %v6795
      %v6797 = vpop.f32.mrf.mxu0
      %v6798 = vadd.f32 %v6577, %v6797
      %v6799 = vand.u32 %v5689, 4294901760
      %6800 = vmatmul.f32.gmra.mxu0 %v6799
      %v6801 = vpop.f32.mrf.mxu0
      %v6802 = vadd.f32 %v6583, %v6801
      %v6803 = vand.u32 %v5692, 4294901760
      %6804 = vmatmul.f32.gmra.mxu0 %v6803
      %v6805 = vpop.f32.mrf.mxu0
      %v6806 = vadd.f32 %v6589, %v6805
      %v6807 = vand.u32 %v5695, 4294901760
      %6808 = vmatmul.f32.gmra.mxu0 %v6807
      %v6809 = vpop.f32.mrf.mxu0
      %v6810 = vadd.f32 %v6595, %v6809
      %v6811 = vand.u32 %v5698, 4294901760
      %6812 = vmatmul.f32.gmra.mxu0 %v6811
      %v6813 = vpop.f32.mrf.mxu0
      %v6814 = vadd.f32 %v6601, %v6813
      %v6815 = vand.u32 %v5701, 4294901760
      %6816 = vmatmul.f32.gmra.mxu0 %v6815
      %v6817 = vpop.f32.mrf.mxu0
      %v6818 = vadd.f32 %v6607, %v6817
      %v6819 = vand.u32 %v5704, 4294901760
      %6820 = vmatmul.f32.gmra.mxu0 %v6819
      %v6821 = vpop.f32.mrf.mxu0
      %v6822 = vadd.f32 %v6613, %v6821
      %v6823 = vand.u32 %v5707, 4294901760
      %6824 = vmatmul.f32.gmra.mxu0 %v6823
      %v6825 = vpop.f32.mrf.mxu0
      %v6826 = vadd.f32 %v6619, %v6825
      %v6827 = vand.u32 %v5710, 4294901760
      %6828 = vmatmul.f32.gmra.mxu0 %v6827
      %v6829 = vpop.f32.mrf.mxu0
      %v6830 = vadd.f32 %v6625, %v6829
      %v6831 = vand.u32 %v5713, 4294901760
      %6832 = vmatmul.f32.gmra.mxu0 %v6831
      %v6833 = vpop.f32.mrf.mxu0
      %v6834 = vadd.f32 %v6631, %v6833
      %v6835 = vand.u32 %v5716, 4294901760
      %6836 = vmatmul.f32.gmra.mxu0 %v6835
      %v6837 = vpop.f32.mrf.mxu0
      %v6838 = vadd.f32 %v6637, %v6837
      %v6839 = vand.u32 %v5719, 4294901760
      %6840 = vmatmul.f32.gmra.mxu0 %v6839
      %v6841 = vpop.f32.mrf.mxu0
      %v6842 = vadd.f32 %v6643, %v6841
      %v6843 = vand.u32 %v5722, 4294901760
      %6844 = vmatmul.f32.gmra.mxu0 %v6843
      %v6845 = vpop.f32.mrf.mxu0
      %v6846 = vadd.f32 %v6649, %v6845
      %v6847 = vand.u32 %v5725, 4294901760
      %6848 = vmatmul.f32.gmra.mxu0 %v6847
      %v6849 = vpop.f32.mrf.mxu0
      %v6850 = vadd.f32 %v6655, %v6849
      %v6851 = vand.u32 %v5728, 4294901760
      %6852 = vmatmul.f32.gmra.mxu0 %v6851
      %v6853 = vpop.f32.mrf.mxu0
      %v6854 = vadd.f32 %v6661, %v6853
      %v6855 = vand.u32 %v5731, 4294901760
      %6856 = vmatmul.f32.gmra.mxu0 %v6855
      %v6857 = vpop.f32.mrf.mxu0
      %v6858 = vadd.f32 %v6667, %v6857
      %v6859 = vand.u32 %v5734, 4294901760
      %6860 = vmatmul.f32.gmra.mxu0 %v6859
      %v6861 = vpop.f32.mrf.mxu0
      %v6862 = vadd.f32 %v6673, %v6861
      %v6863 = vand.u32 %v5737, 4294901760
      %6864 = vmatmul.f32.gmra.mxu0 %v6863
      %v6865 = vpop.f32.mrf.mxu0
      %v6866 = vadd.f32 %v6679, %v6865
      %v6867 = vand.u32 %v5740, 4294901760
      %6868 = vmatmul.f32.gmra.mxu0 %v6867
      %v6869 = vpop.f32.mrf.mxu0
      %v6870 = vadd.f32 %v6685, %v6869
      %v6871 = vand.u32 %v5743, 4294901760
      %6872 = vmatmul.f32.gmra.mxu0 %v6871
      %v6873 = vpop.f32.mrf.mxu0
      %v6874 = vadd.f32 %v6691, %v6873
      %v6875 = vand.u32 %v5746, 4294901760
      %6876 = vmatmul.f32.gmra.mxu0 %v6875
      %v6877 = vpop.f32.mrf.mxu0
      %v6878 = vadd.f32 %v6697, %v6877
      %v6879 = vand.u32 %v5749, 4294901760
      %6880 = vmatmul.f32.gmra.mxu0 %v6879
      %v6881 = vpop.f32.mrf.mxu0
      %v6882 = vadd.f32 %v6703, %v6881
      %v6883 = vand.u32 %v5752, 4294901760
      %6884 = vmatmul.f32.gmra.mxu0 %v6883
      %v6885 = vpop.f32.mrf.mxu0
      %v6886 = vadd.f32 %v6709, %v6885
      %v6887 = vand.u32 %v5755, 4294901760
      %6888 = vmatmul.f32.gmra.mxu0 %v6887
      %v6889 = vpop.f32.mrf.mxu0
      %v6890 = vadd.f32 %v6715, %v6889
      %6891 = vdwg.mxu0
      %6892 = vmatpush.msra.mxu0 0.0
      %6893 = vmatpush.msra.mxu0 0.0
      %6894 = vmatpush.msra.mxu0 0.0
      %6895 = vmatpush.msra.mxu0 0.0
      %6896 = vmatpush.msra.mxu0 0.0
      %6897 = vmatpush.msra.mxu0 0.0
      %6898 = vmatpush.msra.mxu0 0.0
      %6899 = vmatpush.msra.mxu0 0.0
      %6900 = vmatpush.msra.mxu0 0.0
      %6901 = vmatpush.msra.mxu0 0.0
      %6902 = vmatpush.msra.mxu0 0.0
      %6903 = vmatpush.msra.mxu0 0.0
      %6904 = vmatpush.msra.mxu0 0.0
      %6905 = vmatpush.msra.mxu0 0.0
      %v6906 = vand.u32 %v5637, 4294901760
      %6907 = vmatpush.msra.mxu0 %v6906
      %v6908 = vand.u32 %v5636, 4294901760
      %6909 = vmatpush.msra.mxu0 %v6908
      %v6910 = vand.u32 %v5644, 4294901760
      %6911 = vmatmul.f32.gmra.mxu0 %v6910
      %v6912 = vpop.f32.mrf.mxu0
      %v6913 = vadd.f32 %v6742, %v6912
      %v6914 = vand.u32 %v5647, 4294901760
      %6915 = vmatmul.f32.gmra.mxu0 %v6914
      %v6916 = vpop.f32.mrf.mxu0
      %v6917 = vadd.f32 %v6746, %v6916
      %v6918 = vand.u32 %v5650, 4294901760
      %6919 = vmatmul.f32.gmra.mxu0 %v6918
      %v6920 = vpop.f32.mrf.mxu0
      %v6921 = vadd.f32 %v6750, %v6920
      %v6922 = vand.u32 %v5653, 4294901760
      %6923 = vmatmul.f32.gmra.mxu0 %v6922
      %v6924 = vpop.f32.mrf.mxu0
      %v6925 = vadd.f32 %v6754, %v6924
      %v6926 = vand.u32 %v5656, 4294901760
      %6927 = vmatmul.f32.gmra.mxu0 %v6926
      %v6928 = vpop.f32.mrf.mxu0
      %v6929 = vadd.f32 %v6758, %v6928
      %v6930 = vand.u32 %v5659, 4294901760
      %6931 = vmatmul.f32.gmra.mxu0 %v6930
      %v6932 = vpop.f32.mrf.mxu0
      %v6933 = vadd.f32 %v6762, %v6932
      %v6934 = vand.u32 %v5662, 4294901760
      %6935 = vmatmul.f32.gmra.mxu0 %v6934
      %v6936 = vpop.f32.mrf.mxu0
      %v6937 = vadd.f32 %v6766, %v6936
      %v6938 = vand.u32 %v5665, 4294901760
      %6939 = vmatmul.f32.gmra.mxu0 %v6938
      %v6940 = vpop.f32.mrf.mxu0
      %v6941 = vadd.f32 %v6770, %v6940
      %v6942 = vand.u32 %v5668, 4294901760
      %6943 = vmatmul.f32.gmra.mxu0 %v6942
      %v6944 = vpop.f32.mrf.mxu0
      %v6945 = vadd.f32 %v6774, %v6944
      %v6946 = vand.u32 %v5671, 4294901760
      %6947 = vmatmul.f32.gmra.mxu0 %v6946
      %v6948 = vpop.f32.mrf.mxu0
      %v6949 = vadd.f32 %v6778, %v6948
      %v6950 = vand.u32 %v5674, 4294901760
      %6951 = vmatmul.f32.gmra.mxu0 %v6950
      %v6952 = vpop.f32.mrf.mxu0
      %v6953 = vadd.f32 %v6782, %v6952
      %v6954 = vand.u32 %v5677, 4294901760
      %6955 = vmatmul.f32.gmra.mxu0 %v6954
      %v6956 = vpop.f32.mrf.mxu0
      %v6957 = vadd.f32 %v6786, %v6956
      %v6958 = vand.u32 %v5680, 4294901760
      %6959 = vmatmul.f32.gmra.mxu0 %v6958
      %v6960 = vpop.f32.mrf.mxu0
      %v6961 = vadd.f32 %v6790, %v6960
      %v6962 = vand.u32 %v5683, 4294901760
      %6963 = vmatmul.f32.gmra.mxu0 %v6962
      %v6964 = vpop.f32.mrf.mxu0
      %v6965 = vadd.f32 %v6794, %v6964
      %v6966 = vand.u32 %v5686, 4294901760
      %6967 = vmatmul.f32.gmra.mxu0 %v6966
      %v6968 = vpop.f32.mrf.mxu0
      %v6969 = vadd.f32 %v6798, %v6968
      %v6970 = vand.u32 %v5689, 4294901760
      %6971 = vmatmul.f32.gmra.mxu0 %v6970
      %v6972 = vpop.f32.mrf.mxu0
      %v6973 = vadd.f32 %v6802, %v6972
      %v6974 = vand.u32 %v5692, 4294901760
      %6975 = vmatmul.f32.gmra.mxu0 %v6974
      %v6976 = vpop.f32.mrf.mxu0
      %v6977 = vadd.f32 %v6806, %v6976
      %v6978 = vand.u32 %v5695, 4294901760
      %6979 = vmatmul.f32.gmra.mxu0 %v6978
      %v6980 = vpop.f32.mrf.mxu0
      %v6981 = vadd.f32 %v6810, %v6980
      %v6982 = vand.u32 %v5698, 4294901760
      %6983 = vmatmul.f32.gmra.mxu0 %v6982
      %v6984 = vpop.f32.mrf.mxu0
      %v6985 = vadd.f32 %v6814, %v6984
      %v6986 = vand.u32 %v5701, 4294901760
      %6987 = vmatmul.f32.gmra.mxu0 %v6986
      %v6988 = vpop.f32.mrf.mxu0
      %v6989 = vadd.f32 %v6818, %v6988
      %v6990 = vand.u32 %v5704, 4294901760
      %6991 = vmatmul.f32.gmra.mxu0 %v6990
      %v6992 = vpop.f32.mrf.mxu0
      %v6993 = vadd.f32 %v6822, %v6992
      %v6994 = vand.u32 %v5707, 4294901760
      %6995 = vmatmul.f32.gmra.mxu0 %v6994
      %v6996 = vpop.f32.mrf.mxu0
      %v6997 = vadd.f32 %v6826, %v6996
      %v6998 = vand.u32 %v5710, 4294901760
      %6999 = vmatmul.f32.gmra.mxu0 %v6998
      %v7000 = vpop.f32.mrf.mxu0
      %v7001 = vadd.f32 %v6830, %v7000
      %v7002 = vand.u32 %v5713, 4294901760
      %7003 = vmatmul.f32.gmra.mxu0 %v7002
      %v7004 = vpop.f32.mrf.mxu0
      %v7005 = vadd.f32 %v6834, %v7004
      %v7006 = vand.u32 %v5716, 4294901760
      %7007 = vmatmul.f32.gmra.mxu0 %v7006
      %v7008 = vpop.f32.mrf.mxu0
      %v7009 = vadd.f32 %v6838, %v7008
      %v7010 = vand.u32 %v5719, 4294901760
      %7011 = vmatmul.f32.gmra.mxu0 %v7010
      %v7012 = vpop.f32.mrf.mxu0
      %v7013 = vadd.f32 %v6842, %v7012
      %v7014 = vand.u32 %v5722, 4294901760
      %7015 = vmatmul.f32.gmra.mxu0 %v7014
      %v7016 = vpop.f32.mrf.mxu0
      %v7017 = vadd.f32 %v6846, %v7016
      %v7018 = vand.u32 %v5725, 4294901760
      %7019 = vmatmul.f32.gmra.mxu0 %v7018
      %v7020 = vpop.f32.mrf.mxu0
      %v7021 = vadd.f32 %v6850, %v7020
      %v7022 = vand.u32 %v5728, 4294901760
      %7023 = vmatmul.f32.gmra.mxu0 %v7022
      %v7024 = vpop.f32.mrf.mxu0
      %v7025 = vadd.f32 %v6854, %v7024
      %v7026 = vand.u32 %v5731, 4294901760
      %7027 = vmatmul.f32.gmra.mxu0 %v7026
      %v7028 = vpop.f32.mrf.mxu0
      %v7029 = vadd.f32 %v6858, %v7028
      %v7030 = vand.u32 %v5734, 4294901760
      %7031 = vmatmul.f32.gmra.mxu0 %v7030
      %v7032 = vpop.f32.mrf.mxu0
      %v7033 = vadd.f32 %v6862, %v7032
      %v7034 = vand.u32 %v5737, 4294901760
      %7035 = vmatmul.f32.gmra.mxu0 %v7034
      %v7036 = vpop.f32.mrf.mxu0
      %v7037 = vadd.f32 %v6866, %v7036
      %v7038 = vand.u32 %v5740, 4294901760
      %7039 = vmatmul.f32.gmra.mxu0 %v7038
      %v7040 = vpop.f32.mrf.mxu0
      %v7041 = vadd.f32 %v6870, %v7040
      %v7042 = vand.u32 %v5743, 4294901760
      %7043 = vmatmul.f32.gmra.mxu0 %v7042
      %v7044 = vpop.f32.mrf.mxu0
      %v7045 = vadd.f32 %v6874, %v7044
      %v7046 = vand.u32 %v5746, 4294901760
      %7047 = vmatmul.f32.gmra.mxu0 %v7046
      %v7048 = vpop.f32.mrf.mxu0
      %v7049 = vadd.f32 %v6878, %v7048
      %v7050 = vand.u32 %v5749, 4294901760
      %7051 = vmatmul.f32.gmra.mxu0 %v7050
      %v7052 = vpop.f32.mrf.mxu0
      %v7053 = vadd.f32 %v6882, %v7052
      %v7054 = vand.u32 %v5752, 4294901760
      %7055 = vmatmul.f32.gmra.mxu0 %v7054
      %v7056 = vpop.f32.mrf.mxu0
      %v7057 = vadd.f32 %v6886, %v7056
      %v7058 = vand.u32 %v5755, 4294901760
      %7059 = vmatmul.f32.gmra.mxu0 %v7058
      %v7060 = vpop.f32.mrf.mxu0
      %v7061 = vadd.f32 %v6890, %v7060
      %7062 = vdwg.mxu0
      %v7063 = vxor.u32 %v6913, 2147483648
      %v7064 = vxor.u32 %v6917, 2147483648
      %v7065 = vxor.u32 %v6921, 2147483648
      %v7066 = vxor.u32 %v6925, 2147483648
      %v7067 = vxor.u32 %v6929, 2147483648
      %v7068 = vxor.u32 %v6933, 2147483648
      %v7069 = vxor.u32 %v6937, 2147483648
      %v7070 = vxor.u32 %v6941, 2147483648
      %v7071 = vxor.u32 %v6945, 2147483648
      %v7072 = vxor.u32 %v6949, 2147483648
      %v7073 = vxor.u32 %v6953, 2147483648
      %v7074 = vxor.u32 %v6957, 2147483648
      %v7075 = vxor.u32 %v6961, 2147483648
      %v7076 = vxor.u32 %v6965, 2147483648
      %v7077 = vxor.u32 %v6969, 2147483648
      %v7078 = vxor.u32 %v6973, 2147483648
      %v7079 = vxor.u32 %v6977, 2147483648
      %v7080 = vxor.u32 %v6981, 2147483648
      %v7081 = vxor.u32 %v6985, 2147483648
      %v7082 = vxor.u32 %v6989, 2147483648
      %v7083 = vxor.u32 %v6993, 2147483648
      %v7084 = vxor.u32 %v6997, 2147483648
      %v7085 = vxor.u32 %v7001, 2147483648
      %v7086 = vxor.u32 %v7005, 2147483648
      %v7087 = vxor.u32 %v7009, 2147483648
      %v7088 = vxor.u32 %v7013, 2147483648
      %v7089 = vxor.u32 %v7017, 2147483648
      %v7090 = vxor.u32 %v7021, 2147483648
      %v7091 = vxor.u32 %v7025, 2147483648
      %v7092 = vxor.u32 %v7029, 2147483648
      %v7093 = vxor.u32 %v7033, 2147483648
      %v7094 = vxor.u32 %v7037, 2147483648
      %v7095 = vxor.u32 %v7041, 2147483648
      %v7096 = vxor.u32 %v7045, 2147483648
      %v7097 = vxor.u32 %v7049, 2147483648
      %v7098 = vxor.u32 %v7053, 2147483648
      %v7099 = vxor.u32 %v7057, 2147483648
      %v7100 = vxor.u32 %v7061, 2147483648
      %v7101 = vmul.f32 %v7063, 1.442695
      %v7102 = vpow.pop %v7101
      %v7103 = vmul.f32 %v7064, 1.442695
      %v7104 = vpow.pop %v7103
      %v7105 = vmul.f32 %v7065, 1.442695
      %v7106 = vpow.pop %v7105
      %v7107 = vmul.f32 %v7066, 1.442695
      %v7108 = vpow.pop %v7107
      %v7109 = vmul.f32 %v7067, 1.442695
      %v7110 = vpow.pop %v7109
      %v7111 = vmul.f32 %v7068, 1.442695
      %v7112 = vpow.pop %v7111
      %v7113 = vmul.f32 %v7069, 1.442695
      %v7114 = vpow.pop %v7113
      %v7115 = vmul.f32 %v7070, 1.442695
      %v7116 = vpow.pop %v7115
      %v7117 = vmul.f32 %v7071, 1.442695
      %v7118 = vpow.pop %v7117
      %v7119 = vmul.f32 %v7072, 1.442695
      %v7120 = vpow.pop %v7119
      %v7121 = vmul.f32 %v7073, 1.442695
      %v7122 = vpow.pop %v7121
      %v7123 = vmul.f32 %v7074, 1.442695
      %v7124 = vpow.pop %v7123
      %v7125 = vmul.f32 %v7075, 1.442695
      %v7126 = vpow.pop %v7125
      %v7127 = vmul.f32 %v7076, 1.442695
      %v7128 = vpow.pop %v7127
      %v7129 = vmul.f32 %v7077, 1.442695
      %v7130 = vpow.pop %v7129
      %v7131 = vmul.f32 %v7078, 1.442695
      %v7132 = vpow.pop %v7131
      %v7133 = vmul.f32 %v7079, 1.442695
      %v7134 = vpow.pop %v7133
      %v7135 = vmul.f32 %v7080, 1.442695
      %v7136 = vpow.pop %v7135
      %v7137 = vmul.f32 %v7081, 1.442695
      %v7138 = vpow.pop %v7137
      %v7139 = vmul.f32 %v7082, 1.442695
      %v7140 = vpow.pop %v7139
      %v7141 = vmul.f32 %v7083, 1.442695
      %v7142 = vpow.pop %v7141
      %v7143 = vmul.f32 %v7084, 1.442695
      %v7144 = vpow.pop %v7143
      %v7145 = vmul.f32 %v7085, 1.442695
      %v7146 = vpow.pop %v7145
      %v7147 = vmul.f32 %v7086, 1.442695
      %v7148 = vpow.pop %v7147
      %v7149 = vmul.f32 %v7087, 1.442695
      %v7150 = vpow.pop %v7149
      %v7151 = vmul.f32 %v7088, 1.442695
      %v7152 = vpow.pop %v7151
      %v7153 = vmul.f32 %v7089, 1.442695
      %v7154 = vpow.pop %v7153
      %v7155 = vmul.f32 %v7090, 1.442695
      %v7156 = vpow.pop %v7155
      %v7157 = vmul.f32 %v7091, 1.442695
      %v7158 = vpow.pop %v7157
      %v7159 = vmul.f32 %v7092, 1.442695
      %v7160 = vpow.pop %v7159
      %v7161 = vmul.f32 %v7093, 1.442695
      %v7162 = vpow.pop %v7161
      %v7163 = vmul.f32 %v7094, 1.442695
      %v7164 = vpow.pop %v7163
      %v7165 = vmul.f32 %v7095, 1.442695
      %v7166 = vpow.pop %v7165
      %v7167 = vmul.f32 %v7096, 1.442695
      %v7168 = vpow.pop %v7167
      %v7169 = vmul.f32 %v7097, 1.442695
      %v7170 = vpow.pop %v7169
      %v7171 = vmul.f32 %v7098, 1.442695
      %v7172 = vpow.pop %v7171
      %v7173 = vmul.f32 %v7099, 1.442695
      %v7174 = vpow.pop %v7173
      %v7175 = vmul.f32 %v7100, 1.442695
      %v7176 = vpow.pop %v7175
      %v7177 = vadd.f32 %v7102, 1.0
      %v7178 = vadd.f32 %v7104, 1.0
      %v7179 = vadd.f32 %v7106, 1.0
      %v7180 = vadd.f32 %v7108, 1.0
      %v7181 = vadd.f32 %v7110, 1.0
      %v7182 = vadd.f32 %v7112, 1.0
      %v7183 = vadd.f32 %v7114, 1.0
      %v7184 = vadd.f32 %v7116, 1.0
      %v7185 = vadd.f32 %v7118, 1.0
      %v7186 = vadd.f32 %v7120, 1.0
      %v7187 = vadd.f32 %v7122, 1.0
      %v7188 = vadd.f32 %v7124, 1.0
      %v7189 = vadd.f32 %v7126, 1.0
      %v7190 = vadd.f32 %v7128, 1.0
      %v7191 = vadd.f32 %v7130, 1.0
      %v7192 = vadd.f32 %v7132, 1.0
      %v7193 = vadd.f32 %v7134, 1.0
      %v7194 = vadd.f32 %v7136, 1.0
      %v7195 = vadd.f32 %v7138, 1.0
      %v7196 = vadd.f32 %v7140, 1.0
      %v7197 = vadd.f32 %v7142, 1.0
      %v7198 = vadd.f32 %v7144, 1.0
      %v7199 = vadd.f32 %v7146, 1.0
      %v7200 = vadd.f32 %v7148, 1.0
      %v7201 = vadd.f32 %v7150, 1.0
      %v7202 = vadd.f32 %v7152, 1.0
      %v7203 = vadd.f32 %v7154, 1.0
      %v7204 = vadd.f32 %v7156, 1.0
      %v7205 = vadd.f32 %v7158, 1.0
      %v7206 = vadd.f32 %v7160, 1.0
      %v7207 = vadd.f32 %v7162, 1.0
      %v7208 = vadd.f32 %v7164, 1.0
      %v7209 = vadd.f32 %v7166, 1.0
      %v7210 = vadd.f32 %v7168, 1.0
      %v7211 = vadd.f32 %v7170, 1.0
      %v7212 = vadd.f32 %v7172, 1.0
      %v7213 = vadd.f32 %v7174, 1.0
      %v7214 = vadd.f32 %v7176, 1.0
      %v7215 = vrcp.pop %v7177
      %v7216 = vmul.f32 %v7177, %v7215
      %v7217 = vsub.f32 1.0, %v7216
      %v7218 = vmul.f32 %v7215, %v7217
      %v7219 = vadd.f32 %v7215, %v7218
      %vm7220 = vweird.f32 %v7177
      %vm7221 = vweird.f32 %v7215
      %vm7222 = vmor %vm7220, %vm7221
      %v7223 = vsel %vm7222, %v7215, %v7219
      %v7224 = vand.u32 2147483647, %v7177
      %vm7225 = vcmp.eq.f32.partialorder %v7224, 8.507059e+37
      %v7226 = vand.u32 %v7177, 2147483648
      %v7227 = vor.u32 1.1754944e-38, %v7226
      %v7228 = vsel %vm7225, %v7227, %v7223
      %v7229 = vmul.f32 1.0, %v7228
      %v7230 = vrcp.pop %v7178
      %v7231 = vmul.f32 %v7178, %v7230
      %v7232 = vsub.f32 1.0, %v7231
      %v7233 = vmul.f32 %v7230, %v7232
      %v7234 = vadd.f32 %v7230, %v7233
      %vm7235 = vweird.f32 %v7178
      %vm7236 = vweird.f32 %v7230
      %vm7237 = vmor %vm7235, %vm7236
      %v7238 = vsel %vm7237, %v7230, %v7234
      %v7239 = vand.u32 2147483647, %v7178
      %vm7240 = vcmp.eq.f32.partialorder %v7239, 8.507059e+37
      %v7241 = vand.u32 %v7178, 2147483648
      %v7242 = vor.u32 1.1754944e-38, %v7241
      %v7243 = vsel %vm7240, %v7242, %v7238
      %v7244 = vmul.f32 1.0, %v7243
      %v7245 = vrcp.pop %v7179
      %v7246 = vmul.f32 %v7179, %v7245
      %v7247 = vsub.f32 1.0, %v7246
      %v7248 = vmul.f32 %v7245, %v7247
      %v7249 = vadd.f32 %v7245, %v7248
      %vm7250 = vweird.f32 %v7179
      %vm7251 = vweird.f32 %v7245
      %vm7252 = vmor %vm7250, %vm7251
      %v7253 = vsel %vm7252, %v7245, %v7249
      %v7254 = vand.u32 2147483647, %v7179
      %vm7255 = vcmp.eq.f32.partialorder %v7254, 8.507059e+37
      %v7256 = vand.u32 %v7179, 2147483648
      %v7257 = vor.u32 1.1754944e-38, %v7256
      %v7258 = vsel %vm7255, %v7257, %v7253
      %v7259 = vmul.f32 1.0, %v7258
      %v7260 = vrcp.pop %v7180
      %v7261 = vmul.f32 %v7180, %v7260
      %v7262 = vsub.f32 1.0, %v7261
      %v7263 = vmul.f32 %v7260, %v7262
      %v7264 = vadd.f32 %v7260, %v7263
      %vm7265 = vweird.f32 %v7180
      %vm7266 = vweird.f32 %v7260
      %vm7267 = vmor %vm7265, %vm7266
      %v7268 = vsel %vm7267, %v7260, %v7264
      %v7269 = vand.u32 2147483647, %v7180
      %vm7270 = vcmp.eq.f32.partialorder %v7269, 8.507059e+37
      %v7271 = vand.u32 %v7180, 2147483648
      %v7272 = vor.u32 1.1754944e-38, %v7271
      %v7273 = vsel %vm7270, %v7272, %v7268
      %v7274 = vmul.f32 1.0, %v7273
      %v7275 = vrcp.pop %v7181
      %v7276 = vmul.f32 %v7181, %v7275
      %v7277 = vsub.f32 1.0, %v7276
      %v7278 = vmul.f32 %v7275, %v7277
      %v7279 = vadd.f32 %v7275, %v7278
      %vm7280 = vweird.f32 %v7181
      %vm7281 = vweird.f32 %v7275
      %vm7282 = vmor %vm7280, %vm7281
      %v7283 = vsel %vm7282, %v7275, %v7279
      %v7284 = vand.u32 2147483647, %v7181
      %vm7285 = vcmp.eq.f32.partialorder %v7284, 8.507059e+37
      %v7286 = vand.u32 %v7181, 2147483648
      %v7287 = vor.u32 1.1754944e-38, %v7286
      %v7288 = vsel %vm7285, %v7287, %v7283
      %v7289 = vmul.f32 1.0, %v7288
      %v7290 = vrcp.pop %v7182
      %v7291 = vmul.f32 %v7182, %v7290
      %v7292 = vsub.f32 1.0, %v7291
      %v7293 = vmul.f32 %v7290, %v7292
      %v7294 = vadd.f32 %v7290, %v7293
      %vm7295 = vweird.f32 %v7182
      %vm7296 = vweird.f32 %v7290
      %vm7297 = vmor %vm7295, %vm7296
      %v7298 = vsel %vm7297, %v7290, %v7294
      %v7299 = vand.u32 2147483647, %v7182
      %vm7300 = vcmp.eq.f32.partialorder %v7299, 8.507059e+37
      %v7301 = vand.u32 %v7182, 2147483648
      %v7302 = vor.u32 1.1754944e-38, %v7301
      %v7303 = vsel %vm7300, %v7302, %v7298
      %v7304 = vmul.f32 1.0, %v7303
      %v7305 = vrcp.pop %v7183
      %v7306 = vmul.f32 %v7183, %v7305
      %v7307 = vsub.f32 1.0, %v7306
      %v7308 = vmul.f32 %v7305, %v7307
      %v7309 = vadd.f32 %v7305, %v7308
      %vm7310 = vweird.f32 %v7183
      %vm7311 = vweird.f32 %v7305
      %vm7312 = vmor %vm7310, %vm7311
      %v7313 = vsel %vm7312, %v7305, %v7309
      %v7314 = vand.u32 2147483647, %v7183
      %vm7315 = vcmp.eq.f32.partialorder %v7314, 8.507059e+37
      %v7316 = vand.u32 %v7183, 2147483648
      %v7317 = vor.u32 1.1754944e-38, %v7316
      %v7318 = vsel %vm7315, %v7317, %v7313
      %v7319 = vmul.f32 1.0, %v7318
      %v7320 = vrcp.pop %v7184
      %v7321 = vmul.f32 %v7184, %v7320
      %v7322 = vsub.f32 1.0, %v7321
      %v7323 = vmul.f32 %v7320, %v7322
      %v7324 = vadd.f32 %v7320, %v7323
      %vm7325 = vweird.f32 %v7184
      %vm7326 = vweird.f32 %v7320
      %vm7327 = vmor %vm7325, %vm7326
      %v7328 = vsel %vm7327, %v7320, %v7324
      %v7329 = vand.u32 2147483647, %v7184
      %vm7330 = vcmp.eq.f32.partialorder %v7329, 8.507059e+37
      %v7331 = vand.u32 %v7184, 2147483648
      %v7332 = vor.u32 1.1754944e-38, %v7331
      %v7333 = vsel %vm7330, %v7332, %v7328
      %v7334 = vmul.f32 1.0, %v7333
      %v7335 = vrcp.pop %v7185
      %v7336 = vmul.f32 %v7185, %v7335
      %v7337 = vsub.f32 1.0, %v7336
      %v7338 = vmul.f32 %v7335, %v7337
      %v7339 = vadd.f32 %v7335, %v7338
      %vm7340 = vweird.f32 %v7185
      %vm7341 = vweird.f32 %v7335
      %vm7342 = vmor %vm7340, %vm7341
      %v7343 = vsel %vm7342, %v7335, %v7339
      %v7344 = vand.u32 2147483647, %v7185
      %vm7345 = vcmp.eq.f32.partialorder %v7344, 8.507059e+37
      %v7346 = vand.u32 %v7185, 2147483648
      %v7347 = vor.u32 1.1754944e-38, %v7346
      %v7348 = vsel %vm7345, %v7347, %v7343
      %v7349 = vmul.f32 1.0, %v7348
      %v7350 = vrcp.pop %v7186
      %v7351 = vmul.f32 %v7186, %v7350
      %v7352 = vsub.f32 1.0, %v7351
      %v7353 = vmul.f32 %v7350, %v7352
      %v7354 = vadd.f32 %v7350, %v7353
      %vm7355 = vweird.f32 %v7186
      %vm7356 = vweird.f32 %v7350
      %vm7357 = vmor %vm7355, %vm7356
      %v7358 = vsel %vm7357, %v7350, %v7354
      %v7359 = vand.u32 2147483647, %v7186
      %vm7360 = vcmp.eq.f32.partialorder %v7359, 8.507059e+37
      %v7361 = vand.u32 %v7186, 2147483648
      %v7362 = vor.u32 1.1754944e-38, %v7361
      %v7363 = vsel %vm7360, %v7362, %v7358
      %v7364 = vmul.f32 1.0, %v7363
      %v7365 = vrcp.pop %v7187
      %v7366 = vmul.f32 %v7187, %v7365
      %v7367 = vsub.f32 1.0, %v7366
      %v7368 = vmul.f32 %v7365, %v7367
      %v7369 = vadd.f32 %v7365, %v7368
      %vm7370 = vweird.f32 %v7187
      %vm7371 = vweird.f32 %v7365
      %vm7372 = vmor %vm7370, %vm7371
      %v7373 = vsel %vm7372, %v7365, %v7369
      %v7374 = vand.u32 2147483647, %v7187
      %vm7375 = vcmp.eq.f32.partialorder %v7374, 8.507059e+37
      %v7376 = vand.u32 %v7187, 2147483648
      %v7377 = vor.u32 1.1754944e-38, %v7376
      %v7378 = vsel %vm7375, %v7377, %v7373
      %v7379 = vmul.f32 1.0, %v7378
      %v7380 = vrcp.pop %v7188
      %v7381 = vmul.f32 %v7188, %v7380
      %v7382 = vsub.f32 1.0, %v7381
      %v7383 = vmul.f32 %v7380, %v7382
      %v7384 = vadd.f32 %v7380, %v7383
      %vm7385 = vweird.f32 %v7188
      %vm7386 = vweird.f32 %v7380
      %vm7387 = vmor %vm7385, %vm7386
      %v7388 = vsel %vm7387, %v7380, %v7384
      %v7389 = vand.u32 2147483647, %v7188
      %vm7390 = vcmp.eq.f32.partialorder %v7389, 8.507059e+37
      %v7391 = vand.u32 %v7188, 2147483648
      %v7392 = vor.u32 1.1754944e-38, %v7391
      %v7393 = vsel %vm7390, %v7392, %v7388
      %v7394 = vmul.f32 1.0, %v7393
      %v7395 = vrcp.pop %v7189
      %v7396 = vmul.f32 %v7189, %v7395
      %v7397 = vsub.f32 1.0, %v7396
      %v7398 = vmul.f32 %v7395, %v7397
      %v7399 = vadd.f32 %v7395, %v7398
      %vm7400 = vweird.f32 %v7189
      %vm7401 = vweird.f32 %v7395
      %vm7402 = vmor %vm7400, %vm7401
      %v7403 = vsel %vm7402, %v7395, %v7399
      %v7404 = vand.u32 2147483647, %v7189
      %vm7405 = vcmp.eq.f32.partialorder %v7404, 8.507059e+37
      %v7406 = vand.u32 %v7189, 2147483648
      %v7407 = vor.u32 1.1754944e-38, %v7406
      %v7408 = vsel %vm7405, %v7407, %v7403
      %v7409 = vmul.f32 1.0, %v7408
      %v7410 = vrcp.pop %v7190
      %v7411 = vmul.f32 %v7190, %v7410
      %v7412 = vsub.f32 1.0, %v7411
      %v7413 = vmul.f32 %v7410, %v7412
      %v7414 = vadd.f32 %v7410, %v7413
      %vm7415 = vweird.f32 %v7190
      %vm7416 = vweird.f32 %v7410
      %vm7417 = vmor %vm7415, %vm7416
      %v7418 = vsel %vm7417, %v7410, %v7414
      %v7419 = vand.u32 2147483647, %v7190
      %vm7420 = vcmp.eq.f32.partialorder %v7419, 8.507059e+37
      %v7421 = vand.u32 %v7190, 2147483648
      %v7422 = vor.u32 1.1754944e-38, %v7421
      %v7423 = vsel %vm7420, %v7422, %v7418
      %v7424 = vmul.f32 1.0, %v7423
      %v7425 = vrcp.pop %v7191
      %v7426 = vmul.f32 %v7191, %v7425
      %v7427 = vsub.f32 1.0, %v7426
      %v7428 = vmul.f32 %v7425, %v7427
      %v7429 = vadd.f32 %v7425, %v7428
      %vm7430 = vweird.f32 %v7191
      %vm7431 = vweird.f32 %v7425
      %vm7432 = vmor %vm7430, %vm7431
      %v7433 = vsel %vm7432, %v7425, %v7429
      %v7434 = vand.u32 2147483647, %v7191
      %vm7435 = vcmp.eq.f32.partialorder %v7434, 8.507059e+37
      %v7436 = vand.u32 %v7191, 2147483648
      %v7437 = vor.u32 1.1754944e-38, %v7436
      %v7438 = vsel %vm7435, %v7437, %v7433
      %v7439 = vmul.f32 1.0, %v7438
      %v7440 = vrcp.pop %v7192
      %v7441 = vmul.f32 %v7192, %v7440
      %v7442 = vsub.f32 1.0, %v7441
      %v7443 = vmul.f32 %v7440, %v7442
      %v7444 = vadd.f32 %v7440, %v7443
      %vm7445 = vweird.f32 %v7192
      %vm7446 = vweird.f32 %v7440
      %vm7447 = vmor %vm7445, %vm7446
      %v7448 = vsel %vm7447, %v7440, %v7444
      %v7449 = vand.u32 2147483647, %v7192
      %vm7450 = vcmp.eq.f32.partialorder %v7449, 8.507059e+37
      %v7451 = vand.u32 %v7192, 2147483648
      %v7452 = vor.u32 1.1754944e-38, %v7451
      %v7453 = vsel %vm7450, %v7452, %v7448
      %v7454 = vmul.f32 1.0, %v7453
      %v7455 = vrcp.pop %v7193
      %v7456 = vmul.f32 %v7193, %v7455
      %v7457 = vsub.f32 1.0, %v7456
      %v7458 = vmul.f32 %v7455, %v7457
      %v7459 = vadd.f32 %v7455, %v7458
      %vm7460 = vweird.f32 %v7193
      %vm7461 = vweird.f32 %v7455
      %vm7462 = vmor %vm7460, %vm7461
      %v7463 = vsel %vm7462, %v7455, %v7459
      %v7464 = vand.u32 2147483647, %v7193
      %vm7465 = vcmp.eq.f32.partialorder %v7464, 8.507059e+37
      %v7466 = vand.u32 %v7193, 2147483648
      %v7467 = vor.u32 1.1754944e-38, %v7466
      %v7468 = vsel %vm7465, %v7467, %v7463
      %v7469 = vmul.f32 1.0, %v7468
      %v7470 = vrcp.pop %v7194
      %v7471 = vmul.f32 %v7194, %v7470
      %v7472 = vsub.f32 1.0, %v7471
      %v7473 = vmul.f32 %v7470, %v7472
      %v7474 = vadd.f32 %v7470, %v7473
      %vm7475 = vweird.f32 %v7194
      %vm7476 = vweird.f32 %v7470
      %vm7477 = vmor %vm7475, %vm7476
      %v7478 = vsel %vm7477, %v7470, %v7474
      %v7479 = vand.u32 2147483647, %v7194
      %vm7480 = vcmp.eq.f32.partialorder %v7479, 8.507059e+37
      %v7481 = vand.u32 %v7194, 2147483648
      %v7482 = vor.u32 1.1754944e-38, %v7481
      %v7483 = vsel %vm7480, %v7482, %v7478
      %v7484 = vmul.f32 1.0, %v7483
      %v7485 = vrcp.pop %v7195
      %v7486 = vmul.f32 %v7195, %v7485
      %v7487 = vsub.f32 1.0, %v7486
      %v7488 = vmul.f32 %v7485, %v7487
      %v7489 = vadd.f32 %v7485, %v7488
      %vm7490 = vweird.f32 %v7195
      %vm7491 = vweird.f32 %v7485
      %vm7492 = vmor %vm7490, %vm7491
      %v7493 = vsel %vm7492, %v7485, %v7489
      %v7494 = vand.u32 2147483647, %v7195
      %vm7495 = vcmp.eq.f32.partialorder %v7494, 8.507059e+37
      %v7496 = vand.u32 %v7195, 2147483648
      %v7497 = vor.u32 1.1754944e-38, %v7496
      %v7498 = vsel %vm7495, %v7497, %v7493
      %v7499 = vmul.f32 1.0, %v7498
      %v7500 = vrcp.pop %v7196
      %v7501 = vmul.f32 %v7196, %v7500
      %v7502 = vsub.f32 1.0, %v7501
      %v7503 = vmul.f32 %v7500, %v7502
      %v7504 = vadd.f32 %v7500, %v7503
      %vm7505 = vweird.f32 %v7196
      %vm7506 = vweird.f32 %v7500
      %vm7507 = vmor %vm7505, %vm7506
      %v7508 = vsel %vm7507, %v7500, %v7504
      %v7509 = vand.u32 2147483647, %v7196
      %vm7510 = vcmp.eq.f32.partialorder %v7509, 8.507059e+37
      %v7511 = vand.u32 %v7196, 2147483648
      %v7512 = vor.u32 1.1754944e-38, %v7511
      %v7513 = vsel %vm7510, %v7512, %v7508
      %v7514 = vmul.f32 1.0, %v7513
      %v7515 = vrcp.pop %v7197
      %v7516 = vmul.f32 %v7197, %v7515
      %v7517 = vsub.f32 1.0, %v7516
      %v7518 = vmul.f32 %v7515, %v7517
      %v7519 = vadd.f32 %v7515, %v7518
      %vm7520 = vweird.f32 %v7197
      %vm7521 = vweird.f32 %v7515
      %vm7522 = vmor %vm7520, %vm7521
      %v7523 = vsel %vm7522, %v7515, %v7519
      %v7524 = vand.u32 2147483647, %v7197
      %vm7525 = vcmp.eq.f32.partialorder %v7524, 8.507059e+37
      %v7526 = vand.u32 %v7197, 2147483648
      %v7527 = vor.u32 1.1754944e-38, %v7526
      %v7528 = vsel %vm7525, %v7527, %v7523
      %v7529 = vmul.f32 1.0, %v7528
      %v7530 = vrcp.pop %v7198
      %v7531 = vmul.f32 %v7198, %v7530
      %v7532 = vsub.f32 1.0, %v7531
      %v7533 = vmul.f32 %v7530, %v7532
      %v7534 = vadd.f32 %v7530, %v7533
      %vm7535 = vweird.f32 %v7198
      %vm7536 = vweird.f32 %v7530
      %vm7537 = vmor %vm7535, %vm7536
      %v7538 = vsel %vm7537, %v7530, %v7534
      %v7539 = vand.u32 2147483647, %v7198
      %vm7540 = vcmp.eq.f32.partialorder %v7539, 8.507059e+37
      %v7541 = vand.u32 %v7198, 2147483648
      %v7542 = vor.u32 1.1754944e-38, %v7541
      %v7543 = vsel %vm7540, %v7542, %v7538
      %v7544 = vmul.f32 1.0, %v7543
      %v7545 = vrcp.pop %v7199
      %v7546 = vmul.f32 %v7199, %v7545
      %v7547 = vsub.f32 1.0, %v7546
      %v7548 = vmul.f32 %v7545, %v7547
      %v7549 = vadd.f32 %v7545, %v7548
      %vm7550 = vweird.f32 %v7199
      %vm7551 = vweird.f32 %v7545
      %vm7552 = vmor %vm7550, %vm7551
      %v7553 = vsel %vm7552, %v7545, %v7549
      %v7554 = vand.u32 2147483647, %v7199
      %vm7555 = vcmp.eq.f32.partialorder %v7554, 8.507059e+37
      %v7556 = vand.u32 %v7199, 2147483648
      %v7557 = vor.u32 1.1754944e-38, %v7556
      %v7558 = vsel %vm7555, %v7557, %v7553
      %v7559 = vmul.f32 1.0, %v7558
      %v7560 = vrcp.pop %v7200
      %v7561 = vmul.f32 %v7200, %v7560
      %v7562 = vsub.f32 1.0, %v7561
      %v7563 = vmul.f32 %v7560, %v7562
      %v7564 = vadd.f32 %v7560, %v7563
      %vm7565 = vweird.f32 %v7200
      %vm7566 = vweird.f32 %v7560
      %vm7567 = vmor %vm7565, %vm7566
      %v7568 = vsel %vm7567, %v7560, %v7564
      %v7569 = vand.u32 2147483647, %v7200
      %vm7570 = vcmp.eq.f32.partialorder %v7569, 8.507059e+37
      %v7571 = vand.u32 %v7200, 2147483648
      %v7572 = vor.u32 1.1754944e-38, %v7571
      %v7573 = vsel %vm7570, %v7572, %v7568
      %v7574 = vmul.f32 1.0, %v7573
      %v7575 = vrcp.pop %v7201
      %v7576 = vmul.f32 %v7201, %v7575
      %v7577 = vsub.f32 1.0, %v7576
      %v7578 = vmul.f32 %v7575, %v7577
      %v7579 = vadd.f32 %v7575, %v7578
      %vm7580 = vweird.f32 %v7201
      %vm7581 = vweird.f32 %v7575
      %vm7582 = vmor %vm7580, %vm7581
      %v7583 = vsel %vm7582, %v7575, %v7579
      %v7584 = vand.u32 2147483647, %v7201
      %vm7585 = vcmp.eq.f32.partialorder %v7584, 8.507059e+37
      %v7586 = vand.u32 %v7201, 2147483648
      %v7587 = vor.u32 1.1754944e-38, %v7586
      %v7588 = vsel %vm7585, %v7587, %v7583
      %v7589 = vmul.f32 1.0, %v7588
      %v7590 = vrcp.pop %v7202
      %v7591 = vmul.f32 %v7202, %v7590
      %v7592 = vsub.f32 1.0, %v7591
      %v7593 = vmul.f32 %v7590, %v7592
      %v7594 = vadd.f32 %v7590, %v7593
      %vm7595 = vweird.f32 %v7202
      %vm7596 = vweird.f32 %v7590
      %vm7597 = vmor %vm7595, %vm7596
      %v7598 = vsel %vm7597, %v7590, %v7594
      %v7599 = vand.u32 2147483647, %v7202
      %vm7600 = vcmp.eq.f32.partialorder %v7599, 8.507059e+37
      %v7601 = vand.u32 %v7202, 2147483648
      %v7602 = vor.u32 1.1754944e-38, %v7601
      %v7603 = vsel %vm7600, %v7602, %v7598
      %v7604 = vmul.f32 1.0, %v7603
      %v7605 = vrcp.pop %v7203
      %v7606 = vmul.f32 %v7203, %v7605
      %v7607 = vsub.f32 1.0, %v7606
      %v7608 = vmul.f32 %v7605, %v7607
      %v7609 = vadd.f32 %v7605, %v7608
      %vm7610 = vweird.f32 %v7203
      %vm7611 = vweird.f32 %v7605
      %vm7612 = vmor %vm7610, %vm7611
      %v7613 = vsel %vm7612, %v7605, %v7609
      %v7614 = vand.u32 2147483647, %v7203
      %vm7615 = vcmp.eq.f32.partialorder %v7614, 8.507059e+37
      %v7616 = vand.u32 %v7203, 2147483648
      %v7617 = vor.u32 1.1754944e-38, %v7616
      %v7618 = vsel %vm7615, %v7617, %v7613
      %v7619 = vmul.f32 1.0, %v7618
      %v7620 = vrcp.pop %v7204
      %v7621 = vmul.f32 %v7204, %v7620
      %v7622 = vsub.f32 1.0, %v7621
      %v7623 = vmul.f32 %v7620, %v7622
      %v7624 = vadd.f32 %v7620, %v7623
      %vm7625 = vweird.f32 %v7204
      %vm7626 = vweird.f32 %v7620
      %vm7627 = vmor %vm7625, %vm7626
      %v7628 = vsel %vm7627, %v7620, %v7624
      %v7629 = vand.u32 2147483647, %v7204
      %vm7630 = vcmp.eq.f32.partialorder %v7629, 8.507059e+37
      %v7631 = vand.u32 %v7204, 2147483648
      %v7632 = vor.u32 1.1754944e-38, %v7631
      %v7633 = vsel %vm7630, %v7632, %v7628
      %v7634 = vmul.f32 1.0, %v7633
      %v7635 = vrcp.pop %v7205
      %v7636 = vmul.f32 %v7205, %v7635
      %v7637 = vsub.f32 1.0, %v7636
      %v7638 = vmul.f32 %v7635, %v7637
      %v7639 = vadd.f32 %v7635, %v7638
      %vm7640 = vweird.f32 %v7205
      %vm7641 = vweird.f32 %v7635
      %vm7642 = vmor %vm7640, %vm7641
      %v7643 = vsel %vm7642, %v7635, %v7639
      %v7644 = vand.u32 2147483647, %v7205
      %vm7645 = vcmp.eq.f32.partialorder %v7644, 8.507059e+37
      %v7646 = vand.u32 %v7205, 2147483648
      %v7647 = vor.u32 1.1754944e-38, %v7646
      %v7648 = vsel %vm7645, %v7647, %v7643
      %v7649 = vmul.f32 1.0, %v7648
      %v7650 = vrcp.pop %v7206
      %v7651 = vmul.f32 %v7206, %v7650
      %v7652 = vsub.f32 1.0, %v7651
      %v7653 = vmul.f32 %v7650, %v7652
      %v7654 = vadd.f32 %v7650, %v7653
      %vm7655 = vweird.f32 %v7206
      %vm7656 = vweird.f32 %v7650
      %vm7657 = vmor %vm7655, %vm7656
      %v7658 = vsel %vm7657, %v7650, %v7654
      %v7659 = vand.u32 2147483647, %v7206
      %vm7660 = vcmp.eq.f32.partialorder %v7659, 8.507059e+37
      %v7661 = vand.u32 %v7206, 2147483648
      %v7662 = vor.u32 1.1754944e-38, %v7661
      %v7663 = vsel %vm7660, %v7662, %v7658
      %v7664 = vmul.f32 1.0, %v7663
      %v7665 = vrcp.pop %v7207
      %v7666 = vmul.f32 %v7207, %v7665
      %v7667 = vsub.f32 1.0, %v7666
      %v7668 = vmul.f32 %v7665, %v7667
      %v7669 = vadd.f32 %v7665, %v7668
      %vm7670 = vweird.f32 %v7207
      %vm7671 = vweird.f32 %v7665
      %vm7672 = vmor %vm7670, %vm7671
      %v7673 = vsel %vm7672, %v7665, %v7669
      %v7674 = vand.u32 2147483647, %v7207
      %vm7675 = vcmp.eq.f32.partialorder %v7674, 8.507059e+37
      %v7676 = vand.u32 %v7207, 2147483648
      %v7677 = vor.u32 1.1754944e-38, %v7676
      %v7678 = vsel %vm7675, %v7677, %v7673
      %v7679 = vmul.f32 1.0, %v7678
      %v7680 = vrcp.pop %v7208
      %v7681 = vmul.f32 %v7208, %v7680
      %v7682 = vsub.f32 1.0, %v7681
      %v7683 = vmul.f32 %v7680, %v7682
      %v7684 = vadd.f32 %v7680, %v7683
      %vm7685 = vweird.f32 %v7208
      %vm7686 = vweird.f32 %v7680
      %vm7687 = vmor %vm7685, %vm7686
      %v7688 = vsel %vm7687, %v7680, %v7684
      %v7689 = vand.u32 2147483647, %v7208
      %vm7690 = vcmp.eq.f32.partialorder %v7689, 8.507059e+37
      %v7691 = vand.u32 %v7208, 2147483648
      %v7692 = vor.u32 1.1754944e-38, %v7691
      %v7693 = vsel %vm7690, %v7692, %v7688
      %v7694 = vmul.f32 1.0, %v7693
      %v7695 = vrcp.pop %v7209
      %v7696 = vmul.f32 %v7209, %v7695
      %v7697 = vsub.f32 1.0, %v7696
      %v7698 = vmul.f32 %v7695, %v7697
      %v7699 = vadd.f32 %v7695, %v7698
      %vm7700 = vweird.f32 %v7209
      %vm7701 = vweird.f32 %v7695
      %vm7702 = vmor %vm7700, %vm7701
      %v7703 = vsel %vm7702, %v7695, %v7699
      %v7704 = vand.u32 2147483647, %v7209
      %vm7705 = vcmp.eq.f32.partialorder %v7704, 8.507059e+37
      %v7706 = vand.u32 %v7209, 2147483648
      %v7707 = vor.u32 1.1754944e-38, %v7706
      %v7708 = vsel %vm7705, %v7707, %v7703
      %v7709 = vmul.f32 1.0, %v7708
      %v7710 = vrcp.pop %v7210
      %v7711 = vmul.f32 %v7210, %v7710
      %v7712 = vsub.f32 1.0, %v7711
      %v7713 = vmul.f32 %v7710, %v7712
      %v7714 = vadd.f32 %v7710, %v7713
      %vm7715 = vweird.f32 %v7210
      %vm7716 = vweird.f32 %v7710
      %vm7717 = vmor %vm7715, %vm7716
      %v7718 = vsel %vm7717, %v7710, %v7714
      %v7719 = vand.u32 2147483647, %v7210
      %vm7720 = vcmp.eq.f32.partialorder %v7719, 8.507059e+37
      %v7721 = vand.u32 %v7210, 2147483648
      %v7722 = vor.u32 1.1754944e-38, %v7721
      %v7723 = vsel %vm7720, %v7722, %v7718
      %v7724 = vmul.f32 1.0, %v7723
      %v7725 = vrcp.pop %v7211
      %v7726 = vmul.f32 %v7211, %v7725
      %v7727 = vsub.f32 1.0, %v7726
      %v7728 = vmul.f32 %v7725, %v7727
      %v7729 = vadd.f32 %v7725, %v7728
      %vm7730 = vweird.f32 %v7211
      %vm7731 = vweird.f32 %v7725
      %vm7732 = vmor %vm7730, %vm7731
      %v7733 = vsel %vm7732, %v7725, %v7729
      %v7734 = vand.u32 2147483647, %v7211
      %vm7735 = vcmp.eq.f32.partialorder %v7734, 8.507059e+37
      %v7736 = vand.u32 %v7211, 2147483648
      %v7737 = vor.u32 1.1754944e-38, %v7736
      %v7738 = vsel %vm7735, %v7737, %v7733
      %v7739 = vmul.f32 1.0, %v7738
      %v7740 = vrcp.pop %v7212
      %v7741 = vmul.f32 %v7212, %v7740
      %v7742 = vsub.f32 1.0, %v7741
      %v7743 = vmul.f32 %v7740, %v7742
      %v7744 = vadd.f32 %v7740, %v7743
      %vm7745 = vweird.f32 %v7212
      %vm7746 = vweird.f32 %v7740
      %vm7747 = vmor %vm7745, %vm7746
      %v7748 = vsel %vm7747, %v7740, %v7744
      %v7749 = vand.u32 2147483647, %v7212
      %vm7750 = vcmp.eq.f32.partialorder %v7749, 8.507059e+37
      %v7751 = vand.u32 %v7212, 2147483648
      %v7752 = vor.u32 1.1754944e-38, %v7751
      %v7753 = vsel %vm7750, %v7752, %v7748
      %v7754 = vmul.f32 1.0, %v7753
      %v7755 = vrcp.pop %v7213
      %v7756 = vmul.f32 %v7213, %v7755
      %v7757 = vsub.f32 1.0, %v7756
      %v7758 = vmul.f32 %v7755, %v7757
      %v7759 = vadd.f32 %v7755, %v7758
      %vm7760 = vweird.f32 %v7213
      %vm7761 = vweird.f32 %v7755
      %vm7762 = vmor %vm7760, %vm7761
      %v7763 = vsel %vm7762, %v7755, %v7759
      %v7764 = vand.u32 2147483647, %v7213
      %vm7765 = vcmp.eq.f32.partialorder %v7764, 8.507059e+37
      %v7766 = vand.u32 %v7213, 2147483648
      %v7767 = vor.u32 1.1754944e-38, %v7766
      %v7768 = vsel %vm7765, %v7767, %v7763
      %v7769 = vmul.f32 1.0, %v7768
      %v7770 = vrcp.pop %v7214
      %v7771 = vmul.f32 %v7214, %v7770
      %v7772 = vsub.f32 1.0, %v7771
      %v7773 = vmul.f32 %v7770, %v7772
      %v7774 = vadd.f32 %v7770, %v7773
      %vm7775 = vweird.f32 %v7214
      %vm7776 = vweird.f32 %v7770
      %vm7777 = vmor %vm7775, %vm7776
      %v7778 = vsel %vm7777, %v7770, %v7774
      %v7779 = vand.u32 2147483647, %v7214
      %vm7780 = vcmp.eq.f32.partialorder %v7779, 8.507059e+37
      %v7781 = vand.u32 %v7214, 2147483648
      %v7782 = vor.u32 1.1754944e-38, %v7781
      %v7783 = vsel %vm7780, %v7782, %v7778
      %v7784 = vmul.f32 1.0, %v7783
      %v7785 = vld [vmem:[%s11] sm:$0x1]
      %v7786 = vld [vmem:[%s12] sm:$0x1]
      %v7788 = vperm.slane %v7786, 0
      %v7790 = vmul.f32 %v7788, %v7229
      %v7791 = vmul.f32 %v7788, %v7244
      %v7792 = vmul.f32 %v7788, %v7259
      %v7793 = vmul.f32 %v7788, %v7274
      %v7794 = vmul.f32 %v7788, %v7289
      %v7795 = vmul.f32 %v7788, %v7304
      %v7796 = vmul.f32 %v7788, %v7319
      %v7797 = vmul.f32 %v7788, %v7334
      %v7798 = vmul.f32 %v7788, %v7349
      %v7799 = vmul.f32 %v7788, %v7364
      %v7800 = vmul.f32 %v7788, %v7379
      %v7801 = vmul.f32 %v7788, %v7394
      %v7802 = vmul.f32 %v7788, %v7409
      %v7803 = vmul.f32 %v7788, %v7424
      %v7804 = vmul.f32 %v7788, %v7439
      %v7805 = vmul.f32 %v7788, %v7454
      %v7806 = vmul.f32 %v7788, %v7469
      %v7807 = vmul.f32 %v7788, %v7484
      %v7808 = vmul.f32 %v7788, %v7499
      %v7809 = vmul.f32 %v7788, %v7514
      %v7810 = vmul.f32 %v7788, %v7529
      %v7811 = vmul.f32 %v7788, %v7544
      %v7812 = vmul.f32 %v7788, %v7559
      %v7813 = vmul.f32 %v7788, %v7574
      %v7814 = vmul.f32 %v7788, %v7589
      %v7815 = vmul.f32 %v7788, %v7604
      %v7816 = vmul.f32 %v7788, %v7619
      %v7817 = vmul.f32 %v7788, %v7634
      %v7818 = vmul.f32 %v7788, %v7649
      %v7819 = vmul.f32 %v7788, %v7664
      %v7820 = vmul.f32 %v7788, %v7679
      %v7821 = vmul.f32 %v7788, %v7694
      %v7822 = vmul.f32 %v7788, %v7709
      %v7823 = vmul.f32 %v7788, %v7724
      %v7824 = vmul.f32 %v7788, %v7739
      %v7825 = vmul.f32 %v7788, %v7754
      %v7826 = vmul.f32 %v7788, %v7769
      %v7827 = vmul.f32 %v7788, %v7784
      %v7829 = vperm.slane %v7785, 0
      %v7831 = vadd.f32 %v7829, %v7790
      %v7832 = vadd.f32 %v7829, %v7791
      %v7833 = vadd.f32 %v7829, %v7792
      %v7834 = vadd.f32 %v7829, %v7793
      %v7835 = vadd.f32 %v7829, %v7794
      %v7836 = vadd.f32 %v7829, %v7795
      %v7837 = vadd.f32 %v7829, %v7796
      %v7838 = vadd.f32 %v7829, %v7797
      %v7839 = vadd.f32 %v7829, %v7798
      %v7840 = vadd.f32 %v7829, %v7799
      %v7841 = vadd.f32 %v7829, %v7800
      %v7842 = vadd.f32 %v7829, %v7801
      %v7843 = vadd.f32 %v7829, %v7802
      %v7844 = vadd.f32 %v7829, %v7803
      %v7845 = vadd.f32 %v7829, %v7804
      %v7846 = vadd.f32 %v7829, %v7805
      %v7847 = vadd.f32 %v7829, %v7806
      %v7848 = vadd.f32 %v7829, %v7807
      %v7849 = vadd.f32 %v7829, %v7808
      %v7850 = vadd.f32 %v7829, %v7809
      %v7851 = vadd.f32 %v7829, %v7810
      %v7852 = vadd.f32 %v7829, %v7811
      %v7853 = vadd.f32 %v7829, %v7812
      %v7854 = vadd.f32 %v7829, %v7813
      %v7855 = vadd.f32 %v7829, %v7814
      %v7856 = vadd.f32 %v7829, %v7815
      %v7857 = vadd.f32 %v7829, %v7816
      %v7858 = vadd.f32 %v7829, %v7817
      %v7859 = vadd.f32 %v7829, %v7818
      %v7860 = vadd.f32 %v7829, %v7819
      %v7861 = vadd.f32 %v7829, %v7820
      %v7862 = vadd.f32 %v7829, %v7821
      %v7863 = vadd.f32 %v7829, %v7822
      %v7864 = vadd.f32 %v7829, %v7823
      %v7865 = vadd.f32 %v7829, %v7824
      %v7866 = vadd.f32 %v7829, %v7825
      %v7867 = vadd.f32 %v7829, %v7826
      %v7868 = vadd.f32 %v7829, %v7827
      %v7869 = vld [vmem:[%s13] sm:$0x1]
      %v7871 = vperm.slane %v7869, 0
      %v7873 = vmul.f32 %v6913, %v7871
      %v7874 = vmul.f32 %v6917, %v7871
      %v7875 = vmul.f32 %v6921, %v7871
      %v7876 = vmul.f32 %v6925, %v7871
      %v7877 = vmul.f32 %v6929, %v7871
      %v7878 = vmul.f32 %v6933, %v7871
      %v7879 = vmul.f32 %v6937, %v7871
      %v7880 = vmul.f32 %v6941, %v7871
      %v7881 = vmul.f32 %v6945, %v7871
      %v7882 = vmul.f32 %v6949, %v7871
      %v7883 = vmul.f32 %v6953, %v7871
      %v7884 = vmul.f32 %v6957, %v7871
      %v7885 = vmul.f32 %v6961, %v7871
      %v7886 = vmul.f32 %v6965, %v7871
      %v7887 = vmul.f32 %v6969, %v7871
      %v7888 = vmul.f32 %v6973, %v7871
      %v7889 = vmul.f32 %v6977, %v7871
      %v7890 = vmul.f32 %v6981, %v7871
      %v7891 = vmul.f32 %v6985, %v7871
      %v7892 = vmul.f32 %v6989, %v7871
      %v7893 = vmul.f32 %v6993, %v7871
      %v7894 = vmul.f32 %v6997, %v7871
      %v7895 = vmul.f32 %v7001, %v7871
      %v7896 = vmul.f32 %v7005, %v7871
      %v7897 = vmul.f32 %v7009, %v7871
      %v7898 = vmul.f32 %v7013, %v7871
      %v7899 = vmul.f32 %v7017, %v7871
      %v7900 = vmul.f32 %v7021, %v7871
      %v7901 = vmul.f32 %v7025, %v7871
      %v7902 = vmul.f32 %v7029, %v7871
      %v7903 = vmul.f32 %v7033, %v7871
      %v7904 = vmul.f32 %v7037, %v7871
      %v7905 = vmul.f32 %v7041, %v7871
      %v7906 = vmul.f32 %v7045, %v7871
      %v7907 = vmul.f32 %v7049, %v7871
      %v7908 = vmul.f32 %v7053, %v7871
      %v7909 = vmul.f32 %v7057, %v7871
      %v7910 = vmul.f32 %v7061, %v7871
      %v7911 = vsub.f32 1.0, %v7869
      %v7913 = vperm.slane %v7911, 0
      %v7915 = vmul.f32 %v7831, %v7913
      %v7916 = vmul.f32 %v7832, %v7913
      %v7917 = vmul.f32 %v7833, %v7913
      %v7918 = vmul.f32 %v7834, %v7913
      %v7919 = vmul.f32 %v7835, %v7913
      %v7920 = vmul.f32 %v7836, %v7913
      %v7921 = vmul.f32 %v7837, %v7913
      %v7922 = vmul.f32 %v7838, %v7913
      %v7923 = vmul.f32 %v7839, %v7913
      %v7924 = vmul.f32 %v7840, %v7913
      %v7925 = vmul.f32 %v7841, %v7913
      %v7926 = vmul.f32 %v7842, %v7913
      %v7927 = vmul.f32 %v7843, %v7913
      %v7928 = vmul.f32 %v7844, %v7913
      %v7929 = vmul.f32 %v7845, %v7913
      %v7930 = vmul.f32 %v7846, %v7913
      %v7931 = vmul.f32 %v7847, %v7913
      %v7932 = vmul.f32 %v7848, %v7913
      %v7933 = vmul.f32 %v7849, %v7913
      %v7934 = vmul.f32 %v7850, %v7913
      %v7935 = vmul.f32 %v7851, %v7913
      %v7936 = vmul.f32 %v7852, %v7913
      %v7937 = vmul.f32 %v7853, %v7913
      %v7938 = vmul.f32 %v7854, %v7913
      %v7939 = vmul.f32 %v7855, %v7913
      %v7940 = vmul.f32 %v7856, %v7913
      %v7941 = vmul.f32 %v7857, %v7913
      %v7942 = vmul.f32 %v7858, %v7913
      %v7943 = vmul.f32 %v7859, %v7913
      %v7944 = vmul.f32 %v7860, %v7913
      %v7945 = vmul.f32 %v7861, %v7913
      %v7946 = vmul.f32 %v7862, %v7913
      %v7947 = vmul.f32 %v7863, %v7913
      %v7948 = vmul.f32 %v7864, %v7913
      %v7949 = vmul.f32 %v7865, %v7913
      %v7950 = vmul.f32 %v7866, %v7913
      %v7951 = vmul.f32 %v7867, %v7913
      %v7952 = vmul.f32 %v7868, %v7913
      %v7953 = vadd.f32 %v7873, %v7915
      %v7954 = vadd.f32 %v7874, %v7916
      %v7955 = vadd.f32 %v7875, %v7917
      %v7956 = vadd.f32 %v7876, %v7918
      %v7957 = vadd.f32 %v7877, %v7919
      %v7958 = vadd.f32 %v7878, %v7920
      %v7959 = vadd.f32 %v7879, %v7921
      %v7960 = vadd.f32 %v7880, %v7922
      %v7961 = vadd.f32 %v7881, %v7923
      %v7962 = vadd.f32 %v7882, %v7924
      %v7963 = vadd.f32 %v7883, %v7925
      %v7964 = vadd.f32 %v7884, %v7926
      %v7965 = vadd.f32 %v7885, %v7927
      %v7966 = vadd.f32 %v7886, %v7928
      %v7967 = vadd.f32 %v7887, %v7929
      %v7968 = vadd.f32 %v7888, %v7930
      %v7969 = vadd.f32 %v7889, %v7931
      %v7970 = vadd.f32 %v7890, %v7932
      %v7971 = vadd.f32 %v7891, %v7933
      %v7972 = vadd.f32 %v7892, %v7934
      %v7973 = vadd.f32 %v7893, %v7935
      %v7974 = vadd.f32 %v7894, %v7936
      %v7975 = vadd.f32 %v7895, %v7937
      %v7976 = vadd.f32 %v7896, %v7938
      %v7977 = vadd.f32 %v7897, %v7939
      %v7978 = vadd.f32 %v7898, %v7940
      %v7979 = vadd.f32 %v7899, %v7941
      %v7980 = vadd.f32 %v7900, %v7942
      %v7981 = vadd.f32 %v7901, %v7943
      %v7982 = vadd.f32 %v7902, %v7944
      %v7983 = vadd.f32 %v7903, %v7945
      %v7984 = vadd.f32 %v7904, %v7946
      %v7985 = vadd.f32 %v7905, %v7947
      %v7986 = vadd.f32 %v7906, %v7948
      %v7987 = vadd.f32 %v7907, %v7949
      %v7988 = vadd.f32 %v7908, %v7950
      %v7989 = vadd.f32 %v7909, %v7951
      %v7990 = vadd.f32 %v7910, %v7952
      %vm7991 = vcmask 64512
      %7992 = vst.msk [vmem:[%s469] sm:$0xff] %vm7991, %v7953
      %7993 = vst.msk [vmem:[%s469 + $0x8] sm:$0xff] %vm7991, %v7954
      %7994 = vst.msk [vmem:[%s469 + $0x10] sm:$0xff] %vm7991, %v7955
      %7995 = vst.msk [vmem:[%s469 + $0x18] sm:$0xff] %vm7991, %v7956
      %7996 = vst.msk [vmem:[%s469 + $0x20] sm:$0xff] %vm7991, %v7957
      %7997 = vst.msk [vmem:[%s469 + $0x28] sm:$0xff] %vm7991, %v7958
      %7998 = vst.msk [vmem:[%s469 + $0x30] sm:$0xff] %vm7991, %v7959
      %7999 = vst.msk [vmem:[%s469 + $0x38] sm:$0xff] %vm7991, %v7960
      %8000 = vst.msk [vmem:[%s469 + $0x40] sm:$0xff] %vm7991, %v7961
      %8001 = vst.msk [vmem:[%s469 + $0x48] sm:$0xff] %vm7991, %v7962
      %8002 = vst.msk [vmem:[%s469 + $0x50] sm:$0xff] %vm7991, %v7963
      %8003 = vst.msk [vmem:[%s469 + $0x58] sm:$0xff] %vm7991, %v7964
      %8004 = vst.msk [vmem:[%s469 + $0x60] sm:$0xff] %vm7991, %v7965
      %8005 = vst.msk [vmem:[%s469 + $0x68] sm:$0xff] %vm7991, %v7966
      %8006 = vst.msk [vmem:[%s469 + $0x70] sm:$0xff] %vm7991, %v7967
      %8007 = vst.msk [vmem:[%s469 + $0x78] sm:$0xff] %vm7991, %v7968
      %8008 = vst.msk [vmem:[%s469 + $0x80] sm:$0xff] %vm7991, %v7969
      %8009 = vst.msk [vmem:[%s469 + $0x88] sm:$0xff] %vm7991, %v7970
      %8010 = vst.msk [vmem:[%s469 + $0x90] sm:$0xff] %vm7991, %v7971
      %8011 = vst.msk [vmem:[%s469 + $0x98] sm:$0xff] %vm7991, %v7972
      %8012 = vst.msk [vmem:[%s469 + $0xa0] sm:$0xff] %vm7991, %v7973
      %8013 = vst.msk [vmem:[%s469 + $0xa8] sm:$0xff] %vm7991, %v7974
      %8014 = vst.msk [vmem:[%s469 + $0xb0] sm:$0xff] %vm7991, %v7975
      %8015 = vst.msk [vmem:[%s469 + $0xb8] sm:$0xff] %vm7991, %v7976
      %8016 = vst.msk [vmem:[%s469 + $0xc0] sm:$0xff] %vm7991, %v7977
      %8017 = vst.msk [vmem:[%s469 + $0xc8] sm:$0xff] %vm7991, %v7978
      %8018 = vst.msk [vmem:[%s469 + $0xd0] sm:$0xff] %vm7991, %v7979
      %8019 = vst.msk [vmem:[%s469 + $0xd8] sm:$0xff] %vm7991, %v7980
      %8020 = vst.msk [vmem:[%s469 + $0xe0] sm:$0xff] %vm7991, %v7981
      %8021 = vst.msk [vmem:[%s469 + $0xe8] sm:$0xff] %vm7991, %v7982
      %8022 = vst.msk [vmem:[%s469 + $0xf0] sm:$0xff] %vm7991, %v7983
      %8023 = vst.msk [vmem:[%s469 + $0xf8] sm:$0xff] %vm7991, %v7984
      %8024 = vst.msk [vmem:[%s469 + $0x100] sm:$0xff] %vm7991, %v7985
      %8025 = vst.msk [vmem:[%s469 + $0x108] sm:$0xff] %vm7991, %v7986
      %8026 = vst.msk [vmem:[%s469 + $0x110] sm:$0xff] %vm7991, %v7987
      %8027 = vst.msk [vmem:[%s469 + $0x118] sm:$0xff] %vm7991, %v7988
      %8028 = vst.msk [vmem:[%s469 + $0x120] sm:$0xff] %vm7991, %v7989
      %8029 = vst.msk [vmem:[%s469 + $0x128] sm:$0xff] %vm7991, %v7990
      %s8030 = smul.u32 38, %s25
      %p8031 = scmp.lt.s32.totalorder %s8030, 75
      %s8032 = scalar_select %p8031, %s8030, 75
      %s8033 = smul.addr %s8032, 8
      %s8034 = scalar_lea.vmem %s14, %s8033
      // Predicated region
      $region77: #{tpu_custom_call.1} parent=75 // pred_check
        %p8035 = pneg %p342
      $region78: #{tpu_custom_call.1} parent=75 // pred_check_branch
        %8037 = sbr.rel (%p8035) target = $region80
      $region79: #{tpu_custom_call.1} parent=75 // pred_region
        %s8038 = smul.u32 38, %s25
      $region80: #{tpu_custom_call.1} parent=75 // pred_fallthru
        _
    $region76: #{tpu_custom_call.1} parent=5 // pred_fallthru
      _
    %p8039 = scmp.le.s32.totalorder 2, %s20
    // Predicated region
    $region81: #{tpu_custom_call.1} parent=5 // pred_check
      %p8040 = pneg %p8039
    $region82: #{tpu_custom_call.1} parent=5 // pred_check_branch
      %8042 = sbr.rel (%p8040) target = $region84
    $region83: #{tpu_custom_call.1} parent=5 // pred_region
      %s8043 = ssub.s32 %s20, 2
      // Predicated region
      $region85: #{tpu_custom_call.1} parent=83 // pred_check
        %p8044 = pneg %p348
      $region86: #{tpu_custom_call.1} parent=83 // pred_check_branch
        %8046 = sbr.rel (%p8044) target = $region88
      $region87: #{tpu_custom_call.1} parent=83 // pred_region
        %s8047 = smul.u32 38, %s26
        %p8048 = scmp.lt.s32.totalorder %s8047, 75
        %s8049 = scalar_select %p8048, %s8047, 75
        %s8050 = smul.addr %s8049, 8
        %s8051 = scalar_lea.vmem %s14, %s8050
      $region88: #{tpu_custom_call.1} parent=83 // pred_fallthru
        _
    $region84: #{tpu_custom_call.1} parent=5 // pred_fallthru
      _
  $region6: #{tpu_custom_call.1} parent=0 // loop_footer
    %s24 = sadd.s32 1, %s20
  $region7: #{tpu_custom_call.1} parent=0 // loop_footer_branch
    %19 = sbr.rel target = $region3
  $region8: #{tpu_custom_call.1} parent=0 // loop_exit
    _

</llo_original>
